<compile_context>
chip_gen: v7x
topology: tpu7x:2x2x1
jax: 0.10.0
libtpu: 0.0.40
codegen_flags: <defaults>
</compile_context>

<pallas_src>
import functools

import numpy as np
import jax
import jax.numpy as jnp
from jax import lax
from jax.experimental import pallas as pl
from jax.experimental.pallas import tpu as pltpu

APPEAR_DIM = 128
MOTION_DIM = 128
NODE_DIM = APPEAR_DIM + MOTION_DIM  # 256, matches EdgeRegressionMLP input_size
LSTM_H = 128


def _full_spec(shape):
    nd = len(shape)
    return pl.BlockSpec(shape, lambda i, nd=nd: (0,) * nd)


# ---------------- PointNetCustom: per-point MLP (1x1 convs) + global max-pool ----
def _pointnet_kernel(x_ref, w1, b1, w2, b2, w3, b3, out_ref):
    n_obj = out_ref.shape[0]
    pts = x_ref.shape[0] // n_obj

    x = x_ref[...]                                  # (n_obj*P, 3) f32
    w1v = w1[...]                                   # (3, 64) f32
    # First 1x1 conv (K=3) folded into 3 VPU broadcast-MACs; keeps the MXU free
    # and avoids a K=3 matmul that wastes 125/128 of the contraction depth.
    h = (x[:, 0:1] * w1v[0:1, :] + x[:, 1:2] * w1v[1:2, :]
         + x[:, 2:3] * w1v[2:3, :] + b1[...])
    h = jnp.maximum(h, 0.0)
    # 64 -> 128 -> 128 on the MXU: bf16 operands, f32 accumulation.
    h = jnp.maximum(jnp.dot(h.astype(jnp.bfloat16), w2[...],
                            preferred_element_type=jnp.float32) + b2[...], 0.0)
    h = jnp.maximum(jnp.dot(h.astype(jnp.bfloat16), w3[...],
                            preferred_element_type=jnp.float32) + b3[...], 0.0)
    # Global max-pool over points, one object at a time (static unroll, sublane reduce).
    for b in range(n_obj):
        out_ref[b:b + 1, :] = jnp.max(h[b * pts:(b + 1) * pts, :],
                                      axis=0, keepdims=True)


def pointnet_all(det_pc, track_pc, p):
    """Appearance features for det and track objects in a single pallas_call."""
    x = jnp.concatenate([det_pc, track_pc], axis=0)        # (N+M, P, 3)
    B, P, C = x.shape
    x_flat = x.reshape(B * P, C)                            # (B*P, 3)
    n_split = 2 if B % 2 == 0 else 1                        # 'parallel' axis (v7x 2 TCs)
    obj_blk = B // n_split
    return pl.pallas_call(
        _pointnet_kernel,
        out_shape=jax.ShapeDtypeStruct((B, APPEAR_DIM), jnp.float32),
        grid=(n_split,),
        in_specs=[
            pl.BlockSpec((obj_blk * P, C), lambda g: (g, 0)),
            pl.BlockSpec((C, 64), lambda g: (0, 0)),
            pl.BlockSpec((1, 64), lambda g: (0, 0)),
            pl.BlockSpec((64, 128), lambda g: (0, 0)),
            pl.BlockSpec((1, 128), lambda g: (0, 0)),
            pl.BlockSpec((128, APPEAR_DIM), lambda g: (0, 0)),
            pl.BlockSpec((1, APPEAR_DIM), lambda g: (0, 0)),
        ],
        out_specs=pl.BlockSpec((obj_blk, APPEAR_DIM), lambda g: (g, 0)),
        compiler_params=pltpu.CompilerParams(dimension_semantics=("parallel",)),
    )(x_flat, p["pn_w1"], p["pn_b1"], p["pn_w2"], p["pn_b2"], p["pn_w3"], p["pn_b3"])


# ---------------- Fused head: det MLP + track LSTM + graph conv + edge regr ------
def _fused_head_kernel(det_box_ref, trk_x_ref, appear_ref, aff_ref, aff_flat_ref,
                       mw1, mb1, mw2, mb2,
                       wih1, whh1, lb1, wih2, whh2, lb2,
                       gcw, gcb, ew1, eb1, ew2, eb2,
                       out_ref, *, n_det, n_track, seq_len):
    N, M, T, H = n_det, n_track, seq_len, LSTM_H
    f32, bf16 = jnp.float32, jnp.bfloat16

    # ---- det motion: TwoLayersMLP 9 -> 64 -> 128 (ReLU on hidden only) ----
    dh = jnp.maximum(jnp.dot(det_box_ref[...].astype(bf16), mw1[...],
                             preferred_element_type=f32) + mb1[...], 0.0)
    det_motion = jnp.dot(dh.astype(bf16), mw2[...],
                         preferred_element_type=f32) + mb2[...]          # (N, 128)

    # ---- track motion: 2-layer LSTM (gate order i,f,g,o), last hidden state ----
    # Layer-1 input projection hoisted out of the recurrence: one (T*M,9)@(9,4H) matmul.
    gx1 = (jnp.dot(trk_x_ref[...].astype(bf16), wih1[...],
                   preferred_element_type=f32) + lb1[...])               # (T*M, 4H)
    whh1v, wih2v, whh2v, lb2v = whh1[...], wih2[...], whh2[...], lb2[...]

    def cell(pre, c):
        i = jax.nn.sigmoid(pre[:, 0 * H:1 * H])
        f = jax.nn.sigmoid(pre[:, 1 * H:2 * H])
        g = jnp.tanh(pre[:, 2 * H:3 * H])
        o = jax.nn.sigmoid(pre[:, 3 * H:4 * H])
        c_new = f * c + i * g
        return o * jnp.tanh(c_new), c_new

    z = jnp.zeros((M, H), f32)
    h1, c1, h2, c2 = z, z, z, z
    for t in range(T):   # short fixed trip-count: static unroll for LLO visibility
        g1 = gx1[t * M:(t + 1) * M, :] + jnp.dot(h1.astype(bf16), whh1v,
                                                 preferred_element_type=f32)
        h1, c1 = cell(g1, c1)
        g2 = (jnp.dot(h1.astype(bf16), wih2v, preferred_element_type=f32)
              + jnp.dot(h2.astype(bf16), whh2v, preferred_element_type=f32) + lb2v)
        h2, c2 = cell(g2, c2)
    track_motion = h2                                                    # (M, 128)

    # ---- node features [appearance | motion] ----
    motion = jnp.concatenate([det_motion, track_motion], axis=0)         # (N+M, 128)
    feat = jnp.concatenate([appear_ref[...], motion], axis=1)            # (N+M, 256)
    det_feat = feat[:N, :]
    trk_feat = feat[N:, :]

    # ---- graph conv: mean aggregation over init-aff edges + self loops ----
    # No adjacency matrix materialized:
    #   det node i  : (feat_i + sum_j aff[i,j] * feat_{N+j}) / (1 + sum_j aff[i,j])
    #   track node j: feat_{N+j}                              (self loop only)
    # TODO(synk): the real graph_conv operator is built from cfg.graph_conv; this
    # mean-aggregation conv + EdgeRegressionMLP stands in for it (test mode).
    aff = aff_ref[...]                                                   # (N, M)
    deg_det = 1.0 + jnp.sum(aff, axis=1, keepdims=True)                  # (N, 1)
    agg_det = (det_feat + jnp.dot(aff.astype(bf16), trk_feat.astype(bf16),
                                  preferred_element_type=f32)
               ) * pl.reciprocal(deg_det, approx=True)
    agg = jnp.concatenate([agg_det, trk_feat], axis=0)                   # (N+M, 256)
    hg = jnp.maximum(jnp.dot(agg.astype(bf16), gcw[...],
                             preferred_element_type=f32) + gcb[...], 0.0)

    # ---- edge regression: all (det, track) pairs in ONE (N*M,256)@(256,64) matmul ----
    h_det = hg[:N, :]
    h_trk = hg[N:, :]
    # Build |h_det[i] - h_trk[j]| rows i-major via cheap sublane broadcasts + concat
    # (no per-pair matmuls, no masked-select accumulation).
    e = jnp.concatenate([jnp.abs(h_det[i:i + 1, :] - h_trk) for i in range(N)],
                        axis=0)                                          # (N*M, 256)
    e1 = jnp.maximum(jnp.dot(e.astype(bf16), ew1[...],
                             preferred_element_type=f32) + eb1[...], 0.0)  # (N*M, 64)
    s = jnp.sum(e1 * ew2[...], axis=1, keepdims=True) + eb2[0, 0]        # (N*M, 1)
    regr = jax.nn.sigmoid(s)

    # valid = init_aff * regr; entries with no edge -> 99.  Mask directly on
    # init_aff == 0 (robust: sigmoid is never exactly 0).
    # TODO(synk): for large N, M pad the pair axis to a lane-dense multiple of 128.
    aff_flat = aff_flat_ref[...]                                         # (N*M, 1)
    out_ref[...] = jnp.where(aff_flat == 0.0, jnp.float32(99.0), aff_flat * regr)


def fused_graph_head(det_boxes, trk_x_flat, appear, aff, aff_flat, p,
                     n_det, n_track, seq_len):
    kernel = functools.partial(_fused_head_kernel, n_det=n_det, n_track=n_track,
                               seq_len=seq_len)
    args = (det_boxes, trk_x_flat, appear, aff, aff_flat,
            p["mlp_w1"], p["mlp_b1"], p["mlp_w2"], p["mlp_b2"],
            p["lstm_wih1"], p["lstm_whh1"], p["lstm_b1"],
            p["lstm_wih2"], p["lstm_whh2"], p["lstm_b2"],
            p["gc_w"], p["gc_b"], p["er_w1"], p["er_b1"], p["er_w2"], p["er_b2"])
    return pl.pallas_call(
        kernel,
        out_shape=jax.ShapeDtypeStruct((n_det * n_track, 1), jnp.float32),
        grid=(1,),
        in_specs=[_full_spec(a.shape) for a in args],
        out_specs=_full_spec((n_det * n_track, 1)),
        compiler_params=pltpu.CompilerParams(dimension_semantics=("arbitrary",)),
    )(*args)


# ---------------- Parameters (deterministic, synthetic) --------------------------
def init_params(key):
    ks = jax.random.split(key, 22)

    def w(k, shape, dtype=jnp.float32, scale=0.1):
        return (scale * jax.random.normal(k, shape)).astype(dtype)

    bf16 = jnp.bfloat16
    H4 = 4 * LSTM_H
    return {
        # PointNetCustom: 1x1 convs 3->64->128->128 (ReLU) + max-pool.
        # First layer stays f32 (computed on the VPU); MXU-side weights are bf16.
        "pn_w1": w(ks[0], (3, 64)), "pn_b1": w(ks[1], (1, 64)),
        "pn_w2": w(ks[2], (64, 128), bf16), "pn_b2": w(ks[3], (1, 128)),
        "pn_w3": w(ks[4], (128, APPEAR_DIM), bf16), "pn_b3": w(ks[5], (1, APPEAR_DIM)),
        # TwoLayersMLP: 9 -> 64 -> 128
        "mlp_w1": w(ks[6], (9, 64), bf16), "mlp_b1": w(ks[7], (1, 64)),
        "mlp_w2": w(ks[8], (64, MOTION_DIM), bf16), "mlp_b2": w(ks[9], (1, MOTION_DIM)),
        # LSTMfeat: 2 layers, input 9, hidden 128, gate order (i, f, g, o)
        "lstm_wih1": w(ks[10], (9, H4), bf16), "lstm_whh1": w(ks[11], (LSTM_H, H4), bf16),
        "lstm_b1": w(ks[12], (1, H4)),
        "lstm_wih2": w(ks[13], (LSTM_H, H4), bf16), "lstm_whh2": w(ks[14], (LSTM_H, H4), bf16),
        "lstm_b2": w(ks[15], (1, H4)),
        # graph conv: 256 -> 256
        "gc_w": w(ks[16], (NODE_DIM, NODE_DIM), bf16), "gc_b": w(ks[17], (1, NODE_DIM)),
        # EdgeRegressionMLP: 256 -> 64 -> 1 (sigmoid); er_w2 stays f32 (VPU mul+reduce)
        "er_w1": w(ks[18], (NODE_DIM, 64), bf16), "er_b1": w(ks[19], (1, 64)),
        "er_w2": w(ks[20], (1, 64)), "er_b2": w(ks[21], (1, 1)),
    }


# ---------------- GNNMOT forward (test mode) -------------------------------------
def gnn_mot_forward(params, det_pc_in_box, det_boxes3d, track_pc_in_box,
                    track_boxes3d, init_aff_matrix, gt_affinity_matrix):
    N = det_pc_in_box.shape[0]
    M = track_pc_in_box.shape[0]
    T = track_boxes3d.shape[1]
    assert init_aff_matrix.shape == (N, M)
    assert track_pc_in_box.shape[0] != 0

    # Appearance features for det + track objects in one call.
    appear = pointnet_all(det_pc_in_box.astype(jnp.float32),
                          track_pc_in_box.astype(jnp.float32), params)   # (N+M, 128)

    # Track box sequence time-major, flattened for the hoisted LSTM input projection.
    trk_x_flat = jnp.transpose(track_boxes3d.astype(jnp.float32),
                               (1, 0, 2)).reshape(T * M, 9)
    aff = init_aff_matrix.astype(jnp.float32)
    aff_flat = aff.reshape(N * M, 1)

    valid_flat = fused_graph_head(det_boxes3d.astype(jnp.float32), trk_x_flat,
                                  appear, aff, aff_flat, params, N, M, T)
    del gt_affinity_matrix  # only used for the training losses
    return valid_flat.reshape(N, M)


# ---------------- Host-side greedy matching (data-dependent output length) -------
def greedy_match(valid_matrix):
    valid = np.array(valid_matrix, dtype=np.float32, copy=True)
    N = valid.shape[0]
    matched = []
    for i in range(N):
        j = int(valid[i].argmin())
        if valid[i, j] < 99:
            valid[:, j] = 99
            matched.append([i, j])
    return np.array(matched, np.int32).reshape(-1, 2)


def verify_matched_indices(matched_indices):
    m_det, m_track = {}, {}
    for m in matched_indices:
        if m[0] in m_det:
            return False
        m_det[m[0]] = True
        if m[1] in m_track:
            return False
        m_track[m[1]] = True
    return True


if __name__ == "__main__":
    key = jax.random.PRNGKey(0)
    N, M, P, T = 8, 8, 128, 8
    ks = jax.random.split(key, 6)

    det_pc_in_box = jax.random.normal(ks[0], (N, P, 3), jnp.float32)
    track_pc_in_box = jax.random.normal(ks[1], (M, P, 3), jnp.float32)
    det_boxes3d = jax.random.normal(ks[2], (N, 9), jnp.float32)
    track_boxes3d = jax.random.normal(ks[3], (M, T, 9), jnp.float32)
    init_aff_matrix = (jax.random.uniform(ks[4], (N, M)) < 0.5).astype(jnp.float32)
    gt_affinity_matrix = (jax.random.uniform(ks[5], (N, M)) < 0.5).astype(jnp.float32)

    params = init_params(jax.random.PRNGKey(42))

    forward = jax.jit(gnn_mot_forward)
    valid_regr_affinity_matrix = forward(
        params, det_pc_in_box, det_boxes3d, track_pc_in_box, track_boxes3d,
        init_aff_matrix, gt_affinity_matrix)
    valid_regr_affinity_matrix = jax.block_until_ready(valid_regr_affinity_matrix)

    matched_indices = greedy_match(np.asarray(valid_regr_affinity_matrix))
    assert verify_matched_indices(matched_indices.tolist()) is True
    print("KERNEL_OK")
</pallas_src>

<mosaic_0001>
module attributes {stable_mosaic.version = 11 : i64} {
  func.func @_pointnet_kernel(%arg0: i32, %arg1: memref<1024x3xf32, #tpu.memory_space<vmem>>, %arg2: memref<3x64xf32, #tpu.memory_space<vmem>>, %arg3: memref<1x64xf32, #tpu.memory_space<vmem>>, %arg4: memref<64x128xbf16, #tpu.memory_space<vmem>>, %arg5: memref<1x128xf32, #tpu.memory_space<vmem>>, %arg6: memref<128x128xbf16, #tpu.memory_space<vmem>>, %arg7: memref<1x128xf32, #tpu.memory_space<vmem>>, %arg8: memref<8x128xf32, #tpu.memory_space<vmem>>) attributes {dimension_semantics = [#tpu.dimension_semantics<parallel>], iteration_bounds = array<i64: 2>, scalar_prefetch = 0 : i64, scratch_operands = 0 : i64, tpu.core_type = #tpu.core_type<tc>, window_params = [{transform_indices = @transform_0, window_bounds = array<i64: 1024, 3>}, {pipeline_mode = #tpu.pipeline_mode<synchronous>, transform_indices = @transform_1, window_bounds = array<i64: 3, 64>}, {pipeline_mode = #tpu.pipeline_mode<synchronous>, transform_indices = @transform_2, window_bounds = array<i64: 1, 64>}, {pipeline_mode = #tpu.pipeline_mode<synchronous>, transform_indices = @transform_3, window_bounds = array<i64: 64, 128>}, {pipeline_mode = #tpu.pipeline_mode<synchronous>, transform_indices = @transform_4, window_bounds = array<i64: 1, 128>}, {pipeline_mode = #tpu.pipeline_mode<synchronous>, transform_indices = @transform_5, window_bounds = array<i64: 128, 128>}, {pipeline_mode = #tpu.pipeline_mode<synchronous>, transform_indices = @transform_6, window_bounds = array<i64: 1, 128>}, {transform_indices = @transform_7, window_bounds = array<i64: 8, 128>}]} {
    %c0 = arith.constant 0 : index
    %c0_0 = arith.constant 0 : index
    %0 = vector.load %arg1[%c0, %c0_0] : memref<1024x3xf32, #tpu.memory_space<vmem>>, vector<1024x3xf32>
    %c0_1 = arith.constant 0 : index
    %c0_2 = arith.constant 0 : index
    %1 = vector.load %arg2[%c0_1, %c0_2] : memref<3x64xf32, #tpu.memory_space<vmem>>, vector<3x64xf32>
    %2 = vector.extract_strided_slice %0 {offsets = [0, 0], sizes = [1024, 1], strides = [1, 1]} : vector<1024x3xf32> to vector<1024x1xf32>
    %3 = vector.extract_strided_slice %1 {offsets = [0, 0], sizes = [1, 64], strides = [1, 1]} : vector<3x64xf32> to vector<1x64xf32>
    %4 = vector.broadcast %2 : vector<1024x1xf32> to vector<1024x64xf32>
    %5 = vector.broadcast %3 : vector<1x64xf32> to vector<1024x64xf32>
    %6 = arith.mulf %4, %5 : vector<1024x64xf32>
    %7 = vector.extract_strided_slice %0 {offsets = [0, 1], sizes = [1024, 1], strides = [1, 1]} : vector<1024x3xf32> to vector<1024x1xf32>
    %8 = vector.extract_strided_slice %1 {offsets = [1, 0], sizes = [1, 64], strides = [1, 1]} : vector<3x64xf32> to vector<1x64xf32>
    %9 = vector.broadcast %7 : vector<1024x1xf32> to vector<1024x64xf32>
    %10 = vector.broadcast %8 : vector<1x64xf32> to vector<1024x64xf32>
    %11 = arith.mulf %9, %10 : vector<1024x64xf32>
    %12 = arith.addf %6, %11 : vector<1024x64xf32>
    %13 = vector.extract_strided_slice %0 {offsets = [0, 2], sizes = [1024, 1], strides = [1, 1]} : vector<1024x3xf32> to vector<1024x1xf32>
    %14 = vector.extract_strided_slice %1 {offsets = [2, 0], sizes = [1, 64], strides = [1, 1]} : vector<3x64xf32> to vector<1x64xf32>
    %15 = vector.broadcast %13 : vector<1024x1xf32> to vector<1024x64xf32>
    %16 = vector.broadcast %14 : vector<1x64xf32> to vector<1024x64xf32>
    %17 = arith.mulf %15, %16 : vector<1024x64xf32>
    %18 = arith.addf %12, %17 : vector<1024x64xf32>
    %c0_3 = arith.constant 0 : index
    %c0_4 = arith.constant 0 : index
    %19 = vector.load %arg3[%c0_3, %c0_4] : memref<1x64xf32, #tpu.memory_space<vmem>>, vector<1x64xf32>
    %20 = vector.broadcast %19 : vector<1x64xf32> to vector<1024x64xf32>
    %21 = arith.addf %18, %20 : vector<1024x64xf32>
    %cst = arith.constant 0.000000e+00 : f32
    %22 = vector.broadcast %cst : f32 to vector<1024x64xf32>
    %23 = arith.maximumf %21, %22 : vector<1024x64xf32>
    %24 = arith.truncf %23 : vector<1024x64xf32> to vector<1024x64xbf16>
    %c0_5 = arith.constant 0 : index
    %c0_6 = arith.constant 0 : index
    %25 = vector.load %arg4[%c0_5, %c0_6] : memref<64x128xbf16, #tpu.memory_space<vmem>>, vector<64x128xbf16>
    %cst_7 = arith.constant dense<0.000000e+00> : vector<1024x128xf32>
    %26 = tpu.matmul %24, %25, %cst_7 {dimension_numbers = #tpu.dot_dimension_numbers<[1], [0], [0], [1], [0, 0, 1, 1], [], []>} : vector<1024x64xbf16>, vector<64x128xbf16>, vector<1024x128xf32> -> vector<1024x128xf32>
    %c0_8 = arith.constant 0 : index
    %c0_9 = arith.constant 0 : index
    %27 = vector.load %arg5[%c0_8, %c0_9] : memref<1x128xf32, #tpu.memory_space<vmem>>, vector<1x128xf32>
    %28 = vector.broadcast %27 : vector<1x128xf32> to vector<1024x128xf32>
    %29 = arith.addf %26, %28 : vector<1024x128xf32>
    %cst_10 = arith.constant 0.000000e+00 : f32
    %30 = vector.broadcast %cst_10 : f32 to vector<1024x128xf32>
    %31 = arith.maximumf %29, %30 : vector<1024x128xf32>
    %32 = arith.truncf %31 : vector<1024x128xf32> to vector<1024x128xbf16>
    %c0_11 = arith.constant 0 : index
    %c0_12 = arith.constant 0 : index
    %33 = vector.load %arg6[%c0_11, %c0_12] : memref<128x128xbf16, #tpu.memory_space<vmem>>, vector<128x128xbf16>
    %cst_13 = arith.constant dense<0.000000e+00> : vector<1024x128xf32>
    %34 = tpu.matmul %32, %33, %cst_13 {dimension_numbers = #tpu.dot_dimension_numbers<[1], [0], [0], [1], [0, 0, 1, 1], [], []>} : vector<1024x128xbf16>, vector<128x128xbf16>, vector<1024x128xf32> -> vector<1024x128xf32>
    %c0_14 = arith.constant 0 : index
    %c0_15 = arith.constant 0 : index
    %35 = vector.load %arg7[%c0_14, %c0_15] : memref<1x128xf32, #tpu.memory_space<vmem>>, vector<1x128xf32>
    %36 = vector.broadcast %35 : vector<1x128xf32> to vector<1024x128xf32>
    %37 = arith.addf %34, %36 : vector<1024x128xf32>
    %cst_16 = arith.constant 0.000000e+00 : f32
    %38 = vector.broadcast %cst_16 : f32 to vector<1024x128xf32>
    %39 = arith.maximumf %37, %38 : vector<1024x128xf32>
    %40 = vector.extract_strided_slice %39 {offsets = [0, 0], sizes = [128, 128], strides = [1, 1]} : vector<1024x128xf32> to vector<128x128xf32>
    %cst_17 = arith.constant dense<0xFF800000> : vector<128xf32>
    %41 = vector.multi_reduction <maximumf>, %40, %cst_17 [0] : vector<128x128xf32> to vector<128xf32>
    %42 = vector.shape_cast %41 : vector<128xf32> to vector<1x128xf32>
    %c0_18 = arith.constant 0 : index
    %c0_19 = arith.constant 0 : index
    %43 = vector.load %arg8[%c0_18, %c0_19] : memref<8x128xf32, #tpu.memory_space<vmem>>, vector<1x128xf32>
    tpu.vector_store %arg8[%c0_18, %c0_19], %42 {strides = array<i32>} : memref<8x128xf32, #tpu.memory_space<vmem>>, vector<1x128xf32>,
    %44 = vector.extract_strided_slice %39 {offsets = [128, 0], sizes = [128, 128], strides = [1, 1]} : vector<1024x128xf32> to vector<128x128xf32>
    %cst_20 = arith.constant dense<0xFF800000> : vector<128xf32>
    %45 = vector.multi_reduction <maximumf>, %44, %cst_20 [0] : vector<128x128xf32> to vector<128xf32>
    %46 = vector.shape_cast %45 : vector<128xf32> to vector<1x128xf32>
    %c1 = arith.constant 1 : index
    %c0_21 = arith.constant 0 : index
    %47 = vector.load %arg8[%c1, %c0_21] : memref<8x128xf32, #tpu.memory_space<vmem>>, vector<1x128xf32>
    tpu.vector_store %arg8[%c1, %c0_21], %46 {strides = array<i32>} : memref<8x128xf32, #tpu.memory_space<vmem>>, vector<1x128xf32>,
    %48 = vector.extract_strided_slice %39 {offsets = [256, 0], sizes = [128, 128], strides = [1, 1]} : vector<1024x128xf32> to vector<128x128xf32>
    %cst_22 = arith.constant dense<0xFF800000> : vector<128xf32>
    %49 = vector.multi_reduction <maximumf>, %48, %cst_22 [0] : vector<128x128xf32> to vector<128xf32>
    %50 = vector.shape_cast %49 : vector<128xf32> to vector<1x128xf32>
    %c2 = arith.constant 2 : index
    %c0_23 = arith.constant 0 : index
    %51 = vector.load %arg8[%c2, %c0_23] : memref<8x128xf32, #tpu.memory_space<vmem>>, vector<1x128xf32>
    tpu.vector_store %arg8[%c2, %c0_23], %50 {strides = array<i32>} : memref<8x128xf32, #tpu.memory_space<vmem>>, vector<1x128xf32>,
    %52 = vector.extract_strided_slice %39 {offsets = [384, 0], sizes = [128, 128], strides = [1, 1]} : vector<1024x128xf32> to vector<128x128xf32>
    %cst_24 = arith.constant dense<0xFF800000> : vector<128xf32>
    %53 = vector.multi_reduction <maximumf>, %52, %cst_24 [0] : vector<128x128xf32> to vector<128xf32>
    %54 = vector.shape_cast %53 : vector<128xf32> to vector<1x128xf32>
    %c3 = arith.constant 3 : index
    %c0_25 = arith.constant 0 : index
    %55 = vector.load %arg8[%c3, %c0_25] : memref<8x128xf32, #tpu.memory_space<vmem>>, vector<1x128xf32>
    tpu.vector_store %arg8[%c3, %c0_25], %54 {strides = array<i32>} : memref<8x128xf32, #tpu.memory_space<vmem>>, vector<1x128xf32>,
    %56 = vector.extract_strided_slice %39 {offsets = [512, 0], sizes = [128, 128], strides = [1, 1]} : vector<1024x128xf32> to vector<128x128xf32>
    %cst_26 = arith.constant dense<0xFF800000> : vector<128xf32>
    %57 = vector.multi_reduction <maximumf>, %56, %cst_26 [0] : vector<128x128xf32> to vector<128xf32>
    %58 = vector.shape_cast %57 : vector<128xf32> to vector<1x128xf32>
    %c4 = arith.constant 4 : index
    %c0_27 = arith.constant 0 : index
    %59 = vector.load %arg8[%c4, %c0_27] : memref<8x128xf32, #tpu.memory_space<vmem>>, vector<1x128xf32>
    tpu.vector_store %arg8[%c4, %c0_27], %58 {strides = array<i32>} : memref<8x128xf32, #tpu.memory_space<vmem>>, vector<1x128xf32>,
    %60 = vector.extract_strided_slice %39 {offsets = [640, 0], sizes = [128, 128], strides = [1, 1]} : vector<1024x128xf32> to vector<128x128xf32>
    %cst_28 = arith.constant dense<0xFF800000> : vector<128xf32>
    %61 = vector.multi_reduction <maximumf>, %60, %cst_28 [0] : vector<128x128xf32> to vector<128xf32>
    %62 = vector.shape_cast %61 : vector<128xf32> to vector<1x128xf32>
    %c5 = arith.constant 5 : index
    %c0_29 = arith.constant 0 : index
    %63 = vector.load %arg8[%c5, %c0_29] : memref<8x128xf32, #tpu.memory_space<vmem>>, vector<1x128xf32>
    tpu.vector_store %arg8[%c5, %c0_29], %62 {strides = array<i32>} : memref<8x128xf32, #tpu.memory_space<vmem>>, vector<1x128xf32>,
    %64 = vector.extract_strided_slice %39 {offsets = [768, 0], sizes = [128, 128], strides = [1, 1]} : vector<1024x128xf32> to vector<128x128xf32>
    %cst_30 = arith.constant dense<0xFF800000> : vector<128xf32>
    %65 = vector.multi_reduction <maximumf>, %64, %cst_30 [0] : vector<128x128xf32> to vector<128xf32>
    %66 = vector.shape_cast %65 : vector<128xf32> to vector<1x128xf32>
    %c6 = arith.constant 6 : index
    %c0_31 = arith.constant 0 : index
    %67 = vector.load %arg8[%c6, %c0_31] : memref<8x128xf32, #tpu.memory_space<vmem>>, vector<1x128xf32>
    tpu.vector_store %arg8[%c6, %c0_31], %66 {strides = array<i32>} : memref<8x128xf32, #tpu.memory_space<vmem>>, vector<1x128xf32>,
    %68 = vector.extract_strided_slice %39 {offsets = [896, 0], sizes = [128, 128], strides = [1, 1]} : vector<1024x128xf32> to vector<128x128xf32>
    %cst_32 = arith.constant dense<0xFF800000> : vector<128xf32>
    %69 = vector.multi_reduction <maximumf>, %68, %cst_32 [0] : vector<128x128xf32> to vector<128xf32>
    %70 = vector.shape_cast %69 : vector<128xf32> to vector<1x128xf32>
    %c7 = arith.constant 7 : index
    %c0_33 = arith.constant 0 : index
    %71 = vector.load %arg8[%c7, %c0_33] : memref<8x128xf32, #tpu.memory_space<vmem>>, vector<1x128xf32>
    tpu.vector_store %arg8[%c7, %c0_33], %70 {strides = array<i32>} : memref<8x128xf32, #tpu.memory_space<vmem>>, vector<1x128xf32>,
    return
  }
  func.func @transform_0(%arg0: i32) -> (i32, i32) {
    %c0_i32 = arith.constant 0 : i32
    %c0_i32_0 = arith.constant 0 : i32
    return %arg0, %c0_i32 : i32, i32
  }
  func.func @transform_1(%arg0: i32) -> (i32, i32) {
    %c0_i32 = arith.constant 0 : i32
    %c0_i32_0 = arith.constant 0 : i32
    %c0_i32_1 = arith.constant 0 : i32
    return %c0_i32, %c0_i32_0 : i32, i32
  }
  func.func @transform_2(%arg0: i32) -> (i32, i32) {
    %c0_i32 = arith.constant 0 : i32
    %c0_i32_0 = arith.constant 0 : i32
    %c0_i32_1 = arith.constant 0 : i32
    return %c0_i32, %c0_i32_0 : i32, i32
  }
  func.func @transform_3(%arg0: i32) -> (i32, i32) {
    %c0_i32 = arith.constant 0 : i32
    %c0_i32_0 = arith.constant 0 : i32
    %c0_i32_1 = arith.constant 0 : i32
    return %c0_i32, %c0_i32_0 : i32, i32
  }
  func.func @transform_4(%arg0: i32) -> (i32, i32) {
    %c0_i32 = arith.constant 0 : i32
    %c0_i32_0 = arith.constant 0 : i32
    %c0_i32_1 = arith.constant 0 : i32
    return %c0_i32, %c0_i32_0 : i32, i32
  }
  func.func @transform_5(%arg0: i32) -> (i32, i32) {
    %c0_i32 = arith.constant 0 : i32
    %c0_i32_0 = arith.constant 0 : i32
    %c0_i32_1 = arith.constant 0 : i32
    return %c0_i32, %c0_i32_0 : i32, i32
  }
  func.func @transform_6(%arg0: i32) -> (i32, i32) {
    %c0_i32 = arith.constant 0 : i32
    %c0_i32_0 = arith.constant 0 : i32
    %c0_i32_1 = arith.constant 0 : i32
    return %c0_i32, %c0_i32_0 : i32, i32
  }
  func.func @transform_7(%arg0: i32) -> (i32, i32) {
    %c0_i32 = arith.constant 0 : i32
    %c0_i32_0 = arith.constant 0 : i32
    return %arg0, %c0_i32 : i32, i32
  }
}

module attributes {stable_mosaic.version = 11 : i64} {
  func.func @_fused_head_kernel(%arg0: i32, %arg1: memref<8x9xf32, #tpu.memory_space<vmem>>, %arg2: memref<64x9xf32, #tpu.memory_space<vmem>>, %arg3: memref<16x128xf32, #tpu.memory_space<vmem>>, %arg4: memref<8x8xf32, #tpu.memory_space<vmem>>, %arg5: memref<64x1xf32, #tpu.memory_space<vmem>>, %arg6: memref<9x64xbf16, #tpu.memory_space<vmem>>, %arg7: memref<1x64xf32, #tpu.memory_space<vmem>>, %arg8: memref<64x128xbf16, #tpu.memory_space<vmem>>, %arg9: memref<1x128xf32, #tpu.memory_space<vmem>>, %arg10: memref<9x512xbf16, #tpu.memory_space<vmem>>, %arg11: memref<128x512xbf16, #tpu.memory_space<vmem>>, %arg12: memref<1x512xf32, #tpu.memory_space<vmem>>, %arg13: memref<128x512xbf16, #tpu.memory_space<vmem>>, %arg14: memref<128x512xbf16, #tpu.memory_space<vmem>>, %arg15: memref<1x512xf32, #tpu.memory_space<vmem>>, %arg16: memref<256x256xbf16, #tpu.memory_space<vmem>>, %arg17: memref<1x256xf32, #tpu.memory_space<vmem>>, %arg18: memref<256x64xbf16, #tpu.memory_space<vmem>>, %arg19: memref<1x64xf32, #tpu.memory_space<vmem>>, %arg20: memref<1x64xf32, #tpu.memory_space<vmem>>, %arg21: memref<1x1xf32, #tpu.memory_space<vmem>>, %arg22: memref<64x1xf32, #tpu.memory_space<vmem>>) attributes {dimension_semantics = [#tpu.dimension_semantics<arbitrary>], iteration_bounds = array<i64: 1>, scalar_prefetch = 0 : i64, scratch_operands = 0 : i64, tpu.core_type = #tpu.core_type<tc>, window_params = [{pipeline_mode = #tpu.pipeline_mode<synchronous>, transform_indices = @transform_0, window_bounds = array<i64: 8, 9>}, {pipeline_mode = #tpu.pipeline_mode<synchronous>, transform_indices = @transform_1, window_bounds = array<i64: 64, 9>}, {pipeline_mode = #tpu.pipeline_mode<synchronous>, transform_indices = @transform_2, window_bounds = array<i64: 16, 128>}, {pipeline_mode = #tpu.pipeline_mode<synchronous>, transform_indices = @transform_3, window_bounds = array<i64: 8, 8>}, {pipeline_mode = #tpu.pipeline_mode<synchronous>, transform_indices = @transform_4, window_bounds = array<i64: 64, 1>}, {pipeline_mode = #tpu.pipeline_mode<synchronous>, transform_indices = @transform_5, window_bounds = array<i64: 9, 64>}, {pipeline_mode = #tpu.pipeline_mode<synchronous>, transform_indices = @transform_6, window_bounds = array<i64: 1, 64>}, {pipeline_mode = #tpu.pipeline_mode<synchronous>, transform_indices = @transform_7, window_bounds = array<i64: 64, 128>}, {pipeline_mode = #tpu.pipeline_mode<synchronous>, transform_indices = @transform_8, window_bounds = array<i64: 1, 128>}, {pipeline_mode = #tpu.pipeline_mode<synchronous>, transform_indices = @transform_9, window_bounds = array<i64: 9, 512>}, {pipeline_mode = #tpu.pipeline_mode<synchronous>, transform_indices = @transform_10, window_bounds = array<i64: 128, 512>}, {pipeline_mode = #tpu.pipeline_mode<synchronous>, transform_indices = @transform_11, window_bounds = array<i64: 1, 512>}, {pipeline_mode = #tpu.pipeline_mode<synchronous>, transform_indices = @transform_12, window_bounds = array<i64: 128, 512>}, {pipeline_mode = #tpu.pipeline_mode<synchronous>, transform_indices = @transform_13, window_bounds = array<i64: 128, 512>}, {pipeline_mode = #tpu.pipeline_mode<synchronous>, transform_indices = @transform_14, window_bounds = array<i64: 1, 512>}, {pipeline_mode = #tpu.pipeline_mode<synchronous>, transform_indices = @transform_15, window_bounds = array<i64: 256, 256>}, {pipeline_mode = #tpu.pipeline_mode<synchronous>, transform_indices = @transform_16, window_bounds = array<i64: 1, 256>}, {pipeline_mode = #tpu.pipeline_mode<synchronous>, transform_indices = @transform_17, window_bounds = array<i64: 256, 64>}, {pipeline_mode = #tpu.pipeline_mode<synchronous>, transform_indices = @transform_18, window_bounds = array<i64: 1, 64>}, {pipeline_mode = #tpu.pipeline_mode<synchronous>, transform_indices = @transform_19, window_bounds = array<i64: 1, 64>}, {pipeline_mode = #tpu.pipeline_mode<synchronous>, transform_indices = @transform_20, window_bounds = array<i64: 1, 1>}, {pipeline_mode = #tpu.pipeline_mode<synchronous>, transform_indices = @transform_21, window_bounds = array<i64: 64, 1>}]} {
    %c0 = arith.constant 0 : index
    %c0_0 = arith.constant 0 : index
    %0 = vector.load %arg1[%c0, %c0_0] : memref<8x9xf32, #tpu.memory_space<vmem>>, vector<8x9xf32>
    %1 = arith.truncf %0 : vector<8x9xf32> to vector<8x9xbf16>
    %c0_1 = arith.constant 0 : index
    %c0_2 = arith.constant 0 : index
    %2 = vector.load %arg6[%c0_1, %c0_2] : memref<9x64xbf16, #tpu.memory_space<vmem>>, vector<9x64xbf16>
    %cst = arith.constant dense<0.000000e+00> : vector<8x64xf32>
    %3 = tpu.matmul %1, %2, %cst {dimension_numbers = #tpu.dot_dimension_numbers<[1], [0], [0], [1], [0, 0, 1, 1], [], []>} : vector<8x9xbf16>, vector<9x64xbf16>, vector<8x64xf32> -> vector<8x64xf32>
    %c0_3 = arith.constant 0 : index
    %c0_4 = arith.constant 0 : index
    %4 = vector.load %arg7[%c0_3, %c0_4] : memref<1x64xf32, #tpu.memory_space<vmem>>, vector<1x64xf32>
    %5 = vector.broadcast %4 : vector<1x64xf32> to vector<8x64xf32>
    %6 = arith.addf %3, %5 : vector<8x64xf32>
    %cst_5 = arith.constant 0.000000e+00 : f32
    %7 = vector.broadcast %cst_5 : f32 to vector<8x64xf32>
    %8 = arith.maximumf %6, %7 : vector<8x64xf32>
    %9 = arith.truncf %8 : vector<8x64xf32> to vector<8x64xbf16>
    %c0_6 = arith.constant 0 : index
    %c0_7 = arith.constant 0 : index
    %10 = vector.load %arg8[%c0_6, %c0_7] : memref<64x128xbf16, #tpu.memory_space<vmem>>, vector<64x128xbf16>
    %cst_8 = arith.constant dense<0.000000e+00> : vector<8x128xf32>
    %11 = tpu.matmul %9, %10, %cst_8 {dimension_numbers = #tpu.dot_dimension_numbers<[1], [0], [0], [1], [0, 0, 1, 1], [], []>} : vector<8x64xbf16>, vector<64x128xbf16>, vector<8x128xf32> -> vector<8x128xf32>
    %c0_9 = arith.constant 0 : index
    %c0_10 = arith.constant 0 : index
    %12 = vector.load %arg9[%c0_9, %c0_10] : memref<1x128xf32, #tpu.memory_space<vmem>>, vector<1x128xf32>
    %13 = vector.broadcast %12 : vector<1x128xf32> to vector<8x128xf32>
    %14 = arith.addf %11, %13 : vector<8x128xf32>
    %c0_11 = arith.constant 0 : index
    %c0_12 = arith.constant 0 : index
    %15 = vector.load %arg2[%c0_11, %c0_12] : memref<64x9xf32, #tpu.memory_space<vmem>>, vector<64x9xf32>
    %16 = arith.truncf %15 : vector<64x9xf32> to vector<64x9xbf16>
    %c0_13 = arith.constant 0 : index
    %c0_14 = arith.constant 0 : index
    %17 = vector.load %arg10[%c0_13, %c0_14] : memref<9x512xbf16, #tpu.memory_space<vmem>>, vector<9x512xbf16>
    %cst_15 = arith.constant dense<0.000000e+00> : vector<64x512xf32>
    %18 = tpu.matmul %16, %17, %cst_15 {dimension_numbers = #tpu.dot_dimension_numbers<[1], [0], [0], [1], [0, 0, 1, 1], [], []>} : vector<64x9xbf16>, vector<9x512xbf16>, vector<64x512xf32> -> vector<64x512xf32>
    %c0_16 = arith.constant 0 : index
    %c0_17 = arith.constant 0 : index
    %19 = vector.load %arg12[%c0_16, %c0_17] : memref<1x512xf32, #tpu.memory_space<vmem>>, vector<1x512xf32>
    %20 = vector.broadcast %19 : vector<1x512xf32> to vector<64x512xf32>
    %21 = arith.addf %18, %20 : vector<64x512xf32>
    %c0_18 = arith.constant 0 : index
    %c0_19 = arith.constant 0 : index
    %22 = vector.load %arg11[%c0_18, %c0_19] : memref<128x512xbf16, #tpu.memory_space<vmem>>, vector<128x512xbf16>
    %c0_20 = arith.constant 0 : index
    %c0_21 = arith.constant 0 : index
    %23 = vector.load %arg13[%c0_20, %c0_21] : memref<128x512xbf16, #tpu.memory_space<vmem>>, vector<128x512xbf16>
    %c0_22 = arith.constant 0 : index
    %c0_23 = arith.constant 0 : index
    %24 = vector.load %arg14[%c0_22, %c0_23] : memref<128x512xbf16, #tpu.memory_space<vmem>>, vector<128x512xbf16>
    %c0_24 = arith.constant 0 : index
    %c0_25 = arith.constant 0 : index
    %25 = vector.load %arg15[%c0_24, %c0_25] : memref<1x512xf32, #tpu.memory_space<vmem>>, vector<1x512xf32>
    %cst_26 = arith.constant 0.000000e+00 : f32
    %26 = vector.broadcast %cst_26 : f32 to vector<8x128xf32>
    %27 = vector.extract_strided_slice %21 {offsets = [0, 0], sizes = [8, 512], strides = [1, 1]} : vector<64x512xf32> to vector<8x512xf32>
    %28 = arith.truncf %26 : vector<8x128xf32> to vector<8x128xbf16>
    %cst_27 = arith.constant dense<0.000000e+00> : vector<8x512xf32>
    %29 = tpu.matmul %28, %22, %cst_27 {dimension_numbers = #tpu.dot_dimension_numbers<[1], [0], [0], [1], [0, 0, 1, 1], [], []>} : vector<8x128xbf16>, vector<128x512xbf16>, vector<8x512xf32> -> vector<8x512xf32>
    %30 = arith.addf %27, %29 : vector<8x512xf32>
    %31 = vector.extract_strided_slice %30 {offsets = [0, 0], sizes = [8, 128], strides = [1, 1]} : vector<8x512xf32> to vector<8x128xf32>
    %32 = arith.negf %31 : vector<8x128xf32>
    %33 = math.exp %32 : vector<8x128xf32>
    %cst_28 = arith.constant 1.000000e+00 : f32
    %34 = vector.broadcast %cst_28 : f32 to vector<8x128xf32>
    %35 = arith.addf %34, %33 : vector<8x128xf32>
    %36 = arith.divf %34, %35 : vector<8x128xf32>
    %37 = vector.extract_strided_slice %30 {offsets = [0, 128], sizes = [8, 128], strides = [1, 1]} : vector<8x512xf32> to vector<8x128xf32>
    %38 = arith.negf %37 : vector<8x128xf32>
    %39 = math.exp %38 : vector<8x128xf32>
    %cst_29 = arith.constant 1.000000e+00 : f32
    %40 = vector.broadcast %cst_29 : f32 to vector<8x128xf32>
    %41 = arith.addf %40, %39 : vector<8x128xf32>
    %42 = arith.divf %40, %41 : vector<8x128xf32>
    %43 = vector.extract_strided_slice %30 {offsets = [0, 256], sizes = [8, 128], strides = [1, 1]} : vector<8x512xf32> to vector<8x128xf32>
    %44 = math.tanh %43 : vector<8x128xf32>
    %45 = vector.extract_strided_slice %30 {offsets = [0, 384], sizes = [8, 128], strides = [1, 1]} : vector<8x512xf32> to vector<8x128xf32>
    %46 = arith.negf %45 : vector<8x128xf32>
    %47 = math.exp %46 : vector<8x128xf32>
    %cst_30 = arith.constant 1.000000e+00 : f32
    %48 = vector.broadcast %cst_30 : f32 to vector<8x128xf32>
    %49 = arith.addf %48, %47 : vector<8x128xf32>
    %50 = arith.divf %48, %49 : vector<8x128xf32>
    %51 = arith.mulf %42, %26 : vector<8x128xf32>
    %52 = arith.mulf %36, %44 : vector<8x128xf32>
    %53 = arith.addf %51, %52 : vector<8x128xf32>
    %54 = math.tanh %53 : vector<8x128xf32>
    %55 = arith.mulf %50, %54 : vector<8x128xf32>
    %56 = arith.truncf %55 : vector<8x128xf32> to vector<8x128xbf16>
    %cst_31 = arith.constant dense<0.000000e+00> : vector<8x512xf32>
    %57 = tpu.matmul %56, %23, %cst_31 {dimension_numbers = #tpu.dot_dimension_numbers<[1], [0], [0], [1], [0, 0, 1, 1], [], []>} : vector<8x128xbf16>, vector<128x512xbf16>, vector<8x512xf32> -> vector<8x512xf32>
    %58 = arith.truncf %26 : vector<8x128xf32> to vector<8x128xbf16>
    %cst_32 = arith.constant dense<0.000000e+00> : vector<8x512xf32>
    %59 = tpu.matmul %58, %24, %cst_32 {dimension_numbers = #tpu.dot_dimension_numbers<[1], [0], [0], [1], [0, 0, 1, 1], [], []>} : vector<8x128xbf16>, vector<128x512xbf16>, vector<8x512xf32> -> vector<8x512xf32>
    %60 = arith.addf %57, %59 : vector<8x512xf32>
    %61 = vector.broadcast %25 : vector<1x512xf32> to vector<8x512xf32>
    %62 = arith.addf %60, %61 : vector<8x512xf32>
    %63 = vector.extract_strided_slice %62 {offsets = [0, 0], sizes = [8, 128], strides = [1, 1]} : vector<8x512xf32> to vector<8x128xf32>
    %64 = arith.negf %63 : vector<8x128xf32>
    %65 = math.exp %64 : vector<8x128xf32>
    %cst_33 = arith.constant 1.000000e+00 : f32
    %66 = vector.broadcast %cst_33 : f32 to vector<8x128xf32>
    %67 = arith.addf %66, %65 : vector<8x128xf32>
    %68 = arith.divf %66, %67 : vector<8x128xf32>
    %69 = vector.extract_strided_slice %62 {offsets = [0, 128], sizes = [8, 128], strides = [1, 1]} : vector<8x512xf32> to vector<8x128xf32>
    %70 = arith.negf %69 : vector<8x128xf32>
    %71 = math.exp %70 : vector<8x128xf32>
    %cst_34 = arith.constant 1.000000e+00 : f32
    %72 = vector.broadcast %cst_34 : f32 to vector<8x128xf32>
    %73 = arith.addf %72, %71 : vector<8x128xf32>
    %74 = arith.divf %72, %73 : vector<8x128xf32>
    %75 = vector.extract_strided_slice %62 {offsets = [0, 256], sizes = [8, 128], strides = [1, 1]} : vector<8x512xf32> to vector<8x128xf32>
    %76 = math.tanh %75 : vector<8x128xf32>
    %77 = vector.extract_strided_slice %62 {offsets = [0, 384], sizes = [8, 128], strides = [1, 1]} : vector<8x512xf32> to vector<8x128xf32>
    %78 = arith.negf %77 : vector<8x128xf32>
    %79 = math.exp %78 : vector<8x128xf32>
    %cst_35 = arith.constant 1.000000e+00 : f32
    %80 = vector.broadcast %cst_35 : f32 to vector<8x128xf32>
    %81 = arith.addf %80, %79 : vector<8x128xf32>
    %82 = arith.divf %80, %81 : vector<8x128xf32>
    %83 = arith.mulf %74, %26 : vector<8x128xf32>
    %84 = arith.mulf %68, %76 : vector<8x128xf32>
    %85 = arith.addf %83, %84 : vector<8x128xf32>
    %86 = math.tanh %85 : vector<8x128xf32>
    %87 = arith.mulf %82, %86 : vector<8x128xf32>
    %88 = vector.extract_strided_slice %21 {offsets = [8, 0], sizes = [8, 512], strides = [1, 1]} : vector<64x512xf32> to vector<8x512xf32>
    %89 = arith.truncf %55 : vector<8x128xf32> to vector<8x128xbf16>
    %cst_36 = arith.constant dense<0.000000e+00> : vector<8x512xf32>
    %90 = tpu.matmul %89, %22, %cst_36 {dimension_numbers = #tpu.dot_dimension_numbers<[1], [0], [0], [1], [0, 0, 1, 1], [], []>} : vector<8x128xbf16>, vector<128x512xbf16>, vector<8x512xf32> -> vector<8x512xf32>
    %91 = arith.addf %88, %90 : vector<8x512xf32>
    %92 = vector.extract_strided_slice %91 {offsets = [0, 0], sizes = [8, 128], strides = [1, 1]} : vector<8x512xf32> to vector<8x128xf32>
    %93 = arith.negf %92 : vector<8x128xf32>
    %94 = math.exp %93 : vector<8x128xf32>
    %cst_37 = arith.constant 1.000000e+00 : f32
    %95 = vector.broadcast %cst_37 : f32 to vector<8x128xf32>
    %96 = arith.addf %95, %94 : vector<8x128xf32>
    %97 = arith.divf %95, %96 : vector<8x128xf32>
    %98 = vector.extract_strided_slice %91 {offsets = [0, 128], sizes = [8, 128], strides = [1, 1]} : vector<8x512xf32> to vector<8x128xf32>
    %99 = arith.negf %98 : vector<8x128xf32>
    %100 = math.exp %99 : vector<8x128xf32>
    %cst_38 = arith.constant 1.000000e+00 : f32
    %101 = vector.broadcast %cst_38 : f32 to vector<8x128xf32>
    %102 = arith.addf %101, %100 : vector<8x128xf32>
    %103 = arith.divf %101, %102 : vector<8x128xf32>
    %104 = vector.extract_strided_slice %91 {offsets = [0, 256], sizes = [8, 128], strides = [1, 1]} : vector<8x512xf32> to vector<8x128xf32>
    %105 = math.tanh %104 : vector<8x128xf32>
    %106 = vector.extract_strided_slice %91 {offsets = [0, 384], sizes = [8, 128], strides = [1, 1]} : vector<8x512xf32> to vector<8x128xf32>
    %107 = arith.negf %106 : vector<8x128xf32>
    %108 = math.exp %107 : vector<8x128xf32>
    %cst_39 = arith.constant 1.000000e+00 : f32
    %109 = vector.broadcast %cst_39 : f32 to vector<8x128xf32>
    %110 = arith.addf %109, %108 : vector<8x128xf32>
    %111 = arith.divf %109, %110 : vector<8x128xf32>
    %112 = arith.mulf %103, %53 : vector<8x128xf32>
    %113 = arith.mulf %97, %105 : vector<8x128xf32>
    %114 = arith.addf %112, %113 : vector<8x128xf32>
    %115 = math.tanh %114 : vector<8x128xf32>
    %116 = arith.mulf %111, %115 : vector<8x128xf32>
    %117 = arith.truncf %116 : vector<8x128xf32> to vector<8x128xbf16>
    %cst_40 = arith.constant dense<0.000000e+00> : vector<8x512xf32>
    %118 = tpu.matmul %117, %23, %cst_40 {dimension_numbers = #tpu.dot_dimension_numbers<[1], [0], [0], [1], [0, 0, 1, 1], [], []>} : vector<8x128xbf16>, vector<128x512xbf16>, vector<8x512xf32> -> vector<8x512xf32>
    %119 = arith.truncf %87 : vector<8x128xf32> to vector<8x128xbf16>
    %cst_41 = arith.constant dense<0.000000e+00> : vector<8x512xf32>
    %120 = tpu.matmul %119, %24, %cst_41 {dimension_numbers = #tpu.dot_dimension_numbers<[1], [0], [0], [1], [0, 0, 1, 1], [], []>} : vector<8x128xbf16>, vector<128x512xbf16>, vector<8x512xf32> -> vector<8x512xf32>
    %121 = arith.addf %118, %120 : vector<8x512xf32>
    %122 = vector.broadcast %25 : vector<1x512xf32> to vector<8x512xf32>
    %123 = arith.addf %121, %122 : vector<8x512xf32>
    %124 = vector.extract_strided_slice %123 {offsets = [0, 0], sizes = [8, 128], strides = [1, 1]} : vector<8x512xf32> to vector<8x128xf32>
    %125 = arith.negf %124 : vector<8x128xf32>
    %126 = math.exp %125 : vector<8x128xf32>
    %cst_42 = arith.constant 1.000000e+00 : f32
    %127 = vector.broadcast %cst_42 : f32 to vector<8x128xf32>
    %128 = arith.addf %127, %126 : vector<8x128xf32>
    %129 = arith.divf %127, %128 : vector<8x128xf32>
    %130 = vector.extract_strided_slice %123 {offsets = [0, 128], sizes = [8, 128], strides = [1, 1]} : vector<8x512xf32> to vector<8x128xf32>
    %131 = arith.negf %130 : vector<8x128xf32>
    %132 = math.exp %131 : vector<8x128xf32>
    %cst_43 = arith.constant 1.000000e+00 : f32
    %133 = vector.broadcast %cst_43 : f32 to vector<8x128xf32>
    %134 = arith.addf %133, %132 : vector<8x128xf32>
    %135 = arith.divf %133, %134 : vector<8x128xf32>
    %136 = vector.extract_strided_slice %123 {offsets = [0, 256], sizes = [8, 128], strides = [1, 1]} : vector<8x512xf32> to vector<8x128xf32>
    %137 = math.tanh %136 : vector<8x128xf32>
    %138 = vector.extract_strided_slice %123 {offsets = [0, 384], sizes = [8, 128], strides = [1, 1]} : vector<8x512xf32> to vector<8x128xf32>
    %139 = arith.negf %138 : vector<8x128xf32>
    %140 = math.exp %139 : vector<8x128xf32>
    %cst_44 = arith.constant 1.000000e+00 : f32
    %141 = vector.broadcast %cst_44 : f32 to vector<8x128xf32>
    %142 = arith.addf %141, %140 : vector<8x128xf32>
    %143 = arith.divf %141, %142 : vector<8x128xf32>
    %144 = arith.mulf %135, %85 : vector<8x128xf32>
    %145 = arith.mulf %129, %137 : vector<8x128xf32>
    %146 = arith.addf %144, %145 : vector<8x128xf32>
    %147 = math.tanh %146 : vector<8x128xf32>
    %148 = arith.mulf %143, %147 : vector<8x128xf32>
    %149 = vector.extract_strided_slice %21 {offsets = [16, 0], sizes = [8, 512], strides = [1, 1]} : vector<64x512xf32> to vector<8x512xf32>
    %150 = arith.truncf %116 : vector<8x128xf32> to vector<8x128xbf16>
    %cst_45 = arith.constant dense<0.000000e+00> : vector<8x512xf32>
    %151 = tpu.matmul %150, %22, %cst_45 {dimension_numbers = #tpu.dot_dimension_numbers<[1], [0], [0], [1], [0, 0, 1, 1], [], []>} : vector<8x128xbf16>, vector<128x512xbf16>, vector<8x512xf32> -> vector<8x512xf32>
    %152 = arith.addf %149, %151 : vector<8x512xf32>
    %153 = vector.extract_strided_slice %152 {offsets = [0, 0], sizes = [8, 128], strides = [1, 1]} : vector<8x512xf32> to vector<8x128xf32>
    %154 = arith.negf %153 : vector<8x128xf32>
    %155 = math.exp %154 : vector<8x128xf32>
    %cst_46 = arith.constant 1.000000e+00 : f32
    %156 = vector.broadcast %cst_46 : f32 to vector<8x128xf32>
    %157 = arith.addf %156, %155 : vector<8x128xf32>
    %158 = arith.divf %156, %157 : vector<8x128xf32>
    %159 = vector.extract_strided_slice %152 {offsets = [0, 128], sizes = [8, 128], strides = [1, 1]} : vector<8x512xf32> to vector<8x128xf32>
    %160 = arith.negf %159 : vector<8x128xf32>
    %161 = math.exp %160 : vector<8x128xf32>
    %cst_47 = arith.constant 1.000000e+00 : f32
    %162 = vector.broadcast %cst_47 : f32 to vector<8x128xf32>
    %163 = arith.addf %162, %161 : vector<8x128xf32>
    %164 = arith.divf %162, %163 : vector<8x128xf32>
    %165 = vector.extract_strided_slice %152 {offsets = [0, 256], sizes = [8, 128], strides = [1, 1]} : vector<8x512xf32> to vector<8x128xf32>
    %166 = math.tanh %165 : vector<8x128xf32>
    %167 = vector.extract_strided_slice %152 {offsets = [0, 384], sizes = [8, 128], strides = [1, 1]} : vector<8x512xf32> to vector<8x128xf32>
    %168 = arith.negf %167 : vector<8x128xf32>
    %169 = math.exp %168 : vector<8x128xf32>
    %cst_48 = arith.constant 1.000000e+00 : f32
    %170 = vector.broadcast %cst_48 : f32 to vector<8x128xf32>
    %171 = arith.addf %170, %169 : vector<8x128xf32>
    %172 = arith.divf %170, %171 : vector<8x128xf32>
    %173 = arith.mulf %164, %114 : vector<8x128xf32>
    %174 = arith.mulf %158, %166 : vector<8x128xf32>
    %175 = arith.addf %173, %174 : vector<8x128xf32>
    %176 = math.tanh %175 : vector<8x128xf32>
    %177 = arith.mulf %172, %176 : vector<8x128xf32>
    %178 = arith.truncf %177 : vector<8x128xf32> to vector<8x128xbf16>
    %cst_49 = arith.constant dense<0.000000e+00> : vector<8x512xf32>
    %179 = tpu.matmul %178, %23, %cst_49 {dimension_numbers = #tpu.dot_dimension_numbers<[1], [0], [0], [1], [0, 0, 1, 1], [], []>} : vector<8x128xbf16>, vector<128x512xbf16>, vector<8x512xf32> -> vector<8x512xf32>
    %180 = arith.truncf %148 : vector<8x128xf32> to vector<8x128xbf16>
    %cst_50 = arith.constant dense<0.000000e+00> : vector<8x512xf32>
    %181 = tpu.matmul %180, %24, %cst_50 {dimension_numbers = #tpu.dot_dimension_numbers<[1], [0], [0], [1], [0, 0, 1, 1], [], []>} : vector<8x128xbf16>, vector<128x512xbf16>, vector<8x512xf32> -> vector<8x512xf32>
    %182 = arith.addf %179, %181 : vector<8x512xf32>
    %183 = vector.broadcast %25 : vector<1x512xf32> to vector<8x512xf32>
    %184 = arith.addf %182, %183 : vector<8x512xf32>
    %185 = vector.extract_strided_slice %184 {offsets = [0, 0], sizes = [8, 128], strides = [1, 1]} : vector<8x512xf32> to vector<8x128xf32>
    %186 = arith.negf %185 : vector<8x128xf32>
    %187 = math.exp %186 : vector<8x128xf32>
    %cst_51 = arith.constant 1.000000e+00 : f32
    %188 = vector.broadcast %cst_51 : f32 to vector<8x128xf32>
    %189 = arith.addf %188, %187 : vector<8x128xf32>
    %190 = arith.divf %188, %189 : vector<8x128xf32>
    %191 = vector.extract_strided_slice %184 {offsets = [0, 128], sizes = [8, 128], strides = [1, 1]} : vector<8x512xf32> to vector<8x128xf32>
    %192 = arith.negf %191 : vector<8x128xf32>
    %193 = math.exp %192 : vector<8x128xf32>
    %cst_52 = arith.constant 1.000000e+00 : f32
    %194 = vector.broadcast %cst_52 : f32 to vector<8x128xf32>
    %195 = arith.addf %194, %193 : vector<8x128xf32>
    %196 = arith.divf %194, %195 : vector<8x128xf32>
    %197 = vector.extract_strided_slice %184 {offsets = [0, 256], sizes = [8, 128], strides = [1, 1]} : vector<8x512xf32> to vector<8x128xf32>
    %198 = math.tanh %197 : vector<8x128xf32>
    %199 = vector.extract_strided_slice %184 {offsets = [0, 384], sizes = [8, 128], strides = [1, 1]} : vector<8x512xf32> to vector<8x128xf32>
    %200 = arith.negf %199 : vector<8x128xf32>
    %201 = math.exp %200 : vector<8x128xf32>
    %cst_53 = arith.constant 1.000000e+00 : f32
    %202 = vector.broadcast %cst_53 : f32 to vector<8x128xf32>
    %203 = arith.addf %202, %201 : vector<8x128xf32>
    %204 = arith.divf %202, %203 : vector<8x128xf32>
    %205 = arith.mulf %196, %146 : vector<8x128xf32>
    %206 = arith.mulf %190, %198 : vector<8x128xf32>
    %207 = arith.addf %205, %206 : vector<8x128xf32>
    %208 = math.tanh %207 : vector<8x128xf32>
    %209 = arith.mulf %204, %208 : vector<8x128xf32>
    %210 = vector.extract_strided_slice %21 {offsets = [24, 0], sizes = [8, 512], strides = [1, 1]} : vector<64x512xf32> to vector<8x512xf32>
    %211 = arith.truncf %177 : vector<8x128xf32> to vector<8x128xbf16>
    %cst_54 = arith.constant dense<0.000000e+00> : vector<8x512xf32>
    %212 = tpu.matmul %211, %22, %cst_54 {dimension_numbers = #tpu.dot_dimension_numbers<[1], [0], [0], [1], [0, 0, 1, 1], [], []>} : vector<8x128xbf16>, vector<128x512xbf16>, vector<8x512xf32> -> vector<8x512xf32>
    %213 = arith.addf %210, %212 : vector<8x512xf32>
    %214 = vector.extract_strided_slice %213 {offsets = [0, 0], sizes = [8, 128], strides = [1, 1]} : vector<8x512xf32> to vector<8x128xf32>
    %215 = arith.negf %214 : vector<8x128xf32>
    %216 = math.exp %215 : vector<8x128xf32>
    %cst_55 = arith.constant 1.000000e+00 : f32
    %217 = vector.broadcast %cst_55 : f32 to vector<8x128xf32>
    %218 = arith.addf %217, %216 : vector<8x128xf32>
    %219 = arith.divf %217, %218 : vector<8x128xf32>
    %220 = vector.extract_strided_slice %213 {offsets = [0, 128], sizes = [8, 128], strides = [1, 1]} : vector<8x512xf32> to vector<8x128xf32>
    %221 = arith.negf %220 : vector<8x128xf32>
    %222 = math.exp %221 : vector<8x128xf32>
    %cst_56 = arith.constant 1.000000e+00 : f32
    %223 = vector.broadcast %cst_56 : f32 to vector<8x128xf32>
    %224 = arith.addf %223, %222 : vector<8x128xf32>
    %225 = arith.divf %223, %224 : vector<8x128xf32>
    %226 = vector.extract_strided_slice %213 {offsets = [0, 256], sizes = [8, 128], strides = [1, 1]} : vector<8x512xf32> to vector<8x128xf32>
    %227 = math.tanh %226 : vector<8x128xf32>
    %228 = vector.extract_strided_slice %213 {offsets = [0, 384], sizes = [8, 128], strides = [1, 1]} : vector<8x512xf32> to vector<8x128xf32>
    %229 = arith.negf %228 : vector<8x128xf32>
    %230 = math.exp %229 : vector<8x128xf32>
    %cst_57 = arith.constant 1.000000e+00 : f32
    %231 = vector.broadcast %cst_57 : f32 to vector<8x128xf32>
    %232 = arith.addf %231, %230 : vector<8x128xf32>
    %233 = arith.divf %231, %232 : vector<8x128xf32>
    %234 = arith.mulf %225, %175 : vector<8x128xf32>
    %235 = arith.mulf %219, %227 : vector<8x128xf32>
    %236 = arith.addf %234, %235 : vector<8x128xf32>
    %237 = math.tanh %236 : vector<8x128xf32>
    %238 = arith.mulf %233, %237 : vector<8x128xf32>
    %239 = arith.truncf %238 : vector<8x128xf32> to vector<8x128xbf16>
    %cst_58 = arith.constant dense<0.000000e+00> : vector<8x512xf32>
    %240 = tpu.matmul %239, %23, %cst_58 {dimension_numbers = #tpu.dot_dimension_numbers<[1], [0], [0], [1], [0, 0, 1, 1], [], []>} : vector<8x128xbf16>, vector<128x512xbf16>, vector<8x512xf32> -> vector<8x512xf32>
    %241 = arith.truncf %209 : vector<8x128xf32> to vector<8x128xbf16>
    %cst_59 = arith.constant dense<0.000000e+00> : vector<8x512xf32>
    %242 = tpu.matmul %241, %24, %cst_59 {dimension_numbers = #tpu.dot_dimension_numbers<[1], [0], [0], [1], [0, 0, 1, 1], [], []>} : vector<8x128xbf16>, vector<128x512xbf16>, vector<8x512xf32> -> vector<8x512xf32>
    %243 = arith.addf %240, %242 : vector<8x512xf32>
    %244 = vector.broadcast %25 : vector<1x512xf32> to vector<8x512xf32>
    %245 = arith.addf %243, %244 : vector<8x512xf32>
    %246 = vector.extract_strided_slice %245 {offsets = [0, 0], sizes = [8, 128], strides = [1, 1]} : vector<8x512xf32> to vector<8x128xf32>
    %247 = arith.negf %246 : vector<8x128xf32>
    %248 = math.exp %247 : vector<8x128xf32>
    %cst_60 = arith.constant 1.000000e+00 : f32
    %249 = vector.broadcast %cst_60 : f32 to vector<8x128xf32>
    %250 = arith.addf %249, %248 : vector<8x128xf32>
    %251 = arith.divf %249, %250 : vector<8x128xf32>
    %252 = vector.extract_strided_slice %245 {offsets = [0, 128], sizes = [8, 128], strides = [1, 1]} : vector<8x512xf32> to vector<8x128xf32>
    %253 = arith.negf %252 : vector<8x128xf32>
    %254 = math.exp %253 : vector<8x128xf32>
    %cst_61 = arith.constant 1.000000e+00 : f32
    %255 = vector.broadcast %cst_61 : f32 to vector<8x128xf32>
    %256 = arith.addf %255, %254 : vector<8x128xf32>
    %257 = arith.divf %255, %256 : vector<8x128xf32>
    %258 = vector.extract_strided_slice %245 {offsets = [0, 256], sizes = [8, 128], strides = [1, 1]} : vector<8x512xf32> to vector<8x128xf32>
    %259 = math.tanh %258 : vector<8x128xf32>
    %260 = vector.extract_strided_slice %245 {offsets = [0, 384], sizes = [8, 128], strides = [1, 1]} : vector<8x512xf32> to vector<8x128xf32>
    %261 = arith.negf %260 : vector<8x128xf32>
    %262 = math.exp %261 : vector<8x128xf32>
    %cst_62 = arith.constant 1.000000e+00 : f32
    %263 = vector.broadcast %cst_62 : f32 to vector<8x128xf32>
    %264 = arith.addf %263, %262 : vector<8x128xf32>
    %265 = arith.divf %263, %264 : vector<8x128xf32>
    %266 = arith.mulf %257, %207 : vector<8x128xf32>
    %267 = arith.mulf %251, %259 : vector<8x128xf32>
    %268 = arith.addf %266, %267 : vector<8x128xf32>
    %269 = math.tanh %268 : vector<8x128xf32>
    %270 = arith.mulf %265, %269 : vector<8x128xf32>
    %271 = vector.extract_strided_slice %21 {offsets = [32, 0], sizes = [8, 512], strides = [1, 1]} : vector<64x512xf32> to vector<8x512xf32>
    %272 = arith.truncf %238 : vector<8x128xf32> to vector<8x128xbf16>
    %cst_63 = arith.constant dense<0.000000e+00> : vector<8x512xf32>
    %273 = tpu.matmul %272, %22, %cst_63 {dimension_numbers = #tpu.dot_dimension_numbers<[1], [0], [0], [1], [0, 0, 1, 1], [], []>} : vector<8x128xbf16>, vector<128x512xbf16>, vector<8x512xf32> -> vector<8x512xf32>
    %274 = arith.addf %271, %273 : vector<8x512xf32>
    %275 = vector.extract_strided_slice %274 {offsets = [0, 0], sizes = [8, 128], strides = [1, 1]} : vector<8x512xf32> to vector<8x128xf32>
    %276 = arith.negf %275 : vector<8x128xf32>
    %277 = math.exp %276 : vector<8x128xf32>
    %cst_64 = arith.constant 1.000000e+00 : f32
    %278 = vector.broadcast %cst_64 : f32 to vector<8x128xf32>
    %279 = arith.addf %278, %277 : vector<8x128xf32>
    %280 = arith.divf %278, %279 : vector<8x128xf32>
    %281 = vector.extract_strided_slice %274 {offsets = [0, 128], sizes = [8, 128], strides = [1, 1]} : vector<8x512xf32> to vector<8x128xf32>
    %282 = arith.negf %281 : vector<8x128xf32>
    %283 = math.exp %282 : vector<8x128xf32>
    %cst_65 = arith.constant 1.000000e+00 : f32
    %284 = vector.broadcast %cst_65 : f32 to vector<8x128xf32>
    %285 = arith.addf %284, %283 : vector<8x128xf32>
    %286 = arith.divf %284, %285 : vector<8x128xf32>
    %287 = vector.extract_strided_slice %274 {offsets = [0, 256], sizes = [8, 128], strides = [1, 1]} : vector<8x512xf32> to vector<8x128xf32>
    %288 = math.tanh %287 : vector<8x128xf32>
    %289 = vector.extract_strided_slice %274 {offsets = [0, 384], sizes = [8, 128], strides = [1, 1]} : vector<8x512xf32> to vector<8x128xf32>
    %290 = arith.negf %289 : vector<8x128xf32>
    %291 = math.exp %290 : vector<8x128xf32>
    %cst_66 = arith.constant 1.000000e+00 : f32
    %292 = vector.broadcast %cst_66 : f32 to vector<8x128xf32>
    %293 = arith.addf %292, %291 : vector<8x128xf32>
    %294 = arith.divf %292, %293 : vector<8x128xf32>
    %295 = arith.mulf %286, %236 : vector<8x128xf32>
    %296 = arith.mulf %280, %288 : vector<8x128xf32>
    %297 = arith.addf %295, %296 : vector<8x128xf32>
    %298 = math.tanh %297 : vector<8x128xf32>
    %299 = arith.mulf %294, %298 : vector<8x128xf32>
    %300 = arith.truncf %299 : vector<8x128xf32> to vector<8x128xbf16>
    %cst_67 = arith.constant dense<0.000000e+00> : vector<8x512xf32>
    %301 = tpu.matmul %300, %23, %cst_67 {dimension_numbers = #tpu.dot_dimension_numbers<[1], [0], [0], [1], [0, 0, 1, 1], [], []>} : vector<8x128xbf16>, vector<128x512xbf16>, vector<8x512xf32> -> vector<8x512xf32>
    %302 = arith.truncf %270 : vector<8x128xf32> to vector<8x128xbf16>
    %cst_68 = arith.constant dense<0.000000e+00> : vector<8x512xf32>
    %303 = tpu.matmul %302, %24, %cst_68 {dimension_numbers = #tpu.dot_dimension_numbers<[1], [0], [0], [1], [0, 0, 1, 1], [], []>} : vector<8x128xbf16>, vector<128x512xbf16>, vector<8x512xf32> -> vector<8x512xf32>
    %304 = arith.addf %301, %303 : vector<8x512xf32>
    %305 = vector.broadcast %25 : vector<1x512xf32> to vector<8x512xf32>
    %306 = arith.addf %304, %305 : vector<8x512xf32>
    %307 = vector.extract_strided_slice %306 {offsets = [0, 0], sizes = [8, 128], strides = [1, 1]} : vector<8x512xf32> to vector<8x128xf32>
    %308 = arith.negf %307 : vector<8x128xf32>
    %309 = math.exp %308 : vector<8x128xf32>
    %cst_69 = arith.constant 1.000000e+00 : f32
    %310 = vector.broadcast %cst_69 : f32 to vector<8x128xf32>
    %311 = arith.addf %310, %309 : vector<8x128xf32>
    %312 = arith.divf %310, %311 : vector<8x128xf32>
    %313 = vector.extract_strided_slice %306 {offsets = [0, 128], sizes = [8, 128], strides = [1, 1]} : vector<8x512xf32> to vector<8x128xf32>
    %314 = arith.negf %313 : vector<8x128xf32>
    %315 = math.exp %314 : vector<8x128xf32>
    %cst_70 = arith.constant 1.000000e+00 : f32
    %316 = vector.broadcast %cst_70 : f32 to vector<8x128xf32>
    %317 = arith.addf %316, %315 : vector<8x128xf32>
    %318 = arith.divf %316, %317 : vector<8x128xf32>
    %319 = vector.extract_strided_slice %306 {offsets = [0, 256], sizes = [8, 128], strides = [1, 1]} : vector<8x512xf32> to vector<8x128xf32>
    %320 = math.tanh %319 : vector<8x128xf32>
    %321 = vector.extract_strided_slice %306 {offsets = [0, 384], sizes = [8, 128], strides = [1, 1]} : vector<8x512xf32> to vector<8x128xf32>
    %322 = arith.negf %321 : vector<8x128xf32>
    %323 = math.exp %322 : vector<8x128xf32>
    %cst_71 = arith.constant 1.000000e+00 : f32
    %324 = vector.broadcast %cst_71 : f32 to vector<8x128xf32>
    %325 = arith.addf %324, %323 : vector<8x128xf32>
    %326 = arith.divf %324, %325 : vector<8x128xf32>
    %327 = arith.mulf %318, %268 : vector<8x128xf32>
    %328 = arith.mulf %312, %320 : vector<8x128xf32>
    %329 = arith.addf %327, %328 : vector<8x128xf32>
    %330 = math.tanh %329 : vector<8x128xf32>
    %331 = arith.mulf %326, %330 : vector<8x128xf32>
    %332 = vector.extract_strided_slice %21 {offsets = [40, 0], sizes = [8, 512], strides = [1, 1]} : vector<64x512xf32> to vector<8x512xf32>
    %333 = arith.truncf %299 : vector<8x128xf32> to vector<8x128xbf16>
    %cst_72 = arith.constant dense<0.000000e+00> : vector<8x512xf32>
    %334 = tpu.matmul %333, %22, %cst_72 {dimension_numbers = #tpu.dot_dimension_numbers<[1], [0], [0], [1], [0, 0, 1, 1], [], []>} : vector<8x128xbf16>, vector<128x512xbf16>, vector<8x512xf32> -> vector<8x512xf32>
    %335 = arith.addf %332, %334 : vector<8x512xf32>
    %336 = vector.extract_strided_slice %335 {offsets = [0, 0], sizes = [8, 128], strides = [1, 1]} : vector<8x512xf32> to vector<8x128xf32>
    %337 = arith.negf %336 : vector<8x128xf32>
    %338 = math.exp %337 : vector<8x128xf32>
    %cst_73 = arith.constant 1.000000e+00 : f32
    %339 = vector.broadcast %cst_73 : f32 to vector<8x128xf32>
    %340 = arith.addf %339, %338 : vector<8x128xf32>
    %341 = arith.divf %339, %340 : vector<8x128xf32>
    %342 = vector.extract_strided_slice %335 {offsets = [0, 128], sizes = [8, 128], strides = [1, 1]} : vector<8x512xf32> to vector<8x128xf32>
    %343 = arith.negf %342 : vector<8x128xf32>
    %344 = math.exp %343 : vector<8x128xf32>
    %cst_74 = arith.constant 1.000000e+00 : f32
    %345 = vector.broadcast %cst_74 : f32 to vector<8x128xf32>
    %346 = arith.addf %345, %344 : vector<8x128xf32>
    %347 = arith.divf %345, %346 : vector<8x128xf32>
    %348 = vector.extract_strided_slice %335 {offsets = [0, 256], sizes = [8, 128], strides = [1, 1]} : vector<8x512xf32> to vector<8x128xf32>
    %349 = math.tanh %348 : vector<8x128xf32>
    %350 = vector.extract_strided_slice %335 {offsets = [0, 384], sizes = [8, 128], strides = [1, 1]} : vector<8x512xf32> to vector<8x128xf32>
    %351 = arith.negf %350 : vector<8x128xf32>
    %352 = math.exp %351 : vector<8x128xf32>
    %cst_75 = arith.constant 1.000000e+00 : f32
    %353 = vector.broadcast %cst_75 : f32 to vector<8x128xf32>
    %354 = arith.addf %353, %352 : vector<8x128xf32>
    %355 = arith.divf %353, %354 : vector<8x128xf32>
    %356 = arith.mulf %347, %297 : vector<8x128xf32>
    %357 = arith.mulf %341, %349 : vector<8x128xf32>
    %358 = arith.addf %356, %357 : vector<8x128xf32>
    %359 = math.tanh %358 : vector<8x128xf32>
    %360 = arith.mulf %355, %359 : vector<8x128xf32>
    %361 = arith.truncf %360 : vector<8x128xf32> to vector<8x128xbf16>
    %cst_76 = arith.constant dense<0.000000e+00> : vector<8x512xf32>
    %362 = tpu.matmul %361, %23, %cst_76 {dimension_numbers = #tpu.dot_dimension_numbers<[1], [0], [0], [1], [0, 0, 1, 1], [], []>} : vector<8x128xbf16>, vector<128x512xbf16>, vector<8x512xf32> -> vector<8x512xf32>
    %363 = arith.truncf %331 : vector<8x128xf32> to vector<8x128xbf16>
    %cst_77 = arith.constant dense<0.000000e+00> : vector<8x512xf32>
    %364 = tpu.matmul %363, %24, %cst_77 {dimension_numbers = #tpu.dot_dimension_numbers<[1], [0], [0], [1], [0, 0, 1, 1], [], []>} : vector<8x128xbf16>, vector<128x512xbf16>, vector<8x512xf32> -> vector<8x512xf32>
    %365 = arith.addf %362, %364 : vector<8x512xf32>
    %366 = vector.broadcast %25 : vector<1x512xf32> to vector<8x512xf32>
    %367 = arith.addf %365, %366 : vector<8x512xf32>
    %368 = vector.extract_strided_slice %367 {offsets = [0, 0], sizes = [8, 128], strides = [1, 1]} : vector<8x512xf32> to vector<8x128xf32>
    %369 = arith.negf %368 : vector<8x128xf32>
    %370 = math.exp %369 : vector<8x128xf32>
    %cst_78 = arith.constant 1.000000e+00 : f32
    %371 = vector.broadcast %cst_78 : f32 to vector<8x128xf32>
    %372 = arith.addf %371, %370 : vector<8x128xf32>
    %373 = arith.divf %371, %372 : vector<8x128xf32>
    %374 = vector.extract_strided_slice %367 {offsets = [0, 128], sizes = [8, 128], strides = [1, 1]} : vector<8x512xf32> to vector<8x128xf32>
    %375 = arith.negf %374 : vector<8x128xf32>
    %376 = math.exp %375 : vector<8x128xf32>
    %cst_79 = arith.constant 1.000000e+00 : f32
    %377 = vector.broadcast %cst_79 : f32 to vector<8x128xf32>
    %378 = arith.addf %377, %376 : vector<8x128xf32>
    %379 = arith.divf %377, %378 : vector<8x128xf32>
    %380 = vector.extract_strided_slice %367 {offsets = [0, 256], sizes = [8, 128], strides = [1, 1]} : vector<8x512xf32> to vector<8x128xf32>
    %381 = math.tanh %380 : vector<8x128xf32>
    %382 = vector.extract_strided_slice %367 {offsets = [0, 384], sizes = [8, 128], strides = [1, 1]} : vector<8x512xf32> to vector<8x128xf32>
    %383 = arith.negf %382 : vector<8x128xf32>
    %384 = math.exp %383 : vector<8x128xf32>
    %cst_80 = arith.constant 1.000000e+00 : f32
    %385 = vector.broadcast %cst_80 : f32 to vector<8x128xf32>
    %386 = arith.addf %385, %384 : vector<8x128xf32>
    %387 = arith.divf %385, %386 : vector<8x128xf32>
    %388 = arith.mulf %379, %329 : vector<8x128xf32>
    %389 = arith.mulf %373, %381 : vector<8x128xf32>
    %390 = arith.addf %388, %389 : vector<8x128xf32>
    %391 = math.tanh %390 : vector<8x128xf32>
    %392 = arith.mulf %387, %391 : vector<8x128xf32>
    %393 = vector.extract_strided_slice %21 {offsets = [48, 0], sizes = [8, 512], strides = [1, 1]} : vector<64x512xf32> to vector<8x512xf32>
    %394 = arith.truncf %360 : vector<8x128xf32> to vector<8x128xbf16>
    %cst_81 = arith.constant dense<0.000000e+00> : vector<8x512xf32>
    %395 = tpu.matmul %394, %22, %cst_81 {dimension_numbers = #tpu.dot_dimension_numbers<[1], [0], [0], [1], [0, 0, 1, 1], [], []>} : vector<8x128xbf16>, vector<128x512xbf16>, vector<8x512xf32> -> vector<8x512xf32>
    %396 = arith.addf %393, %395 : vector<8x512xf32>
    %397 = vector.extract_strided_slice %396 {offsets = [0, 0], sizes = [8, 128], strides = [1, 1]} : vector<8x512xf32> to vector<8x128xf32>
    %398 = arith.negf %397 : vector<8x128xf32>
    %399 = math.exp %398 : vector<8x128xf32>
    %cst_82 = arith.constant 1.000000e+00 : f32
    %400 = vector.broadcast %cst_82 : f32 to vector<8x128xf32>
    %401 = arith.addf %400, %399 : vector<8x128xf32>
    %402 = arith.divf %400, %401 : vector<8x128xf32>
    %403 = vector.extract_strided_slice %396 {offsets = [0, 128], sizes = [8, 128], strides = [1, 1]} : vector<8x512xf32> to vector<8x128xf32>
    %404 = arith.negf %403 : vector<8x128xf32>
    %405 = math.exp %404 : vector<8x128xf32>
    %cst_83 = arith.constant 1.000000e+00 : f32
    %406 = vector.broadcast %cst_83 : f32 to vector<8x128xf32>
    %407 = arith.addf %406, %405 : vector<8x128xf32>
    %408 = arith.divf %406, %407 : vector<8x128xf32>
    %409 = vector.extract_strided_slice %396 {offsets = [0, 256], sizes = [8, 128], strides = [1, 1]} : vector<8x512xf32> to vector<8x128xf32>
    %410 = math.tanh %409 : vector<8x128xf32>
    %411 = vector.extract_strided_slice %396 {offsets = [0, 384], sizes = [8, 128], strides = [1, 1]} : vector<8x512xf32> to vector<8x128xf32>
    %412 = arith.negf %411 : vector<8x128xf32>
    %413 = math.exp %412 : vector<8x128xf32>
    %cst_84 = arith.constant 1.000000e+00 : f32
    %414 = vector.broadcast %cst_84 : f32 to vector<8x128xf32>
    %415 = arith.addf %414, %413 : vector<8x128xf32>
    %416 = arith.divf %414, %415 : vector<8x128xf32>
    %417 = arith.mulf %408, %358 : vector<8x128xf32>
    %418 = arith.mulf %402, %410 : vector<8x128xf32>
    %419 = arith.addf %417, %418 : vector<8x128xf32>
    %420 = math.tanh %419 : vector<8x128xf32>
    %421 = arith.mulf %416, %420 : vector<8x128xf32>
    %422 = arith.truncf %421 : vector<8x128xf32> to vector<8x128xbf16>
    %cst_85 = arith.constant dense<0.000000e+00> : vector<8x512xf32>
    %423 = tpu.matmul %422, %23, %cst_85 {dimension_numbers = #tpu.dot_dimension_numbers<[1], [0], [0], [1], [0, 0, 1, 1], [], []>} : vector<8x128xbf16>, vector<128x512xbf16>, vector<8x512xf32> -> vector<8x512xf32>
    %424 = arith.truncf %392 : vector<8x128xf32> to vector<8x128xbf16>
    %cst_86 = arith.constant dense<0.000000e+00> : vector<8x512xf32>
    %425 = tpu.matmul %424, %24, %cst_86 {dimension_numbers = #tpu.dot_dimension_numbers<[1], [0], [0], [1], [0, 0, 1, 1], [], []>} : vector<8x128xbf16>, vector<128x512xbf16>, vector<8x512xf32> -> vector<8x512xf32>
    %426 = arith.addf %423, %425 : vector<8x512xf32>
    %427 = vector.broadcast %25 : vector<1x512xf32> to vector<8x512xf32>
    %428 = arith.addf %426, %427 : vector<8x512xf32>
    %429 = vector.extract_strided_slice %428 {offsets = [0, 0], sizes = [8, 128], strides = [1, 1]} : vector<8x512xf32> to vector<8x128xf32>
    %430 = arith.negf %429 : vector<8x128xf32>
    %431 = math.exp %430 : vector<8x128xf32>
    %cst_87 = arith.constant 1.000000e+00 : f32
    %432 = vector.broadcast %cst_87 : f32 to vector<8x128xf32>
    %433 = arith.addf %432, %431 : vector<8x128xf32>
    %434 = arith.divf %432, %433 : vector<8x128xf32>
    %435 = vector.extract_strided_slice %428 {offsets = [0, 128], sizes = [8, 128], strides = [1, 1]} : vector<8x512xf32> to vector<8x128xf32>
    %436 = arith.negf %435 : vector<8x128xf32>
    %437 = math.exp %436 : vector<8x128xf32>
    %cst_88 = arith.constant 1.000000e+00 : f32
    %438 = vector.broadcast %cst_88 : f32 to vector<8x128xf32>
    %439 = arith.addf %438, %437 : vector<8x128xf32>
    %440 = arith.divf %438, %439 : vector<8x128xf32>
    %441 = vector.extract_strided_slice %428 {offsets = [0, 256], sizes = [8, 128], strides = [1, 1]} : vector<8x512xf32> to vector<8x128xf32>
    %442 = math.tanh %441 : vector<8x128xf32>
    %443 = vector.extract_strided_slice %428 {offsets = [0, 384], sizes = [8, 128], strides = [1, 1]} : vector<8x512xf32> to vector<8x128xf32>
    %444 = arith.negf %443 : vector<8x128xf32>
    %445 = math.exp %444 : vector<8x128xf32>
    %cst_89 = arith.constant 1.000000e+00 : f32
    %446 = vector.broadcast %cst_89 : f32 to vector<8x128xf32>
    %447 = arith.addf %446, %445 : vector<8x128xf32>
    %448 = arith.divf %446, %447 : vector<8x128xf32>
    %449 = arith.mulf %440, %390 : vector<8x128xf32>
    %450 = arith.mulf %434, %442 : vector<8x128xf32>
    %451 = arith.addf %449, %450 : vector<8x128xf32>
    %452 = math.tanh %451 : vector<8x128xf32>
    %453 = arith.mulf %448, %452 : vector<8x128xf32>
    %454 = vector.extract_strided_slice %21 {offsets = [56, 0], sizes = [8, 512], strides = [1, 1]} : vector<64x512xf32> to vector<8x512xf32>
    %455 = arith.truncf %421 : vector<8x128xf32> to vector<8x128xbf16>
    %cst_90 = arith.constant dense<0.000000e+00> : vector<8x512xf32>
    %456 = tpu.matmul %455, %22, %cst_90 {dimension_numbers = #tpu.dot_dimension_numbers<[1], [0], [0], [1], [0, 0, 1, 1], [], []>} : vector<8x128xbf16>, vector<128x512xbf16>, vector<8x512xf32> -> vector<8x512xf32>
    %457 = arith.addf %454, %456 : vector<8x512xf32>
    %458 = vector.extract_strided_slice %457 {offsets = [0, 0], sizes = [8, 128], strides = [1, 1]} : vector<8x512xf32> to vector<8x128xf32>
    %459 = arith.negf %458 : vector<8x128xf32>
    %460 = math.exp %459 : vector<8x128xf32>
    %cst_91 = arith.constant 1.000000e+00 : f32
    %461 = vector.broadcast %cst_91 : f32 to vector<8x128xf32>
    %462 = arith.addf %461, %460 : vector<8x128xf32>
    %463 = arith.divf %461, %462 : vector<8x128xf32>
    %464 = vector.extract_strided_slice %457 {offsets = [0, 128], sizes = [8, 128], strides = [1, 1]} : vector<8x512xf32> to vector<8x128xf32>
    %465 = arith.negf %464 : vector<8x128xf32>
    %466 = math.exp %465 : vector<8x128xf32>
    %cst_92 = arith.constant 1.000000e+00 : f32
    %467 = vector.broadcast %cst_92 : f32 to vector<8x128xf32>
    %468 = arith.addf %467, %466 : vector<8x128xf32>
    %469 = arith.divf %467, %468 : vector<8x128xf32>
    %470 = vector.extract_strided_slice %457 {offsets = [0, 256], sizes = [8, 128], strides = [1, 1]} : vector<8x512xf32> to vector<8x128xf32>
    %471 = math.tanh %470 : vector<8x128xf32>
    %472 = vector.extract_strided_slice %457 {offsets = [0, 384], sizes = [8, 128], strides = [1, 1]} : vector<8x512xf32> to vector<8x128xf32>
    %473 = arith.negf %472 : vector<8x128xf32>
    %474 = math.exp %473 : vector<8x128xf32>
    %cst_93 = arith.constant 1.000000e+00 : f32
    %475 = vector.broadcast %cst_93 : f32 to vector<8x128xf32>
    %476 = arith.addf %475, %474 : vector<8x128xf32>
    %477 = arith.divf %475, %476 : vector<8x128xf32>
    %478 = arith.mulf %469, %419 : vector<8x128xf32>
    %479 = arith.mulf %463, %471 : vector<8x128xf32>
    %480 = arith.addf %478, %479 : vector<8x128xf32>
    %481 = math.tanh %480 : vector<8x128xf32>
    %482 = arith.mulf %477, %481 : vector<8x128xf32>
    %483 = arith.truncf %482 : vector<8x128xf32> to vector<8x128xbf16>
    %cst_94 = arith.constant dense<0.000000e+00> : vector<8x512xf32>
    %484 = tpu.matmul %483, %23, %cst_94 {dimension_numbers = #tpu.dot_dimension_numbers<[1], [0], [0], [1], [0, 0, 1, 1], [], []>} : vector<8x128xbf16>, vector<128x512xbf16>, vector<8x512xf32> -> vector<8x512xf32>
    %485 = arith.truncf %453 : vector<8x128xf32> to vector<8x128xbf16>
    %cst_95 = arith.constant dense<0.000000e+00> : vector<8x512xf32>
    %486 = tpu.matmul %485, %24, %cst_95 {dimension_numbers = #tpu.dot_dimension_numbers<[1], [0], [0], [1], [0, 0, 1, 1], [], []>} : vector<8x128xbf16>, vector<128x512xbf16>, vector<8x512xf32> -> vector<8x512xf32>
    %487 = arith.addf %484, %486 : vector<8x512xf32>
    %488 = vector.broadcast %25 : vector<1x512xf32> to vector<8x512xf32>
    %489 = arith.addf %487, %488 : vector<8x512xf32>
    %490 = vector.extract_strided_slice %489 {offsets = [0, 0], sizes = [8, 128], strides = [1, 1]} : vector<8x512xf32> to vector<8x128xf32>
    %491 = arith.negf %490 : vector<8x128xf32>
    %492 = math.exp %491 : vector<8x128xf32>
    %cst_96 = arith.constant 1.000000e+00 : f32
    %493 = vector.broadcast %cst_96 : f32 to vector<8x128xf32>
    %494 = arith.addf %493, %492 : vector<8x128xf32>
    %495 = arith.divf %493, %494 : vector<8x128xf32>
    %496 = vector.extract_strided_slice %489 {offsets = [0, 128], sizes = [8, 128], strides = [1, 1]} : vector<8x512xf32> to vector<8x128xf32>
    %497 = arith.negf %496 : vector<8x128xf32>
    %498 = math.exp %497 : vector<8x128xf32>
    %cst_97 = arith.constant 1.000000e+00 : f32
    %499 = vector.broadcast %cst_97 : f32 to vector<8x128xf32>
    %500 = arith.addf %499, %498 : vector<8x128xf32>
    %501 = arith.divf %499, %500 : vector<8x128xf32>
    %502 = vector.extract_strided_slice %489 {offsets = [0, 256], sizes = [8, 128], strides = [1, 1]} : vector<8x512xf32> to vector<8x128xf32>
    %503 = math.tanh %502 : vector<8x128xf32>
    %504 = vector.extract_strided_slice %489 {offsets = [0, 384], sizes = [8, 128], strides = [1, 1]} : vector<8x512xf32> to vector<8x128xf32>
    %505 = arith.negf %504 : vector<8x128xf32>
    %506 = math.exp %505 : vector<8x128xf32>
    %cst_98 = arith.constant 1.000000e+00 : f32
    %507 = vector.broadcast %cst_98 : f32 to vector<8x128xf32>
    %508 = arith.addf %507, %506 : vector<8x128xf32>
    %509 = arith.divf %507, %508 : vector<8x128xf32>
    %510 = arith.mulf %501, %451 : vector<8x128xf32>
    %511 = arith.mulf %495, %503 : vector<8x128xf32>
    %512 = arith.addf %510, %511 : vector<8x128xf32>
    %513 = math.tanh %512 : vector<8x128xf32>
    %514 = arith.mulf %509, %513 : vector<8x128xf32>
    %515 = tpu.concatenate %14, %514 in 0 : vector<8x128xf32>, vector<8x128xf32> -> vector<16x128xf32>
    %c0_99 = arith.constant 0 : index
    %c0_100 = arith.constant 0 : index
    %516 = vector.load %arg3[%c0_99, %c0_100] : memref<16x128xf32, #tpu.memory_space<vmem>>, vector<16x128xf32>
    %517 = tpu.concatenate %516, %515 in 1 : vector<16x128xf32>, vector<16x128xf32> -> vector<16x256xf32>
    %518 = vector.extract_strided_slice %517 {offsets = [0, 0], sizes = [8, 256], strides = [1, 1]} : vector<16x256xf32> to vector<8x256xf32>
    %519 = vector.extract_strided_slice %517 {offsets = [8, 0], sizes = [8, 256], strides = [1, 1]} : vector<16x256xf32> to vector<8x256xf32>
    %c0_101 = arith.constant 0 : index
    %c0_102 = arith.constant 0 : index
    %520 = vector.load %arg4[%c0_101, %c0_102] : memref<8x8xf32, #tpu.memory_space<vmem>>, vector<8x8xf32>
    %cst_103 = arith.constant dense<0.000000e+00> : vector<8xf32>
    %521 = vector.multi_reduction <add>, %520, %cst_103 [1] : vector<8x8xf32> to vector<8xf32>
    %522 = vector.shape_cast %521 : vector<8xf32> to vector<8x1xf32>
    %cst_104 = arith.constant 1.000000e+00 : f32
    %523 = vector.broadcast %cst_104 : f32 to vector<8x1xf32>
    %524 = arith.addf %523, %522 : vector<8x1xf32>
    %525 = arith.truncf %520 : vector<8x8xf32> to vector<8x8xbf16>
    %526 = arith.truncf %519 : vector<8x256xf32> to vector<8x256xbf16>
    %cst_105 = arith.constant dense<0.000000e+00> : vector<8x256xf32>
    %527 = tpu.matmul %525, %526, %cst_105 {dimension_numbers = #tpu.dot_dimension_numbers<[1], [0], [0], [1], [0, 0, 1, 1], [], []>} : vector<8x8xbf16>, vector<8x256xbf16>, vector<8x256xf32> -> vector<8x256xf32>
    %528 = arith.addf %518, %527 : vector<8x256xf32>
    %529 = tpu.reciprocal %524 {approx = true} : vector<8x1xf32> -> vector<8x1xf32>
    %530 = vector.broadcast %529 : vector<8x1xf32> to vector<8x256xf32>
    %531 = arith.mulf %528, %530 : vector<8x256xf32>
    %532 = tpu.concatenate %531, %519 in 0 : vector<8x256xf32>, vector<8x256xf32> -> vector<16x256xf32>
    %533 = arith.truncf %532 : vector<16x256xf32> to vector<16x256xbf16>
    %c0_106 = arith.constant 0 : index
    %c0_107 = arith.constant 0 : index
    %534 = vector.load %arg16[%c0_106, %c0_107] : memref<256x256xbf16, #tpu.memory_space<vmem>>, vector<256x256xbf16>
    %cst_108 = arith.constant dense<0.000000e+00> : vector<16x256xf32>
    %535 = tpu.matmul %533, %534, %cst_108 {dimension_numbers = #tpu.dot_dimension_numbers<[1], [0], [0], [1], [0, 0, 1, 1], [], []>} : vector<16x256xbf16>, vector<256x256xbf16>, vector<16x256xf32> -> vector<16x256xf32>
    %c0_109 = arith.constant 0 : index
    %c0_110 = arith.constant 0 : index
    %536 = vector.load %arg17[%c0_109, %c0_110] : memref<1x256xf32, #tpu.memory_space<vmem>>, vector<1x256xf32>
    %537 = vector.broadcast %536 : vector<1x256xf32> to vector<16x256xf32>
    %538 = arith.addf %535, %537 : vector<16x256xf32>
    %cst_111 = arith.constant 0.000000e+00 : f32
    %539 = vector.broadcast %cst_111 : f32 to vector<16x256xf32>
    %540 = arith.maximumf %538, %539 : vector<16x256xf32>
    %541 = vector.extract_strided_slice %540 {offsets = [0, 0], sizes = [8, 256], strides = [1, 1]} : vector<16x256xf32> to vector<8x256xf32>
    %542 = vector.extract_strided_slice %540 {offsets = [8, 0], sizes = [8, 256], strides = [1, 1]} : vector<16x256xf32> to vector<8x256xf32>
    %543 = vector.extract_strided_slice %541 {offsets = [0, 0], sizes = [1, 256], strides = [1, 1]} : vector<8x256xf32> to vector<1x256xf32>
    %544 = vector.broadcast %543 : vector<1x256xf32> to vector<8x256xf32>
    %545 = arith.subf %544, %542 : vector<8x256xf32>
    %546 = math.absf %545 : vector<8x256xf32>
    %547 = vector.extract_strided_slice %541 {offsets = [1, 0], sizes = [1, 256], strides = [1, 1]} : vector<8x256xf32> to vector<1x256xf32>
    %548 = vector.broadcast %547 : vector<1x256xf32> to vector<8x256xf32>
    %549 = arith.subf %548, %542 : vector<8x256xf32>
    %550 = math.absf %549 : vector<8x256xf32>
    %551 = vector.extract_strided_slice %541 {offsets = [2, 0], sizes = [1, 256], strides = [1, 1]} : vector<8x256xf32> to vector<1x256xf32>
    %552 = vector.broadcast %551 : vector<1x256xf32> to vector<8x256xf32>
    %553 = arith.subf %552, %542 : vector<8x256xf32>
    %554 = math.absf %553 : vector<8x256xf32>
    %555 = vector.extract_strided_slice %541 {offsets = [3, 0], sizes = [1, 256], strides = [1, 1]} : vector<8x256xf32> to vector<1x256xf32>
    %556 = vector.broadcast %555 : vector<1x256xf32> to vector<8x256xf32>
    %557 = arith.subf %556, %542 : vector<8x256xf32>
    %558 = math.absf %557 : vector<8x256xf32>
    %559 = vector.extract_strided_slice %541 {offsets = [4, 0], sizes = [1, 256], strides = [1, 1]} : vector<8x256xf32> to vector<1x256xf32>
    %560 = vector.broadcast %559 : vector<1x256xf32> to vector<8x256xf32>
    %561 = arith.subf %560, %542 : vector<8x256xf32>
    %562 = math.absf %561 : vector<8x256xf32>
    %563 = vector.extract_strided_slice %541 {offsets = [5, 0], sizes = [1, 256], strides = [1, 1]} : vector<8x256xf32> to vector<1x256xf32>
    %564 = vector.broadcast %563 : vector<1x256xf32> to vector<8x256xf32>
    %565 = arith.subf %564, %542 : vector<8x256xf32>
    %566 = math.absf %565 : vector<8x256xf32>
    %567 = vector.extract_strided_slice %541 {offsets = [6, 0], sizes = [1, 256], strides = [1, 1]} : vector<8x256xf32> to vector<1x256xf32>
    %568 = vector.broadcast %567 : vector<1x256xf32> to vector<8x256xf32>
    %569 = arith.subf %568, %542 : vector<8x256xf32>
    %570 = math.absf %569 : vector<8x256xf32>
    %571 = vector.extract_strided_slice %541 {offsets = [7, 0], sizes = [1, 256], strides = [1, 1]} : vector<8x256xf32> to vector<1x256xf32>
    %572 = vector.broadcast %571 : vector<1x256xf32> to vector<8x256xf32>
    %573 = arith.subf %572, %542 : vector<8x256xf32>
    %574 = math.absf %573 : vector<8x256xf32>
    %575 = tpu.concatenate %546, %550, %554, %558, %562, %566, %570, %574 in 0 : vector<8x256xf32>, vector<8x256xf32>, vector<8x256xf32>, vector<8x256xf32>, vector<8x256xf32>, vector<8x256xf32>, vector<8x256xf32>, vector<8x256xf32> -> vector<64x256xf32>
    %576 = arith.truncf %575 : vector<64x256xf32> to vector<64x256xbf16>
    %c0_112 = arith.constant 0 : index
    %c0_113 = arith.constant 0 : index
    %577 = vector.load %arg18[%c0_112, %c0_113] : memref<256x64xbf16, #tpu.memory_space<vmem>>, vector<256x64xbf16>
    %cst_114 = arith.constant dense<0.000000e+00> : vector<64x64xf32>
    %578 = tpu.matmul %576, %577, %cst_114 {dimension_numbers = #tpu.dot_dimension_numbers<[1], [0], [0], [1], [0, 0, 1, 1], [], []>} : vector<64x256xbf16>, vector<256x64xbf16>, vector<64x64xf32> -> vector<64x64xf32>
    %c0_115 = arith.constant 0 : index
    %c0_116 = arith.constant 0 : index
    %579 = vector.load %arg19[%c0_115, %c0_116] : memref<1x64xf32, #tpu.memory_space<vmem>>, vector<1x64xf32>
    %580 = vector.broadcast %579 : vector<1x64xf32> to vector<64x64xf32>
    %581 = arith.addf %578, %580 : vector<64x64xf32>
    %cst_117 = arith.constant 0.000000e+00 : f32
    %582 = vector.broadcast %cst_117 : f32 to vector<64x64xf32>
    %583 = arith.maximumf %581, %582 : vector<64x64xf32>
    %c0_118 = arith.constant 0 : index
    %c0_119 = arith.constant 0 : index
    %584 = vector.load %arg20[%c0_118, %c0_119] : memref<1x64xf32, #tpu.memory_space<vmem>>, vector<1x64xf32>
    %585 = vector.broadcast %584 : vector<1x64xf32> to vector<64x64xf32>
    %586 = arith.mulf %583, %585 : vector<64x64xf32>
    %cst_120 = arith.constant dense<0.000000e+00> : vector<64xf32>
    %587 = vector.multi_reduction <add>, %586, %cst_120 [1] : vector<64x64xf32> to vector<64xf32>
    %588 = vector.shape_cast %587 : vector<64xf32> to vector<64x1xf32>
    %c0_121 = arith.constant 0 : index
    %c0_122 = arith.constant 0 : index
    %589 = vector.load %arg21[%c0_121, %c0_122] : memref<1x1xf32, #tpu.memory_space<vmem>>, vector<1x1xf32>
    %590 = vector.extract %589[0, 0] : f32 from vector<1x1xf32>
    %591 = vector.broadcast %590 : f32 to vector<64x1xf32>
    %592 = arith.addf %588, %591 : vector<64x1xf32>
    %593 = arith.negf %592 : vector<64x1xf32>
    %594 = math.exp %593 : vector<64x1xf32>
    %cst_123 = arith.constant 1.000000e+00 : f32
    %595 = vector.broadcast %cst_123 : f32 to vector<64x1xf32>
    %596 = arith.addf %595, %594 : vector<64x1xf32>
    %597 = arith.divf %595, %596 : vector<64x1xf32>
    %c0_124 = arith.constant 0 : index
    %c0_125 = arith.constant 0 : index
    %598 = vector.load %arg5[%c0_124, %c0_125] : memref<64x1xf32, #tpu.memory_space<vmem>>, vector<64x1xf32>
    %cst_126 = arith.constant 0.000000e+00 : f32
    %599 = vector.broadcast %cst_126 : f32 to vector<64x1xf32>
    %600 = arith.cmpf oeq, %598, %599 : vector<64x1xf32>
    %601 = arith.mulf %598, %597 : vector<64x1xf32>
    %cst_127 = arith.constant 9.900000e+01 : f32
    %602 = vector.broadcast %cst_127 : f32 to vector<64x1xf32>
    %603 = arith.select %600, %602, %601 : vector<64x1xi1>, vector<64x1xf32>
    %c0_128 = arith.constant 0 : index
    %c0_129 = arith.constant 0 : index
    %604 = vector.load %arg22[%c0_128, %c0_129] : memref<64x1xf32, #tpu.memory_space<vmem>>, vector<64x1xf32>
    tpu.vector_store %arg22[%c0_128, %c0_129], %603 {strides = array<i32>} : memref<64x1xf32, #tpu.memory_space<vmem>>, vector<64x1xf32>,
    return
  }
  func.func @transform_0(%arg0: i32) -> (i32, i32) {
    %c0_i32 = arith.constant 0 : i32
    %c0_i32_0 = arith.constant 0 : i32
    %c0_i32_1 = arith.constant 0 : i32
    return %c0_i32, %c0_i32_0 : i32, i32
  }
  func.func @transform_1(%arg0: i32) -> (i32, i32) {
    %c0_i32 = arith.constant 0 : i32
    %c0_i32_0 = arith.constant 0 : i32
    %c0_i32_1 = arith.constant 0 : i32
    return %c0_i32, %c0_i32_0 : i32, i32
  }
  func.func @transform_2(%arg0: i32) -> (i32, i32) {
    %c0_i32 = arith.constant 0 : i32
    %c0_i32_0 = arith.constant 0 : i32
    %c0_i32_1 = arith.constant 0 : i32
    return %c0_i32, %c0_i32_0 : i32, i32
  }
  func.func @transform_3(%arg0: i32) -> (i32, i32) {
    %c0_i32 = arith.constant 0 : i32
    %c0_i32_0 = arith.constant 0 : i32
    %c0_i32_1 = arith.constant 0 : i32
    return %c0_i32, %c0_i32_0 : i32, i32
  }
  func.func @transform_4(%arg0: i32) -> (i32, i32) {
    %c0_i32 = arith.constant 0 : i32
    %c0_i32_0 = arith.constant 0 : i32
    %c0_i32_1 = arith.constant 0 : i32
    return %c0_i32, %c0_i32_0 : i32, i32
  }
  func.func @transform_5(%arg0: i32) -> (i32, i32) {
    %c0_i32 = arith.constant 0 : i32
    %c0_i32_0 = arith.constant 0 : i32
    %c0_i32_1 = arith.constant 0 : i32
    return %c0_i32, %c0_i32_0 : i32, i32
  }
  func.func @transform_6(%arg0: i32) -> (i32, i32) {
    %c0_i32 = arith.constant 0 : i32
    %c0_i32_0 = arith.constant 0 : i32
    %c0_i32_1 = arith.constant 0 : i32
    return %c0_i32, %c0_i32_0 : i32, i32
  }
  func.func @transform_7(%arg0: i32) -> (i32, i32) {
    %c0_i32 = arith.constant 0 : i32
    %c0_i32_0 = arith.constant 0 : i32
    %c0_i32_1 = arith.constant 0 : i32
    return %c0_i32, %c0_i32_0 : i32, i32
  }
  func.func @transform_8(%arg0: i32) -> (i32, i32) {
    %c0_i32 = arith.constant 0 : i32
    %c0_i32_0 = arith.constant 0 : i32
    %c0_i32_1 = arith.constant 0 : i32
    return %c0_i32, %c0_i32_0 : i32, i32
  }
  func.func @transform_9(%arg0: i32) -> (i32, i32) {
    %c0_i32 = arith.constant 0 : i32
    %c0_i32_0 = arith.constant 0 : i32
    %c0_i32_1 = arith.constant 0 : i32
    return %c0_i32, %c0_i32_0 : i32, i32
  }
  func.func @transform_10(%arg0: i32) -> (i32, i32) {
    %c0_i32 = arith.constant 0 : i32
    %c0_i32_0 = arith.constant 0 : i32
    %c0_i32_1 = arith.constant 0 : i32
    return %c0_i32, %c0_i32_0 : i32, i32
  }
  func.func @transform_11(%arg0: i32) -> (i32, i32) {
    %c0_i32 = arith.constant 0 : i32
    %c0_i32_0 = arith.constant 0 : i32
    %c0_i32_1 = arith.constant 0 : i32
    return %c0_i32, %c0_i32_0 : i32, i32
  }
  func.func @transform_12(%arg0: i32) -> (i32, i32) {
    %c0_i32 = arith.constant 0 : i32
    %c0_i32_0 = arith.constant 0 : i32
    %c0_i32_1 = arith.constant 0 : i32
    return %c0_i32, %c0_i32_0 : i32, i32
  }
  func.func @transform_13(%arg0: i32) -> (i32, i32) {
    %c0_i32 = arith.constant 0 : i32
    %c0_i32_0 = arith.constant 0 : i32
    %c0_i32_1 = arith.constant 0 : i32
    return %c0_i32, %c0_i32_0 : i32, i32
  }
  func.func @transform_14(%arg0: i32) -> (i32, i32) {
    %c0_i32 = arith.constant 0 : i32
    %c0_i32_0 = arith.constant 0 : i32
    %c0_i32_1 = arith.constant 0 : i32
    return %c0_i32, %c0_i32_0 : i32, i32
  }
  func.func @transform_15(%arg0: i32) -> (i32, i32) {
    %c0_i32 = arith.constant 0 : i32
    %c0_i32_0 = arith.constant 0 : i32
    %c0_i32_1 = arith.constant 0 : i32
    return %c0_i32, %c0_i32_0 : i32, i32
  }
  func.func @transform_16(%arg0: i32) -> (i32, i32) {
    %c0_i32 = arith.constant 0 : i32
    %c0_i32_0 = arith.constant 0 : i32
    %c0_i32_1 = arith.constant 0 : i32
    return %c0_i32, %c0_i32_0 : i32, i32
  }
  func.func @transform_17(%arg0: i32) -> (i32, i32) {
    %c0_i32 = arith.constant 0 : i32
    %c0_i32_0 = arith.constant 0 : i32
    %c0_i32_1 = arith.constant 0 : i32
    return %c0_i32, %c0_i32_0 : i32, i32
  }
  func.func @transform_18(%arg0: i32) -> (i32, i32) {
    %c0_i32 = arith.constant 0 : i32
    %c0_i32_0 = arith.constant 0 : i32
    %c0_i32_1 = arith.constant 0 : i32
    return %c0_i32, %c0_i32_0 : i32, i32
  }
  func.func @transform_19(%arg0: i32) -> (i32, i32) {
    %c0_i32 = arith.constant 0 : i32
    %c0_i32_0 = arith.constant 0 : i32
    %c0_i32_1 = arith.constant 0 : i32
    return %c0_i32, %c0_i32_0 : i32, i32
  }
  func.func @transform_20(%arg0: i32) -> (i32, i32) {
    %c0_i32 = arith.constant 0 : i32
    %c0_i32_0 = arith.constant 0 : i32
    %c0_i32_1 = arith.constant 0 : i32
    return %c0_i32, %c0_i32_0 : i32, i32
  }
  func.func @transform_21(%arg0: i32) -> (i32, i32) {
    %c0_i32 = arith.constant 0 : i32
    %c0_i32_0 = arith.constant 0 : i32
    %c0_i32_1 = arith.constant 0 : i32
    return %c0_i32, %c0_i32_0 : i32, i32
  }
}

</mosaic_0001>

<llo_original>
// kernel: gnn_mot_forward.2
$region0: #{gnn_mot_forward.2}
  #allocation0 [shape = 'u32[]', space=smem, size = 0x4, offset = 0x4, fixed_abs, tag = 'smem constant byte address 0x4 - core index']
  #allocation1 [shape = 'u32[144,128]{1,0:T(1,128)}', space=vmem, size = 0x12000, scoped, tag = 'internal scratch']
  %s0 = inlined_call_operand.vmem [shape: f32[2048,3], index: 0, kind: input, shape index: {}]
  %s1 = inlined_call_operand.vmem [shape: f32[3,64], index: 1, kind: input, shape index: {}]
  %s2 = inlined_call_operand.vmem [shape: f32[1,64], index: 2, kind: input, shape index: {}]
  %s3 = inlined_call_operand.vmem [shape: bf16[64,128], index: 3, kind: input, shape index: {}]
  %s4 = inlined_call_operand.vmem [shape: f32[1,128], index: 4, kind: input, shape index: {}]
  %s5 = inlined_call_operand.vmem [shape: bf16[128,128], index: 5, kind: input, shape index: {}]
  %s6 = inlined_call_operand.vmem [shape: f32[1,128], index: 6, kind: input, shape index: {}]
  %s7 = inlined_call_operand.vmem [shape: f32[16,128], index: 7, kind: output, shape index: {}]
  %s8 = sld [smem:[#allocation0]]
  $region61: #{gnn_mot_forward.2} parent=0
    _
  %s10 = ssub.s32 1, %s8
  %s11 = scalar_select 0, %s10, %s8
  loop: start=0, step=1, limit=4
  $region2: #{gnn_mot_forward.2} parent=0 // loop_pre_header
    _
  $region3: #{gnn_mot_forward.2} parent=0 // loop_header
    %s13 = sphi 0, %s17
    %p14 = scmp.ge.s32.totalorder %s13, 4
    %s23 = sphi 0, %s25
    %s26 = sphi 0, %s23
    %s27 = sphi 0, %s26
    %s43 = sphi 0, %s27
    %s47 = sphi 0, %s47
    %s49 = sphi 0, %s47
    %s50 = sphi 0, %s49
    %s64 = sphi 0, %s50
    %s68 = sphi 0, %s68
    %s70 = sphi 0, %s68
    %s71 = sphi 0, %s70
    %s85 = sphi 0, %s71
    %s89 = sphi 0, %s89
    %s91 = sphi 0, %s89
    %s92 = sphi 0, %s91
    %s106 = sphi 0, %s92
    %s110 = sphi 0, %s110
    %s112 = sphi 0, %s110
    %s113 = sphi 0, %s112
    %s127 = sphi 0, %s113
    %s131 = sphi 0, %s131
    %s133 = sphi 0, %s131
    %s134 = sphi 0, %s133
    %s148 = sphi 0, %s134
    %s152 = sphi 0, %s152
    %s154 = sphi 0, %s152
    %s155 = sphi 0, %s154
    %s169 = sphi 0, %s155
    %s175 = sphi 0, %s177
    %s178 = sphi 0, %s175
    %s179 = sphi 0, %s178
    %s195 = sphi 0, %s179
  $region4: #{gnn_mot_forward.2} parent=0 // loop_header_branch
    %16 = sbr.rel (%p14) target = $region8
  $region5: #{gnn_mot_forward.2} parent=0 // loop_body
    %s18 = ssub.s32 %s13, 1
    %s19 = ssub.s32 %s13, 2
    %s20 = sadd.s32 %s13, 1
    %s21 = ssub.s32 %s13, %s20
    %p22 = scmp.eq.s32.totalorder %s21, 0
    %s24 = sadd.s32 %s23, 1
    %s25 = scalar_select %p22, %s23, %s24
    %p28 = pneg %p22
    %p29 = scmp.eq.s32.totalorder %s13, 1
    %p30 = por %p28, %p29
    %p31 = scmp.ne.s32.totalorder %s23, %s26
    %p32 = scmp.eq.s32.totalorder %s13, 0
    %p33 = por %p31, %p32
    %p34 = scmp.ne.s32.totalorder %s23, %s26
    %p35 = scmp.eq.s32.totalorder %s18, 1
    %p36 = por %p34, %p35
    %p37 = scmp.ne.s32.totalorder %s26, %s27
    %p38 = scmp.eq.s32.totalorder %s18, 0
    %p39 = por %p37, %p38
    %p40 = scmp.ne.s32.totalorder %s26, %s27
    %p41 = scmp.eq.s32.totalorder %s19, 1
    %p42 = por %p40, %p41
    %p44 = scmp.ne.s32.totalorder %s27, %s43
    %p45 = scmp.eq.s32.totalorder %s19, 0
    %p46 = por %p44, %p45
    %s48 = sadd.s32 %s47, 1
    %p51 = scmp.eq.s32.totalorder %s13, 1
    %p52 = scmp.ne.s32.totalorder %s47, %s49
    %p53 = scmp.eq.s32.totalorder %s13, 0
    %p54 = por %p52, %p53
    %p55 = scmp.ne.s32.totalorder %s47, %s49
    %p56 = scmp.eq.s32.totalorder %s18, 1
    %p57 = por %p55, %p56
    %p58 = scmp.ne.s32.totalorder %s49, %s50
    %p59 = scmp.eq.s32.totalorder %s18, 0
    %p60 = por %p58, %p59
    %p61 = scmp.ne.s32.totalorder %s49, %s50
    %p62 = scmp.eq.s32.totalorder %s19, 1
    %p63 = por %p61, %p62
    %p65 = scmp.ne.s32.totalorder %s50, %s64
    %p66 = scmp.eq.s32.totalorder %s19, 0
    %p67 = por %p65, %p66
    %s69 = sadd.s32 %s68, 1
    %p72 = scmp.eq.s32.totalorder %s13, 1
    %p73 = scmp.ne.s32.totalorder %s68, %s70
    %p74 = scmp.eq.s32.totalorder %s13, 0
    %p75 = por %p73, %p74
    %p76 = scmp.ne.s32.totalorder %s68, %s70
    %p77 = scmp.eq.s32.totalorder %s18, 1
    %p78 = por %p76, %p77
    %p79 = scmp.ne.s32.totalorder %s70, %s71
    %p80 = scmp.eq.s32.totalorder %s18, 0
    %p81 = por %p79, %p80
    %p82 = scmp.ne.s32.totalorder %s70, %s71
    %p83 = scmp.eq.s32.totalorder %s19, 1
    %p84 = por %p82, %p83
    %p86 = scmp.ne.s32.totalorder %s71, %s85
    %p87 = scmp.eq.s32.totalorder %s19, 0
    %p88 = por %p86, %p87
    %s90 = sadd.s32 %s89, 1
    %p93 = scmp.eq.s32.totalorder %s13, 1
    %p94 = scmp.ne.s32.totalorder %s89, %s91
    %p95 = scmp.eq.s32.totalorder %s13, 0
    %p96 = por %p94, %p95
    %p97 = scmp.ne.s32.totalorder %s89, %s91
    %p98 = scmp.eq.s32.totalorder %s18, 1
    %p99 = por %p97, %p98
    %p100 = scmp.ne.s32.totalorder %s91, %s92
    %p101 = scmp.eq.s32.totalorder %s18, 0
    %p102 = por %p100, %p101
    %p103 = scmp.ne.s32.totalorder %s91, %s92
    %p104 = scmp.eq.s32.totalorder %s19, 1
    %p105 = por %p103, %p104
    %p107 = scmp.ne.s32.totalorder %s92, %s106
    %p108 = scmp.eq.s32.totalorder %s19, 0
    %p109 = por %p107, %p108
    %s111 = sadd.s32 %s110, 1
    %p114 = scmp.eq.s32.totalorder %s13, 1
    %p115 = scmp.ne.s32.totalorder %s110, %s112
    %p116 = scmp.eq.s32.totalorder %s13, 0
    %p117 = por %p115, %p116
    %p118 = scmp.ne.s32.totalorder %s110, %s112
    %p119 = scmp.eq.s32.totalorder %s18, 1
    %p120 = por %p118, %p119
    %p121 = scmp.ne.s32.totalorder %s112, %s113
    %p122 = scmp.eq.s32.totalorder %s18, 0
    %p123 = por %p121, %p122
    %p124 = scmp.ne.s32.totalorder %s112, %s113
    %p125 = scmp.eq.s32.totalorder %s19, 1
    %p126 = por %p124, %p125
    %p128 = scmp.ne.s32.totalorder %s113, %s127
    %p129 = scmp.eq.s32.totalorder %s19, 0
    %p130 = por %p128, %p129
    %s132 = sadd.s32 %s131, 1
    %p135 = scmp.eq.s32.totalorder %s13, 1
    %p136 = scmp.ne.s32.totalorder %s131, %s133
    %p137 = scmp.eq.s32.totalorder %s13, 0
    %p138 = por %p136, %p137
    %p139 = scmp.ne.s32.totalorder %s131, %s133
    %p140 = scmp.eq.s32.totalorder %s18, 1
    %p141 = por %p139, %p140
    %p142 = scmp.ne.s32.totalorder %s133, %s134
    %p143 = scmp.eq.s32.totalorder %s18, 0
    %p144 = por %p142, %p143
    %p145 = scmp.ne.s32.totalorder %s133, %s134
    %p146 = scmp.eq.s32.totalorder %s19, 1
    %p147 = por %p145, %p146
    %p149 = scmp.ne.s32.totalorder %s134, %s148
    %p150 = scmp.eq.s32.totalorder %s19, 0
    %p151 = por %p149, %p150
    %s153 = sadd.s32 %s152, 1
    %p156 = scmp.eq.s32.totalorder %s13, 1
    %p157 = scmp.ne.s32.totalorder %s152, %s154
    %p158 = scmp.eq.s32.totalorder %s13, 0
    %p159 = por %p157, %p158
    %p160 = scmp.ne.s32.totalorder %s152, %s154
    %p161 = scmp.eq.s32.totalorder %s18, 1
    %p162 = por %p160, %p161
    %p163 = scmp.ne.s32.totalorder %s154, %s155
    %p164 = scmp.eq.s32.totalorder %s18, 0
    %p165 = por %p163, %p164
    %p166 = scmp.ne.s32.totalorder %s154, %s155
    %p167 = scmp.eq.s32.totalorder %s19, 1
    %p168 = por %p166, %p167
    %p170 = scmp.ne.s32.totalorder %s155, %s169
    %p171 = scmp.eq.s32.totalorder %s19, 0
    %p172 = por %p170, %p171
    %s173 = ssub.s32 %s13, %s20
    %p174 = scmp.eq.s32.totalorder %s173, 0
    %s176 = sadd.s32 %s175, 1
    %s177 = scalar_select %p174, %s175, %s176
    %p180 = pneg %p174
    %p181 = scmp.eq.s32.totalorder %s13, 1
    %p182 = por %p180, %p181
    %p183 = scmp.ne.s32.totalorder %s175, %s178
    %p184 = scmp.eq.s32.totalorder %s13, 0
    %p185 = por %p183, %p184
    %p186 = scmp.ne.s32.totalorder %s175, %s178
    %p187 = scmp.eq.s32.totalorder %s18, 1
    %p188 = por %p186, %p187
    %p189 = scmp.ne.s32.totalorder %s178, %s179
    %p190 = scmp.eq.s32.totalorder %s18, 0
    %p191 = por %p189, %p190
    %p192 = scmp.ne.s32.totalorder %s178, %s179
    %p193 = scmp.eq.s32.totalorder %s19, 1
    %p194 = por %p192, %p193
    %p196 = scmp.ne.s32.totalorder %s179, %s195
    %p197 = scmp.eq.s32.totalorder %s19, 0
    %p198 = por %p196, %p197
    %p199 = scmp.le.s32.totalorder 1, %s13
    %p200 = scmp.lt.s32.totalorder %s13, 3
    %p201 = pnand %p199, %p200
    %p202 = pneg %p201
    // Predicated region
    $region9: #{gnn_mot_forward.2} parent=5 // pred_check
      _
    $region10: #{gnn_mot_forward.2} parent=5 // pred_check_branch
      %204 = sbr.rel (%p201) target = $region12
    $region11: #{gnn_mot_forward.2} parent=5 // pred_region
      %s205 = ssub.s32 %s13, 1
      // Predicated region
      $region13: #{gnn_mot_forward.2} parent=11 // pred_check
        %p206 = pneg %p60
      $region14: #{gnn_mot_forward.2} parent=11 // pred_check_branch
        %208 = sbr.rel (%p206) target = $region16
      $region15: #{gnn_mot_forward.2} parent=11 // pred_region
        _
      $region16: #{gnn_mot_forward.2} parent=11 // pred_fallthru
        _
      // Predicated region
      $region17: #{gnn_mot_forward.2} parent=11 // pred_check
        %p209 = pneg %p81
      $region18: #{gnn_mot_forward.2} parent=11 // pred_check_branch
        %211 = sbr.rel (%p209) target = $region20
      $region19: #{gnn_mot_forward.2} parent=11 // pred_region
        _
      $region20: #{gnn_mot_forward.2} parent=11 // pred_fallthru
        _
      // Predicated region
      $region21: #{gnn_mot_forward.2} parent=11 // pred_check
        %p212 = pneg %p102
      $region22: #{gnn_mot_forward.2} parent=11 // pred_check_branch
        %214 = sbr.rel (%p212) target = $region24
      $region23: #{gnn_mot_forward.2} parent=11 // pred_region
        _
      $region24: #{gnn_mot_forward.2} parent=11 // pred_fallthru
        _
      // Predicated region
      $region25: #{gnn_mot_forward.2} parent=11 // pred_check
        %p215 = pneg %p123
      $region26: #{gnn_mot_forward.2} parent=11 // pred_check_branch
        %217 = sbr.rel (%p215) target = $region28
      $region27: #{gnn_mot_forward.2} parent=11 // pred_region
        _
      $region28: #{gnn_mot_forward.2} parent=11 // pred_fallthru
        _
      // Predicated region
      $region29: #{gnn_mot_forward.2} parent=11 // pred_check
        %p218 = pneg %p144
      $region30: #{gnn_mot_forward.2} parent=11 // pred_check_branch
        %220 = sbr.rel (%p218) target = $region32
      $region31: #{gnn_mot_forward.2} parent=11 // pred_region
        _
      $region32: #{gnn_mot_forward.2} parent=11 // pred_fallthru
        _
      // Predicated region
      $region33: #{gnn_mot_forward.2} parent=11 // pred_check
        %p221 = pneg %p165
      $region34: #{gnn_mot_forward.2} parent=11 // pred_check_branch
        %223 = sbr.rel (%p221) target = $region36
      $region35: #{gnn_mot_forward.2} parent=11 // pred_region
        _
      $region36: #{gnn_mot_forward.2} parent=11 // pred_fallthru
        _
    $region12: #{gnn_mot_forward.2} parent=5 // pred_fallthru
      _
    %p224 = scmp.lt.s32.totalorder %s13, 2
    // Predicated region
    $region37: #{gnn_mot_forward.2} parent=5 // pred_check
      %p225 = pneg %p224
    $region38: #{gnn_mot_forward.2} parent=5 // pred_check_branch
      %227 = sbr.rel (%p225) target = $region40
    $region39: #{gnn_mot_forward.2} parent=5 // pred_region
      // Predicated region
      $region41: #{gnn_mot_forward.2} parent=39 // pred_check
        %p228 = pneg %p33
      $region42: #{gnn_mot_forward.2} parent=39 // pred_check_branch
        %230 = sbr.rel (%p228) target = $region44
      $region43: #{gnn_mot_forward.2} parent=39 // pred_region
        %s231 = smul.u32 128, %s13
        %p232 = scmp.lt.s32.totalorder %s231, 255
        %s233 = scalar_select %p232, %s231, 255
        %s234 = smul.addr %s233, 8
        %s235 = scalar_lea.vmem %s0, %s234
        %s236 = smul.u32 128, %s13
      $region44: #{gnn_mot_forward.2} parent=39 // pred_fallthru
        _
    $region40: #{gnn_mot_forward.2} parent=5 // pred_fallthru
      _
    %p237 = scmp.le.s32.totalorder 1, %s13
    %p238 = scmp.lt.s32.totalorder %s13, 3
    %p239 = pnand %p237, %p238
    %p240 = pneg %p239
    // Predicated region
    $region45: #{gnn_mot_forward.2} parent=5 // pred_check
      _
    $region46: #{gnn_mot_forward.2} parent=5 // pred_check_branch
      %242 = sbr.rel (%p239) target = $region48
    $region47: #{gnn_mot_forward.2} parent=5 // pred_region
      %s243 = ssub.s32 %s13, 1
      %s244 = smul.u32 128, %s18
      %p245 = scmp.lt.s32.totalorder %s244, 255
      %s246 = scalar_select %p245, %s244, 255
      %s247 = smul.addr %s246, 8
      %s248 = scalar_lea.vmem %s0, %s247
      %p249 = pneg %p39
      %p250 = pneg %p36
      %p251 = pneg %p60
      %p252 = pneg %p57
      %p253 = pneg %p81
      %p254 = pneg %p78
      %p255 = pneg %p102
      %p256 = pneg %p99
      %p257 = pneg %p123
      %p258 = pneg %p120
      %p259 = pneg %p144
      %p260 = pneg %p141
      %p261 = pneg %p165
      %p262 = pneg %p162
      %p263 = pneg %p191
      %p264 = pneg %p188
      %p265 = scmp.lt.s32.totalorder %s18, 1
      %s266 = scalar_select %p265, %s18, 1
      %s267 = smul.addr %s266, 8
      %s268 = scalar_lea.vmem %s7, %s267
      %s269 = smul.u32 128, %s18
      %p270 = scmp.lt.s32.totalorder %s269, 255
      %s271 = scalar_select %p270, %s269, 255
      %s272 = smul.addr %s271, 8
      %s273 = scalar_lea.vmem %s0, %s272
      %s274 = smul.u32 128, %s18
      %p275 = scmp.lt.s32.totalorder %s18, 1
      %s276 = scalar_select %p275, %s18, 1
      %s277 = smul.addr %s276, 8
      %s278 = scalar_lea.vmem %s7, %s277
      %v280 = vld [vmem:[%s273] sm:$0xff]
      %v281 = vld [vmem:[%s273 + $0x8] sm:$0xff]
      %v282 = vld [vmem:[%s273 + $0x10] sm:$0xff]
      %v283 = vld [vmem:[%s273 + $0x18] sm:$0xff]
      %v284 = vld [vmem:[%s273 + $0x20] sm:$0xff]
      %v285 = vld [vmem:[%s273 + $0x28] sm:$0xff]
      %v286 = vld [vmem:[%s273 + $0x30] sm:$0xff]
      %v287 = vld [vmem:[%s273 + $0x38] sm:$0xff]
      %v288 = vld [vmem:[%s273 + $0x40] sm:$0xff]
      %v289 = vld [vmem:[%s273 + $0x48] sm:$0xff]
      %v290 = vld [vmem:[%s273 + $0x50] sm:$0xff]
      %v291 = vld [vmem:[%s273 + $0x58] sm:$0xff]
      %v292 = vld [vmem:[%s273 + $0x60] sm:$0xff]
      %v293 = vld [vmem:[%s273 + $0x68] sm:$0xff]
      %v294 = vld [vmem:[%s273 + $0x70] sm:$0xff]
      %v295 = vld [vmem:[%s273 + $0x78] sm:$0xff]
      %v296 = vld [vmem:[%s273 + $0x80] sm:$0xff]
      %v297 = vld [vmem:[%s273 + $0x88] sm:$0xff]
      %v298 = vld [vmem:[%s273 + $0x90] sm:$0xff]
      %v299 = vld [vmem:[%s273 + $0x98] sm:$0xff]
      %v300 = vld [vmem:[%s273 + $0xa0] sm:$0xff]
      %v301 = vld [vmem:[%s273 + $0xa8] sm:$0xff]
      %v302 = vld [vmem:[%s273 + $0xb0] sm:$0xff]
      %v303 = vld [vmem:[%s273 + $0xb8] sm:$0xff]
      %v304 = vld [vmem:[%s273 + $0xc0] sm:$0xff]
      %v305 = vld [vmem:[%s273 + $0xc8] sm:$0xff]
      %v306 = vld [vmem:[%s273 + $0xd0] sm:$0xff]
      %v307 = vld [vmem:[%s273 + $0xd8] sm:$0xff]
      %v308 = vld [vmem:[%s273 + $0xe0] sm:$0xff]
      %v309 = vld [vmem:[%s273 + $0xe8] sm:$0xff]
      %v310 = vld [vmem:[%s273 + $0xf0] sm:$0xff]
      %v311 = vld [vmem:[%s273 + $0xf8] sm:$0xff]
      %v312 = vld [vmem:[%s273 + $0x100] sm:$0xff]
      %v313 = vld [vmem:[%s273 + $0x108] sm:$0xff]
      %v314 = vld [vmem:[%s273 + $0x110] sm:$0xff]
      %v315 = vld [vmem:[%s273 + $0x118] sm:$0xff]
      %v316 = vld [vmem:[%s273 + $0x120] sm:$0xff]
      %v317 = vld [vmem:[%s273 + $0x128] sm:$0xff]
      %v318 = vld [vmem:[%s273 + $0x130] sm:$0xff]
      %v319 = vld [vmem:[%s273 + $0x138] sm:$0xff]
      %v320 = vld [vmem:[%s273 + $0x140] sm:$0xff]
      %v321 = vld [vmem:[%s273 + $0x148] sm:$0xff]
      %v322 = vld [vmem:[%s273 + $0x150] sm:$0xff]
      %v323 = vld [vmem:[%s273 + $0x158] sm:$0xff]
      %v324 = vld [vmem:[%s273 + $0x160] sm:$0xff]
      %v325 = vld [vmem:[%s273 + $0x168] sm:$0xff]
      %v326 = vld [vmem:[%s273 + $0x170] sm:$0xff]
      %v327 = vld [vmem:[%s273 + $0x178] sm:$0xff]
      %v328 = vld [vmem:[%s273 + $0x180] sm:$0xff]
      %v329 = vld [vmem:[%s273 + $0x188] sm:$0xff]
      %v330 = vld [vmem:[%s273 + $0x190] sm:$0xff]
      %v331 = vld [vmem:[%s273 + $0x198] sm:$0xff]
      %v332 = vld [vmem:[%s273 + $0x1a0] sm:$0xff]
      %v333 = vld [vmem:[%s273 + $0x1a8] sm:$0xff]
      %v334 = vld [vmem:[%s273 + $0x1b0] sm:$0xff]
      %v335 = vld [vmem:[%s273 + $0x1b8] sm:$0xff]
      %v336 = vld [vmem:[%s273 + $0x1c0] sm:$0xff]
      %v337 = vld [vmem:[%s273 + $0x1c8] sm:$0xff]
      %v338 = vld [vmem:[%s273 + $0x1d0] sm:$0xff]
      %v339 = vld [vmem:[%s273 + $0x1d8] sm:$0xff]
      %v340 = vld [vmem:[%s273 + $0x1e0] sm:$0xff]
      %v341 = vld [vmem:[%s273 + $0x1e8] sm:$0xff]
      %v342 = vld [vmem:[%s273 + $0x1f0] sm:$0xff]
      %v343 = vld [vmem:[%s273 + $0x1f8] sm:$0xff]
      %v344 = vld [vmem:[%s273 + $0x200] sm:$0xff]
      %v345 = vld [vmem:[%s273 + $0x208] sm:$0xff]
      %v346 = vld [vmem:[%s273 + $0x210] sm:$0xff]
      %v347 = vld [vmem:[%s273 + $0x218] sm:$0xff]
      %v348 = vld [vmem:[%s273 + $0x220] sm:$0xff]
      %v349 = vld [vmem:[%s273 + $0x228] sm:$0xff]
      %v350 = vld [vmem:[%s273 + $0x230] sm:$0xff]
      %v351 = vld [vmem:[%s273 + $0x238] sm:$0xff]
      %v352 = vld [vmem:[%s273 + $0x240] sm:$0xff]
      %v353 = vld [vmem:[%s273 + $0x248] sm:$0xff]
      %v354 = vld [vmem:[%s273 + $0x250] sm:$0xff]
      %v355 = vld [vmem:[%s273 + $0x258] sm:$0xff]
      %v356 = vld [vmem:[%s273 + $0x260] sm:$0xff]
      %v357 = vld [vmem:[%s273 + $0x268] sm:$0xff]
      %v358 = vld [vmem:[%s273 + $0x270] sm:$0xff]
      %v359 = vld [vmem:[%s273 + $0x278] sm:$0xff]
      %v360 = vld [vmem:[%s273 + $0x280] sm:$0xff]
      %v361 = vld [vmem:[%s273 + $0x288] sm:$0xff]
      %v362 = vld [vmem:[%s273 + $0x290] sm:$0xff]
      %v363 = vld [vmem:[%s273 + $0x298] sm:$0xff]
      %v364 = vld [vmem:[%s273 + $0x2a0] sm:$0xff]
      %v365 = vld [vmem:[%s273 + $0x2a8] sm:$0xff]
      %v366 = vld [vmem:[%s273 + $0x2b0] sm:$0xff]
      %v367 = vld [vmem:[%s273 + $0x2b8] sm:$0xff]
      %v368 = vld [vmem:[%s273 + $0x2c0] sm:$0xff]
      %v369 = vld [vmem:[%s273 + $0x2c8] sm:$0xff]
      %v370 = vld [vmem:[%s273 + $0x2d0] sm:$0xff]
      %v371 = vld [vmem:[%s273 + $0x2d8] sm:$0xff]
      %v372 = vld [vmem:[%s273 + $0x2e0] sm:$0xff]
      %v373 = vld [vmem:[%s273 + $0x2e8] sm:$0xff]
      %v374 = vld [vmem:[%s273 + $0x2f0] sm:$0xff]
      %v375 = vld [vmem:[%s273 + $0x2f8] sm:$0xff]
      %v376 = vld [vmem:[%s273 + $0x300] sm:$0xff]
      %v377 = vld [vmem:[%s273 + $0x308] sm:$0xff]
      %v378 = vld [vmem:[%s273 + $0x310] sm:$0xff]
      %v379 = vld [vmem:[%s273 + $0x318] sm:$0xff]
      %v380 = vld [vmem:[%s273 + $0x320] sm:$0xff]
      %v381 = vld [vmem:[%s273 + $0x328] sm:$0xff]
      %v382 = vld [vmem:[%s273 + $0x330] sm:$0xff]
      %v383 = vld [vmem:[%s273 + $0x338] sm:$0xff]
      %v384 = vld [vmem:[%s273 + $0x340] sm:$0xff]
      %v385 = vld [vmem:[%s273 + $0x348] sm:$0xff]
      %v386 = vld [vmem:[%s273 + $0x350] sm:$0xff]
      %v387 = vld [vmem:[%s273 + $0x358] sm:$0xff]
      %v388 = vld [vmem:[%s273 + $0x360] sm:$0xff]
      %v389 = vld [vmem:[%s273 + $0x368] sm:$0xff]
      %v390 = vld [vmem:[%s273 + $0x370] sm:$0xff]
      %v391 = vld [vmem:[%s273 + $0x378] sm:$0xff]
      %v392 = vld [vmem:[%s273 + $0x380] sm:$0xff]
      %v393 = vld [vmem:[%s273 + $0x388] sm:$0xff]
      %v394 = vld [vmem:[%s273 + $0x390] sm:$0xff]
      %v395 = vld [vmem:[%s273 + $0x398] sm:$0xff]
      %v396 = vld [vmem:[%s273 + $0x3a0] sm:$0xff]
      %v397 = vld [vmem:[%s273 + $0x3a8] sm:$0xff]
      %v398 = vld [vmem:[%s273 + $0x3b0] sm:$0xff]
      %v399 = vld [vmem:[%s273 + $0x3b8] sm:$0xff]
      %v400 = vld [vmem:[%s273 + $0x3c0] sm:$0xff]
      %v401 = vld [vmem:[%s273 + $0x3c8] sm:$0xff]
      %v402 = vld [vmem:[%s273 + $0x3d0] sm:$0xff]
      %v403 = vld [vmem:[%s273 + $0x3d8] sm:$0xff]
      %v404 = vld [vmem:[%s273 + $0x3e0] sm:$0xff]
      %v405 = vld [vmem:[%s273 + $0x3e8] sm:$0xff]
      %v406 = vld [vmem:[%s273 + $0x3f0] sm:$0xff]
      %v407 = vld [vmem:[%s273 + $0x3f8] sm:$0xff]
      %v408 = vld [vmem:[%s1] sm:$0x7]
      %410 = vset.pattern.permute.xlu0 0
      %411 = vperm.xlu0 %410, %v280
      %v412 = vpop.permute.xlu0 %411
      %415 = vset.pattern.permute.xlu0 0
      %416 = vperm.xlu0 %415, %v281
      %v417 = vpop.permute.xlu0 %416
      %420 = vset.pattern.permute.xlu0 0
      %421 = vperm.xlu0 %420, %v282
      %v422 = vpop.permute.xlu0 %421
      %425 = vset.pattern.permute.xlu0 0
      %426 = vperm.xlu0 %425, %v283
      %v427 = vpop.permute.xlu0 %426
      %430 = vset.pattern.permute.xlu0 0
      %431 = vperm.xlu0 %430, %v284
      %v432 = vpop.permute.xlu0 %431
      %435 = vset.pattern.permute.xlu0 0
      %436 = vperm.xlu0 %435, %v285
      %v437 = vpop.permute.xlu0 %436
      %440 = vset.pattern.permute.xlu0 0
      %441 = vperm.xlu0 %440, %v286
      %v442 = vpop.permute.xlu0 %441
      %445 = vset.pattern.permute.xlu0 0
      %446 = vperm.xlu0 %445, %v287
      %v447 = vpop.permute.xlu0 %446
      %450 = vset.pattern.permute.xlu0 0
      %451 = vperm.xlu0 %450, %v288
      %v452 = vpop.permute.xlu0 %451
      %455 = vset.pattern.permute.xlu0 0
      %456 = vperm.xlu0 %455, %v289
      %v457 = vpop.permute.xlu0 %456
      %460 = vset.pattern.permute.xlu0 0
      %461 = vperm.xlu0 %460, %v290
      %v462 = vpop.permute.xlu0 %461
      %465 = vset.pattern.permute.xlu0 0
      %466 = vperm.xlu0 %465, %v291
      %v467 = vpop.permute.xlu0 %466
      %470 = vset.pattern.permute.xlu0 0
      %471 = vperm.xlu0 %470, %v292
      %v472 = vpop.permute.xlu0 %471
      %475 = vset.pattern.permute.xlu0 0
      %476 = vperm.xlu0 %475, %v293
      %v477 = vpop.permute.xlu0 %476
      %480 = vset.pattern.permute.xlu0 0
      %481 = vperm.xlu0 %480, %v294
      %v482 = vpop.permute.xlu0 %481
      %485 = vset.pattern.permute.xlu0 0
      %486 = vperm.xlu0 %485, %v295
      %v487 = vpop.permute.xlu0 %486
      %490 = vset.pattern.permute.xlu0 0
      %491 = vperm.xlu0 %490, %v296
      %v492 = vpop.permute.xlu0 %491
      %495 = vset.pattern.permute.xlu0 0
      %496 = vperm.xlu0 %495, %v297
      %v497 = vpop.permute.xlu0 %496
      %500 = vset.pattern.permute.xlu0 0
      %501 = vperm.xlu0 %500, %v298
      %v502 = vpop.permute.xlu0 %501
      %505 = vset.pattern.permute.xlu0 0
      %506 = vperm.xlu0 %505, %v299
      %v507 = vpop.permute.xlu0 %506
      %510 = vset.pattern.permute.xlu0 0
      %511 = vperm.xlu0 %510, %v300
      %v512 = vpop.permute.xlu0 %511
      %515 = vset.pattern.permute.xlu0 0
      %516 = vperm.xlu0 %515, %v301
      %v517 = vpop.permute.xlu0 %516
      %520 = vset.pattern.permute.xlu0 0
      %521 = vperm.xlu0 %520, %v302
      %v522 = vpop.permute.xlu0 %521
      %525 = vset.pattern.permute.xlu0 0
      %526 = vperm.xlu0 %525, %v303
      %v527 = vpop.permute.xlu0 %526
      %530 = vset.pattern.permute.xlu0 0
      %531 = vperm.xlu0 %530, %v304
      %v532 = vpop.permute.xlu0 %531
      %535 = vset.pattern.permute.xlu0 0
      %536 = vperm.xlu0 %535, %v305
      %v537 = vpop.permute.xlu0 %536
      %540 = vset.pattern.permute.xlu0 0
      %541 = vperm.xlu0 %540, %v306
      %v542 = vpop.permute.xlu0 %541
      %545 = vset.pattern.permute.xlu0 0
      %546 = vperm.xlu0 %545, %v307
      %v547 = vpop.permute.xlu0 %546
      %550 = vset.pattern.permute.xlu0 0
      %551 = vperm.xlu0 %550, %v308
      %v552 = vpop.permute.xlu0 %551
      %555 = vset.pattern.permute.xlu0 0
      %556 = vperm.xlu0 %555, %v309
      %v557 = vpop.permute.xlu0 %556
      %560 = vset.pattern.permute.xlu0 0
      %561 = vperm.xlu0 %560, %v310
      %v562 = vpop.permute.xlu0 %561
      %565 = vset.pattern.permute.xlu0 0
      %566 = vperm.xlu0 %565, %v311
      %v567 = vpop.permute.xlu0 %566
      %570 = vset.pattern.permute.xlu0 0
      %571 = vperm.xlu0 %570, %v312
      %v572 = vpop.permute.xlu0 %571
      %575 = vset.pattern.permute.xlu0 0
      %576 = vperm.xlu0 %575, %v313
      %v577 = vpop.permute.xlu0 %576
      %580 = vset.pattern.permute.xlu0 0
      %581 = vperm.xlu0 %580, %v314
      %v582 = vpop.permute.xlu0 %581
      %585 = vset.pattern.permute.xlu0 0
      %586 = vperm.xlu0 %585, %v315
      %v587 = vpop.permute.xlu0 %586
      %590 = vset.pattern.permute.xlu0 0
      %591 = vperm.xlu0 %590, %v316
      %v592 = vpop.permute.xlu0 %591
      %595 = vset.pattern.permute.xlu0 0
      %596 = vperm.xlu0 %595, %v317
      %v597 = vpop.permute.xlu0 %596
      %600 = vset.pattern.permute.xlu0 0
      %601 = vperm.xlu0 %600, %v318
      %v602 = vpop.permute.xlu0 %601
      %605 = vset.pattern.permute.xlu0 0
      %606 = vperm.xlu0 %605, %v319
      %v607 = vpop.permute.xlu0 %606
      %610 = vset.pattern.permute.xlu0 0
      %611 = vperm.xlu0 %610, %v320
      %v612 = vpop.permute.xlu0 %611
      %615 = vset.pattern.permute.xlu0 0
      %616 = vperm.xlu0 %615, %v321
      %v617 = vpop.permute.xlu0 %616
      %620 = vset.pattern.permute.xlu0 0
      %621 = vperm.xlu0 %620, %v322
      %v622 = vpop.permute.xlu0 %621
      %625 = vset.pattern.permute.xlu0 0
      %626 = vperm.xlu0 %625, %v323
      %v627 = vpop.permute.xlu0 %626
      %630 = vset.pattern.permute.xlu0 0
      %631 = vperm.xlu0 %630, %v324
      %v632 = vpop.permute.xlu0 %631
      %635 = vset.pattern.permute.xlu0 0
      %636 = vperm.xlu0 %635, %v325
      %v637 = vpop.permute.xlu0 %636
      %640 = vset.pattern.permute.xlu0 0
      %641 = vperm.xlu0 %640, %v326
      %v642 = vpop.permute.xlu0 %641
      %645 = vset.pattern.permute.xlu0 0
      %646 = vperm.xlu0 %645, %v327
      %v647 = vpop.permute.xlu0 %646
      %650 = vset.pattern.permute.xlu0 0
      %651 = vperm.xlu0 %650, %v328
      %v652 = vpop.permute.xlu0 %651
      %655 = vset.pattern.permute.xlu0 0
      %656 = vperm.xlu0 %655, %v329
      %v657 = vpop.permute.xlu0 %656
      %660 = vset.pattern.permute.xlu0 0
      %661 = vperm.xlu0 %660, %v330
      %v662 = vpop.permute.xlu0 %661
      %665 = vset.pattern.permute.xlu0 0
      %666 = vperm.xlu0 %665, %v331
      %v667 = vpop.permute.xlu0 %666
      %670 = vset.pattern.permute.xlu0 0
      %671 = vperm.xlu0 %670, %v332
      %v672 = vpop.permute.xlu0 %671
      %675 = vset.pattern.permute.xlu0 0
      %676 = vperm.xlu0 %675, %v333
      %v677 = vpop.permute.xlu0 %676
      %680 = vset.pattern.permute.xlu0 0
      %681 = vperm.xlu0 %680, %v334
      %v682 = vpop.permute.xlu0 %681
      %685 = vset.pattern.permute.xlu0 0
      %686 = vperm.xlu0 %685, %v335
      %v687 = vpop.permute.xlu0 %686
      %690 = vset.pattern.permute.xlu0 0
      %691 = vperm.xlu0 %690, %v336
      %v692 = vpop.permute.xlu0 %691
      %695 = vset.pattern.permute.xlu0 0
      %696 = vperm.xlu0 %695, %v337
      %v697 = vpop.permute.xlu0 %696
      %700 = vset.pattern.permute.xlu0 0
      %701 = vperm.xlu0 %700, %v338
      %v702 = vpop.permute.xlu0 %701
      %705 = vset.pattern.permute.xlu0 0
      %706 = vperm.xlu0 %705, %v339
      %v707 = vpop.permute.xlu0 %706
      %710 = vset.pattern.permute.xlu0 0
      %711 = vperm.xlu0 %710, %v340
      %v712 = vpop.permute.xlu0 %711
      %715 = vset.pattern.permute.xlu0 0
      %716 = vperm.xlu0 %715, %v341
      %v717 = vpop.permute.xlu0 %716
      %720 = vset.pattern.permute.xlu0 0
      %721 = vperm.xlu0 %720, %v342
      %v722 = vpop.permute.xlu0 %721
      %725 = vset.pattern.permute.xlu0 0
      %726 = vperm.xlu0 %725, %v343
      %v727 = vpop.permute.xlu0 %726
      %730 = vset.pattern.permute.xlu0 0
      %731 = vperm.xlu0 %730, %v344
      %v732 = vpop.permute.xlu0 %731
      %735 = vset.pattern.permute.xlu0 0
      %736 = vperm.xlu0 %735, %v345
      %v737 = vpop.permute.xlu0 %736
      %740 = vset.pattern.permute.xlu0 0
      %741 = vperm.xlu0 %740, %v346
      %v742 = vpop.permute.xlu0 %741
      %745 = vset.pattern.permute.xlu0 0
      %746 = vperm.xlu0 %745, %v347
      %v747 = vpop.permute.xlu0 %746
      %750 = vset.pattern.permute.xlu0 0
      %751 = vperm.xlu0 %750, %v348
      %v752 = vpop.permute.xlu0 %751
      %755 = vset.pattern.permute.xlu0 0
      %756 = vperm.xlu0 %755, %v349
      %v757 = vpop.permute.xlu0 %756
      %760 = vset.pattern.permute.xlu0 0
      %761 = vperm.xlu0 %760, %v350
      %v762 = vpop.permute.xlu0 %761
      %765 = vset.pattern.permute.xlu0 0
      %766 = vperm.xlu0 %765, %v351
      %v767 = vpop.permute.xlu0 %766
      %770 = vset.pattern.permute.xlu0 0
      %771 = vperm.xlu0 %770, %v352
      %v772 = vpop.permute.xlu0 %771
      %775 = vset.pattern.permute.xlu0 0
      %776 = vperm.xlu0 %775, %v353
      %v777 = vpop.permute.xlu0 %776
      %780 = vset.pattern.permute.xlu0 0
      %781 = vperm.xlu0 %780, %v354
      %v782 = vpop.permute.xlu0 %781
      %785 = vset.pattern.permute.xlu0 0
      %786 = vperm.xlu0 %785, %v355
      %v787 = vpop.permute.xlu0 %786
      %790 = vset.pattern.permute.xlu0 0
      %791 = vperm.xlu0 %790, %v356
      %v792 = vpop.permute.xlu0 %791
      %795 = vset.pattern.permute.xlu0 0
      %796 = vperm.xlu0 %795, %v357
      %v797 = vpop.permute.xlu0 %796
      %800 = vset.pattern.permute.xlu0 0
      %801 = vperm.xlu0 %800, %v358
      %v802 = vpop.permute.xlu0 %801
      %805 = vset.pattern.permute.xlu0 0
      %806 = vperm.xlu0 %805, %v359
      %v807 = vpop.permute.xlu0 %806
      %810 = vset.pattern.permute.xlu0 0
      %811 = vperm.xlu0 %810, %v360
      %v812 = vpop.permute.xlu0 %811
      %815 = vset.pattern.permute.xlu0 0
      %816 = vperm.xlu0 %815, %v361
      %v817 = vpop.permute.xlu0 %816
      %820 = vset.pattern.permute.xlu0 0
      %821 = vperm.xlu0 %820, %v362
      %v822 = vpop.permute.xlu0 %821
      %825 = vset.pattern.permute.xlu0 0
      %826 = vperm.xlu0 %825, %v363
      %v827 = vpop.permute.xlu0 %826
      %830 = vset.pattern.permute.xlu0 0
      %831 = vperm.xlu0 %830, %v364
      %v832 = vpop.permute.xlu0 %831
      %835 = vset.pattern.permute.xlu0 0
      %836 = vperm.xlu0 %835, %v365
      %v837 = vpop.permute.xlu0 %836
      %840 = vset.pattern.permute.xlu0 0
      %841 = vperm.xlu0 %840, %v366
      %v842 = vpop.permute.xlu0 %841
      %845 = vset.pattern.permute.xlu0 0
      %846 = vperm.xlu0 %845, %v367
      %v847 = vpop.permute.xlu0 %846
      %850 = vset.pattern.permute.xlu0 0
      %851 = vperm.xlu0 %850, %v368
      %v852 = vpop.permute.xlu0 %851
      %855 = vset.pattern.permute.xlu0 0
      %856 = vperm.xlu0 %855, %v369
      %v857 = vpop.permute.xlu0 %856
      %860 = vset.pattern.permute.xlu0 0
      %861 = vperm.xlu0 %860, %v370
      %v862 = vpop.permute.xlu0 %861
      %865 = vset.pattern.permute.xlu0 0
      %866 = vperm.xlu0 %865, %v371
      %v867 = vpop.permute.xlu0 %866
      %870 = vset.pattern.permute.xlu0 0
      %871 = vperm.xlu0 %870, %v372
      %v872 = vpop.permute.xlu0 %871
      %875 = vset.pattern.permute.xlu0 0
      %876 = vperm.xlu0 %875, %v373
      %v877 = vpop.permute.xlu0 %876
      %880 = vset.pattern.permute.xlu0 0
      %881 = vperm.xlu0 %880, %v374
      %v882 = vpop.permute.xlu0 %881
      %885 = vset.pattern.permute.xlu0 0
      %886 = vperm.xlu0 %885, %v375
      %v887 = vpop.permute.xlu0 %886
      %890 = vset.pattern.permute.xlu0 0
      %891 = vperm.xlu0 %890, %v376
      %v892 = vpop.permute.xlu0 %891
      %895 = vset.pattern.permute.xlu0 0
      %896 = vperm.xlu0 %895, %v377
      %v897 = vpop.permute.xlu0 %896
      %900 = vset.pattern.permute.xlu0 0
      %901 = vperm.xlu0 %900, %v378
      %v902 = vpop.permute.xlu0 %901
      %905 = vset.pattern.permute.xlu0 0
      %906 = vperm.xlu0 %905, %v379
      %v907 = vpop.permute.xlu0 %906
      %910 = vset.pattern.permute.xlu0 0
      %911 = vperm.xlu0 %910, %v380
      %v912 = vpop.permute.xlu0 %911
      %915 = vset.pattern.permute.xlu0 0
      %916 = vperm.xlu0 %915, %v381
      %v917 = vpop.permute.xlu0 %916
      %920 = vset.pattern.permute.xlu0 0
      %921 = vperm.xlu0 %920, %v382
      %v922 = vpop.permute.xlu0 %921
      %925 = vset.pattern.permute.xlu0 0
      %926 = vperm.xlu0 %925, %v383
      %v927 = vpop.permute.xlu0 %926
      %930 = vset.pattern.permute.xlu0 0
      %931 = vperm.xlu0 %930, %v384
      %v932 = vpop.permute.xlu0 %931
      %935 = vset.pattern.permute.xlu0 0
      %936 = vperm.xlu0 %935, %v385
      %v937 = vpop.permute.xlu0 %936
      %940 = vset.pattern.permute.xlu0 0
      %941 = vperm.xlu0 %940, %v386
      %v942 = vpop.permute.xlu0 %941
      %945 = vset.pattern.permute.xlu0 0
      %946 = vperm.xlu0 %945, %v387
      %v947 = vpop.permute.xlu0 %946
      %950 = vset.pattern.permute.xlu0 0
      %951 = vperm.xlu0 %950, %v388
      %v952 = vpop.permute.xlu0 %951
      %955 = vset.pattern.permute.xlu0 0
      %956 = vperm.xlu0 %955, %v389
      %v957 = vpop.permute.xlu0 %956
      %960 = vset.pattern.permute.xlu0 0
      %961 = vperm.xlu0 %960, %v390
      %v962 = vpop.permute.xlu0 %961
      %965 = vset.pattern.permute.xlu0 0
      %966 = vperm.xlu0 %965, %v391
      %v967 = vpop.permute.xlu0 %966
      %970 = vset.pattern.permute.xlu0 0
      %971 = vperm.xlu0 %970, %v392
      %v972 = vpop.permute.xlu0 %971
      %975 = vset.pattern.permute.xlu0 0
      %976 = vperm.xlu0 %975, %v393
      %v977 = vpop.permute.xlu0 %976
      %980 = vset.pattern.permute.xlu0 0
      %981 = vperm.xlu0 %980, %v394
      %v982 = vpop.permute.xlu0 %981
      %985 = vset.pattern.permute.xlu0 0
      %986 = vperm.xlu0 %985, %v395
      %v987 = vpop.permute.xlu0 %986
      %990 = vset.pattern.permute.xlu0 0
      %991 = vperm.xlu0 %990, %v396
      %v992 = vpop.permute.xlu0 %991
      %995 = vset.pattern.permute.xlu0 0
      %996 = vperm.xlu0 %995, %v397
      %v997 = vpop.permute.xlu0 %996
      %1000 = vset.pattern.permute.xlu0 0
      %1001 = vperm.xlu0 %1000, %v398
      %v1002 = vpop.permute.xlu0 %1001
      %1005 = vset.pattern.permute.xlu0 0
      %1006 = vperm.xlu0 %1005, %v399
      %v1007 = vpop.permute.xlu0 %1006
      %1010 = vset.pattern.permute.xlu0 0
      %1011 = vperm.xlu0 %1010, %v400
      %v1012 = vpop.permute.xlu0 %1011
      %1015 = vset.pattern.permute.xlu0 0
      %1016 = vperm.xlu0 %1015, %v401
      %v1017 = vpop.permute.xlu0 %1016
      %1020 = vset.pattern.permute.xlu0 0
      %1021 = vperm.xlu0 %1020, %v402
      %v1022 = vpop.permute.xlu0 %1021
      %1025 = vset.pattern.permute.xlu0 0
      %1026 = vperm.xlu0 %1025, %v403
      %v1027 = vpop.permute.xlu0 %1026
      %1030 = vset.pattern.permute.xlu0 0
      %1031 = vperm.xlu0 %1030, %v404
      %v1032 = vpop.permute.xlu0 %1031
      %1035 = vset.pattern.permute.xlu0 0
      %1036 = vperm.xlu0 %1035, %v405
      %v1037 = vpop.permute.xlu0 %1036
      %1040 = vset.pattern.permute.xlu0 0
      %1041 = vperm.xlu0 %1040, %v406
      %v1042 = vpop.permute.xlu0 %1041
      %1045 = vset.pattern.permute.xlu0 0
      %1046 = vperm.xlu0 %1045, %v407
      %v1047 = vpop.permute.xlu0 %1046
      %v1049 = vlaneseq
      %v1050 = vshrl.u32 %v1049, 7
      %v1051 = vsub.s32 0, %v1050
      %v1052 = vrot.slane %v408, %v1051
      %v1053 = vmul.f32 %v412, %v1052
      %v1054 = vmul.f32 %v417, %v1052
      %v1055 = vmul.f32 %v422, %v1052
      %v1056 = vmul.f32 %v427, %v1052
      %v1057 = vmul.f32 %v432, %v1052
      %v1058 = vmul.f32 %v437, %v1052
      %v1059 = vmul.f32 %v442, %v1052
      %v1060 = vmul.f32 %v447, %v1052
      %v1061 = vmul.f32 %v452, %v1052
      %v1062 = vmul.f32 %v457, %v1052
      %v1063 = vmul.f32 %v462, %v1052
      %v1064 = vmul.f32 %v467, %v1052
      %v1065 = vmul.f32 %v472, %v1052
      %v1066 = vmul.f32 %v477, %v1052
      %v1067 = vmul.f32 %v482, %v1052
      %v1068 = vmul.f32 %v487, %v1052
      %v1069 = vmul.f32 %v492, %v1052
      %v1070 = vmul.f32 %v497, %v1052
      %v1071 = vmul.f32 %v502, %v1052
      %v1072 = vmul.f32 %v507, %v1052
      %v1073 = vmul.f32 %v512, %v1052
      %v1074 = vmul.f32 %v517, %v1052
      %v1075 = vmul.f32 %v522, %v1052
      %v1076 = vmul.f32 %v527, %v1052
      %v1077 = vmul.f32 %v532, %v1052
      %v1078 = vmul.f32 %v537, %v1052
      %v1079 = vmul.f32 %v542, %v1052
      %v1080 = vmul.f32 %v547, %v1052
      %v1081 = vmul.f32 %v552, %v1052
      %v1082 = vmul.f32 %v557, %v1052
      %v1083 = vmul.f32 %v562, %v1052
      %v1084 = vmul.f32 %v567, %v1052
      %v1085 = vmul.f32 %v572, %v1052
      %v1086 = vmul.f32 %v577, %v1052
      %v1087 = vmul.f32 %v582, %v1052
      %v1088 = vmul.f32 %v587, %v1052
      %v1089 = vmul.f32 %v592, %v1052
      %v1090 = vmul.f32 %v597, %v1052
      %v1091 = vmul.f32 %v602, %v1052
      %v1092 = vmul.f32 %v607, %v1052
      %v1093 = vmul.f32 %v612, %v1052
      %v1094 = vmul.f32 %v617, %v1052
      %v1095 = vmul.f32 %v622, %v1052
      %v1096 = vmul.f32 %v627, %v1052
      %v1097 = vmul.f32 %v632, %v1052
      %v1098 = vmul.f32 %v637, %v1052
      %v1099 = vmul.f32 %v642, %v1052
      %v1100 = vmul.f32 %v647, %v1052
      %v1101 = vmul.f32 %v652, %v1052
      %v1102 = vmul.f32 %v657, %v1052
      %v1103 = vmul.f32 %v662, %v1052
      %v1104 = vmul.f32 %v667, %v1052
      %v1105 = vmul.f32 %v672, %v1052
      %v1106 = vmul.f32 %v677, %v1052
      %v1107 = vmul.f32 %v682, %v1052
      %v1108 = vmul.f32 %v687, %v1052
      %v1109 = vmul.f32 %v692, %v1052
      %v1110 = vmul.f32 %v697, %v1052
      %v1111 = vmul.f32 %v702, %v1052
      %v1112 = vmul.f32 %v707, %v1052
      %v1113 = vmul.f32 %v712, %v1052
      %v1114 = vmul.f32 %v717, %v1052
      %v1115 = vmul.f32 %v722, %v1052
      %v1116 = vmul.f32 %v727, %v1052
      %v1117 = vmul.f32 %v732, %v1052
      %v1118 = vmul.f32 %v737, %v1052
      %v1119 = vmul.f32 %v742, %v1052
      %v1120 = vmul.f32 %v747, %v1052
      %v1121 = vmul.f32 %v752, %v1052
      %v1122 = vmul.f32 %v757, %v1052
      %v1123 = vmul.f32 %v762, %v1052
      %v1124 = vmul.f32 %v767, %v1052
      %v1125 = vmul.f32 %v772, %v1052
      %v1126 = vmul.f32 %v777, %v1052
      %v1127 = vmul.f32 %v782, %v1052
      %v1128 = vmul.f32 %v787, %v1052
      %v1129 = vmul.f32 %v792, %v1052
      %v1130 = vmul.f32 %v797, %v1052
      %v1131 = vmul.f32 %v802, %v1052
      %v1132 = vmul.f32 %v807, %v1052
      %v1133 = vmul.f32 %v812, %v1052
      %v1134 = vmul.f32 %v817, %v1052
      %v1135 = vmul.f32 %v822, %v1052
      %v1136 = vmul.f32 %v827, %v1052
      %v1137 = vmul.f32 %v832, %v1052
      %v1138 = vmul.f32 %v837, %v1052
      %v1139 = vmul.f32 %v842, %v1052
      %v1140 = vmul.f32 %v847, %v1052
      %v1141 = vmul.f32 %v852, %v1052
      %v1142 = vmul.f32 %v857, %v1052
      %v1143 = vmul.f32 %v862, %v1052
      %v1144 = vmul.f32 %v867, %v1052
      %v1145 = vmul.f32 %v872, %v1052
      %v1146 = vmul.f32 %v877, %v1052
      %v1147 = vmul.f32 %v882, %v1052
      %v1148 = vmul.f32 %v887, %v1052
      %v1149 = vmul.f32 %v892, %v1052
      %v1150 = vmul.f32 %v897, %v1052
      %v1151 = vmul.f32 %v902, %v1052
      %v1152 = vmul.f32 %v907, %v1052
      %v1153 = vmul.f32 %v912, %v1052
      %v1154 = vmul.f32 %v917, %v1052
      %v1155 = vmul.f32 %v922, %v1052
      %v1156 = vmul.f32 %v927, %v1052
      %v1157 = vmul.f32 %v932, %v1052
      %v1158 = vmul.f32 %v937, %v1052
      %v1159 = vmul.f32 %v942, %v1052
      %v1160 = vmul.f32 %v947, %v1052
      %v1161 = vmul.f32 %v952, %v1052
      %v1162 = vmul.f32 %v957, %v1052
      %v1163 = vmul.f32 %v962, %v1052
      %v1164 = vmul.f32 %v967, %v1052
      %v1165 = vmul.f32 %v972, %v1052
      %v1166 = vmul.f32 %v977, %v1052
      %v1167 = vmul.f32 %v982, %v1052
      %v1168 = vmul.f32 %v987, %v1052
      %v1169 = vmul.f32 %v992, %v1052
      %v1170 = vmul.f32 %v997, %v1052
      %v1171 = vmul.f32 %v1002, %v1052
      %v1172 = vmul.f32 %v1007, %v1052
      %v1173 = vmul.f32 %v1012, %v1052
      %v1174 = vmul.f32 %v1017, %v1052
      %v1175 = vmul.f32 %v1022, %v1052
      %v1176 = vmul.f32 %v1027, %v1052
      %v1177 = vmul.f32 %v1032, %v1052
      %v1178 = vmul.f32 %v1037, %v1052
      %v1179 = vmul.f32 %v1042, %v1052
      %v1180 = vmul.f32 %v1047, %v1052
      %1181 = vset.pattern.permute.xlu0 1
      %1182 = vperm.xlu0 %1181, %v280
      %v1183 = vpop.permute.xlu0 %1182
      %1185 = vset.pattern.permute.xlu0 1
      %1186 = vperm.xlu0 %1185, %v281
      %v1187 = vpop.permute.xlu0 %1186
      %1189 = vset.pattern.permute.xlu0 1
      %1190 = vperm.xlu0 %1189, %v282
      %v1191 = vpop.permute.xlu0 %1190
      %1193 = vset.pattern.permute.xlu0 1
      %1194 = vperm.xlu0 %1193, %v283
      %v1195 = vpop.permute.xlu0 %1194
      %1197 = vset.pattern.permute.xlu0 1
      %1198 = vperm.xlu0 %1197, %v284
      %v1199 = vpop.permute.xlu0 %1198
      %1201 = vset.pattern.permute.xlu0 1
      %1202 = vperm.xlu0 %1201, %v285
      %v1203 = vpop.permute.xlu0 %1202
      %1205 = vset.pattern.permute.xlu0 1
      %1206 = vperm.xlu0 %1205, %v286
      %v1207 = vpop.permute.xlu0 %1206
      %1209 = vset.pattern.permute.xlu0 1
      %1210 = vperm.xlu0 %1209, %v287
      %v1211 = vpop.permute.xlu0 %1210
      %1213 = vset.pattern.permute.xlu0 1
      %1214 = vperm.xlu0 %1213, %v288
      %v1215 = vpop.permute.xlu0 %1214
      %1217 = vset.pattern.permute.xlu0 1
      %1218 = vperm.xlu0 %1217, %v289
      %v1219 = vpop.permute.xlu0 %1218
      %1221 = vset.pattern.permute.xlu0 1
      %1222 = vperm.xlu0 %1221, %v290
      %v1223 = vpop.permute.xlu0 %1222
      %1225 = vset.pattern.permute.xlu0 1
      %1226 = vperm.xlu0 %1225, %v291
      %v1227 = vpop.permute.xlu0 %1226
      %1229 = vset.pattern.permute.xlu0 1
      %1230 = vperm.xlu0 %1229, %v292
      %v1231 = vpop.permute.xlu0 %1230
      %1233 = vset.pattern.permute.xlu0 1
      %1234 = vperm.xlu0 %1233, %v293
      %v1235 = vpop.permute.xlu0 %1234
      %1237 = vset.pattern.permute.xlu0 1
      %1238 = vperm.xlu0 %1237, %v294
      %v1239 = vpop.permute.xlu0 %1238
      %1241 = vset.pattern.permute.xlu0 1
      %1242 = vperm.xlu0 %1241, %v295
      %v1243 = vpop.permute.xlu0 %1242
      %1245 = vset.pattern.permute.xlu0 1
      %1246 = vperm.xlu0 %1245, %v296
      %v1247 = vpop.permute.xlu0 %1246
      %1249 = vset.pattern.permute.xlu0 1
      %1250 = vperm.xlu0 %1249, %v297
      %v1251 = vpop.permute.xlu0 %1250
      %1253 = vset.pattern.permute.xlu0 1
      %1254 = vperm.xlu0 %1253, %v298
      %v1255 = vpop.permute.xlu0 %1254
      %1257 = vset.pattern.permute.xlu0 1
      %1258 = vperm.xlu0 %1257, %v299
      %v1259 = vpop.permute.xlu0 %1258
      %1261 = vset.pattern.permute.xlu0 1
      %1262 = vperm.xlu0 %1261, %v300
      %v1263 = vpop.permute.xlu0 %1262
      %1265 = vset.pattern.permute.xlu0 1
      %1266 = vperm.xlu0 %1265, %v301
      %v1267 = vpop.permute.xlu0 %1266
      %1269 = vset.pattern.permute.xlu0 1
      %1270 = vperm.xlu0 %1269, %v302
      %v1271 = vpop.permute.xlu0 %1270
      %1273 = vset.pattern.permute.xlu0 1
      %1274 = vperm.xlu0 %1273, %v303
      %v1275 = vpop.permute.xlu0 %1274
      %1277 = vset.pattern.permute.xlu0 1
      %1278 = vperm.xlu0 %1277, %v304
      %v1279 = vpop.permute.xlu0 %1278
      %1281 = vset.pattern.permute.xlu0 1
      %1282 = vperm.xlu0 %1281, %v305
      %v1283 = vpop.permute.xlu0 %1282
      %1285 = vset.pattern.permute.xlu0 1
      %1286 = vperm.xlu0 %1285, %v306
      %v1287 = vpop.permute.xlu0 %1286
      %1289 = vset.pattern.permute.xlu0 1
      %1290 = vperm.xlu0 %1289, %v307
      %v1291 = vpop.permute.xlu0 %1290
      %1293 = vset.pattern.permute.xlu0 1
      %1294 = vperm.xlu0 %1293, %v308
      %v1295 = vpop.permute.xlu0 %1294
      %1297 = vset.pattern.permute.xlu0 1
      %1298 = vperm.xlu0 %1297, %v309
      %v1299 = vpop.permute.xlu0 %1298
      %1301 = vset.pattern.permute.xlu0 1
      %1302 = vperm.xlu0 %1301, %v310
      %v1303 = vpop.permute.xlu0 %1302
      %1305 = vset.pattern.permute.xlu0 1
      %1306 = vperm.xlu0 %1305, %v311
      %v1307 = vpop.permute.xlu0 %1306
      %1309 = vset.pattern.permute.xlu0 1
      %1310 = vperm.xlu0 %1309, %v312
      %v1311 = vpop.permute.xlu0 %1310
      %1313 = vset.pattern.permute.xlu0 1
      %1314 = vperm.xlu0 %1313, %v313
      %v1315 = vpop.permute.xlu0 %1314
      %1317 = vset.pattern.permute.xlu0 1
      %1318 = vperm.xlu0 %1317, %v314
      %v1319 = vpop.permute.xlu0 %1318
      %1321 = vset.pattern.permute.xlu0 1
      %1322 = vperm.xlu0 %1321, %v315
      %v1323 = vpop.permute.xlu0 %1322
      %1325 = vset.pattern.permute.xlu0 1
      %1326 = vperm.xlu0 %1325, %v316
      %v1327 = vpop.permute.xlu0 %1326
      %1329 = vset.pattern.permute.xlu0 1
      %1330 = vperm.xlu0 %1329, %v317
      %v1331 = vpop.permute.xlu0 %1330
      %1333 = vset.pattern.permute.xlu0 1
      %1334 = vperm.xlu0 %1333, %v318
      %v1335 = vpop.permute.xlu0 %1334
      %1337 = vset.pattern.permute.xlu0 1
      %1338 = vperm.xlu0 %1337, %v319
      %v1339 = vpop.permute.xlu0 %1338
      %1341 = vset.pattern.permute.xlu0 1
      %1342 = vperm.xlu0 %1341, %v320
      %v1343 = vpop.permute.xlu0 %1342
      %1345 = vset.pattern.permute.xlu0 1
      %1346 = vperm.xlu0 %1345, %v321
      %v1347 = vpop.permute.xlu0 %1346
      %1349 = vset.pattern.permute.xlu0 1
      %1350 = vperm.xlu0 %1349, %v322
      %v1351 = vpop.permute.xlu0 %1350
      %1353 = vset.pattern.permute.xlu0 1
      %1354 = vperm.xlu0 %1353, %v323
      %v1355 = vpop.permute.xlu0 %1354
      %1357 = vset.pattern.permute.xlu0 1
      %1358 = vperm.xlu0 %1357, %v324
      %v1359 = vpop.permute.xlu0 %1358
      %1361 = vset.pattern.permute.xlu0 1
      %1362 = vperm.xlu0 %1361, %v325
      %v1363 = vpop.permute.xlu0 %1362
      %1365 = vset.pattern.permute.xlu0 1
      %1366 = vperm.xlu0 %1365, %v326
      %v1367 = vpop.permute.xlu0 %1366
      %1369 = vset.pattern.permute.xlu0 1
      %1370 = vperm.xlu0 %1369, %v327
      %v1371 = vpop.permute.xlu0 %1370
      %1373 = vset.pattern.permute.xlu0 1
      %1374 = vperm.xlu0 %1373, %v328
      %v1375 = vpop.permute.xlu0 %1374
      %1377 = vset.pattern.permute.xlu0 1
      %1378 = vperm.xlu0 %1377, %v329
      %v1379 = vpop.permute.xlu0 %1378
      %1381 = vset.pattern.permute.xlu0 1
      %1382 = vperm.xlu0 %1381, %v330
      %v1383 = vpop.permute.xlu0 %1382
      %1385 = vset.pattern.permute.xlu0 1
      %1386 = vperm.xlu0 %1385, %v331
      %v1387 = vpop.permute.xlu0 %1386
      %1389 = vset.pattern.permute.xlu0 1
      %1390 = vperm.xlu0 %1389, %v332
      %v1391 = vpop.permute.xlu0 %1390
      %1393 = vset.pattern.permute.xlu0 1
      %1394 = vperm.xlu0 %1393, %v333
      %v1395 = vpop.permute.xlu0 %1394
      %1397 = vset.pattern.permute.xlu0 1
      %1398 = vperm.xlu0 %1397, %v334
      %v1399 = vpop.permute.xlu0 %1398
      %1401 = vset.pattern.permute.xlu0 1
      %1402 = vperm.xlu0 %1401, %v335
      %v1403 = vpop.permute.xlu0 %1402
      %1405 = vset.pattern.permute.xlu0 1
      %1406 = vperm.xlu0 %1405, %v336
      %v1407 = vpop.permute.xlu0 %1406
      %1409 = vset.pattern.permute.xlu0 1
      %1410 = vperm.xlu0 %1409, %v337
      %v1411 = vpop.permute.xlu0 %1410
      %1413 = vset.pattern.permute.xlu0 1
      %1414 = vperm.xlu0 %1413, %v338
      %v1415 = vpop.permute.xlu0 %1414
      %1417 = vset.pattern.permute.xlu0 1
      %1418 = vperm.xlu0 %1417, %v339
      %v1419 = vpop.permute.xlu0 %1418
      %1421 = vset.pattern.permute.xlu0 1
      %1422 = vperm.xlu0 %1421, %v340
      %v1423 = vpop.permute.xlu0 %1422
      %1425 = vset.pattern.permute.xlu0 1
      %1426 = vperm.xlu0 %1425, %v341
      %v1427 = vpop.permute.xlu0 %1426
      %1429 = vset.pattern.permute.xlu0 1
      %1430 = vperm.xlu0 %1429, %v342
      %v1431 = vpop.permute.xlu0 %1430
      %1433 = vset.pattern.permute.xlu0 1
      %1434 = vperm.xlu0 %1433, %v343
      %v1435 = vpop.permute.xlu0 %1434
      %1437 = vset.pattern.permute.xlu0 1
      %1438 = vperm.xlu0 %1437, %v344
      %v1439 = vpop.permute.xlu0 %1438
      %1441 = vset.pattern.permute.xlu0 1
      %1442 = vperm.xlu0 %1441, %v345
      %v1443 = vpop.permute.xlu0 %1442
      %1445 = vset.pattern.permute.xlu0 1
      %1446 = vperm.xlu0 %1445, %v346
      %v1447 = vpop.permute.xlu0 %1446
      %1449 = vset.pattern.permute.xlu0 1
      %1450 = vperm.xlu0 %1449, %v347
      %v1451 = vpop.permute.xlu0 %1450
      %1453 = vset.pattern.permute.xlu0 1
      %1454 = vperm.xlu0 %1453, %v348
      %v1455 = vpop.permute.xlu0 %1454
      %1457 = vset.pattern.permute.xlu0 1
      %1458 = vperm.xlu0 %1457, %v349
      %v1459 = vpop.permute.xlu0 %1458
      %1461 = vset.pattern.permute.xlu0 1
      %1462 = vperm.xlu0 %1461, %v350
      %v1463 = vpop.permute.xlu0 %1462
      %1465 = vset.pattern.permute.xlu0 1
      %1466 = vperm.xlu0 %1465, %v351
      %v1467 = vpop.permute.xlu0 %1466
      %1469 = vset.pattern.permute.xlu0 1
      %1470 = vperm.xlu0 %1469, %v352
      %v1471 = vpop.permute.xlu0 %1470
      %1473 = vset.pattern.permute.xlu0 1
      %1474 = vperm.xlu0 %1473, %v353
      %v1475 = vpop.permute.xlu0 %1474
      %1477 = vset.pattern.permute.xlu0 1
      %1478 = vperm.xlu0 %1477, %v354
      %v1479 = vpop.permute.xlu0 %1478
      %1481 = vset.pattern.permute.xlu0 1
      %1482 = vperm.xlu0 %1481, %v355
      %v1483 = vpop.permute.xlu0 %1482
      %1485 = vset.pattern.permute.xlu0 1
      %1486 = vperm.xlu0 %1485, %v356
      %v1487 = vpop.permute.xlu0 %1486
      %1489 = vset.pattern.permute.xlu0 1
      %1490 = vperm.xlu0 %1489, %v357
      %v1491 = vpop.permute.xlu0 %1490
      %1493 = vset.pattern.permute.xlu0 1
      %1494 = vperm.xlu0 %1493, %v358
      %v1495 = vpop.permute.xlu0 %1494
      %1497 = vset.pattern.permute.xlu0 1
      %1498 = vperm.xlu0 %1497, %v359
      %v1499 = vpop.permute.xlu0 %1498
      %1501 = vset.pattern.permute.xlu0 1
      %1502 = vperm.xlu0 %1501, %v360
      %v1503 = vpop.permute.xlu0 %1502
      %1505 = vset.pattern.permute.xlu0 1
      %1506 = vperm.xlu0 %1505, %v361
      %v1507 = vpop.permute.xlu0 %1506
      %1509 = vset.pattern.permute.xlu0 1
      %1510 = vperm.xlu0 %1509, %v362
      %v1511 = vpop.permute.xlu0 %1510
      %1513 = vset.pattern.permute.xlu0 1
      %1514 = vperm.xlu0 %1513, %v363
      %v1515 = vpop.permute.xlu0 %1514
      %1517 = vset.pattern.permute.xlu0 1
      %1518 = vperm.xlu0 %1517, %v364
      %v1519 = vpop.permute.xlu0 %1518
      %1521 = vset.pattern.permute.xlu0 1
      %1522 = vperm.xlu0 %1521, %v365
      %v1523 = vpop.permute.xlu0 %1522
      %1525 = vset.pattern.permute.xlu0 1
      %1526 = vperm.xlu0 %1525, %v366
      %v1527 = vpop.permute.xlu0 %1526
      %1529 = vset.pattern.permute.xlu0 1
      %1530 = vperm.xlu0 %1529, %v367
      %v1531 = vpop.permute.xlu0 %1530
      %1533 = vset.pattern.permute.xlu0 1
      %1534 = vperm.xlu0 %1533, %v368
      %v1535 = vpop.permute.xlu0 %1534
      %1537 = vset.pattern.permute.xlu0 1
      %1538 = vperm.xlu0 %1537, %v369
      %v1539 = vpop.permute.xlu0 %1538
      %1541 = vset.pattern.permute.xlu0 1
      %1542 = vperm.xlu0 %1541, %v370
      %v1543 = vpop.permute.xlu0 %1542
      %1545 = vset.pattern.permute.xlu0 1
      %1546 = vperm.xlu0 %1545, %v371
      %v1547 = vpop.permute.xlu0 %1546
      %1549 = vset.pattern.permute.xlu0 1
      %1550 = vperm.xlu0 %1549, %v372
      %v1551 = vpop.permute.xlu0 %1550
      %1553 = vset.pattern.permute.xlu0 1
      %1554 = vperm.xlu0 %1553, %v373
      %v1555 = vpop.permute.xlu0 %1554
      %1557 = vset.pattern.permute.xlu0 1
      %1558 = vperm.xlu0 %1557, %v374
      %v1559 = vpop.permute.xlu0 %1558
      %1561 = vset.pattern.permute.xlu0 1
      %1562 = vperm.xlu0 %1561, %v375
      %v1563 = vpop.permute.xlu0 %1562
      %1565 = vset.pattern.permute.xlu0 1
      %1566 = vperm.xlu0 %1565, %v376
      %v1567 = vpop.permute.xlu0 %1566
      %1569 = vset.pattern.permute.xlu0 1
      %1570 = vperm.xlu0 %1569, %v377
      %v1571 = vpop.permute.xlu0 %1570
      %1573 = vset.pattern.permute.xlu0 1
      %1574 = vperm.xlu0 %1573, %v378
      %v1575 = vpop.permute.xlu0 %1574
      %1577 = vset.pattern.permute.xlu0 1
      %1578 = vperm.xlu0 %1577, %v379
      %v1579 = vpop.permute.xlu0 %1578
      %1581 = vset.pattern.permute.xlu0 1
      %1582 = vperm.xlu0 %1581, %v380
      %v1583 = vpop.permute.xlu0 %1582
      %1585 = vset.pattern.permute.xlu0 1
      %1586 = vperm.xlu0 %1585, %v381
      %v1587 = vpop.permute.xlu0 %1586
      %1589 = vset.pattern.permute.xlu0 1
      %1590 = vperm.xlu0 %1589, %v382
      %v1591 = vpop.permute.xlu0 %1590
      %1593 = vset.pattern.permute.xlu0 1
      %1594 = vperm.xlu0 %1593, %v383
      %v1595 = vpop.permute.xlu0 %1594
      %1597 = vset.pattern.permute.xlu0 1
      %1598 = vperm.xlu0 %1597, %v384
      %v1599 = vpop.permute.xlu0 %1598
      %1601 = vset.pattern.permute.xlu0 1
      %1602 = vperm.xlu0 %1601, %v385
      %v1603 = vpop.permute.xlu0 %1602
      %1605 = vset.pattern.permute.xlu0 1
      %1606 = vperm.xlu0 %1605, %v386
      %v1607 = vpop.permute.xlu0 %1606
      %1609 = vset.pattern.permute.xlu0 1
      %1610 = vperm.xlu0 %1609, %v387
      %v1611 = vpop.permute.xlu0 %1610
      %1613 = vset.pattern.permute.xlu0 1
      %1614 = vperm.xlu0 %1613, %v388
      %v1615 = vpop.permute.xlu0 %1614
      %1617 = vset.pattern.permute.xlu0 1
      %1618 = vperm.xlu0 %1617, %v389
      %v1619 = vpop.permute.xlu0 %1618
      %1621 = vset.pattern.permute.xlu0 1
      %1622 = vperm.xlu0 %1621, %v390
      %v1623 = vpop.permute.xlu0 %1622
      %1625 = vset.pattern.permute.xlu0 1
      %1626 = vperm.xlu0 %1625, %v391
      %v1627 = vpop.permute.xlu0 %1626
      %1629 = vset.pattern.permute.xlu0 1
      %1630 = vperm.xlu0 %1629, %v392
      %v1631 = vpop.permute.xlu0 %1630
      %1633 = vset.pattern.permute.xlu0 1
      %1634 = vperm.xlu0 %1633, %v393
      %v1635 = vpop.permute.xlu0 %1634
      %1637 = vset.pattern.permute.xlu0 1
      %1638 = vperm.xlu0 %1637, %v394
      %v1639 = vpop.permute.xlu0 %1638
      %1641 = vset.pattern.permute.xlu0 1
      %1642 = vperm.xlu0 %1641, %v395
      %v1643 = vpop.permute.xlu0 %1642
      %1645 = vset.pattern.permute.xlu0 1
      %1646 = vperm.xlu0 %1645, %v396
      %v1647 = vpop.permute.xlu0 %1646
      %1649 = vset.pattern.permute.xlu0 1
      %1650 = vperm.xlu0 %1649, %v397
      %v1651 = vpop.permute.xlu0 %1650
      %1653 = vset.pattern.permute.xlu0 1
      %1654 = vperm.xlu0 %1653, %v398
      %v1655 = vpop.permute.xlu0 %1654
      %1657 = vset.pattern.permute.xlu0 1
      %1658 = vperm.xlu0 %1657, %v399
      %v1659 = vpop.permute.xlu0 %1658
      %1661 = vset.pattern.permute.xlu0 1
      %1662 = vperm.xlu0 %1661, %v400
      %v1663 = vpop.permute.xlu0 %1662
      %1665 = vset.pattern.permute.xlu0 1
      %1666 = vperm.xlu0 %1665, %v401
      %v1667 = vpop.permute.xlu0 %1666
      %1669 = vset.pattern.permute.xlu0 1
      %1670 = vperm.xlu0 %1669, %v402
      %v1671 = vpop.permute.xlu0 %1670
      %1673 = vset.pattern.permute.xlu0 1
      %1674 = vperm.xlu0 %1673, %v403
      %v1675 = vpop.permute.xlu0 %1674
      %1677 = vset.pattern.permute.xlu0 1
      %1678 = vperm.xlu0 %1677, %v404
      %v1679 = vpop.permute.xlu0 %1678
      %1681 = vset.pattern.permute.xlu0 1
      %1682 = vperm.xlu0 %1681, %v405
      %v1683 = vpop.permute.xlu0 %1682
      %1685 = vset.pattern.permute.xlu0 1
      %1686 = vperm.xlu0 %1685, %v406
      %v1687 = vpop.permute.xlu0 %1686
      %1689 = vset.pattern.permute.xlu0 1
      %1690 = vperm.xlu0 %1689, %v407
      %v1691 = vpop.permute.xlu0 %1690
      %v1693 = vlaneseq
      %v1694 = vshrl.u32 %v1693, 7
      %v1695 = vsub.s32 1, %v1694
      %v1696 = vrot.slane %v408, %v1695
      %v1697 = vmul.f32 %v1183, %v1696
      %v1698 = vmul.f32 %v1187, %v1696
      %v1699 = vmul.f32 %v1191, %v1696
      %v1700 = vmul.f32 %v1195, %v1696
      %v1701 = vmul.f32 %v1199, %v1696
      %v1702 = vmul.f32 %v1203, %v1696
      %v1703 = vmul.f32 %v1207, %v1696
      %v1704 = vmul.f32 %v1211, %v1696
      %v1705 = vmul.f32 %v1215, %v1696
      %v1706 = vmul.f32 %v1219, %v1696
      %v1707 = vmul.f32 %v1223, %v1696
      %v1708 = vmul.f32 %v1227, %v1696
      %v1709 = vmul.f32 %v1231, %v1696
      %v1710 = vmul.f32 %v1235, %v1696
      %v1711 = vmul.f32 %v1239, %v1696
      %v1712 = vmul.f32 %v1243, %v1696
      %v1713 = vmul.f32 %v1247, %v1696
      %v1714 = vmul.f32 %v1251, %v1696
      %v1715 = vmul.f32 %v1255, %v1696
      %v1716 = vmul.f32 %v1259, %v1696
      %v1717 = vmul.f32 %v1263, %v1696
      %v1718 = vmul.f32 %v1267, %v1696
      %v1719 = vmul.f32 %v1271, %v1696
      %v1720 = vmul.f32 %v1275, %v1696
      %v1721 = vmul.f32 %v1279, %v1696
      %v1722 = vmul.f32 %v1283, %v1696
      %v1723 = vmul.f32 %v1287, %v1696
      %v1724 = vmul.f32 %v1291, %v1696
      %v1725 = vmul.f32 %v1295, %v1696
      %v1726 = vmul.f32 %v1299, %v1696
      %v1727 = vmul.f32 %v1303, %v1696
      %v1728 = vmul.f32 %v1307, %v1696
      %v1729 = vmul.f32 %v1311, %v1696
      %v1730 = vmul.f32 %v1315, %v1696
      %v1731 = vmul.f32 %v1319, %v1696
      %v1732 = vmul.f32 %v1323, %v1696
      %v1733 = vmul.f32 %v1327, %v1696
      %v1734 = vmul.f32 %v1331, %v1696
      %v1735 = vmul.f32 %v1335, %v1696
      %v1736 = vmul.f32 %v1339, %v1696
      %v1737 = vmul.f32 %v1343, %v1696
      %v1738 = vmul.f32 %v1347, %v1696
      %v1739 = vmul.f32 %v1351, %v1696
      %v1740 = vmul.f32 %v1355, %v1696
      %v1741 = vmul.f32 %v1359, %v1696
      %v1742 = vmul.f32 %v1363, %v1696
      %v1743 = vmul.f32 %v1367, %v1696
      %v1744 = vmul.f32 %v1371, %v1696
      %v1745 = vmul.f32 %v1375, %v1696
      %v1746 = vmul.f32 %v1379, %v1696
      %v1747 = vmul.f32 %v1383, %v1696
      %v1748 = vmul.f32 %v1387, %v1696
      %v1749 = vmul.f32 %v1391, %v1696
      %v1750 = vmul.f32 %v1395, %v1696
      %v1751 = vmul.f32 %v1399, %v1696
      %v1752 = vmul.f32 %v1403, %v1696
      %v1753 = vmul.f32 %v1407, %v1696
      %v1754 = vmul.f32 %v1411, %v1696
      %v1755 = vmul.f32 %v1415, %v1696
      %v1756 = vmul.f32 %v1419, %v1696
      %v1757 = vmul.f32 %v1423, %v1696
      %v1758 = vmul.f32 %v1427, %v1696
      %v1759 = vmul.f32 %v1431, %v1696
      %v1760 = vmul.f32 %v1435, %v1696
      %v1761 = vmul.f32 %v1439, %v1696
      %v1762 = vmul.f32 %v1443, %v1696
      %v1763 = vmul.f32 %v1447, %v1696
      %v1764 = vmul.f32 %v1451, %v1696
      %v1765 = vmul.f32 %v1455, %v1696
      %v1766 = vmul.f32 %v1459, %v1696
      %v1767 = vmul.f32 %v1463, %v1696
      %v1768 = vmul.f32 %v1467, %v1696
      %v1769 = vmul.f32 %v1471, %v1696
      %v1770 = vmul.f32 %v1475, %v1696
      %v1771 = vmul.f32 %v1479, %v1696
      %v1772 = vmul.f32 %v1483, %v1696
      %v1773 = vmul.f32 %v1487, %v1696
      %v1774 = vmul.f32 %v1491, %v1696
      %v1775 = vmul.f32 %v1495, %v1696
      %v1776 = vmul.f32 %v1499, %v1696
      %v1777 = vmul.f32 %v1503, %v1696
      %v1778 = vmul.f32 %v1507, %v1696
      %v1779 = vmul.f32 %v1511, %v1696
      %v1780 = vmul.f32 %v1515, %v1696
      %v1781 = vmul.f32 %v1519, %v1696
      %v1782 = vmul.f32 %v1523, %v1696
      %v1783 = vmul.f32 %v1527, %v1696
      %v1784 = vmul.f32 %v1531, %v1696
      %v1785 = vmul.f32 %v1535, %v1696
      %v1786 = vmul.f32 %v1539, %v1696
      %v1787 = vmul.f32 %v1543, %v1696
      %v1788 = vmul.f32 %v1547, %v1696
      %v1789 = vmul.f32 %v1551, %v1696
      %v1790 = vmul.f32 %v1555, %v1696
      %v1791 = vmul.f32 %v1559, %v1696
      %v1792 = vmul.f32 %v1563, %v1696
      %v1793 = vmul.f32 %v1567, %v1696
      %v1794 = vmul.f32 %v1571, %v1696
      %v1795 = vmul.f32 %v1575, %v1696
      %v1796 = vmul.f32 %v1579, %v1696
      %v1797 = vmul.f32 %v1583, %v1696
      %v1798 = vmul.f32 %v1587, %v1696
      %v1799 = vmul.f32 %v1591, %v1696
      %v1800 = vmul.f32 %v1595, %v1696
      %v1801 = vmul.f32 %v1599, %v1696
      %v1802 = vmul.f32 %v1603, %v1696
      %v1803 = vmul.f32 %v1607, %v1696
      %v1804 = vmul.f32 %v1611, %v1696
      %v1805 = vmul.f32 %v1615, %v1696
      %v1806 = vmul.f32 %v1619, %v1696
      %v1807 = vmul.f32 %v1623, %v1696
      %v1808 = vmul.f32 %v1627, %v1696
      %v1809 = vmul.f32 %v1631, %v1696
      %v1810 = vmul.f32 %v1635, %v1696
      %v1811 = vmul.f32 %v1639, %v1696
      %v1812 = vmul.f32 %v1643, %v1696
      %v1813 = vmul.f32 %v1647, %v1696
      %v1814 = vmul.f32 %v1651, %v1696
      %v1815 = vmul.f32 %v1655, %v1696
      %v1816 = vmul.f32 %v1659, %v1696
      %v1817 = vmul.f32 %v1663, %v1696
      %v1818 = vmul.f32 %v1667, %v1696
      %v1819 = vmul.f32 %v1671, %v1696
      %v1820 = vmul.f32 %v1675, %v1696
      %v1821 = vmul.f32 %v1679, %v1696
      %v1822 = vmul.f32 %v1683, %v1696
      %v1823 = vmul.f32 %v1687, %v1696
      %v1824 = vmul.f32 %v1691, %v1696
      %v1825 = vadd.f32 %v1053, %v1697
      %v1826 = vadd.f32 %v1054, %v1698
      %v1827 = vadd.f32 %v1055, %v1699
      %v1828 = vadd.f32 %v1056, %v1700
      %v1829 = vadd.f32 %v1057, %v1701
      %v1830 = vadd.f32 %v1058, %v1702
      %v1831 = vadd.f32 %v1059, %v1703
      %v1832 = vadd.f32 %v1060, %v1704
      %v1833 = vadd.f32 %v1061, %v1705
      %v1834 = vadd.f32 %v1062, %v1706
      %v1835 = vadd.f32 %v1063, %v1707
      %v1836 = vadd.f32 %v1064, %v1708
      %v1837 = vadd.f32 %v1065, %v1709
      %v1838 = vadd.f32 %v1066, %v1710
      %v1839 = vadd.f32 %v1067, %v1711
      %v1840 = vadd.f32 %v1068, %v1712
      %v1841 = vadd.f32 %v1069, %v1713
      %v1842 = vadd.f32 %v1070, %v1714
      %v1843 = vadd.f32 %v1071, %v1715
      %v1844 = vadd.f32 %v1072, %v1716
      %v1845 = vadd.f32 %v1073, %v1717
      %v1846 = vadd.f32 %v1074, %v1718
      %v1847 = vadd.f32 %v1075, %v1719
      %v1848 = vadd.f32 %v1076, %v1720
      %v1849 = vadd.f32 %v1077, %v1721
      %v1850 = vadd.f32 %v1078, %v1722
      %v1851 = vadd.f32 %v1079, %v1723
      %v1852 = vadd.f32 %v1080, %v1724
      %v1853 = vadd.f32 %v1081, %v1725
      %v1854 = vadd.f32 %v1082, %v1726
      %v1855 = vadd.f32 %v1083, %v1727
      %v1856 = vadd.f32 %v1084, %v1728
      %v1857 = vadd.f32 %v1085, %v1729
      %v1858 = vadd.f32 %v1086, %v1730
      %v1859 = vadd.f32 %v1087, %v1731
      %v1860 = vadd.f32 %v1088, %v1732
      %v1861 = vadd.f32 %v1089, %v1733
      %v1862 = vadd.f32 %v1090, %v1734
      %v1863 = vadd.f32 %v1091, %v1735
      %v1864 = vadd.f32 %v1092, %v1736
      %v1865 = vadd.f32 %v1093, %v1737
      %v1866 = vadd.f32 %v1094, %v1738
      %v1867 = vadd.f32 %v1095, %v1739
      %v1868 = vadd.f32 %v1096, %v1740
      %v1869 = vadd.f32 %v1097, %v1741
      %v1870 = vadd.f32 %v1098, %v1742
      %v1871 = vadd.f32 %v1099, %v1743
      %v1872 = vadd.f32 %v1100, %v1744
      %v1873 = vadd.f32 %v1101, %v1745
      %v1874 = vadd.f32 %v1102, %v1746
      %v1875 = vadd.f32 %v1103, %v1747
      %v1876 = vadd.f32 %v1104, %v1748
      %v1877 = vadd.f32 %v1105, %v1749
      %v1878 = vadd.f32 %v1106, %v1750
      %v1879 = vadd.f32 %v1107, %v1751
      %v1880 = vadd.f32 %v1108, %v1752
      %v1881 = vadd.f32 %v1109, %v1753
      %v1882 = vadd.f32 %v1110, %v1754
      %v1883 = vadd.f32 %v1111, %v1755
      %v1884 = vadd.f32 %v1112, %v1756
      %v1885 = vadd.f32 %v1113, %v1757
      %v1886 = vadd.f32 %v1114, %v1758
      %v1887 = vadd.f32 %v1115, %v1759
      %v1888 = vadd.f32 %v1116, %v1760
      %v1889 = vadd.f32 %v1117, %v1761
      %v1890 = vadd.f32 %v1118, %v1762
      %v1891 = vadd.f32 %v1119, %v1763
      %v1892 = vadd.f32 %v1120, %v1764
      %v1893 = vadd.f32 %v1121, %v1765
      %v1894 = vadd.f32 %v1122, %v1766
      %v1895 = vadd.f32 %v1123, %v1767
      %v1896 = vadd.f32 %v1124, %v1768
      %v1897 = vadd.f32 %v1125, %v1769
      %v1898 = vadd.f32 %v1126, %v1770
      %v1899 = vadd.f32 %v1127, %v1771
      %v1900 = vadd.f32 %v1128, %v1772
      %v1901 = vadd.f32 %v1129, %v1773
      %v1902 = vadd.f32 %v1130, %v1774
      %v1903 = vadd.f32 %v1131, %v1775
      %v1904 = vadd.f32 %v1132, %v1776
      %v1905 = vadd.f32 %v1133, %v1777
      %v1906 = vadd.f32 %v1134, %v1778
      %v1907 = vadd.f32 %v1135, %v1779
      %v1908 = vadd.f32 %v1136, %v1780
      %v1909 = vadd.f32 %v1137, %v1781
      %v1910 = vadd.f32 %v1138, %v1782
      %v1911 = vadd.f32 %v1139, %v1783
      %v1912 = vadd.f32 %v1140, %v1784
      %v1913 = vadd.f32 %v1141, %v1785
      %v1914 = vadd.f32 %v1142, %v1786
      %v1915 = vadd.f32 %v1143, %v1787
      %v1916 = vadd.f32 %v1144, %v1788
      %v1917 = vadd.f32 %v1145, %v1789
      %v1918 = vadd.f32 %v1146, %v1790
      %v1919 = vadd.f32 %v1147, %v1791
      %v1920 = vadd.f32 %v1148, %v1792
      %v1921 = vadd.f32 %v1149, %v1793
      %v1922 = vadd.f32 %v1150, %v1794
      %v1923 = vadd.f32 %v1151, %v1795
      %v1924 = vadd.f32 %v1152, %v1796
      %v1925 = vadd.f32 %v1153, %v1797
      %v1926 = vadd.f32 %v1154, %v1798
      %v1927 = vadd.f32 %v1155, %v1799
      %v1928 = vadd.f32 %v1156, %v1800
      %v1929 = vadd.f32 %v1157, %v1801
      %v1930 = vadd.f32 %v1158, %v1802
      %v1931 = vadd.f32 %v1159, %v1803
      %v1932 = vadd.f32 %v1160, %v1804
      %v1933 = vadd.f32 %v1161, %v1805
      %v1934 = vadd.f32 %v1162, %v1806
      %v1935 = vadd.f32 %v1163, %v1807
      %v1936 = vadd.f32 %v1164, %v1808
      %v1937 = vadd.f32 %v1165, %v1809
      %v1938 = vadd.f32 %v1166, %v1810
      %v1939 = vadd.f32 %v1167, %v1811
      %v1940 = vadd.f32 %v1168, %v1812
      %v1941 = vadd.f32 %v1169, %v1813
      %v1942 = vadd.f32 %v1170, %v1814
      %v1943 = vadd.f32 %v1171, %v1815
      %v1944 = vadd.f32 %v1172, %v1816
      %v1945 = vadd.f32 %v1173, %v1817
      %v1946 = vadd.f32 %v1174, %v1818
      %v1947 = vadd.f32 %v1175, %v1819
      %v1948 = vadd.f32 %v1176, %v1820
      %v1949 = vadd.f32 %v1177, %v1821
      %v1950 = vadd.f32 %v1178, %v1822
      %v1951 = vadd.f32 %v1179, %v1823
      %v1952 = vadd.f32 %v1180, %v1824
      %1953 = vset.pattern.permute.xlu0 2
      %1954 = vperm.xlu0 %1953, %v280
      %v1955 = vpop.permute.xlu0 %1954
      %1957 = vset.pattern.permute.xlu0 2
      %1958 = vperm.xlu0 %1957, %v281
      %v1959 = vpop.permute.xlu0 %1958
      %1961 = vset.pattern.permute.xlu0 2
      %1962 = vperm.xlu0 %1961, %v282
      %v1963 = vpop.permute.xlu0 %1962
      %1965 = vset.pattern.permute.xlu0 2
      %1966 = vperm.xlu0 %1965, %v283
      %v1967 = vpop.permute.xlu0 %1966
      %1969 = vset.pattern.permute.xlu0 2
      %1970 = vperm.xlu0 %1969, %v284
      %v1971 = vpop.permute.xlu0 %1970
      %1973 = vset.pattern.permute.xlu0 2
      %1974 = vperm.xlu0 %1973, %v285
      %v1975 = vpop.permute.xlu0 %1974
      %1977 = vset.pattern.permute.xlu0 2
      %1978 = vperm.xlu0 %1977, %v286
      %v1979 = vpop.permute.xlu0 %1978
      %1981 = vset.pattern.permute.xlu0 2
      %1982 = vperm.xlu0 %1981, %v287
      %v1983 = vpop.permute.xlu0 %1982
      %1985 = vset.pattern.permute.xlu0 2
      %1986 = vperm.xlu0 %1985, %v288
      %v1987 = vpop.permute.xlu0 %1986
      %1989 = vset.pattern.permute.xlu0 2
      %1990 = vperm.xlu0 %1989, %v289
      %v1991 = vpop.permute.xlu0 %1990
      %1993 = vset.pattern.permute.xlu0 2
      %1994 = vperm.xlu0 %1993, %v290
      %v1995 = vpop.permute.xlu0 %1994
      %1997 = vset.pattern.permute.xlu0 2
      %1998 = vperm.xlu0 %1997, %v291
      %v1999 = vpop.permute.xlu0 %1998
      %2001 = vset.pattern.permute.xlu0 2
      %2002 = vperm.xlu0 %2001, %v292
      %v2003 = vpop.permute.xlu0 %2002
      %2005 = vset.pattern.permute.xlu0 2
      %2006 = vperm.xlu0 %2005, %v293
      %v2007 = vpop.permute.xlu0 %2006
      %2009 = vset.pattern.permute.xlu0 2
      %2010 = vperm.xlu0 %2009, %v294
      %v2011 = vpop.permute.xlu0 %2010
      %2013 = vset.pattern.permute.xlu0 2
      %2014 = vperm.xlu0 %2013, %v295
      %v2015 = vpop.permute.xlu0 %2014
      %2017 = vset.pattern.permute.xlu0 2
      %2018 = vperm.xlu0 %2017, %v296
      %v2019 = vpop.permute.xlu0 %2018
      %2021 = vset.pattern.permute.xlu0 2
      %2022 = vperm.xlu0 %2021, %v297
      %v2023 = vpop.permute.xlu0 %2022
      %2025 = vset.pattern.permute.xlu0 2
      %2026 = vperm.xlu0 %2025, %v298
      %v2027 = vpop.permute.xlu0 %2026
      %2029 = vset.pattern.permute.xlu0 2
      %2030 = vperm.xlu0 %2029, %v299
      %v2031 = vpop.permute.xlu0 %2030
      %2033 = vset.pattern.permute.xlu0 2
      %2034 = vperm.xlu0 %2033, %v300
      %v2035 = vpop.permute.xlu0 %2034
      %2037 = vset.pattern.permute.xlu0 2
      %2038 = vperm.xlu0 %2037, %v301
      %v2039 = vpop.permute.xlu0 %2038
      %2041 = vset.pattern.permute.xlu0 2
      %2042 = vperm.xlu0 %2041, %v302
      %v2043 = vpop.permute.xlu0 %2042
      %2045 = vset.pattern.permute.xlu0 2
      %2046 = vperm.xlu0 %2045, %v303
      %v2047 = vpop.permute.xlu0 %2046
      %2049 = vset.pattern.permute.xlu0 2
      %2050 = vperm.xlu0 %2049, %v304
      %v2051 = vpop.permute.xlu0 %2050
      %2053 = vset.pattern.permute.xlu0 2
      %2054 = vperm.xlu0 %2053, %v305
      %v2055 = vpop.permute.xlu0 %2054
      %2057 = vset.pattern.permute.xlu0 2
      %2058 = vperm.xlu0 %2057, %v306
      %v2059 = vpop.permute.xlu0 %2058
      %2061 = vset.pattern.permute.xlu0 2
      %2062 = vperm.xlu0 %2061, %v307
      %v2063 = vpop.permute.xlu0 %2062
      %2065 = vset.pattern.permute.xlu0 2
      %2066 = vperm.xlu0 %2065, %v308
      %v2067 = vpop.permute.xlu0 %2066
      %2069 = vset.pattern.permute.xlu0 2
      %2070 = vperm.xlu0 %2069, %v309
      %v2071 = vpop.permute.xlu0 %2070
      %2073 = vset.pattern.permute.xlu0 2
      %2074 = vperm.xlu0 %2073, %v310
      %v2075 = vpop.permute.xlu0 %2074
      %2077 = vset.pattern.permute.xlu0 2
      %2078 = vperm.xlu0 %2077, %v311
      %v2079 = vpop.permute.xlu0 %2078
      %2081 = vset.pattern.permute.xlu0 2
      %2082 = vperm.xlu0 %2081, %v312
      %v2083 = vpop.permute.xlu0 %2082
      %2085 = vset.pattern.permute.xlu0 2
      %2086 = vperm.xlu0 %2085, %v313
      %v2087 = vpop.permute.xlu0 %2086
      %2089 = vset.pattern.permute.xlu0 2
      %2090 = vperm.xlu0 %2089, %v314
      %v2091 = vpop.permute.xlu0 %2090
      %2093 = vset.pattern.permute.xlu0 2
      %2094 = vperm.xlu0 %2093, %v315
      %v2095 = vpop.permute.xlu0 %2094
      %2097 = vset.pattern.permute.xlu0 2
      %2098 = vperm.xlu0 %2097, %v316
      %v2099 = vpop.permute.xlu0 %2098
      %2101 = vset.pattern.permute.xlu0 2
      %2102 = vperm.xlu0 %2101, %v317
      %v2103 = vpop.permute.xlu0 %2102
      %2105 = vset.pattern.permute.xlu0 2
      %2106 = vperm.xlu0 %2105, %v318
      %v2107 = vpop.permute.xlu0 %2106
      %2109 = vset.pattern.permute.xlu0 2
      %2110 = vperm.xlu0 %2109, %v319
      %v2111 = vpop.permute.xlu0 %2110
      %2113 = vset.pattern.permute.xlu0 2
      %2114 = vperm.xlu0 %2113, %v320
      %v2115 = vpop.permute.xlu0 %2114
      %2117 = vset.pattern.permute.xlu0 2
      %2118 = vperm.xlu0 %2117, %v321
      %v2119 = vpop.permute.xlu0 %2118
      %2121 = vset.pattern.permute.xlu0 2
      %2122 = vperm.xlu0 %2121, %v322
      %v2123 = vpop.permute.xlu0 %2122
      %2125 = vset.pattern.permute.xlu0 2
      %2126 = vperm.xlu0 %2125, %v323
      %v2127 = vpop.permute.xlu0 %2126
      %2129 = vset.pattern.permute.xlu0 2
      %2130 = vperm.xlu0 %2129, %v324
      %v2131 = vpop.permute.xlu0 %2130
      %2133 = vset.pattern.permute.xlu0 2
      %2134 = vperm.xlu0 %2133, %v325
      %v2135 = vpop.permute.xlu0 %2134
      %2137 = vset.pattern.permute.xlu0 2
      %2138 = vperm.xlu0 %2137, %v326
      %v2139 = vpop.permute.xlu0 %2138
      %2141 = vset.pattern.permute.xlu0 2
      %2142 = vperm.xlu0 %2141, %v327
      %v2143 = vpop.permute.xlu0 %2142
      %2145 = vset.pattern.permute.xlu0 2
      %2146 = vperm.xlu0 %2145, %v328
      %v2147 = vpop.permute.xlu0 %2146
      %2149 = vset.pattern.permute.xlu0 2
      %2150 = vperm.xlu0 %2149, %v329
      %v2151 = vpop.permute.xlu0 %2150
      %2153 = vset.pattern.permute.xlu0 2
      %2154 = vperm.xlu0 %2153, %v330
      %v2155 = vpop.permute.xlu0 %2154
      %2157 = vset.pattern.permute.xlu0 2
      %2158 = vperm.xlu0 %2157, %v331
      %v2159 = vpop.permute.xlu0 %2158
      %2161 = vset.pattern.permute.xlu0 2
      %2162 = vperm.xlu0 %2161, %v332
      %v2163 = vpop.permute.xlu0 %2162
      %2165 = vset.pattern.permute.xlu0 2
      %2166 = vperm.xlu0 %2165, %v333
      %v2167 = vpop.permute.xlu0 %2166
      %2169 = vset.pattern.permute.xlu0 2
      %2170 = vperm.xlu0 %2169, %v334
      %v2171 = vpop.permute.xlu0 %2170
      %2173 = vset.pattern.permute.xlu0 2
      %2174 = vperm.xlu0 %2173, %v335
      %v2175 = vpop.permute.xlu0 %2174
      %2177 = vset.pattern.permute.xlu0 2
      %2178 = vperm.xlu0 %2177, %v336
      %v2179 = vpop.permute.xlu0 %2178
      %2181 = vset.pattern.permute.xlu0 2
      %2182 = vperm.xlu0 %2181, %v337
      %v2183 = vpop.permute.xlu0 %2182
      %2185 = vset.pattern.permute.xlu0 2
      %2186 = vperm.xlu0 %2185, %v338
      %v2187 = vpop.permute.xlu0 %2186
      %2189 = vset.pattern.permute.xlu0 2
      %2190 = vperm.xlu0 %2189, %v339
      %v2191 = vpop.permute.xlu0 %2190
      %2193 = vset.pattern.permute.xlu0 2
      %2194 = vperm.xlu0 %2193, %v340
      %v2195 = vpop.permute.xlu0 %2194
      %2197 = vset.pattern.permute.xlu0 2
      %2198 = vperm.xlu0 %2197, %v341
      %v2199 = vpop.permute.xlu0 %2198
      %2201 = vset.pattern.permute.xlu0 2
      %2202 = vperm.xlu0 %2201, %v342
      %v2203 = vpop.permute.xlu0 %2202
      %2205 = vset.pattern.permute.xlu0 2
      %2206 = vperm.xlu0 %2205, %v343
      %v2207 = vpop.permute.xlu0 %2206
      %2209 = vset.pattern.permute.xlu0 2
      %2210 = vperm.xlu0 %2209, %v344
      %v2211 = vpop.permute.xlu0 %2210
      %2213 = vset.pattern.permute.xlu0 2
      %2214 = vperm.xlu0 %2213, %v345
      %v2215 = vpop.permute.xlu0 %2214
      %2217 = vset.pattern.permute.xlu0 2
      %2218 = vperm.xlu0 %2217, %v346
      %v2219 = vpop.permute.xlu0 %2218
      %2221 = vset.pattern.permute.xlu0 2
      %2222 = vperm.xlu0 %2221, %v347
      %v2223 = vpop.permute.xlu0 %2222
      %2225 = vset.pattern.permute.xlu0 2
      %2226 = vperm.xlu0 %2225, %v348
      %v2227 = vpop.permute.xlu0 %2226
      %2229 = vset.pattern.permute.xlu0 2
      %2230 = vperm.xlu0 %2229, %v349
      %v2231 = vpop.permute.xlu0 %2230
      %2233 = vset.pattern.permute.xlu0 2
      %2234 = vperm.xlu0 %2233, %v350
      %v2235 = vpop.permute.xlu0 %2234
      %2237 = vset.pattern.permute.xlu0 2
      %2238 = vperm.xlu0 %2237, %v351
      %v2239 = vpop.permute.xlu0 %2238
      %2241 = vset.pattern.permute.xlu0 2
      %2242 = vperm.xlu0 %2241, %v352
      %v2243 = vpop.permute.xlu0 %2242
      %2245 = vset.pattern.permute.xlu0 2
      %2246 = vperm.xlu0 %2245, %v353
      %v2247 = vpop.permute.xlu0 %2246
      %2249 = vset.pattern.permute.xlu0 2
      %2250 = vperm.xlu0 %2249, %v354
      %v2251 = vpop.permute.xlu0 %2250
      %2253 = vset.pattern.permute.xlu0 2
      %2254 = vperm.xlu0 %2253, %v355
      %v2255 = vpop.permute.xlu0 %2254
      %2257 = vset.pattern.permute.xlu0 2
      %2258 = vperm.xlu0 %2257, %v356
      %v2259 = vpop.permute.xlu0 %2258
      %2261 = vset.pattern.permute.xlu0 2
      %2262 = vperm.xlu0 %2261, %v357
      %v2263 = vpop.permute.xlu0 %2262
      %2265 = vset.pattern.permute.xlu0 2
      %2266 = vperm.xlu0 %2265, %v358
      %v2267 = vpop.permute.xlu0 %2266
      %2269 = vset.pattern.permute.xlu0 2
      %2270 = vperm.xlu0 %2269, %v359
      %v2271 = vpop.permute.xlu0 %2270
      %2273 = vset.pattern.permute.xlu0 2
      %2274 = vperm.xlu0 %2273, %v360
      %v2275 = vpop.permute.xlu0 %2274
      %2277 = vset.pattern.permute.xlu0 2
      %2278 = vperm.xlu0 %2277, %v361
      %v2279 = vpop.permute.xlu0 %2278
      %2281 = vset.pattern.permute.xlu0 2
      %2282 = vperm.xlu0 %2281, %v362
      %v2283 = vpop.permute.xlu0 %2282
      %2285 = vset.pattern.permute.xlu0 2
      %2286 = vperm.xlu0 %2285, %v363
      %v2287 = vpop.permute.xlu0 %2286
      %2289 = vset.pattern.permute.xlu0 2
      %2290 = vperm.xlu0 %2289, %v364
      %v2291 = vpop.permute.xlu0 %2290
      %2293 = vset.pattern.permute.xlu0 2
      %2294 = vperm.xlu0 %2293, %v365
      %v2295 = vpop.permute.xlu0 %2294
      %2297 = vset.pattern.permute.xlu0 2
      %2298 = vperm.xlu0 %2297, %v366
      %v2299 = vpop.permute.xlu0 %2298
      %2301 = vset.pattern.permute.xlu0 2
      %2302 = vperm.xlu0 %2301, %v367
      %v2303 = vpop.permute.xlu0 %2302
      %2305 = vset.pattern.permute.xlu0 2
      %2306 = vperm.xlu0 %2305, %v368
      %v2307 = vpop.permute.xlu0 %2306
      %2309 = vset.pattern.permute.xlu0 2
      %2310 = vperm.xlu0 %2309, %v369
      %v2311 = vpop.permute.xlu0 %2310
      %2313 = vset.pattern.permute.xlu0 2
      %2314 = vperm.xlu0 %2313, %v370
      %v2315 = vpop.permute.xlu0 %2314
      %2317 = vset.pattern.permute.xlu0 2
      %2318 = vperm.xlu0 %2317, %v371
      %v2319 = vpop.permute.xlu0 %2318
      %2321 = vset.pattern.permute.xlu0 2
      %2322 = vperm.xlu0 %2321, %v372
      %v2323 = vpop.permute.xlu0 %2322
      %2325 = vset.pattern.permute.xlu0 2
      %2326 = vperm.xlu0 %2325, %v373
      %v2327 = vpop.permute.xlu0 %2326
      %2329 = vset.pattern.permute.xlu0 2
      %2330 = vperm.xlu0 %2329, %v374
      %v2331 = vpop.permute.xlu0 %2330
      %2333 = vset.pattern.permute.xlu0 2
      %2334 = vperm.xlu0 %2333, %v375
      %v2335 = vpop.permute.xlu0 %2334
      %2337 = vset.pattern.permute.xlu0 2
      %2338 = vperm.xlu0 %2337, %v376
      %v2339 = vpop.permute.xlu0 %2338
      %2341 = vset.pattern.permute.xlu0 2
      %2342 = vperm.xlu0 %2341, %v377
      %v2343 = vpop.permute.xlu0 %2342
      %2345 = vset.pattern.permute.xlu0 2
      %2346 = vperm.xlu0 %2345, %v378
      %v2347 = vpop.permute.xlu0 %2346
      %2349 = vset.pattern.permute.xlu0 2
      %2350 = vperm.xlu0 %2349, %v379
      %v2351 = vpop.permute.xlu0 %2350
      %2353 = vset.pattern.permute.xlu0 2
      %2354 = vperm.xlu0 %2353, %v380
      %v2355 = vpop.permute.xlu0 %2354
      %2357 = vset.pattern.permute.xlu0 2
      %2358 = vperm.xlu0 %2357, %v381
      %v2359 = vpop.permute.xlu0 %2358
      %2361 = vset.pattern.permute.xlu0 2
      %2362 = vperm.xlu0 %2361, %v382
      %v2363 = vpop.permute.xlu0 %2362
      %2365 = vset.pattern.permute.xlu0 2
      %2366 = vperm.xlu0 %2365, %v383
      %v2367 = vpop.permute.xlu0 %2366
      %2369 = vset.pattern.permute.xlu0 2
      %2370 = vperm.xlu0 %2369, %v384
      %v2371 = vpop.permute.xlu0 %2370
      %2373 = vset.pattern.permute.xlu0 2
      %2374 = vperm.xlu0 %2373, %v385
      %v2375 = vpop.permute.xlu0 %2374
      %2377 = vset.pattern.permute.xlu0 2
      %2378 = vperm.xlu0 %2377, %v386
      %v2379 = vpop.permute.xlu0 %2378
      %2381 = vset.pattern.permute.xlu0 2
      %2382 = vperm.xlu0 %2381, %v387
      %v2383 = vpop.permute.xlu0 %2382
      %2385 = vset.pattern.permute.xlu0 2
      %2386 = vperm.xlu0 %2385, %v388
      %v2387 = vpop.permute.xlu0 %2386
      %2389 = vset.pattern.permute.xlu0 2
      %2390 = vperm.xlu0 %2389, %v389
      %v2391 = vpop.permute.xlu0 %2390
      %2393 = vset.pattern.permute.xlu0 2
      %2394 = vperm.xlu0 %2393, %v390
      %v2395 = vpop.permute.xlu0 %2394
      %2397 = vset.pattern.permute.xlu0 2
      %2398 = vperm.xlu0 %2397, %v391
      %v2399 = vpop.permute.xlu0 %2398
      %2401 = vset.pattern.permute.xlu0 2
      %2402 = vperm.xlu0 %2401, %v392
      %v2403 = vpop.permute.xlu0 %2402
      %2405 = vset.pattern.permute.xlu0 2
      %2406 = vperm.xlu0 %2405, %v393
      %v2407 = vpop.permute.xlu0 %2406
      %2409 = vset.pattern.permute.xlu0 2
      %2410 = vperm.xlu0 %2409, %v394
      %v2411 = vpop.permute.xlu0 %2410
      %2413 = vset.pattern.permute.xlu0 2
      %2414 = vperm.xlu0 %2413, %v395
      %v2415 = vpop.permute.xlu0 %2414
      %2417 = vset.pattern.permute.xlu0 2
      %2418 = vperm.xlu0 %2417, %v396
      %v2419 = vpop.permute.xlu0 %2418
      %2421 = vset.pattern.permute.xlu0 2
      %2422 = vperm.xlu0 %2421, %v397
      %v2423 = vpop.permute.xlu0 %2422
      %2425 = vset.pattern.permute.xlu0 2
      %2426 = vperm.xlu0 %2425, %v398
      %v2427 = vpop.permute.xlu0 %2426
      %2429 = vset.pattern.permute.xlu0 2
      %2430 = vperm.xlu0 %2429, %v399
      %v2431 = vpop.permute.xlu0 %2430
      %2433 = vset.pattern.permute.xlu0 2
      %2434 = vperm.xlu0 %2433, %v400
      %v2435 = vpop.permute.xlu0 %2434
      %2437 = vset.pattern.permute.xlu0 2
      %2438 = vperm.xlu0 %2437, %v401
      %v2439 = vpop.permute.xlu0 %2438
      %2441 = vset.pattern.permute.xlu0 2
      %2442 = vperm.xlu0 %2441, %v402
      %v2443 = vpop.permute.xlu0 %2442
      %2445 = vset.pattern.permute.xlu0 2
      %2446 = vperm.xlu0 %2445, %v403
      %v2447 = vpop.permute.xlu0 %2446
      %2449 = vset.pattern.permute.xlu0 2
      %2450 = vperm.xlu0 %2449, %v404
      %v2451 = vpop.permute.xlu0 %2450
      %2453 = vset.pattern.permute.xlu0 2
      %2454 = vperm.xlu0 %2453, %v405
      %v2455 = vpop.permute.xlu0 %2454
      %2457 = vset.pattern.permute.xlu0 2
      %2458 = vperm.xlu0 %2457, %v406
      %v2459 = vpop.permute.xlu0 %2458
      %2461 = vset.pattern.permute.xlu0 2
      %2462 = vperm.xlu0 %2461, %v407
      %v2463 = vpop.permute.xlu0 %2462
      %v2465 = vlaneseq
      %v2466 = vshrl.u32 %v2465, 7
      %v2467 = vsub.s32 2, %v2466
      %v2468 = vrot.slane %v408, %v2467
      %v2469 = vmul.f32 %v1955, %v2468
      %v2470 = vmul.f32 %v1959, %v2468
      %v2471 = vmul.f32 %v1963, %v2468
      %v2472 = vmul.f32 %v1967, %v2468
      %v2473 = vmul.f32 %v1971, %v2468
      %v2474 = vmul.f32 %v1975, %v2468
      %v2475 = vmul.f32 %v1979, %v2468
      %v2476 = vmul.f32 %v1983, %v2468
      %v2477 = vmul.f32 %v1987, %v2468
      %v2478 = vmul.f32 %v1991, %v2468
      %v2479 = vmul.f32 %v1995, %v2468
      %v2480 = vmul.f32 %v1999, %v2468
      %v2481 = vmul.f32 %v2003, %v2468
      %v2482 = vmul.f32 %v2007, %v2468
      %v2483 = vmul.f32 %v2011, %v2468
      %v2484 = vmul.f32 %v2015, %v2468
      %v2485 = vmul.f32 %v2019, %v2468
      %v2486 = vmul.f32 %v2023, %v2468
      %v2487 = vmul.f32 %v2027, %v2468
      %v2488 = vmul.f32 %v2031, %v2468
      %v2489 = vmul.f32 %v2035, %v2468
      %v2490 = vmul.f32 %v2039, %v2468
      %v2491 = vmul.f32 %v2043, %v2468
      %v2492 = vmul.f32 %v2047, %v2468
      %v2493 = vmul.f32 %v2051, %v2468
      %v2494 = vmul.f32 %v2055, %v2468
      %v2495 = vmul.f32 %v2059, %v2468
      %v2496 = vmul.f32 %v2063, %v2468
      %v2497 = vmul.f32 %v2067, %v2468
      %v2498 = vmul.f32 %v2071, %v2468
      %v2499 = vmul.f32 %v2075, %v2468
      %v2500 = vmul.f32 %v2079, %v2468
      %v2501 = vmul.f32 %v2083, %v2468
      %v2502 = vmul.f32 %v2087, %v2468
      %v2503 = vmul.f32 %v2091, %v2468
      %v2504 = vmul.f32 %v2095, %v2468
      %v2505 = vmul.f32 %v2099, %v2468
      %v2506 = vmul.f32 %v2103, %v2468
      %v2507 = vmul.f32 %v2107, %v2468
      %v2508 = vmul.f32 %v2111, %v2468
      %v2509 = vmul.f32 %v2115, %v2468
      %v2510 = vmul.f32 %v2119, %v2468
      %v2511 = vmul.f32 %v2123, %v2468
      %v2512 = vmul.f32 %v2127, %v2468
      %v2513 = vmul.f32 %v2131, %v2468
      %v2514 = vmul.f32 %v2135, %v2468
      %v2515 = vmul.f32 %v2139, %v2468
      %v2516 = vmul.f32 %v2143, %v2468
      %v2517 = vmul.f32 %v2147, %v2468
      %v2518 = vmul.f32 %v2151, %v2468
      %v2519 = vmul.f32 %v2155, %v2468
      %v2520 = vmul.f32 %v2159, %v2468
      %v2521 = vmul.f32 %v2163, %v2468
      %v2522 = vmul.f32 %v2167, %v2468
      %v2523 = vmul.f32 %v2171, %v2468
      %v2524 = vmul.f32 %v2175, %v2468
      %v2525 = vmul.f32 %v2179, %v2468
      %v2526 = vmul.f32 %v2183, %v2468
      %v2527 = vmul.f32 %v2187, %v2468
      %v2528 = vmul.f32 %v2191, %v2468
      %v2529 = vmul.f32 %v2195, %v2468
      %v2530 = vmul.f32 %v2199, %v2468
      %v2531 = vmul.f32 %v2203, %v2468
      %v2532 = vmul.f32 %v2207, %v2468
      %v2533 = vmul.f32 %v2211, %v2468
      %v2534 = vmul.f32 %v2215, %v2468
      %v2535 = vmul.f32 %v2219, %v2468
      %v2536 = vmul.f32 %v2223, %v2468
      %v2537 = vmul.f32 %v2227, %v2468
      %v2538 = vmul.f32 %v2231, %v2468
      %v2539 = vmul.f32 %v2235, %v2468
      %v2540 = vmul.f32 %v2239, %v2468
      %v2541 = vmul.f32 %v2243, %v2468
      %v2542 = vmul.f32 %v2247, %v2468
      %v2543 = vmul.f32 %v2251, %v2468
      %v2544 = vmul.f32 %v2255, %v2468
      %v2545 = vmul.f32 %v2259, %v2468
      %v2546 = vmul.f32 %v2263, %v2468
      %v2547 = vmul.f32 %v2267, %v2468
      %v2548 = vmul.f32 %v2271, %v2468
      %v2549 = vmul.f32 %v2275, %v2468
      %v2550 = vmul.f32 %v2279, %v2468
      %v2551 = vmul.f32 %v2283, %v2468
      %v2552 = vmul.f32 %v2287, %v2468
      %v2553 = vmul.f32 %v2291, %v2468
      %v2554 = vmul.f32 %v2295, %v2468
      %v2555 = vmul.f32 %v2299, %v2468
      %v2556 = vmul.f32 %v2303, %v2468
      %v2557 = vmul.f32 %v2307, %v2468
      %v2558 = vmul.f32 %v2311, %v2468
      %v2559 = vmul.f32 %v2315, %v2468
      %v2560 = vmul.f32 %v2319, %v2468
      %v2561 = vmul.f32 %v2323, %v2468
      %v2562 = vmul.f32 %v2327, %v2468
      %v2563 = vmul.f32 %v2331, %v2468
      %v2564 = vmul.f32 %v2335, %v2468
      %v2565 = vmul.f32 %v2339, %v2468
      %v2566 = vmul.f32 %v2343, %v2468
      %v2567 = vmul.f32 %v2347, %v2468
      %v2568 = vmul.f32 %v2351, %v2468
      %v2569 = vmul.f32 %v2355, %v2468
      %v2570 = vmul.f32 %v2359, %v2468
      %v2571 = vmul.f32 %v2363, %v2468
      %v2572 = vmul.f32 %v2367, %v2468
      %v2573 = vmul.f32 %v2371, %v2468
      %v2574 = vmul.f32 %v2375, %v2468
      %v2575 = vmul.f32 %v2379, %v2468
      %v2576 = vmul.f32 %v2383, %v2468
      %v2577 = vmul.f32 %v2387, %v2468
      %v2578 = vmul.f32 %v2391, %v2468
      %v2579 = vmul.f32 %v2395, %v2468
      %v2580 = vmul.f32 %v2399, %v2468
      %v2581 = vmul.f32 %v2403, %v2468
      %v2582 = vmul.f32 %v2407, %v2468
      %v2583 = vmul.f32 %v2411, %v2468
      %v2584 = vmul.f32 %v2415, %v2468
      %v2585 = vmul.f32 %v2419, %v2468
      %v2586 = vmul.f32 %v2423, %v2468
      %v2587 = vmul.f32 %v2427, %v2468
      %v2588 = vmul.f32 %v2431, %v2468
      %v2589 = vmul.f32 %v2435, %v2468
      %v2590 = vmul.f32 %v2439, %v2468
      %v2591 = vmul.f32 %v2443, %v2468
      %v2592 = vmul.f32 %v2447, %v2468
      %v2593 = vmul.f32 %v2451, %v2468
      %v2594 = vmul.f32 %v2455, %v2468
      %v2595 = vmul.f32 %v2459, %v2468
      %v2596 = vmul.f32 %v2463, %v2468
      %v2597 = vadd.f32 %v1825, %v2469
      %v2598 = vadd.f32 %v1826, %v2470
      %v2599 = vadd.f32 %v1827, %v2471
      %v2600 = vadd.f32 %v1828, %v2472
      %v2601 = vadd.f32 %v1829, %v2473
      %v2602 = vadd.f32 %v1830, %v2474
      %v2603 = vadd.f32 %v1831, %v2475
      %v2604 = vadd.f32 %v1832, %v2476
      %v2605 = vadd.f32 %v1833, %v2477
      %v2606 = vadd.f32 %v1834, %v2478
      %v2607 = vadd.f32 %v1835, %v2479
      %v2608 = vadd.f32 %v1836, %v2480
      %v2609 = vadd.f32 %v1837, %v2481
      %v2610 = vadd.f32 %v1838, %v2482
      %v2611 = vadd.f32 %v1839, %v2483
      %v2612 = vadd.f32 %v1840, %v2484
      %v2613 = vadd.f32 %v1841, %v2485
      %v2614 = vadd.f32 %v1842, %v2486
      %v2615 = vadd.f32 %v1843, %v2487
      %v2616 = vadd.f32 %v1844, %v2488
      %v2617 = vadd.f32 %v1845, %v2489
      %v2618 = vadd.f32 %v1846, %v2490
      %v2619 = vadd.f32 %v1847, %v2491
      %v2620 = vadd.f32 %v1848, %v2492
      %v2621 = vadd.f32 %v1849, %v2493
      %v2622 = vadd.f32 %v1850, %v2494
      %v2623 = vadd.f32 %v1851, %v2495
      %v2624 = vadd.f32 %v1852, %v2496
      %v2625 = vadd.f32 %v1853, %v2497
      %v2626 = vadd.f32 %v1854, %v2498
      %v2627 = vadd.f32 %v1855, %v2499
      %v2628 = vadd.f32 %v1856, %v2500
      %v2629 = vadd.f32 %v1857, %v2501
      %v2630 = vadd.f32 %v1858, %v2502
      %v2631 = vadd.f32 %v1859, %v2503
      %v2632 = vadd.f32 %v1860, %v2504
      %v2633 = vadd.f32 %v1861, %v2505
      %v2634 = vadd.f32 %v1862, %v2506
      %v2635 = vadd.f32 %v1863, %v2507
      %v2636 = vadd.f32 %v1864, %v2508
      %v2637 = vadd.f32 %v1865, %v2509
      %v2638 = vadd.f32 %v1866, %v2510
      %v2639 = vadd.f32 %v1867, %v2511
      %v2640 = vadd.f32 %v1868, %v2512
      %v2641 = vadd.f32 %v1869, %v2513
      %v2642 = vadd.f32 %v1870, %v2514
      %v2643 = vadd.f32 %v1871, %v2515
      %v2644 = vadd.f32 %v1872, %v2516
      %v2645 = vadd.f32 %v1873, %v2517
      %v2646 = vadd.f32 %v1874, %v2518
      %v2647 = vadd.f32 %v1875, %v2519
      %v2648 = vadd.f32 %v1876, %v2520
      %v2649 = vadd.f32 %v1877, %v2521
      %v2650 = vadd.f32 %v1878, %v2522
      %v2651 = vadd.f32 %v1879, %v2523
      %v2652 = vadd.f32 %v1880, %v2524
      %v2653 = vadd.f32 %v1881, %v2525
      %v2654 = vadd.f32 %v1882, %v2526
      %v2655 = vadd.f32 %v1883, %v2527
      %v2656 = vadd.f32 %v1884, %v2528
      %v2657 = vadd.f32 %v1885, %v2529
      %v2658 = vadd.f32 %v1886, %v2530
      %v2659 = vadd.f32 %v1887, %v2531
      %v2660 = vadd.f32 %v1888, %v2532
      %v2661 = vadd.f32 %v1889, %v2533
      %v2662 = vadd.f32 %v1890, %v2534
      %v2663 = vadd.f32 %v1891, %v2535
      %v2664 = vadd.f32 %v1892, %v2536
      %v2665 = vadd.f32 %v1893, %v2537
      %v2666 = vadd.f32 %v1894, %v2538
      %v2667 = vadd.f32 %v1895, %v2539
      %v2668 = vadd.f32 %v1896, %v2540
      %v2669 = vadd.f32 %v1897, %v2541
      %v2670 = vadd.f32 %v1898, %v2542
      %v2671 = vadd.f32 %v1899, %v2543
      %v2672 = vadd.f32 %v1900, %v2544
      %v2673 = vadd.f32 %v1901, %v2545
      %v2674 = vadd.f32 %v1902, %v2546
      %v2675 = vadd.f32 %v1903, %v2547
      %v2676 = vadd.f32 %v1904, %v2548
      %v2677 = vadd.f32 %v1905, %v2549
      %v2678 = vadd.f32 %v1906, %v2550
      %v2679 = vadd.f32 %v1907, %v2551
      %v2680 = vadd.f32 %v1908, %v2552
      %v2681 = vadd.f32 %v1909, %v2553
      %v2682 = vadd.f32 %v1910, %v2554
      %v2683 = vadd.f32 %v1911, %v2555
      %v2684 = vadd.f32 %v1912, %v2556
      %v2685 = vadd.f32 %v1913, %v2557
      %v2686 = vadd.f32 %v1914, %v2558
      %v2687 = vadd.f32 %v1915, %v2559
      %v2688 = vadd.f32 %v1916, %v2560
      %v2689 = vadd.f32 %v1917, %v2561
      %v2690 = vadd.f32 %v1918, %v2562
      %v2691 = vadd.f32 %v1919, %v2563
      %v2692 = vadd.f32 %v1920, %v2564
      %v2693 = vadd.f32 %v1921, %v2565
      %v2694 = vadd.f32 %v1922, %v2566
      %v2695 = vadd.f32 %v1923, %v2567
      %v2696 = vadd.f32 %v1924, %v2568
      %v2697 = vadd.f32 %v1925, %v2569
      %v2698 = vadd.f32 %v1926, %v2570
      %v2699 = vadd.f32 %v1927, %v2571
      %v2700 = vadd.f32 %v1928, %v2572
      %v2701 = vadd.f32 %v1929, %v2573
      %v2702 = vadd.f32 %v1930, %v2574
      %v2703 = vadd.f32 %v1931, %v2575
      %v2704 = vadd.f32 %v1932, %v2576
      %v2705 = vadd.f32 %v1933, %v2577
      %v2706 = vadd.f32 %v1934, %v2578
      %v2707 = vadd.f32 %v1935, %v2579
      %v2708 = vadd.f32 %v1936, %v2580
      %v2709 = vadd.f32 %v1937, %v2581
      %v2710 = vadd.f32 %v1938, %v2582
      %v2711 = vadd.f32 %v1939, %v2583
      %v2712 = vadd.f32 %v1940, %v2584
      %v2713 = vadd.f32 %v1941, %v2585
      %v2714 = vadd.f32 %v1942, %v2586
      %v2715 = vadd.f32 %v1943, %v2587
      %v2716 = vadd.f32 %v1944, %v2588
      %v2717 = vadd.f32 %v1945, %v2589
      %v2718 = vadd.f32 %v1946, %v2590
      %v2719 = vadd.f32 %v1947, %v2591
      %v2720 = vadd.f32 %v1948, %v2592
      %v2721 = vadd.f32 %v1949, %v2593
      %v2722 = vadd.f32 %v1950, %v2594
      %v2723 = vadd.f32 %v1951, %v2595
      %v2724 = vadd.f32 %v1952, %v2596
      %v2725 = vld [vmem:[%s2] sm:$0x1]
      %v2727 = vlaneseq
      %v2728 = vshrl.u32 %v2727, 7
      %v2729 = vsub.s32 0, %v2728
      %v2730 = vrot.slane %v2725, %v2729
      %v2732 = vadd.f32 %v2597, %v2730
      %v2733 = vadd.f32 %v2598, %v2730
      %v2734 = vadd.f32 %v2599, %v2730
      %v2735 = vadd.f32 %v2600, %v2730
      %v2736 = vadd.f32 %v2601, %v2730
      %v2737 = vadd.f32 %v2602, %v2730
      %v2738 = vadd.f32 %v2603, %v2730
      %v2739 = vadd.f32 %v2604, %v2730
      %v2740 = vadd.f32 %v2605, %v2730
      %v2741 = vadd.f32 %v2606, %v2730
      %v2742 = vadd.f32 %v2607, %v2730
      %v2743 = vadd.f32 %v2608, %v2730
      %v2744 = vadd.f32 %v2609, %v2730
      %v2745 = vadd.f32 %v2610, %v2730
      %v2746 = vadd.f32 %v2611, %v2730
      %v2747 = vadd.f32 %v2612, %v2730
      %v2748 = vadd.f32 %v2613, %v2730
      %v2749 = vadd.f32 %v2614, %v2730
      %v2750 = vadd.f32 %v2615, %v2730
      %v2751 = vadd.f32 %v2616, %v2730
      %v2752 = vadd.f32 %v2617, %v2730
      %v2753 = vadd.f32 %v2618, %v2730
      %v2754 = vadd.f32 %v2619, %v2730
      %v2755 = vadd.f32 %v2620, %v2730
      %v2756 = vadd.f32 %v2621, %v2730
      %v2757 = vadd.f32 %v2622, %v2730
      %v2758 = vadd.f32 %v2623, %v2730
      %v2759 = vadd.f32 %v2624, %v2730
      %v2760 = vadd.f32 %v2625, %v2730
      %v2761 = vadd.f32 %v2626, %v2730
      %v2762 = vadd.f32 %v2627, %v2730
      %v2763 = vadd.f32 %v2628, %v2730
      %v2764 = vadd.f32 %v2629, %v2730
      %v2765 = vadd.f32 %v2630, %v2730
      %v2766 = vadd.f32 %v2631, %v2730
      %v2767 = vadd.f32 %v2632, %v2730
      %v2768 = vadd.f32 %v2633, %v2730
      %v2769 = vadd.f32 %v2634, %v2730
      %v2770 = vadd.f32 %v2635, %v2730
      %v2771 = vadd.f32 %v2636, %v2730
      %v2772 = vadd.f32 %v2637, %v2730
      %v2773 = vadd.f32 %v2638, %v2730
      %v2774 = vadd.f32 %v2639, %v2730
      %v2775 = vadd.f32 %v2640, %v2730
      %v2776 = vadd.f32 %v2641, %v2730
      %v2777 = vadd.f32 %v2642, %v2730
      %v2778 = vadd.f32 %v2643, %v2730
      %v2779 = vadd.f32 %v2644, %v2730
      %v2780 = vadd.f32 %v2645, %v2730
      %v2781 = vadd.f32 %v2646, %v2730
      %v2782 = vadd.f32 %v2647, %v2730
      %v2783 = vadd.f32 %v2648, %v2730
      %v2784 = vadd.f32 %v2649, %v2730
      %v2785 = vadd.f32 %v2650, %v2730
      %v2786 = vadd.f32 %v2651, %v2730
      %v2787 = vadd.f32 %v2652, %v2730
      %v2788 = vadd.f32 %v2653, %v2730
      %v2789 = vadd.f32 %v2654, %v2730
      %v2790 = vadd.f32 %v2655, %v2730
      %v2791 = vadd.f32 %v2656, %v2730
      %v2792 = vadd.f32 %v2657, %v2730
      %v2793 = vadd.f32 %v2658, %v2730
      %v2794 = vadd.f32 %v2659, %v2730
      %v2795 = vadd.f32 %v2660, %v2730
      %v2796 = vadd.f32 %v2661, %v2730
      %v2797 = vadd.f32 %v2662, %v2730
      %v2798 = vadd.f32 %v2663, %v2730
      %v2799 = vadd.f32 %v2664, %v2730
      %v2800 = vadd.f32 %v2665, %v2730
      %v2801 = vadd.f32 %v2666, %v2730
      %v2802 = vadd.f32 %v2667, %v2730
      %v2803 = vadd.f32 %v2668, %v2730
      %v2804 = vadd.f32 %v2669, %v2730
      %v2805 = vadd.f32 %v2670, %v2730
      %v2806 = vadd.f32 %v2671, %v2730
      %v2807 = vadd.f32 %v2672, %v2730
      %v2808 = vadd.f32 %v2673, %v2730
      %v2809 = vadd.f32 %v2674, %v2730
      %v2810 = vadd.f32 %v2675, %v2730
      %v2811 = vadd.f32 %v2676, %v2730
      %v2812 = vadd.f32 %v2677, %v2730
      %v2813 = vadd.f32 %v2678, %v2730
      %v2814 = vadd.f32 %v2679, %v2730
      %v2815 = vadd.f32 %v2680, %v2730
      %v2816 = vadd.f32 %v2681, %v2730
      %v2817 = vadd.f32 %v2682, %v2730
      %v2818 = vadd.f32 %v2683, %v2730
      %v2819 = vadd.f32 %v2684, %v2730
      %v2820 = vadd.f32 %v2685, %v2730
      %v2821 = vadd.f32 %v2686, %v2730
      %v2822 = vadd.f32 %v2687, %v2730
      %v2823 = vadd.f32 %v2688, %v2730
      %v2824 = vadd.f32 %v2689, %v2730
      %v2825 = vadd.f32 %v2690, %v2730
      %v2826 = vadd.f32 %v2691, %v2730
      %v2827 = vadd.f32 %v2692, %v2730
      %v2828 = vadd.f32 %v2693, %v2730
      %v2829 = vadd.f32 %v2694, %v2730
      %v2830 = vadd.f32 %v2695, %v2730
      %v2831 = vadd.f32 %v2696, %v2730
      %v2832 = vadd.f32 %v2697, %v2730
      %v2833 = vadd.f32 %v2698, %v2730
      %v2834 = vadd.f32 %v2699, %v2730
      %v2835 = vadd.f32 %v2700, %v2730
      %v2836 = vadd.f32 %v2701, %v2730
      %v2837 = vadd.f32 %v2702, %v2730
      %v2838 = vadd.f32 %v2703, %v2730
      %v2839 = vadd.f32 %v2704, %v2730
      %v2840 = vadd.f32 %v2705, %v2730
      %v2841 = vadd.f32 %v2706, %v2730
      %v2842 = vadd.f32 %v2707, %v2730
      %v2843 = vadd.f32 %v2708, %v2730
      %v2844 = vadd.f32 %v2709, %v2730
      %v2845 = vadd.f32 %v2710, %v2730
      %v2846 = vadd.f32 %v2711, %v2730
      %v2847 = vadd.f32 %v2712, %v2730
      %v2848 = vadd.f32 %v2713, %v2730
      %v2849 = vadd.f32 %v2714, %v2730
      %v2850 = vadd.f32 %v2715, %v2730
      %v2851 = vadd.f32 %v2716, %v2730
      %v2852 = vadd.f32 %v2717, %v2730
      %v2853 = vadd.f32 %v2718, %v2730
      %v2854 = vadd.f32 %v2719, %v2730
      %v2855 = vadd.f32 %v2720, %v2730
      %v2856 = vadd.f32 %v2721, %v2730
      %v2857 = vadd.f32 %v2722, %v2730
      %v2858 = vadd.f32 %v2723, %v2730
      %v2859 = vadd.f32 %v2724, %v2730
      %v2860 = vmax.f32 %v2732, 0.0
      %v2861 = vmax.f32 %v2733, 0.0
      %v2862 = vmax.f32 %v2734, 0.0
      %v2863 = vmax.f32 %v2735, 0.0
      %v2864 = vmax.f32 %v2736, 0.0
      %v2865 = vmax.f32 %v2737, 0.0
      %v2866 = vmax.f32 %v2738, 0.0
      %v2867 = vmax.f32 %v2739, 0.0
      %v2868 = vmax.f32 %v2740, 0.0
      %v2869 = vmax.f32 %v2741, 0.0
      %v2870 = vmax.f32 %v2742, 0.0
      %v2871 = vmax.f32 %v2743, 0.0
      %v2872 = vmax.f32 %v2744, 0.0
      %v2873 = vmax.f32 %v2745, 0.0
      %v2874 = vmax.f32 %v2746, 0.0
      %v2875 = vmax.f32 %v2747, 0.0
      %v2876 = vmax.f32 %v2748, 0.0
      %v2877 = vmax.f32 %v2749, 0.0
      %v2878 = vmax.f32 %v2750, 0.0
      %v2879 = vmax.f32 %v2751, 0.0
      %v2880 = vmax.f32 %v2752, 0.0
      %v2881 = vmax.f32 %v2753, 0.0
      %v2882 = vmax.f32 %v2754, 0.0
      %v2883 = vmax.f32 %v2755, 0.0
      %v2884 = vmax.f32 %v2756, 0.0
      %v2885 = vmax.f32 %v2757, 0.0
      %v2886 = vmax.f32 %v2758, 0.0
      %v2887 = vmax.f32 %v2759, 0.0
      %v2888 = vmax.f32 %v2760, 0.0
      %v2889 = vmax.f32 %v2761, 0.0
      %v2890 = vmax.f32 %v2762, 0.0
      %v2891 = vmax.f32 %v2763, 0.0
      %v2892 = vmax.f32 %v2764, 0.0
      %v2893 = vmax.f32 %v2765, 0.0
      %v2894 = vmax.f32 %v2766, 0.0
      %v2895 = vmax.f32 %v2767, 0.0
      %v2896 = vmax.f32 %v2768, 0.0
      %v2897 = vmax.f32 %v2769, 0.0
      %v2898 = vmax.f32 %v2770, 0.0
      %v2899 = vmax.f32 %v2771, 0.0
      %v2900 = vmax.f32 %v2772, 0.0
      %v2901 = vmax.f32 %v2773, 0.0
      %v2902 = vmax.f32 %v2774, 0.0
      %v2903 = vmax.f32 %v2775, 0.0
      %v2904 = vmax.f32 %v2776, 0.0
      %v2905 = vmax.f32 %v2777, 0.0
      %v2906 = vmax.f32 %v2778, 0.0
      %v2907 = vmax.f32 %v2779, 0.0
      %v2908 = vmax.f32 %v2780, 0.0
      %v2909 = vmax.f32 %v2781, 0.0
      %v2910 = vmax.f32 %v2782, 0.0
      %v2911 = vmax.f32 %v2783, 0.0
      %v2912 = vmax.f32 %v2784, 0.0
      %v2913 = vmax.f32 %v2785, 0.0
      %v2914 = vmax.f32 %v2786, 0.0
      %v2915 = vmax.f32 %v2787, 0.0
      %v2916 = vmax.f32 %v2788, 0.0
      %v2917 = vmax.f32 %v2789, 0.0
      %v2918 = vmax.f32 %v2790, 0.0
      %v2919 = vmax.f32 %v2791, 0.0
      %v2920 = vmax.f32 %v2792, 0.0
      %v2921 = vmax.f32 %v2793, 0.0
      %v2922 = vmax.f32 %v2794, 0.0
      %v2923 = vmax.f32 %v2795, 0.0
      %v2924 = vmax.f32 %v2796, 0.0
      %v2925 = vmax.f32 %v2797, 0.0
      %v2926 = vmax.f32 %v2798, 0.0
      %v2927 = vmax.f32 %v2799, 0.0
      %v2928 = vmax.f32 %v2800, 0.0
      %v2929 = vmax.f32 %v2801, 0.0
      %v2930 = vmax.f32 %v2802, 0.0
      %v2931 = vmax.f32 %v2803, 0.0
      %v2932 = vmax.f32 %v2804, 0.0
      %v2933 = vmax.f32 %v2805, 0.0
      %v2934 = vmax.f32 %v2806, 0.0
      %v2935 = vmax.f32 %v2807, 0.0
      %v2936 = vmax.f32 %v2808, 0.0
      %v2937 = vmax.f32 %v2809, 0.0
      %v2938 = vmax.f32 %v2810, 0.0
      %v2939 = vmax.f32 %v2811, 0.0
      %v2940 = vmax.f32 %v2812, 0.0
      %v2941 = vmax.f32 %v2813, 0.0
      %v2942 = vmax.f32 %v2814, 0.0
      %v2943 = vmax.f32 %v2815, 0.0
      %v2944 = vmax.f32 %v2816, 0.0
      %v2945 = vmax.f32 %v2817, 0.0
      %v2946 = vmax.f32 %v2818, 0.0
      %v2947 = vmax.f32 %v2819, 0.0
      %v2948 = vmax.f32 %v2820, 0.0
      %v2949 = vmax.f32 %v2821, 0.0
      %v2950 = vmax.f32 %v2822, 0.0
      %v2951 = vmax.f32 %v2823, 0.0
      %v2952 = vmax.f32 %v2824, 0.0
      %v2953 = vmax.f32 %v2825, 0.0
      %v2954 = vmax.f32 %v2826, 0.0
      %v2955 = vmax.f32 %v2827, 0.0
      %v2956 = vmax.f32 %v2828, 0.0
      %v2957 = vmax.f32 %v2829, 0.0
      %v2958 = vmax.f32 %v2830, 0.0
      %v2959 = vmax.f32 %v2831, 0.0
      %v2960 = vmax.f32 %v2832, 0.0
      %v2961 = vmax.f32 %v2833, 0.0
      %v2962 = vmax.f32 %v2834, 0.0
      %v2963 = vmax.f32 %v2835, 0.0
      %v2964 = vmax.f32 %v2836, 0.0
      %v2965 = vmax.f32 %v2837, 0.0
      %v2966 = vmax.f32 %v2838, 0.0
      %v2967 = vmax.f32 %v2839, 0.0
      %v2968 = vmax.f32 %v2840, 0.0
      %v2969 = vmax.f32 %v2841, 0.0
      %v2970 = vmax.f32 %v2842, 0.0
      %v2971 = vmax.f32 %v2843, 0.0
      %v2972 = vmax.f32 %v2844, 0.0
      %v2973 = vmax.f32 %v2845, 0.0
      %v2974 = vmax.f32 %v2846, 0.0
      %v2975 = vmax.f32 %v2847, 0.0
      %v2976 = vmax.f32 %v2848, 0.0
      %v2977 = vmax.f32 %v2849, 0.0
      %v2978 = vmax.f32 %v2850, 0.0
      %v2979 = vmax.f32 %v2851, 0.0
      %v2980 = vmax.f32 %v2852, 0.0
      %v2981 = vmax.f32 %v2853, 0.0
      %v2982 = vmax.f32 %v2854, 0.0
      %v2983 = vmax.f32 %v2855, 0.0
      %v2984 = vmax.f32 %v2856, 0.0
      %v2985 = vmax.f32 %v2857, 0.0
      %v2986 = vmax.f32 %v2858, 0.0
      %v2987 = vmax.f32 %v2859, 0.0
      %v2988 = vpack.c.bf16 %v2861, %v2860
      %v2989 = vpack.c.bf16 %v2863, %v2862
      %v2990 = vpack.c.bf16 %v2865, %v2864
      %v2991 = vpack.c.bf16 %v2867, %v2866
      %v2992 = vpack.c.bf16 %v2869, %v2868
      %v2993 = vpack.c.bf16 %v2871, %v2870
      %v2994 = vpack.c.bf16 %v2873, %v2872
      %v2995 = vpack.c.bf16 %v2875, %v2874
      %v2996 = vpack.c.bf16 %v2877, %v2876
      %v2997 = vpack.c.bf16 %v2879, %v2878
      %v2998 = vpack.c.bf16 %v2881, %v2880
      %v2999 = vpack.c.bf16 %v2883, %v2882
      %v3000 = vpack.c.bf16 %v2885, %v2884
      %v3001 = vpack.c.bf16 %v2887, %v2886
      %v3002 = vpack.c.bf16 %v2889, %v2888
      %v3003 = vpack.c.bf16 %v2891, %v2890
      %v3004 = vpack.c.bf16 %v2893, %v2892
      %v3005 = vpack.c.bf16 %v2895, %v2894
      %v3006 = vpack.c.bf16 %v2897, %v2896
      %v3007 = vpack.c.bf16 %v2899, %v2898
      %v3008 = vpack.c.bf16 %v2901, %v2900
      %v3009 = vpack.c.bf16 %v2903, %v2902
      %v3010 = vpack.c.bf16 %v2905, %v2904
      %v3011 = vpack.c.bf16 %v2907, %v2906
      %v3012 = vpack.c.bf16 %v2909, %v2908
      %v3013 = vpack.c.bf16 %v2911, %v2910
      %v3014 = vpack.c.bf16 %v2913, %v2912
      %v3015 = vpack.c.bf16 %v2915, %v2914
      %v3016 = vpack.c.bf16 %v2917, %v2916
      %v3017 = vpack.c.bf16 %v2919, %v2918
      %v3018 = vpack.c.bf16 %v2921, %v2920
      %v3019 = vpack.c.bf16 %v2923, %v2922
      %v3020 = vpack.c.bf16 %v2925, %v2924
      %v3021 = vpack.c.bf16 %v2927, %v2926
      %v3022 = vpack.c.bf16 %v2929, %v2928
      %v3023 = vpack.c.bf16 %v2931, %v2930
      %v3024 = vpack.c.bf16 %v2933, %v2932
      %v3025 = vpack.c.bf16 %v2935, %v2934
      %v3026 = vpack.c.bf16 %v2937, %v2936
      %v3027 = vpack.c.bf16 %v2939, %v2938
      %v3028 = vpack.c.bf16 %v2941, %v2940
      %v3029 = vpack.c.bf16 %v2943, %v2942
      %v3030 = vpack.c.bf16 %v2945, %v2944
      %v3031 = vpack.c.bf16 %v2947, %v2946
      %v3032 = vpack.c.bf16 %v2949, %v2948
      %v3033 = vpack.c.bf16 %v2951, %v2950
      %v3034 = vpack.c.bf16 %v2953, %v2952
      %v3035 = vpack.c.bf16 %v2955, %v2954
      %v3036 = vpack.c.bf16 %v2957, %v2956
      %v3037 = vpack.c.bf16 %v2959, %v2958
      %v3038 = vpack.c.bf16 %v2961, %v2960
      %v3039 = vpack.c.bf16 %v2963, %v2962
      %v3040 = vpack.c.bf16 %v2965, %v2964
      %v3041 = vpack.c.bf16 %v2967, %v2966
      %v3042 = vpack.c.bf16 %v2969, %v2968
      %v3043 = vpack.c.bf16 %v2971, %v2970
      %v3044 = vpack.c.bf16 %v2973, %v2972
      %v3045 = vpack.c.bf16 %v2975, %v2974
      %v3046 = vpack.c.bf16 %v2977, %v2976
      %v3047 = vpack.c.bf16 %v2979, %v2978
      %v3048 = vpack.c.bf16 %v2981, %v2980
      %v3049 = vpack.c.bf16 %v2983, %v2982
      %v3050 = vpack.c.bf16 %v2985, %v2984
      %v3051 = vpack.c.bf16 %v2987, %v2986
      %v3052 = vld [vmem:[%s3] sm:$0xf]
      %v3053 = vld [vmem:[%s3 + $0x4] sm:$0xf]
      %v3054 = vld [vmem:[%s3 + $0x8] sm:$0xf]
      %v3055 = vld [vmem:[%s3 + $0xc] sm:$0xf]
      %v3056 = vld [vmem:[%s3 + $0x10] sm:$0xf]
      %v3057 = vld [vmem:[%s3 + $0x14] sm:$0xf]
      %v3058 = vld [vmem:[%s3 + $0x18] sm:$0xf]
      %v3059 = vld [vmem:[%s3 + $0x1c] sm:$0xf]
      %v3060 = vld [vmem:[%s4] sm:$0x1]
      %v3062 = vlaneseq
      %v3063 = vshrl.u32 %v3062, 7
      %v3064 = vsub.s32 0, %v3063
      %v3065 = vrot.slane %v3060, %v3064
      %v3075 = vunpack.c.l.b16 %v3052
      %v3076 = vunpack.c.l.b16 %v3053
      %v3077 = vunpack.c.l.b16 %v3054
      %v3078 = vunpack.c.l.b16 %v3055
      %v3079 = vunpack.c.l.b16 %v3056
      %v3080 = vunpack.c.l.b16 %v3057
      %v3081 = vunpack.c.l.b16 %v3058
      %v3082 = vunpack.c.l.b16 %v3059
      %v3083 = vpack.c.b16 %v3076, %v3075
      %v3084 = vpack.c.b16 %v3078, %v3077
      %v3085 = vpack.c.b16 %v3080, %v3079
      %v3086 = vpack.c.b16 %v3082, %v3081
      %vm3091 = vcmask 523264
      %v3093 = vsel %vm3091, %v2988, 0
      %v3096 = vsel %vm3091, %v2989, 0
      %v3099 = vsel %vm3091, %v2990, 0
      %v3102 = vsel %vm3091, %v2991, 0
      %v3105 = vsel %vm3091, %v2992, 0
      %v3108 = vsel %vm3091, %v2993, 0
      %v3111 = vsel %vm3091, %v2994, 0
      %v3114 = vsel %vm3091, %v2995, 0
      %v3117 = vsel %vm3091, %v2996, 0
      %v3120 = vsel %vm3091, %v2997, 0
      %v3123 = vsel %vm3091, %v2998, 0
      %v3126 = vsel %vm3091, %v2999, 0
      %v3129 = vsel %vm3091, %v3000, 0
      %v3132 = vsel %vm3091, %v3001, 0
      %v3135 = vsel %vm3091, %v3002, 0
      %v3138 = vsel %vm3091, %v3003, 0
      %v3141 = vsel %vm3091, %v3004, 0
      %v3144 = vsel %vm3091, %v3005, 0
      %v3147 = vsel %vm3091, %v3006, 0
      %v3150 = vsel %vm3091, %v3007, 0
      %v3153 = vsel %vm3091, %v3008, 0
      %v3156 = vsel %vm3091, %v3009, 0
      %v3159 = vsel %vm3091, %v3010, 0
      %v3162 = vsel %vm3091, %v3011, 0
      %v3165 = vsel %vm3091, %v3012, 0
      %v3168 = vsel %vm3091, %v3013, 0
      %v3171 = vsel %vm3091, %v3014, 0
      %v3174 = vsel %vm3091, %v3015, 0
      %v3177 = vsel %vm3091, %v3016, 0
      %v3180 = vsel %vm3091, %v3017, 0
      %v3183 = vsel %vm3091, %v3018, 0
      %v3186 = vsel %vm3091, %v3019, 0
      %v3189 = vsel %vm3091, %v3020, 0
      %v3192 = vsel %vm3091, %v3021, 0
      %v3195 = vsel %vm3091, %v3022, 0
      %v3198 = vsel %vm3091, %v3023, 0
      %v3201 = vsel %vm3091, %v3024, 0
      %v3204 = vsel %vm3091, %v3025, 0
      %v3207 = vsel %vm3091, %v3026, 0
      %v3210 = vsel %vm3091, %v3027, 0
      %v3213 = vsel %vm3091, %v3028, 0
      %v3216 = vsel %vm3091, %v3029, 0
      %v3219 = vsel %vm3091, %v3030, 0
      %v3222 = vsel %vm3091, %v3031, 0
      %v3225 = vsel %vm3091, %v3032, 0
      %v3228 = vsel %vm3091, %v3033, 0
      %v3231 = vsel %vm3091, %v3034, 0
      %v3234 = vsel %vm3091, %v3035, 0
      %v3237 = vsel %vm3091, %v3036, 0
      %v3240 = vsel %vm3091, %v3037, 0
      %v3243 = vsel %vm3091, %v3038, 0
      %v3246 = vsel %vm3091, %v3039, 0
      %v3249 = vsel %vm3091, %v3040, 0
      %v3252 = vsel %vm3091, %v3041, 0
      %v3255 = vsel %vm3091, %v3042, 0
      %v3258 = vsel %vm3091, %v3043, 0
      %v3261 = vsel %vm3091, %v3044, 0
      %v3264 = vsel %vm3091, %v3045, 0
      %v3267 = vsel %vm3091, %v3046, 0
      %v3270 = vsel %vm3091, %v3047, 0
      %v3273 = vsel %vm3091, %v3048, 0
      %v3276 = vsel %vm3091, %v3049, 0
      %v3279 = vsel %vm3091, %v3050, 0
      %v3282 = vsel %vm3091, %v3051, 0
      %3284 = vmatprep.subr.bf16.mxu0 0
      %3285 = vmatpush1.bf16.msra.mxu0 %v3083
      %3286 = vmatprep.subr.bf16.mxu0 0
      %3287 = vmatpush1.bf16.msra.mxu0 %v3084
      %3288 = vmatprep.subr.bf16.mxu0 0
      %3289 = vmatpush1.bf16.msra.mxu0 %v3085
      %3290 = vmatprep.subr.bf16.mxu0 0
      %3291 = vmatpush1.bf16.msra.mxu0 %v3086
      %3292 = vmatprep.subr.bf16.mxu0 0
      %3293 = vmatpush1.bf16.msra.mxu0 0
      %3294 = vmatprep.subr.bf16.mxu0 0
      %3295 = vmatpush1.bf16.msra.mxu0 0
      %3296 = vmatprep.subr.bf16.mxu0 0
      %3297 = vmatpush1.bf16.msra.mxu0 0
      %3298 = vmatprep.subr.bf16.mxu0 0
      %3299 = vmatpush1.bf16.msra.mxu0 0
      %3300 = vmatprep.subr.bf16.mxu0 0
      %3301 = vmatpush1.bf16.msra.mxu0 0
      %3302 = vmatprep.subr.bf16.mxu0 0
      %3303 = vmatpush1.bf16.msra.mxu0 0
      %3304 = vmatprep.subr.bf16.mxu0 0
      %3305 = vmatpush1.bf16.msra.mxu0 0
      %3306 = vmatprep.subr.bf16.mxu0 0
      %3307 = vmatpush1.bf16.msra.mxu0 0
      %3308 = vmatprep.subr.bf16.mxu0 0
      %3309 = vmatpush1.bf16.msra.mxu0 0
      %3310 = vmatprep.subr.bf16.mxu0 0
      %3311 = vmatpush1.bf16.msra.mxu0 0
      %3312 = vmatprep.subr.bf16.mxu0 0
      %3313 = vmatpush1.bf16.msra.mxu0 0
      %3314 = vmatprep.subr.bf16.mxu0 0
      %3315 = vmatpush1.bf16.msra.mxu0 0
      %3316 = vmatprep.mubr.bf16.mxu0 0
      %3317 = vmatmul.mubr.bf16.gmra.mrb[0].mxu0 %v3093
      %v3318 = vpop.f32.mrb[0].mxu0
      %v3319 = vadd.f32 %v3065, %v3318
      %v3320 = vpop.f32.mrb[0].mxu0
      %v3321 = vpop.f32.mrb[0].mxu0
      %v3322 = vadd.f32 %v3065, %v3321
      %v3323 = vpop.f32.mrb[0].mxu0
      %3324 = vmatprep.mubr.bf16.mxu0 0
      %3325 = vmatmul.mubr.bf16.gmra.mrb[0].mxu0 %v3096
      %v3326 = vpop.f32.mrb[0].mxu0
      %v3327 = vadd.f32 %v3065, %v3326
      %v3328 = vpop.f32.mrb[0].mxu0
      %v3329 = vpop.f32.mrb[0].mxu0
      %v3330 = vadd.f32 %v3065, %v3329
      %v3331 = vpop.f32.mrb[0].mxu0
      %3332 = vmatprep.mubr.bf16.mxu0 0
      %3333 = vmatmul.mubr.bf16.gmra.mrb[0].mxu0 %v3099
      %v3334 = vpop.f32.mrb[0].mxu0
      %v3335 = vadd.f32 %v3065, %v3334
      %v3336 = vpop.f32.mrb[0].mxu0
      %v3337 = vpop.f32.mrb[0].mxu0
      %v3338 = vadd.f32 %v3065, %v3337
      %v3339 = vpop.f32.mrb[0].mxu0
      %3340 = vmatprep.mubr.bf16.mxu0 0
      %3341 = vmatmul.mubr.bf16.gmra.mrb[0].mxu0 %v3102
      %v3342 = vpop.f32.mrb[0].mxu0
      %v3343 = vadd.f32 %v3065, %v3342
      %v3344 = vpop.f32.mrb[0].mxu0
      %v3345 = vpop.f32.mrb[0].mxu0
      %v3346 = vadd.f32 %v3065, %v3345
      %v3347 = vpop.f32.mrb[0].mxu0
      %3348 = vmatprep.mubr.bf16.mxu0 0
      %3349 = vmatmul.mubr.bf16.gmra.mrb[0].mxu0 %v3105
      %v3350 = vpop.f32.mrb[0].mxu0
      %v3351 = vadd.f32 %v3065, %v3350
      %v3352 = vpop.f32.mrb[0].mxu0
      %v3353 = vpop.f32.mrb[0].mxu0
      %v3354 = vadd.f32 %v3065, %v3353
      %v3355 = vpop.f32.mrb[0].mxu0
      %3356 = vmatprep.mubr.bf16.mxu0 0
      %3357 = vmatmul.mubr.bf16.gmra.mrb[0].mxu0 %v3108
      %v3358 = vpop.f32.mrb[0].mxu0
      %v3359 = vadd.f32 %v3065, %v3358
      %v3360 = vpop.f32.mrb[0].mxu0
      %v3361 = vpop.f32.mrb[0].mxu0
      %v3362 = vadd.f32 %v3065, %v3361
      %v3363 = vpop.f32.mrb[0].mxu0
      %3364 = vmatprep.mubr.bf16.mxu0 0
      %3365 = vmatmul.mubr.bf16.gmra.mrb[0].mxu0 %v3111
      %v3366 = vpop.f32.mrb[0].mxu0
      %v3367 = vadd.f32 %v3065, %v3366
      %v3368 = vpop.f32.mrb[0].mxu0
      %v3369 = vpop.f32.mrb[0].mxu0
      %v3370 = vadd.f32 %v3065, %v3369
      %v3371 = vpop.f32.mrb[0].mxu0
      %3372 = vmatprep.mubr.bf16.mxu0 0
      %3373 = vmatmul.mubr.bf16.gmra.mrb[0].mxu0 %v3114
      %v3374 = vpop.f32.mrb[0].mxu0
      %v3375 = vadd.f32 %v3065, %v3374
      %v3376 = vpop.f32.mrb[0].mxu0
      %v3377 = vpop.f32.mrb[0].mxu0
      %v3378 = vadd.f32 %v3065, %v3377
      %v3379 = vpop.f32.mrb[0].mxu0
      %3380 = vmatprep.mubr.bf16.mxu0 0
      %3381 = vmatmul.mubr.bf16.gmra.mrb[0].mxu0 %v3117
      %v3382 = vpop.f32.mrb[0].mxu0
      %v3383 = vadd.f32 %v3065, %v3382
      %v3384 = vpop.f32.mrb[0].mxu0
      %v3385 = vpop.f32.mrb[0].mxu0
      %v3386 = vadd.f32 %v3065, %v3385
      %v3387 = vpop.f32.mrb[0].mxu0
      %3388 = vmatprep.mubr.bf16.mxu0 0
      %3389 = vmatmul.mubr.bf16.gmra.mrb[0].mxu0 %v3120
      %v3390 = vpop.f32.mrb[0].mxu0
      %v3391 = vadd.f32 %v3065, %v3390
      %v3392 = vpop.f32.mrb[0].mxu0
      %v3393 = vpop.f32.mrb[0].mxu0
      %v3394 = vadd.f32 %v3065, %v3393
      %v3395 = vpop.f32.mrb[0].mxu0
      %3396 = vmatprep.mubr.bf16.mxu0 0
      %3397 = vmatmul.mubr.bf16.gmra.mrb[0].mxu0 %v3123
      %v3398 = vpop.f32.mrb[0].mxu0
      %v3399 = vadd.f32 %v3065, %v3398
      %v3400 = vpop.f32.mrb[0].mxu0
      %v3401 = vpop.f32.mrb[0].mxu0
      %v3402 = vadd.f32 %v3065, %v3401
      %v3403 = vpop.f32.mrb[0].mxu0
      %3404 = vmatprep.mubr.bf16.mxu0 0
      %3405 = vmatmul.mubr.bf16.gmra.mrb[0].mxu0 %v3126
      %v3406 = vpop.f32.mrb[0].mxu0
      %v3407 = vadd.f32 %v3065, %v3406
      %v3408 = vpop.f32.mrb[0].mxu0
      %v3409 = vpop.f32.mrb[0].mxu0
      %v3410 = vadd.f32 %v3065, %v3409
      %v3411 = vpop.f32.mrb[0].mxu0
      %3412 = vmatprep.mubr.bf16.mxu0 0
      %3413 = vmatmul.mubr.bf16.gmra.mrb[0].mxu0 %v3129
      %v3414 = vpop.f32.mrb[0].mxu0
      %v3415 = vadd.f32 %v3065, %v3414
      %v3416 = vpop.f32.mrb[0].mxu0
      %v3417 = vpop.f32.mrb[0].mxu0
      %v3418 = vadd.f32 %v3065, %v3417
      %v3419 = vpop.f32.mrb[0].mxu0
      %3420 = vmatprep.mubr.bf16.mxu0 0
      %3421 = vmatmul.mubr.bf16.gmra.mrb[0].mxu0 %v3132
      %v3422 = vpop.f32.mrb[0].mxu0
      %v3423 = vadd.f32 %v3065, %v3422
      %v3424 = vpop.f32.mrb[0].mxu0
      %v3425 = vpop.f32.mrb[0].mxu0
      %v3426 = vadd.f32 %v3065, %v3425
      %v3427 = vpop.f32.mrb[0].mxu0
      %3428 = vmatprep.mubr.bf16.mxu0 0
      %3429 = vmatmul.mubr.bf16.gmra.mrb[0].mxu0 %v3135
      %v3430 = vpop.f32.mrb[0].mxu0
      %v3431 = vadd.f32 %v3065, %v3430
      %v3432 = vpop.f32.mrb[0].mxu0
      %v3433 = vpop.f32.mrb[0].mxu0
      %v3434 = vadd.f32 %v3065, %v3433
      %v3435 = vpop.f32.mrb[0].mxu0
      %3436 = vmatprep.mubr.bf16.mxu0 0
      %3437 = vmatmul.mubr.bf16.gmra.mrb[0].mxu0 %v3138
      %v3438 = vpop.f32.mrb[0].mxu0
      %v3439 = vadd.f32 %v3065, %v3438
      %v3440 = vpop.f32.mrb[0].mxu0
      %v3441 = vpop.f32.mrb[0].mxu0
      %v3442 = vadd.f32 %v3065, %v3441
      %v3443 = vpop.f32.mrb[0].mxu0
      %3444 = vmatprep.mubr.bf16.mxu0 0
      %3445 = vmatmul.mubr.bf16.gmra.mrb[0].mxu0 %v3141
      %v3446 = vpop.f32.mrb[0].mxu0
      %v3447 = vadd.f32 %v3065, %v3446
      %v3448 = vpop.f32.mrb[0].mxu0
      %v3449 = vpop.f32.mrb[0].mxu0
      %v3450 = vadd.f32 %v3065, %v3449
      %v3451 = vpop.f32.mrb[0].mxu0
      %3452 = vmatprep.mubr.bf16.mxu0 0
      %3453 = vmatmul.mubr.bf16.gmra.mrb[0].mxu0 %v3144
      %v3454 = vpop.f32.mrb[0].mxu0
      %v3455 = vadd.f32 %v3065, %v3454
      %v3456 = vpop.f32.mrb[0].mxu0
      %v3457 = vpop.f32.mrb[0].mxu0
      %v3458 = vadd.f32 %v3065, %v3457
      %v3459 = vpop.f32.mrb[0].mxu0
      %3460 = vmatprep.mubr.bf16.mxu0 0
      %3461 = vmatmul.mubr.bf16.gmra.mrb[0].mxu0 %v3147
      %v3462 = vpop.f32.mrb[0].mxu0
      %v3463 = vadd.f32 %v3065, %v3462
      %v3464 = vpop.f32.mrb[0].mxu0
      %v3465 = vpop.f32.mrb[0].mxu0
      %v3466 = vadd.f32 %v3065, %v3465
      %v3467 = vpop.f32.mrb[0].mxu0
      %3468 = vmatprep.mubr.bf16.mxu0 0
      %3469 = vmatmul.mubr.bf16.gmra.mrb[0].mxu0 %v3150
      %v3470 = vpop.f32.mrb[0].mxu0
      %v3471 = vadd.f32 %v3065, %v3470
      %v3472 = vpop.f32.mrb[0].mxu0
      %v3473 = vpop.f32.mrb[0].mxu0
      %v3474 = vadd.f32 %v3065, %v3473
      %v3475 = vpop.f32.mrb[0].mxu0
      %3476 = vmatprep.mubr.bf16.mxu0 0
      %3477 = vmatmul.mubr.bf16.gmra.mrb[0].mxu0 %v3153
      %v3478 = vpop.f32.mrb[0].mxu0
      %v3479 = vadd.f32 %v3065, %v3478
      %v3480 = vpop.f32.mrb[0].mxu0
      %v3481 = vpop.f32.mrb[0].mxu0
      %v3482 = vadd.f32 %v3065, %v3481
      %v3483 = vpop.f32.mrb[0].mxu0
      %3484 = vmatprep.mubr.bf16.mxu0 0
      %3485 = vmatmul.mubr.bf16.gmra.mrb[0].mxu0 %v3156
      %v3486 = vpop.f32.mrb[0].mxu0
      %v3487 = vadd.f32 %v3065, %v3486
      %v3488 = vpop.f32.mrb[0].mxu0
      %v3489 = vpop.f32.mrb[0].mxu0
      %v3490 = vadd.f32 %v3065, %v3489
      %v3491 = vpop.f32.mrb[0].mxu0
      %3492 = vmatprep.mubr.bf16.mxu0 0
      %3493 = vmatmul.mubr.bf16.gmra.mrb[0].mxu0 %v3159
      %v3494 = vpop.f32.mrb[0].mxu0
      %v3495 = vadd.f32 %v3065, %v3494
      %v3496 = vpop.f32.mrb[0].mxu0
      %v3497 = vpop.f32.mrb[0].mxu0
      %v3498 = vadd.f32 %v3065, %v3497
      %v3499 = vpop.f32.mrb[0].mxu0
      %3500 = vmatprep.mubr.bf16.mxu0 0
      %3501 = vmatmul.mubr.bf16.gmra.mrb[0].mxu0 %v3162
      %v3502 = vpop.f32.mrb[0].mxu0
      %v3503 = vadd.f32 %v3065, %v3502
      %v3504 = vpop.f32.mrb[0].mxu0
      %v3505 = vpop.f32.mrb[0].mxu0
      %v3506 = vadd.f32 %v3065, %v3505
      %v3507 = vpop.f32.mrb[0].mxu0
      %3508 = vmatprep.mubr.bf16.mxu0 0
      %3509 = vmatmul.mubr.bf16.gmra.mrb[0].mxu0 %v3165
      %v3510 = vpop.f32.mrb[0].mxu0
      %v3511 = vadd.f32 %v3065, %v3510
      %v3512 = vpop.f32.mrb[0].mxu0
      %v3513 = vpop.f32.mrb[0].mxu0
      %v3514 = vadd.f32 %v3065, %v3513
      %v3515 = vpop.f32.mrb[0].mxu0
      %3516 = vmatprep.mubr.bf16.mxu0 0
      %3517 = vmatmul.mubr.bf16.gmra.mrb[0].mxu0 %v3168
      %v3518 = vpop.f32.mrb[0].mxu0
      %v3519 = vadd.f32 %v3065, %v3518
      %v3520 = vpop.f32.mrb[0].mxu0
      %v3521 = vpop.f32.mrb[0].mxu0
      %v3522 = vadd.f32 %v3065, %v3521
      %v3523 = vpop.f32.mrb[0].mxu0
      %3524 = vmatprep.mubr.bf16.mxu0 0
      %3525 = vmatmul.mubr.bf16.gmra.mrb[0].mxu0 %v3171
      %v3526 = vpop.f32.mrb[0].mxu0
      %v3527 = vadd.f32 %v3065, %v3526
      %v3528 = vpop.f32.mrb[0].mxu0
      %v3529 = vpop.f32.mrb[0].mxu0
      %v3530 = vadd.f32 %v3065, %v3529
      %v3531 = vpop.f32.mrb[0].mxu0
      %3532 = vmatprep.mubr.bf16.mxu0 0
      %3533 = vmatmul.mubr.bf16.gmra.mrb[0].mxu0 %v3174
      %v3534 = vpop.f32.mrb[0].mxu0
      %v3535 = vadd.f32 %v3065, %v3534
      %v3536 = vpop.f32.mrb[0].mxu0
      %v3537 = vpop.f32.mrb[0].mxu0
      %v3538 = vadd.f32 %v3065, %v3537
      %v3539 = vpop.f32.mrb[0].mxu0
      %3540 = vmatprep.mubr.bf16.mxu0 0
      %3541 = vmatmul.mubr.bf16.gmra.mrb[0].mxu0 %v3177
      %v3542 = vpop.f32.mrb[0].mxu0
      %v3543 = vadd.f32 %v3065, %v3542
      %v3544 = vpop.f32.mrb[0].mxu0
      %v3545 = vpop.f32.mrb[0].mxu0
      %v3546 = vadd.f32 %v3065, %v3545
      %v3547 = vpop.f32.mrb[0].mxu0
      %3548 = vmatprep.mubr.bf16.mxu0 0
      %3549 = vmatmul.mubr.bf16.gmra.mrb[0].mxu0 %v3180
      %v3550 = vpop.f32.mrb[0].mxu0
      %v3551 = vadd.f32 %v3065, %v3550
      %v3552 = vpop.f32.mrb[0].mxu0
      %v3553 = vpop.f32.mrb[0].mxu0
      %v3554 = vadd.f32 %v3065, %v3553
      %v3555 = vpop.f32.mrb[0].mxu0
      %3556 = vmatprep.mubr.bf16.mxu0 0
      %3557 = vmatmul.mubr.bf16.gmra.mrb[0].mxu0 %v3183
      %v3558 = vpop.f32.mrb[0].mxu0
      %v3559 = vadd.f32 %v3065, %v3558
      %v3560 = vpop.f32.mrb[0].mxu0
      %v3561 = vpop.f32.mrb[0].mxu0
      %v3562 = vadd.f32 %v3065, %v3561
      %v3563 = vpop.f32.mrb[0].mxu0
      %3564 = vmatprep.mubr.bf16.mxu0 0
      %3565 = vmatmul.mubr.bf16.gmra.mrb[0].mxu0 %v3186
      %v3566 = vpop.f32.mrb[0].mxu0
      %v3567 = vadd.f32 %v3065, %v3566
      %v3568 = vpop.f32.mrb[0].mxu0
      %v3569 = vpop.f32.mrb[0].mxu0
      %v3570 = vadd.f32 %v3065, %v3569
      %v3571 = vpop.f32.mrb[0].mxu0
      %3572 = vmatprep.mubr.bf16.mxu0 0
      %3573 = vmatmul.mubr.bf16.gmra.mrb[0].mxu0 %v3189
      %v3574 = vpop.f32.mrb[0].mxu0
      %v3575 = vadd.f32 %v3065, %v3574
      %v3576 = vpop.f32.mrb[0].mxu0
      %v3577 = vpop.f32.mrb[0].mxu0
      %v3578 = vadd.f32 %v3065, %v3577
      %v3579 = vpop.f32.mrb[0].mxu0
      %3580 = vmatprep.mubr.bf16.mxu0 0
      %3581 = vmatmul.mubr.bf16.gmra.mrb[0].mxu0 %v3192
      %v3582 = vpop.f32.mrb[0].mxu0
      %v3583 = vadd.f32 %v3065, %v3582
      %v3584 = vpop.f32.mrb[0].mxu0
      %v3585 = vpop.f32.mrb[0].mxu0
      %v3586 = vadd.f32 %v3065, %v3585
      %v3587 = vpop.f32.mrb[0].mxu0
      %3588 = vmatprep.mubr.bf16.mxu0 0
      %3589 = vmatmul.mubr.bf16.gmra.mrb[0].mxu0 %v3195
      %v3590 = vpop.f32.mrb[0].mxu0
      %v3591 = vadd.f32 %v3065, %v3590
      %v3592 = vpop.f32.mrb[0].mxu0
      %v3593 = vpop.f32.mrb[0].mxu0
      %v3594 = vadd.f32 %v3065, %v3593
      %v3595 = vpop.f32.mrb[0].mxu0
      %3596 = vmatprep.mubr.bf16.mxu0 0
      %3597 = vmatmul.mubr.bf16.gmra.mrb[0].mxu0 %v3198
      %v3598 = vpop.f32.mrb[0].mxu0
      %v3599 = vadd.f32 %v3065, %v3598
      %v3600 = vpop.f32.mrb[0].mxu0
      %v3601 = vpop.f32.mrb[0].mxu0
      %v3602 = vadd.f32 %v3065, %v3601
      %v3603 = vpop.f32.mrb[0].mxu0
      %3604 = vmatprep.mubr.bf16.mxu0 0
      %3605 = vmatmul.mubr.bf16.gmra.mrb[0].mxu0 %v3201
      %v3606 = vpop.f32.mrb[0].mxu0
      %v3607 = vadd.f32 %v3065, %v3606
      %v3608 = vpop.f32.mrb[0].mxu0
      %v3609 = vpop.f32.mrb[0].mxu0
      %v3610 = vadd.f32 %v3065, %v3609
      %v3611 = vpop.f32.mrb[0].mxu0
      %3612 = vmatprep.mubr.bf16.mxu0 0
      %3613 = vmatmul.mubr.bf16.gmra.mrb[0].mxu0 %v3204
      %v3614 = vpop.f32.mrb[0].mxu0
      %v3615 = vadd.f32 %v3065, %v3614
      %v3616 = vpop.f32.mrb[0].mxu0
      %v3617 = vpop.f32.mrb[0].mxu0
      %v3618 = vadd.f32 %v3065, %v3617
      %v3619 = vpop.f32.mrb[0].mxu0
      %3620 = vmatprep.mubr.bf16.mxu0 0
      %3621 = vmatmul.mubr.bf16.gmra.mrb[0].mxu0 %v3207
      %v3622 = vpop.f32.mrb[0].mxu0
      %v3623 = vadd.f32 %v3065, %v3622
      %v3624 = vpop.f32.mrb[0].mxu0
      %v3625 = vpop.f32.mrb[0].mxu0
      %v3626 = vadd.f32 %v3065, %v3625
      %v3627 = vpop.f32.mrb[0].mxu0
      %3628 = vmatprep.mubr.bf16.mxu0 0
      %3629 = vmatmul.mubr.bf16.gmra.mrb[0].mxu0 %v3210
      %v3630 = vpop.f32.mrb[0].mxu0
      %v3631 = vadd.f32 %v3065, %v3630
      %v3632 = vpop.f32.mrb[0].mxu0
      %v3633 = vpop.f32.mrb[0].mxu0
      %v3634 = vadd.f32 %v3065, %v3633
      %v3635 = vpop.f32.mrb[0].mxu0
      %3636 = vmatprep.mubr.bf16.mxu0 0
      %3637 = vmatmul.mubr.bf16.gmra.mrb[0].mxu0 %v3213
      %v3638 = vpop.f32.mrb[0].mxu0
      %v3639 = vadd.f32 %v3065, %v3638
      %v3640 = vpop.f32.mrb[0].mxu0
      %v3641 = vpop.f32.mrb[0].mxu0
      %v3642 = vadd.f32 %v3065, %v3641
      %v3643 = vpop.f32.mrb[0].mxu0
      %3644 = vmatprep.mubr.bf16.mxu0 0
      %3645 = vmatmul.mubr.bf16.gmra.mrb[0].mxu0 %v3216
      %v3646 = vpop.f32.mrb[0].mxu0
      %v3647 = vadd.f32 %v3065, %v3646
      %v3648 = vpop.f32.mrb[0].mxu0
      %v3649 = vpop.f32.mrb[0].mxu0
      %v3650 = vadd.f32 %v3065, %v3649
      %v3651 = vpop.f32.mrb[0].mxu0
      %3652 = vmatprep.mubr.bf16.mxu0 0
      %3653 = vmatmul.mubr.bf16.gmra.mrb[0].mxu0 %v3219
      %v3654 = vpop.f32.mrb[0].mxu0
      %v3655 = vadd.f32 %v3065, %v3654
      %v3656 = vpop.f32.mrb[0].mxu0
      %v3657 = vpop.f32.mrb[0].mxu0
      %v3658 = vadd.f32 %v3065, %v3657
      %v3659 = vpop.f32.mrb[0].mxu0
      %3660 = vmatprep.mubr.bf16.mxu0 0
      %3661 = vmatmul.mubr.bf16.gmra.mrb[0].mxu0 %v3222
      %v3662 = vpop.f32.mrb[0].mxu0
      %v3663 = vadd.f32 %v3065, %v3662
      %v3664 = vpop.f32.mrb[0].mxu0
      %v3665 = vpop.f32.mrb[0].mxu0
      %v3666 = vadd.f32 %v3065, %v3665
      %v3667 = vpop.f32.mrb[0].mxu0
      %3668 = vmatprep.mubr.bf16.mxu0 0
      %3669 = vmatmul.mubr.bf16.gmra.mrb[0].mxu0 %v3225
      %v3670 = vpop.f32.mrb[0].mxu0
      %v3671 = vadd.f32 %v3065, %v3670
      %v3672 = vpop.f32.mrb[0].mxu0
      %v3673 = vpop.f32.mrb[0].mxu0
      %v3674 = vadd.f32 %v3065, %v3673
      %v3675 = vpop.f32.mrb[0].mxu0
      %3676 = vmatprep.mubr.bf16.mxu0 0
      %3677 = vmatmul.mubr.bf16.gmra.mrb[0].mxu0 %v3228
      %v3678 = vpop.f32.mrb[0].mxu0
      %v3679 = vadd.f32 %v3065, %v3678
      %v3680 = vpop.f32.mrb[0].mxu0
      %v3681 = vpop.f32.mrb[0].mxu0
      %v3682 = vadd.f32 %v3065, %v3681
      %v3683 = vpop.f32.mrb[0].mxu0
      %3684 = vmatprep.mubr.bf16.mxu0 0
      %3685 = vmatmul.mubr.bf16.gmra.mrb[0].mxu0 %v3231
      %v3686 = vpop.f32.mrb[0].mxu0
      %v3687 = vadd.f32 %v3065, %v3686
      %v3688 = vpop.f32.mrb[0].mxu0
      %v3689 = vpop.f32.mrb[0].mxu0
      %v3690 = vadd.f32 %v3065, %v3689
      %v3691 = vpop.f32.mrb[0].mxu0
      %3692 = vmatprep.mubr.bf16.mxu0 0
      %3693 = vmatmul.mubr.bf16.gmra.mrb[0].mxu0 %v3234
      %v3694 = vpop.f32.mrb[0].mxu0
      %v3695 = vadd.f32 %v3065, %v3694
      %v3696 = vpop.f32.mrb[0].mxu0
      %v3697 = vpop.f32.mrb[0].mxu0
      %v3698 = vadd.f32 %v3065, %v3697
      %v3699 = vpop.f32.mrb[0].mxu0
      %3700 = vmatprep.mubr.bf16.mxu0 0
      %3701 = vmatmul.mubr.bf16.gmra.mrb[0].mxu0 %v3237
      %v3702 = vpop.f32.mrb[0].mxu0
      %v3703 = vadd.f32 %v3065, %v3702
      %v3704 = vpop.f32.mrb[0].mxu0
      %v3705 = vpop.f32.mrb[0].mxu0
      %v3706 = vadd.f32 %v3065, %v3705
      %v3707 = vpop.f32.mrb[0].mxu0
      %3708 = vmatprep.mubr.bf16.mxu0 0
      %3709 = vmatmul.mubr.bf16.gmra.mrb[0].mxu0 %v3240
      %v3710 = vpop.f32.mrb[0].mxu0
      %v3711 = vadd.f32 %v3065, %v3710
      %v3712 = vpop.f32.mrb[0].mxu0
      %v3713 = vpop.f32.mrb[0].mxu0
      %v3714 = vadd.f32 %v3065, %v3713
      %v3715 = vpop.f32.mrb[0].mxu0
      %3716 = vmatprep.mubr.bf16.mxu0 0
      %3717 = vmatmul.mubr.bf16.gmra.mrb[0].mxu0 %v3243
      %v3718 = vpop.f32.mrb[0].mxu0
      %v3719 = vadd.f32 %v3065, %v3718
      %v3720 = vpop.f32.mrb[0].mxu0
      %v3721 = vpop.f32.mrb[0].mxu0
      %v3722 = vadd.f32 %v3065, %v3721
      %v3723 = vpop.f32.mrb[0].mxu0
      %3724 = vmatprep.mubr.bf16.mxu0 0
      %3725 = vmatmul.mubr.bf16.gmra.mrb[0].mxu0 %v3246
      %v3726 = vpop.f32.mrb[0].mxu0
      %v3727 = vadd.f32 %v3065, %v3726
      %v3728 = vpop.f32.mrb[0].mxu0
      %v3729 = vpop.f32.mrb[0].mxu0
      %v3730 = vadd.f32 %v3065, %v3729
      %v3731 = vpop.f32.mrb[0].mxu0
      %3732 = vmatprep.mubr.bf16.mxu0 0
      %3733 = vmatmul.mubr.bf16.gmra.mrb[0].mxu0 %v3249
      %v3734 = vpop.f32.mrb[0].mxu0
      %v3735 = vadd.f32 %v3065, %v3734
      %v3736 = vpop.f32.mrb[0].mxu0
      %v3737 = vpop.f32.mrb[0].mxu0
      %v3738 = vadd.f32 %v3065, %v3737
      %v3739 = vpop.f32.mrb[0].mxu0
      %3740 = vmatprep.mubr.bf16.mxu0 0
      %3741 = vmatmul.mubr.bf16.gmra.mrb[0].mxu0 %v3252
      %v3742 = vpop.f32.mrb[0].mxu0
      %v3743 = vadd.f32 %v3065, %v3742
      %v3744 = vpop.f32.mrb[0].mxu0
      %v3745 = vpop.f32.mrb[0].mxu0
      %v3746 = vadd.f32 %v3065, %v3745
      %v3747 = vpop.f32.mrb[0].mxu0
      %3748 = vmatprep.mubr.bf16.mxu0 0
      %3749 = vmatmul.mubr.bf16.gmra.mrb[0].mxu0 %v3255
      %v3750 = vpop.f32.mrb[0].mxu0
      %v3751 = vadd.f32 %v3065, %v3750
      %v3752 = vpop.f32.mrb[0].mxu0
      %v3753 = vpop.f32.mrb[0].mxu0
      %v3754 = vadd.f32 %v3065, %v3753
      %v3755 = vpop.f32.mrb[0].mxu0
      %3756 = vmatprep.mubr.bf16.mxu0 0
      %3757 = vmatmul.mubr.bf16.gmra.mrb[0].mxu0 %v3258
      %v3758 = vpop.f32.mrb[0].mxu0
      %v3759 = vadd.f32 %v3065, %v3758
      %v3760 = vpop.f32.mrb[0].mxu0
      %v3761 = vpop.f32.mrb[0].mxu0
      %v3762 = vadd.f32 %v3065, %v3761
      %v3763 = vpop.f32.mrb[0].mxu0
      %3764 = vmatprep.mubr.bf16.mxu0 0
      %3765 = vmatmul.mubr.bf16.gmra.mrb[0].mxu0 %v3261
      %v3766 = vpop.f32.mrb[0].mxu0
      %v3767 = vadd.f32 %v3065, %v3766
      %v3768 = vpop.f32.mrb[0].mxu0
      %v3769 = vpop.f32.mrb[0].mxu0
      %v3770 = vadd.f32 %v3065, %v3769
      %v3771 = vpop.f32.mrb[0].mxu0
      %3772 = vmatprep.mubr.bf16.mxu0 0
      %3773 = vmatmul.mubr.bf16.gmra.mrb[0].mxu0 %v3264
      %v3774 = vpop.f32.mrb[0].mxu0
      %v3775 = vadd.f32 %v3065, %v3774
      %v3776 = vpop.f32.mrb[0].mxu0
      %v3777 = vpop.f32.mrb[0].mxu0
      %v3778 = vadd.f32 %v3065, %v3777
      %v3779 = vpop.f32.mrb[0].mxu0
      %3780 = vmatprep.mubr.bf16.mxu0 0
      %3781 = vmatmul.mubr.bf16.gmra.mrb[0].mxu0 %v3267
      %v3782 = vpop.f32.mrb[0].mxu0
      %v3783 = vadd.f32 %v3065, %v3782
      %v3784 = vpop.f32.mrb[0].mxu0
      %v3785 = vpop.f32.mrb[0].mxu0
      %v3786 = vadd.f32 %v3065, %v3785
      %v3787 = vpop.f32.mrb[0].mxu0
      %3788 = vmatprep.mubr.bf16.mxu0 0
      %3789 = vmatmul.mubr.bf16.gmra.mrb[0].mxu0 %v3270
      %v3790 = vpop.f32.mrb[0].mxu0
      %v3791 = vadd.f32 %v3065, %v3790
      %v3792 = vpop.f32.mrb[0].mxu0
      %v3793 = vpop.f32.mrb[0].mxu0
      %v3794 = vadd.f32 %v3065, %v3793
      %v3795 = vpop.f32.mrb[0].mxu0
      %3796 = vmatprep.mubr.bf16.mxu0 0
      %3797 = vmatmul.mubr.bf16.gmra.mrb[0].mxu0 %v3273
      %v3798 = vpop.f32.mrb[0].mxu0
      %v3799 = vadd.f32 %v3065, %v3798
      %v3800 = vpop.f32.mrb[0].mxu0
      %v3801 = vpop.f32.mrb[0].mxu0
      %v3802 = vadd.f32 %v3065, %v3801
      %v3803 = vpop.f32.mrb[0].mxu0
      %3804 = vmatprep.mubr.bf16.mxu0 0
      %3805 = vmatmul.mubr.bf16.gmra.mrb[0].mxu0 %v3276
      %v3806 = vpop.f32.mrb[0].mxu0
      %v3807 = vadd.f32 %v3065, %v3806
      %v3808 = vpop.f32.mrb[0].mxu0
      %v3809 = vpop.f32.mrb[0].mxu0
      %v3810 = vadd.f32 %v3065, %v3809
      %v3811 = vpop.f32.mrb[0].mxu0
      %3812 = vmatprep.mubr.bf16.mxu0 0
      %3813 = vmatmul.mubr.bf16.gmra.mrb[0].mxu0 %v3279
      %v3814 = vpop.f32.mrb[0].mxu0
      %v3815 = vadd.f32 %v3065, %v3814
      %v3816 = vpop.f32.mrb[0].mxu0
      %v3817 = vpop.f32.mrb[0].mxu0
      %v3818 = vadd.f32 %v3065, %v3817
      %v3819 = vpop.f32.mrb[0].mxu0
      %3820 = vmatprep.mubr.bf16.mxu0 0
      %3821 = vmatmul.mubr.bf16.gmra.mrb[0].mxu0 %v3282
      %v3822 = vpop.f32.mrb[0].mxu0
      %v3823 = vadd.f32 %v3065, %v3822
      %v3824 = vpop.f32.mrb[0].mxu0
      %v3825 = vpop.f32.mrb[0].mxu0
      %v3826 = vadd.f32 %v3065, %v3825
      %v3827 = vpop.f32.mrb[0].mxu0
      %3828 = vdwg.mxu0
      %v3829 = vmax.f32 %v3319, 0.0
      %v3830 = vmax.f32 %v3322, 0.0
      %v3831 = vmax.f32 %v3327, 0.0
      %v3832 = vmax.f32 %v3330, 0.0
      %v3833 = vmax.f32 %v3335, 0.0
      %v3834 = vmax.f32 %v3338, 0.0
      %v3835 = vmax.f32 %v3343, 0.0
      %v3836 = vmax.f32 %v3346, 0.0
      %v3837 = vmax.f32 %v3351, 0.0
      %v3838 = vmax.f32 %v3354, 0.0
      %v3839 = vmax.f32 %v3359, 0.0
      %v3840 = vmax.f32 %v3362, 0.0
      %v3841 = vmax.f32 %v3367, 0.0
      %v3842 = vmax.f32 %v3370, 0.0
      %v3843 = vmax.f32 %v3375, 0.0
      %v3844 = vmax.f32 %v3378, 0.0
      %v3845 = vmax.f32 %v3383, 0.0
      %v3846 = vmax.f32 %v3386, 0.0
      %v3847 = vmax.f32 %v3391, 0.0
      %v3848 = vmax.f32 %v3394, 0.0
      %v3849 = vmax.f32 %v3399, 0.0
      %v3850 = vmax.f32 %v3402, 0.0
      %v3851 = vmax.f32 %v3407, 0.0
      %v3852 = vmax.f32 %v3410, 0.0
      %v3853 = vmax.f32 %v3415, 0.0
      %v3854 = vmax.f32 %v3418, 0.0
      %v3855 = vmax.f32 %v3423, 0.0
      %v3856 = vmax.f32 %v3426, 0.0
      %v3857 = vmax.f32 %v3431, 0.0
      %v3858 = vmax.f32 %v3434, 0.0
      %v3859 = vmax.f32 %v3439, 0.0
      %v3860 = vmax.f32 %v3442, 0.0
      %v3861 = vmax.f32 %v3447, 0.0
      %v3862 = vmax.f32 %v3450, 0.0
      %v3863 = vmax.f32 %v3455, 0.0
      %v3864 = vmax.f32 %v3458, 0.0
      %v3865 = vmax.f32 %v3463, 0.0
      %v3866 = vmax.f32 %v3466, 0.0
      %v3867 = vmax.f32 %v3471, 0.0
      %v3868 = vmax.f32 %v3474, 0.0
      %v3869 = vmax.f32 %v3479, 0.0
      %v3870 = vmax.f32 %v3482, 0.0
      %v3871 = vmax.f32 %v3487, 0.0
      %v3872 = vmax.f32 %v3490, 0.0
      %v3873 = vmax.f32 %v3495, 0.0
      %v3874 = vmax.f32 %v3498, 0.0
      %v3875 = vmax.f32 %v3503, 0.0
      %v3876 = vmax.f32 %v3506, 0.0
      %v3877 = vmax.f32 %v3511, 0.0
      %v3878 = vmax.f32 %v3514, 0.0
      %v3879 = vmax.f32 %v3519, 0.0
      %v3880 = vmax.f32 %v3522, 0.0
      %v3881 = vmax.f32 %v3527, 0.0
      %v3882 = vmax.f32 %v3530, 0.0
      %v3883 = vmax.f32 %v3535, 0.0
      %v3884 = vmax.f32 %v3538, 0.0
      %v3885 = vmax.f32 %v3543, 0.0
      %v3886 = vmax.f32 %v3546, 0.0
      %v3887 = vmax.f32 %v3551, 0.0
      %v3888 = vmax.f32 %v3554, 0.0
      %v3889 = vmax.f32 %v3559, 0.0
      %v3890 = vmax.f32 %v3562, 0.0
      %v3891 = vmax.f32 %v3567, 0.0
      %v3892 = vmax.f32 %v3570, 0.0
      %v3893 = vmax.f32 %v3575, 0.0
      %v3894 = vmax.f32 %v3578, 0.0
      %v3895 = vmax.f32 %v3583, 0.0
      %v3896 = vmax.f32 %v3586, 0.0
      %v3897 = vmax.f32 %v3591, 0.0
      %v3898 = vmax.f32 %v3594, 0.0
      %v3899 = vmax.f32 %v3599, 0.0
      %v3900 = vmax.f32 %v3602, 0.0
      %v3901 = vmax.f32 %v3607, 0.0
      %v3902 = vmax.f32 %v3610, 0.0
      %v3903 = vmax.f32 %v3615, 0.0
      %v3904 = vmax.f32 %v3618, 0.0
      %v3905 = vmax.f32 %v3623, 0.0
      %v3906 = vmax.f32 %v3626, 0.0
      %v3907 = vmax.f32 %v3631, 0.0
      %v3908 = vmax.f32 %v3634, 0.0
      %v3909 = vmax.f32 %v3639, 0.0
      %v3910 = vmax.f32 %v3642, 0.0
      %v3911 = vmax.f32 %v3647, 0.0
      %v3912 = vmax.f32 %v3650, 0.0
      %v3913 = vmax.f32 %v3655, 0.0
      %v3914 = vmax.f32 %v3658, 0.0
      %v3915 = vmax.f32 %v3663, 0.0
      %v3916 = vmax.f32 %v3666, 0.0
      %v3917 = vmax.f32 %v3671, 0.0
      %v3918 = vmax.f32 %v3674, 0.0
      %v3919 = vmax.f32 %v3679, 0.0
      %v3920 = vmax.f32 %v3682, 0.0
      %v3921 = vmax.f32 %v3687, 0.0
      %v3922 = vmax.f32 %v3690, 0.0
      %v3923 = vmax.f32 %v3695, 0.0
      %v3924 = vmax.f32 %v3698, 0.0
      %v3925 = vmax.f32 %v3703, 0.0
      %v3926 = vmax.f32 %v3706, 0.0
      %v3927 = vmax.f32 %v3711, 0.0
      %v3928 = vmax.f32 %v3714, 0.0
      %v3929 = vmax.f32 %v3719, 0.0
      %v3930 = vmax.f32 %v3722, 0.0
      %v3931 = vmax.f32 %v3727, 0.0
      %v3932 = vmax.f32 %v3730, 0.0
      %v3933 = vmax.f32 %v3735, 0.0
      %v3934 = vmax.f32 %v3738, 0.0
      %v3935 = vmax.f32 %v3743, 0.0
      %v3936 = vmax.f32 %v3746, 0.0
      %v3937 = vmax.f32 %v3751, 0.0
      %v3938 = vmax.f32 %v3754, 0.0
      %v3939 = vmax.f32 %v3759, 0.0
      %v3940 = vmax.f32 %v3762, 0.0
      %v3941 = vmax.f32 %v3767, 0.0
      %v3942 = vmax.f32 %v3770, 0.0
      %v3943 = vmax.f32 %v3775, 0.0
      %v3944 = vmax.f32 %v3778, 0.0
      %v3945 = vmax.f32 %v3783, 0.0
      %v3946 = vmax.f32 %v3786, 0.0
      %v3947 = vmax.f32 %v3791, 0.0
      %v3948 = vmax.f32 %v3794, 0.0
      %v3949 = vmax.f32 %v3799, 0.0
      %v3950 = vmax.f32 %v3802, 0.0
      %v3951 = vmax.f32 %v3807, 0.0
      %v3952 = vmax.f32 %v3810, 0.0
      %v3953 = vmax.f32 %v3815, 0.0
      %v3954 = vmax.f32 %v3818, 0.0
      %v3955 = vmax.f32 %v3823, 0.0
      %v3956 = vmax.f32 %v3826, 0.0
      %v3957 = vpack.c.bf16 %v3830, %v3829
      %v3958 = vpack.c.bf16 %v3832, %v3831
      %v3959 = vpack.c.bf16 %v3834, %v3833
      %v3960 = vpack.c.bf16 %v3836, %v3835
      %v3961 = vpack.c.bf16 %v3838, %v3837
      %v3962 = vpack.c.bf16 %v3840, %v3839
      %v3963 = vpack.c.bf16 %v3842, %v3841
      %v3964 = vpack.c.bf16 %v3844, %v3843
      %v3965 = vpack.c.bf16 %v3846, %v3845
      %v3966 = vpack.c.bf16 %v3848, %v3847
      %v3967 = vpack.c.bf16 %v3850, %v3849
      %v3968 = vpack.c.bf16 %v3852, %v3851
      %v3969 = vpack.c.bf16 %v3854, %v3853
      %v3970 = vpack.c.bf16 %v3856, %v3855
      %v3971 = vpack.c.bf16 %v3858, %v3857
      %v3972 = vpack.c.bf16 %v3860, %v3859
      %v3973 = vpack.c.bf16 %v3862, %v3861
      %v3974 = vpack.c.bf16 %v3864, %v3863
      %v3975 = vpack.c.bf16 %v3866, %v3865
      %v3976 = vpack.c.bf16 %v3868, %v3867
      %v3977 = vpack.c.bf16 %v3870, %v3869
      %v3978 = vpack.c.bf16 %v3872, %v3871
      %v3979 = vpack.c.bf16 %v3874, %v3873
      %v3980 = vpack.c.bf16 %v3876, %v3875
      %v3981 = vpack.c.bf16 %v3878, %v3877
      %v3982 = vpack.c.bf16 %v3880, %v3879
      %v3983 = vpack.c.bf16 %v3882, %v3881
      %v3984 = vpack.c.bf16 %v3884, %v3883
      %v3985 = vpack.c.bf16 %v3886, %v3885
      %v3986 = vpack.c.bf16 %v3888, %v3887
      %v3987 = vpack.c.bf16 %v3890, %v3889
      %v3988 = vpack.c.bf16 %v3892, %v3891
      %v3989 = vpack.c.bf16 %v3894, %v3893
      %v3990 = vpack.c.bf16 %v3896, %v3895
      %v3991 = vpack.c.bf16 %v3898, %v3897
      %v3992 = vpack.c.bf16 %v3900, %v3899
      %v3993 = vpack.c.bf16 %v3902, %v3901
      %v3994 = vpack.c.bf16 %v3904, %v3903
      %v3995 = vpack.c.bf16 %v3906, %v3905
      %v3996 = vpack.c.bf16 %v3908, %v3907
      %v3997 = vpack.c.bf16 %v3910, %v3909
      %v3998 = vpack.c.bf16 %v3912, %v3911
      %v3999 = vpack.c.bf16 %v3914, %v3913
      %v4000 = vpack.c.bf16 %v3916, %v3915
      %v4001 = vpack.c.bf16 %v3918, %v3917
      %v4002 = vpack.c.bf16 %v3920, %v3919
      %v4003 = vpack.c.bf16 %v3922, %v3921
      %v4004 = vpack.c.bf16 %v3924, %v3923
      %v4005 = vpack.c.bf16 %v3926, %v3925
      %v4006 = vpack.c.bf16 %v3928, %v3927
      %v4007 = vpack.c.bf16 %v3930, %v3929
      %v4008 = vpack.c.bf16 %v3932, %v3931
      %v4009 = vpack.c.bf16 %v3934, %v3933
      %v4010 = vpack.c.bf16 %v3936, %v3935
      %v4011 = vpack.c.bf16 %v3938, %v3937
      %v4012 = vpack.c.bf16 %v3940, %v3939
      %v4013 = vpack.c.bf16 %v3942, %v3941
      %v4014 = vpack.c.bf16 %v3944, %v3943
      %v4015 = vpack.c.bf16 %v3946, %v3945
      %v4016 = vpack.c.bf16 %v3948, %v3947
      %v4017 = vpack.c.bf16 %v3950, %v3949
      %v4018 = vpack.c.bf16 %v3952, %v3951
      %v4019 = vpack.c.bf16 %v3954, %v3953
      %v4020 = vpack.c.bf16 %v3956, %v3955
      %v4021 = vld [vmem:[%s5] sm:$0xf]
      %v4022 = vld [vmem:[%s5 + $0x4] sm:$0xf]
      %v4023 = vld [vmem:[%s5 + $0x8] sm:$0xf]
      %v4024 = vld [vmem:[%s5 + $0xc] sm:$0xf]
      %v4025 = vld [vmem:[%s5 + $0x10] sm:$0xf]
      %v4026 = vld [vmem:[%s5 + $0x14] sm:$0xf]
      %v4027 = vld [vmem:[%s5 + $0x18] sm:$0xf]
      %v4028 = vld [vmem:[%s5 + $0x1c] sm:$0xf]
      %v4029 = vld [vmem:[%s5 + $0x20] sm:$0xf]
      %v4030 = vld [vmem:[%s5 + $0x24] sm:$0xf]
      %v4031 = vld [vmem:[%s5 + $0x28] sm:$0xf]
      %v4032 = vld [vmem:[%s5 + $0x2c] sm:$0xf]
      %v4033 = vld [vmem:[%s5 + $0x30] sm:$0xf]
      %v4034 = vld [vmem:[%s5 + $0x34] sm:$0xf]
      %v4035 = vld [vmem:[%s5 + $0x38] sm:$0xf]
      %v4036 = vld [vmem:[%s5 + $0x3c] sm:$0xf]
      %v4037 = vld [vmem:[%s6] sm:$0x1]
      %v4039 = vlaneseq
      %v4040 = vshrl.u32 %v4039, 7
      %v4041 = vsub.s32 0, %v4040
      %v4042 = vrot.slane %v4037, %v4041
      %v4060 = vunpack.c.l.b16 %v4021
      %v4061 = vunpack.c.l.b16 %v4022
      %v4062 = vunpack.c.l.b16 %v4023
      %v4063 = vunpack.c.l.b16 %v4024
      %v4064 = vunpack.c.l.b16 %v4025
      %v4065 = vunpack.c.l.b16 %v4026
      %v4066 = vunpack.c.l.b16 %v4027
      %v4067 = vunpack.c.l.b16 %v4028
      %v4068 = vunpack.c.l.b16 %v4029
      %v4069 = vunpack.c.l.b16 %v4030
      %v4070 = vunpack.c.l.b16 %v4031
      %v4071 = vunpack.c.l.b16 %v4032
      %v4072 = vunpack.c.l.b16 %v4033
      %v4073 = vunpack.c.l.b16 %v4034
      %v4074 = vunpack.c.l.b16 %v4035
      %v4075 = vunpack.c.l.b16 %v4036
      %v4076 = vpack.c.b16 %v4061, %v4060
      %v4077 = vpack.c.b16 %v4063, %v4062
      %v4078 = vpack.c.b16 %v4065, %v4064
      %v4079 = vpack.c.b16 %v4067, %v4066
      %v4080 = vpack.c.b16 %v4069, %v4068
      %v4081 = vpack.c.b16 %v4071, %v4070
      %v4082 = vpack.c.b16 %v4073, %v4072
      %v4083 = vpack.c.b16 %v4075, %v4074
      %4092 = vmatprep.subr.bf16.mxu0 0
      %4093 = vmatpush1.bf16.msra.mxu0 %v4076
      %4094 = vmatprep.subr.bf16.mxu0 0
      %4095 = vmatpush1.bf16.msra.mxu0 %v4077
      %4096 = vmatprep.subr.bf16.mxu0 0
      %4097 = vmatpush1.bf16.msra.mxu0 %v4078
      %4098 = vmatprep.subr.bf16.mxu0 0
      %4099 = vmatpush1.bf16.msra.mxu0 %v4079
      %4100 = vmatprep.subr.bf16.mxu0 0
      %4101 = vmatpush1.bf16.msra.mxu0 %v4080
      %4102 = vmatprep.subr.bf16.mxu0 0
      %4103 = vmatpush1.bf16.msra.mxu0 %v4081
      %4104 = vmatprep.subr.bf16.mxu0 0
      %4105 = vmatpush1.bf16.msra.mxu0 %v4082
      %4106 = vmatprep.subr.bf16.mxu0 0
      %4107 = vmatpush1.bf16.msra.mxu0 %v4083
      %4108 = vmatprep.subr.bf16.mxu0 0
      %4109 = vmatpush1.bf16.msra.mxu0 0
      %4110 = vmatprep.subr.bf16.mxu0 0
      %4111 = vmatpush1.bf16.msra.mxu0 0
      %4112 = vmatprep.subr.bf16.mxu0 0
      %4113 = vmatpush1.bf16.msra.mxu0 0
      %4114 = vmatprep.subr.bf16.mxu0 0
      %4115 = vmatpush1.bf16.msra.mxu0 0
      %4116 = vmatprep.subr.bf16.mxu0 0
      %4117 = vmatpush1.bf16.msra.mxu0 0
      %4118 = vmatprep.subr.bf16.mxu0 0
      %4119 = vmatpush1.bf16.msra.mxu0 0
      %4120 = vmatprep.subr.bf16.mxu0 0
      %4121 = vmatpush1.bf16.msra.mxu0 0
      %4122 = vmatprep.subr.bf16.mxu0 0
      %4123 = vmatpush1.bf16.msra.mxu0 0
      %4124 = vmatprep.mubr.bf16.mxu0 0
      %4125 = vmatmul.mubr.bf16.gmra.mrb[0].mxu0 %v3957
      %v4126 = vpop.f32.mrb[0].mxu0
      %v4127 = vadd.f32 %v4042, %v4126
      %v4128 = vpop.f32.mrb[0].mxu0
      %v4129 = vpop.f32.mrb[0].mxu0
      %v4130 = vadd.f32 %v4042, %v4129
      %v4131 = vpop.f32.mrb[0].mxu0
      %4132 = vmatprep.mubr.bf16.mxu0 0
      %4133 = vmatmul.mubr.bf16.gmra.mrb[0].mxu0 %v3958
      %v4134 = vpop.f32.mrb[0].mxu0
      %v4135 = vadd.f32 %v4042, %v4134
      %v4136 = vpop.f32.mrb[0].mxu0
      %v4137 = vpop.f32.mrb[0].mxu0
      %v4138 = vadd.f32 %v4042, %v4137
      %v4139 = vpop.f32.mrb[0].mxu0
      %4140 = vmatprep.mubr.bf16.mxu0 0
      %4141 = vmatmul.mubr.bf16.gmra.mrb[0].mxu0 %v3959
      %v4142 = vpop.f32.mrb[0].mxu0
      %v4143 = vadd.f32 %v4042, %v4142
      %v4144 = vpop.f32.mrb[0].mxu0
      %v4145 = vpop.f32.mrb[0].mxu0
      %v4146 = vadd.f32 %v4042, %v4145
      %v4147 = vpop.f32.mrb[0].mxu0
      %4148 = vmatprep.mubr.bf16.mxu0 0
      %4149 = vmatmul.mubr.bf16.gmra.mrb[0].mxu0 %v3960
      %v4150 = vpop.f32.mrb[0].mxu0
      %v4151 = vadd.f32 %v4042, %v4150
      %v4152 = vpop.f32.mrb[0].mxu0
      %v4153 = vpop.f32.mrb[0].mxu0
      %v4154 = vadd.f32 %v4042, %v4153
      %v4155 = vpop.f32.mrb[0].mxu0
      %4156 = vmatprep.mubr.bf16.mxu0 0
      %4157 = vmatmul.mubr.bf16.gmra.mrb[0].mxu0 %v3961
      %v4158 = vpop.f32.mrb[0].mxu0
      %v4159 = vadd.f32 %v4042, %v4158
      %v4160 = vpop.f32.mrb[0].mxu0
      %v4161 = vpop.f32.mrb[0].mxu0
      %v4162 = vadd.f32 %v4042, %v4161
      %v4163 = vpop.f32.mrb[0].mxu0
      %4164 = vmatprep.mubr.bf16.mxu0 0
      %4165 = vmatmul.mubr.bf16.gmra.mrb[0].mxu0 %v3962
      %v4166 = vpop.f32.mrb[0].mxu0
      %v4167 = vadd.f32 %v4042, %v4166
      %v4168 = vpop.f32.mrb[0].mxu0
      %v4169 = vpop.f32.mrb[0].mxu0
      %v4170 = vadd.f32 %v4042, %v4169
      %v4171 = vpop.f32.mrb[0].mxu0
      %4172 = vmatprep.mubr.bf16.mxu0 0
      %4173 = vmatmul.mubr.bf16.gmra.mrb[0].mxu0 %v3963
      %v4174 = vpop.f32.mrb[0].mxu0
      %v4175 = vadd.f32 %v4042, %v4174
      %v4176 = vpop.f32.mrb[0].mxu0
      %v4177 = vpop.f32.mrb[0].mxu0
      %v4178 = vadd.f32 %v4042, %v4177
      %v4179 = vpop.f32.mrb[0].mxu0
      %4180 = vmatprep.mubr.bf16.mxu0 0
      %4181 = vmatmul.mubr.bf16.gmra.mrb[0].mxu0 %v3964
      %v4182 = vpop.f32.mrb[0].mxu0
      %v4183 = vadd.f32 %v4042, %v4182
      %v4184 = vpop.f32.mrb[0].mxu0
      %v4185 = vpop.f32.mrb[0].mxu0
      %v4186 = vadd.f32 %v4042, %v4185
      %v4187 = vpop.f32.mrb[0].mxu0
      %4188 = vmatprep.mubr.bf16.mxu0 0
      %4189 = vmatmul.mubr.bf16.gmra.mrb[0].mxu0 %v3965
      %v4190 = vpop.f32.mrb[0].mxu0
      %v4191 = vadd.f32 %v4042, %v4190
      %v4192 = vpop.f32.mrb[0].mxu0
      %v4193 = vpop.f32.mrb[0].mxu0
      %v4194 = vadd.f32 %v4042, %v4193
      %v4195 = vpop.f32.mrb[0].mxu0
      %4196 = vmatprep.mubr.bf16.mxu0 0
      %4197 = vmatmul.mubr.bf16.gmra.mrb[0].mxu0 %v3966
      %v4198 = vpop.f32.mrb[0].mxu0
      %v4199 = vadd.f32 %v4042, %v4198
      %v4200 = vpop.f32.mrb[0].mxu0
      %v4201 = vpop.f32.mrb[0].mxu0
      %v4202 = vadd.f32 %v4042, %v4201
      %v4203 = vpop.f32.mrb[0].mxu0
      %4204 = vmatprep.mubr.bf16.mxu0 0
      %4205 = vmatmul.mubr.bf16.gmra.mrb[0].mxu0 %v3967
      %v4206 = vpop.f32.mrb[0].mxu0
      %v4207 = vadd.f32 %v4042, %v4206
      %v4208 = vpop.f32.mrb[0].mxu0
      %v4209 = vpop.f32.mrb[0].mxu0
      %v4210 = vadd.f32 %v4042, %v4209
      %v4211 = vpop.f32.mrb[0].mxu0
      %4212 = vmatprep.mubr.bf16.mxu0 0
      %4213 = vmatmul.mubr.bf16.gmra.mrb[0].mxu0 %v3968
      %v4214 = vpop.f32.mrb[0].mxu0
      %v4215 = vadd.f32 %v4042, %v4214
      %v4216 = vpop.f32.mrb[0].mxu0
      %v4217 = vpop.f32.mrb[0].mxu0
      %v4218 = vadd.f32 %v4042, %v4217
      %v4219 = vpop.f32.mrb[0].mxu0
      %4220 = vmatprep.mubr.bf16.mxu0 0
      %4221 = vmatmul.mubr.bf16.gmra.mrb[0].mxu0 %v3969
      %v4222 = vpop.f32.mrb[0].mxu0
      %v4223 = vadd.f32 %v4042, %v4222
      %v4224 = vpop.f32.mrb[0].mxu0
      %v4225 = vpop.f32.mrb[0].mxu0
      %v4226 = vadd.f32 %v4042, %v4225
      %v4227 = vpop.f32.mrb[0].mxu0
      %4228 = vmatprep.mubr.bf16.mxu0 0
      %4229 = vmatmul.mubr.bf16.gmra.mrb[0].mxu0 %v3970
      %v4230 = vpop.f32.mrb[0].mxu0
      %v4231 = vadd.f32 %v4042, %v4230
      %v4232 = vpop.f32.mrb[0].mxu0
      %v4233 = vpop.f32.mrb[0].mxu0
      %v4234 = vadd.f32 %v4042, %v4233
      %v4235 = vpop.f32.mrb[0].mxu0
      %4236 = vmatprep.mubr.bf16.mxu0 0
      %4237 = vmatmul.mubr.bf16.gmra.mrb[0].mxu0 %v3971
      %v4238 = vpop.f32.mrb[0].mxu0
      %v4239 = vadd.f32 %v4042, %v4238
      %v4240 = vpop.f32.mrb[0].mxu0
      %v4241 = vpop.f32.mrb[0].mxu0
      %v4242 = vadd.f32 %v4042, %v4241
      %v4243 = vpop.f32.mrb[0].mxu0
      %4244 = vmatprep.mubr.bf16.mxu0 0
      %4245 = vmatmul.mubr.bf16.gmra.mrb[0].mxu0 %v3972
      %v4246 = vpop.f32.mrb[0].mxu0
      %v4247 = vadd.f32 %v4042, %v4246
      %v4248 = vpop.f32.mrb[0].mxu0
      %v4249 = vpop.f32.mrb[0].mxu0
      %v4250 = vadd.f32 %v4042, %v4249
      %v4251 = vpop.f32.mrb[0].mxu0
      %4252 = vmatprep.mubr.bf16.mxu0 0
      %4253 = vmatmul.mubr.bf16.gmra.mrb[0].mxu0 %v3973
      %v4254 = vpop.f32.mrb[0].mxu0
      %v4255 = vadd.f32 %v4042, %v4254
      %v4256 = vpop.f32.mrb[0].mxu0
      %v4257 = vpop.f32.mrb[0].mxu0
      %v4258 = vadd.f32 %v4042, %v4257
      %v4259 = vpop.f32.mrb[0].mxu0
      %4260 = vmatprep.mubr.bf16.mxu0 0
      %4261 = vmatmul.mubr.bf16.gmra.mrb[0].mxu0 %v3974
      %v4262 = vpop.f32.mrb[0].mxu0
      %v4263 = vadd.f32 %v4042, %v4262
      %v4264 = vpop.f32.mrb[0].mxu0
      %v4265 = vpop.f32.mrb[0].mxu0
      %v4266 = vadd.f32 %v4042, %v4265
      %v4267 = vpop.f32.mrb[0].mxu0
      %4268 = vmatprep.mubr.bf16.mxu0 0
      %4269 = vmatmul.mubr.bf16.gmra.mrb[0].mxu0 %v3975
      %v4270 = vpop.f32.mrb[0].mxu0
      %v4271 = vadd.f32 %v4042, %v4270
      %v4272 = vpop.f32.mrb[0].mxu0
      %v4273 = vpop.f32.mrb[0].mxu0
      %v4274 = vadd.f32 %v4042, %v4273
      %v4275 = vpop.f32.mrb[0].mxu0
      %4276 = vmatprep.mubr.bf16.mxu0 0
      %4277 = vmatmul.mubr.bf16.gmra.mrb[0].mxu0 %v3976
      %v4278 = vpop.f32.mrb[0].mxu0
      %v4279 = vadd.f32 %v4042, %v4278
      %v4280 = vpop.f32.mrb[0].mxu0
      %v4281 = vpop.f32.mrb[0].mxu0
      %v4282 = vadd.f32 %v4042, %v4281
      %v4283 = vpop.f32.mrb[0].mxu0
      %4284 = vmatprep.mubr.bf16.mxu0 0
      %4285 = vmatmul.mubr.bf16.gmra.mrb[0].mxu0 %v3977
      %v4286 = vpop.f32.mrb[0].mxu0
      %v4287 = vadd.f32 %v4042, %v4286
      %v4288 = vpop.f32.mrb[0].mxu0
      %v4289 = vpop.f32.mrb[0].mxu0
      %v4290 = vadd.f32 %v4042, %v4289
      %v4291 = vpop.f32.mrb[0].mxu0
      %4292 = vmatprep.mubr.bf16.mxu0 0
      %4293 = vmatmul.mubr.bf16.gmra.mrb[0].mxu0 %v3978
      %v4294 = vpop.f32.mrb[0].mxu0
      %v4295 = vadd.f32 %v4042, %v4294
      %v4296 = vpop.f32.mrb[0].mxu0
      %v4297 = vpop.f32.mrb[0].mxu0
      %v4298 = vadd.f32 %v4042, %v4297
      %v4299 = vpop.f32.mrb[0].mxu0
      %4300 = vmatprep.mubr.bf16.mxu0 0
      %4301 = vmatmul.mubr.bf16.gmra.mrb[0].mxu0 %v3979
      %v4302 = vpop.f32.mrb[0].mxu0
      %v4303 = vadd.f32 %v4042, %v4302
      %v4304 = vpop.f32.mrb[0].mxu0
      %v4305 = vpop.f32.mrb[0].mxu0
      %v4306 = vadd.f32 %v4042, %v4305
      %v4307 = vpop.f32.mrb[0].mxu0
      %4308 = vmatprep.mubr.bf16.mxu0 0
      %4309 = vmatmul.mubr.bf16.gmra.mrb[0].mxu0 %v3980
      %v4310 = vpop.f32.mrb[0].mxu0
      %v4311 = vadd.f32 %v4042, %v4310
      %v4312 = vpop.f32.mrb[0].mxu0
      %v4313 = vpop.f32.mrb[0].mxu0
      %v4314 = vadd.f32 %v4042, %v4313
      %v4315 = vpop.f32.mrb[0].mxu0
      %4316 = vmatprep.mubr.bf16.mxu0 0
      %4317 = vmatmul.mubr.bf16.gmra.mrb[0].mxu0 %v3981
      %v4318 = vpop.f32.mrb[0].mxu0
      %v4319 = vadd.f32 %v4042, %v4318
      %v4320 = vpop.f32.mrb[0].mxu0
      %v4321 = vpop.f32.mrb[0].mxu0
      %v4322 = vadd.f32 %v4042, %v4321
      %v4323 = vpop.f32.mrb[0].mxu0
      %4324 = vmatprep.mubr.bf16.mxu0 0
      %4325 = vmatmul.mubr.bf16.gmra.mrb[0].mxu0 %v3982
      %v4326 = vpop.f32.mrb[0].mxu0
      %v4327 = vadd.f32 %v4042, %v4326
      %v4328 = vpop.f32.mrb[0].mxu0
      %v4329 = vpop.f32.mrb[0].mxu0
      %v4330 = vadd.f32 %v4042, %v4329
      %v4331 = vpop.f32.mrb[0].mxu0
      %4332 = vmatprep.mubr.bf16.mxu0 0
      %4333 = vmatmul.mubr.bf16.gmra.mrb[0].mxu0 %v3983
      %v4334 = vpop.f32.mrb[0].mxu0
      %v4335 = vadd.f32 %v4042, %v4334
      %v4336 = vpop.f32.mrb[0].mxu0
      %v4337 = vpop.f32.mrb[0].mxu0
      %v4338 = vadd.f32 %v4042, %v4337
      %v4339 = vpop.f32.mrb[0].mxu0
      %4340 = vmatprep.mubr.bf16.mxu0 0
      %4341 = vmatmul.mubr.bf16.gmra.mrb[0].mxu0 %v3984
      %v4342 = vpop.f32.mrb[0].mxu0
      %v4343 = vadd.f32 %v4042, %v4342
      %v4344 = vpop.f32.mrb[0].mxu0
      %v4345 = vpop.f32.mrb[0].mxu0
      %v4346 = vadd.f32 %v4042, %v4345
      %v4347 = vpop.f32.mrb[0].mxu0
      %4348 = vmatprep.mubr.bf16.mxu0 0
      %4349 = vmatmul.mubr.bf16.gmra.mrb[0].mxu0 %v3985
      %v4350 = vpop.f32.mrb[0].mxu0
      %v4351 = vadd.f32 %v4042, %v4350
      %v4352 = vpop.f32.mrb[0].mxu0
      %v4353 = vpop.f32.mrb[0].mxu0
      %v4354 = vadd.f32 %v4042, %v4353
      %v4355 = vpop.f32.mrb[0].mxu0
      %4356 = vmatprep.mubr.bf16.mxu0 0
      %4357 = vmatmul.mubr.bf16.gmra.mrb[0].mxu0 %v3986
      %v4358 = vpop.f32.mrb[0].mxu0
      %v4359 = vadd.f32 %v4042, %v4358
      %v4360 = vpop.f32.mrb[0].mxu0
      %v4361 = vpop.f32.mrb[0].mxu0
      %v4362 = vadd.f32 %v4042, %v4361
      %v4363 = vpop.f32.mrb[0].mxu0
      %4364 = vmatprep.mubr.bf16.mxu0 0
      %4365 = vmatmul.mubr.bf16.gmra.mrb[0].mxu0 %v3987
      %v4366 = vpop.f32.mrb[0].mxu0
      %v4367 = vadd.f32 %v4042, %v4366
      %v4368 = vpop.f32.mrb[0].mxu0
      %v4369 = vpop.f32.mrb[0].mxu0
      %v4370 = vadd.f32 %v4042, %v4369
      %v4371 = vpop.f32.mrb[0].mxu0
      %4372 = vmatprep.mubr.bf16.mxu0 0
      %4373 = vmatmul.mubr.bf16.gmra.mrb[0].mxu0 %v3988
      %v4374 = vpop.f32.mrb[0].mxu0
      %v4375 = vadd.f32 %v4042, %v4374
      %v4376 = vpop.f32.mrb[0].mxu0
      %v4377 = vpop.f32.mrb[0].mxu0
      %v4378 = vadd.f32 %v4042, %v4377
      %v4379 = vpop.f32.mrb[0].mxu0
      %4380 = vmatprep.mubr.bf16.mxu0 0
      %4381 = vmatmul.mubr.bf16.gmra.mrb[0].mxu0 %v3989
      %v4382 = vpop.f32.mrb[0].mxu0
      %v4383 = vadd.f32 %v4042, %v4382
      %v4384 = vpop.f32.mrb[0].mxu0
      %v4385 = vpop.f32.mrb[0].mxu0
      %v4386 = vadd.f32 %v4042, %v4385
      %v4387 = vpop.f32.mrb[0].mxu0
      %4388 = vmatprep.mubr.bf16.mxu0 0
      %4389 = vmatmul.mubr.bf16.gmra.mrb[0].mxu0 %v3990
      %v4390 = vpop.f32.mrb[0].mxu0
      %v4391 = vadd.f32 %v4042, %v4390
      %v4392 = vpop.f32.mrb[0].mxu0
      %v4393 = vpop.f32.mrb[0].mxu0
      %v4394 = vadd.f32 %v4042, %v4393
      %v4395 = vpop.f32.mrb[0].mxu0
      %4396 = vmatprep.mubr.bf16.mxu0 0
      %4397 = vmatmul.mubr.bf16.gmra.mrb[0].mxu0 %v3991
      %v4398 = vpop.f32.mrb[0].mxu0
      %v4399 = vadd.f32 %v4042, %v4398
      %v4400 = vpop.f32.mrb[0].mxu0
      %v4401 = vpop.f32.mrb[0].mxu0
      %v4402 = vadd.f32 %v4042, %v4401
      %v4403 = vpop.f32.mrb[0].mxu0
      %4404 = vmatprep.mubr.bf16.mxu0 0
      %4405 = vmatmul.mubr.bf16.gmra.mrb[0].mxu0 %v3992
      %v4406 = vpop.f32.mrb[0].mxu0
      %v4407 = vadd.f32 %v4042, %v4406
      %v4408 = vpop.f32.mrb[0].mxu0
      %v4409 = vpop.f32.mrb[0].mxu0
      %v4410 = vadd.f32 %v4042, %v4409
      %v4411 = vpop.f32.mrb[0].mxu0
      %4412 = vmatprep.mubr.bf16.mxu0 0
      %4413 = vmatmul.mubr.bf16.gmra.mrb[0].mxu0 %v3993
      %v4414 = vpop.f32.mrb[0].mxu0
      %v4415 = vadd.f32 %v4042, %v4414
      %v4416 = vpop.f32.mrb[0].mxu0
      %v4417 = vpop.f32.mrb[0].mxu0
      %v4418 = vadd.f32 %v4042, %v4417
      %v4419 = vpop.f32.mrb[0].mxu0
      %4420 = vmatprep.mubr.bf16.mxu0 0
      %4421 = vmatmul.mubr.bf16.gmra.mrb[0].mxu0 %v3994
      %v4422 = vpop.f32.mrb[0].mxu0
      %v4423 = vadd.f32 %v4042, %v4422
      %v4424 = vpop.f32.mrb[0].mxu0
      %v4425 = vpop.f32.mrb[0].mxu0
      %v4426 = vadd.f32 %v4042, %v4425
      %v4427 = vpop.f32.mrb[0].mxu0
      %4428 = vmatprep.mubr.bf16.mxu0 0
      %4429 = vmatmul.mubr.bf16.gmra.mrb[0].mxu0 %v3995
      %v4430 = vpop.f32.mrb[0].mxu0
      %v4431 = vadd.f32 %v4042, %v4430
      %v4432 = vpop.f32.mrb[0].mxu0
      %v4433 = vpop.f32.mrb[0].mxu0
      %v4434 = vadd.f32 %v4042, %v4433
      %v4435 = vpop.f32.mrb[0].mxu0
      %4436 = vmatprep.mubr.bf16.mxu0 0
      %4437 = vmatmul.mubr.bf16.gmra.mrb[0].mxu0 %v3996
      %v4438 = vpop.f32.mrb[0].mxu0
      %v4439 = vadd.f32 %v4042, %v4438
      %v4440 = vpop.f32.mrb[0].mxu0
      %v4441 = vpop.f32.mrb[0].mxu0
      %v4442 = vadd.f32 %v4042, %v4441
      %v4443 = vpop.f32.mrb[0].mxu0
      %4444 = vmatprep.mubr.bf16.mxu0 0
      %4445 = vmatmul.mubr.bf16.gmra.mrb[0].mxu0 %v3997
      %v4446 = vpop.f32.mrb[0].mxu0
      %v4447 = vadd.f32 %v4042, %v4446
      %v4448 = vpop.f32.mrb[0].mxu0
      %v4449 = vpop.f32.mrb[0].mxu0
      %v4450 = vadd.f32 %v4042, %v4449
      %v4451 = vpop.f32.mrb[0].mxu0
      %4452 = vmatprep.mubr.bf16.mxu0 0
      %4453 = vmatmul.mubr.bf16.gmra.mrb[0].mxu0 %v3998
      %v4454 = vpop.f32.mrb[0].mxu0
      %v4455 = vadd.f32 %v4042, %v4454
      %v4456 = vpop.f32.mrb[0].mxu0
      %v4457 = vpop.f32.mrb[0].mxu0
      %v4458 = vadd.f32 %v4042, %v4457
      %v4459 = vpop.f32.mrb[0].mxu0
      %4460 = vmatprep.mubr.bf16.mxu0 0
      %4461 = vmatmul.mubr.bf16.gmra.mrb[0].mxu0 %v3999
      %v4462 = vpop.f32.mrb[0].mxu0
      %v4463 = vadd.f32 %v4042, %v4462
      %v4464 = vpop.f32.mrb[0].mxu0
      %v4465 = vpop.f32.mrb[0].mxu0
      %v4466 = vadd.f32 %v4042, %v4465
      %v4467 = vpop.f32.mrb[0].mxu0
      %4468 = vmatprep.mubr.bf16.mxu0 0
      %4469 = vmatmul.mubr.bf16.gmra.mrb[0].mxu0 %v4000
      %v4470 = vpop.f32.mrb[0].mxu0
      %v4471 = vadd.f32 %v4042, %v4470
      %v4472 = vpop.f32.mrb[0].mxu0
      %v4473 = vpop.f32.mrb[0].mxu0
      %v4474 = vadd.f32 %v4042, %v4473
      %v4475 = vpop.f32.mrb[0].mxu0
      %4476 = vmatprep.mubr.bf16.mxu0 0
      %4477 = vmatmul.mubr.bf16.gmra.mrb[0].mxu0 %v4001
      %v4478 = vpop.f32.mrb[0].mxu0
      %v4479 = vadd.f32 %v4042, %v4478
      %v4480 = vpop.f32.mrb[0].mxu0
      %v4481 = vpop.f32.mrb[0].mxu0
      %v4482 = vadd.f32 %v4042, %v4481
      %v4483 = vpop.f32.mrb[0].mxu0
      %4484 = vmatprep.mubr.bf16.mxu0 0
      %4485 = vmatmul.mubr.bf16.gmra.mrb[0].mxu0 %v4002
      %v4486 = vpop.f32.mrb[0].mxu0
      %v4487 = vadd.f32 %v4042, %v4486
      %v4488 = vpop.f32.mrb[0].mxu0
      %v4489 = vpop.f32.mrb[0].mxu0
      %v4490 = vadd.f32 %v4042, %v4489
      %v4491 = vpop.f32.mrb[0].mxu0
      %4492 = vmatprep.mubr.bf16.mxu0 0
      %4493 = vmatmul.mubr.bf16.gmra.mrb[0].mxu0 %v4003
      %v4494 = vpop.f32.mrb[0].mxu0
      %v4495 = vadd.f32 %v4042, %v4494
      %v4496 = vpop.f32.mrb[0].mxu0
      %v4497 = vpop.f32.mrb[0].mxu0
      %v4498 = vadd.f32 %v4042, %v4497
      %v4499 = vpop.f32.mrb[0].mxu0
      %4500 = vmatprep.mubr.bf16.mxu0 0
      %4501 = vmatmul.mubr.bf16.gmra.mrb[0].mxu0 %v4004
      %v4502 = vpop.f32.mrb[0].mxu0
      %v4503 = vadd.f32 %v4042, %v4502
      %v4504 = vpop.f32.mrb[0].mxu0
      %v4505 = vpop.f32.mrb[0].mxu0
      %v4506 = vadd.f32 %v4042, %v4505
      %v4507 = vpop.f32.mrb[0].mxu0
      %4508 = vmatprep.mubr.bf16.mxu0 0
      %4509 = vmatmul.mubr.bf16.gmra.mrb[0].mxu0 %v4005
      %v4510 = vpop.f32.mrb[0].mxu0
      %v4511 = vadd.f32 %v4042, %v4510
      %v4512 = vpop.f32.mrb[0].mxu0
      %v4513 = vpop.f32.mrb[0].mxu0
      %v4514 = vadd.f32 %v4042, %v4513
      %v4515 = vpop.f32.mrb[0].mxu0
      %4516 = vmatprep.mubr.bf16.mxu0 0
      %4517 = vmatmul.mubr.bf16.gmra.mrb[0].mxu0 %v4006
      %v4518 = vpop.f32.mrb[0].mxu0
      %v4519 = vadd.f32 %v4042, %v4518
      %v4520 = vpop.f32.mrb[0].mxu0
      %v4521 = vpop.f32.mrb[0].mxu0
      %v4522 = vadd.f32 %v4042, %v4521
      %v4523 = vpop.f32.mrb[0].mxu0
      %4524 = vmatprep.mubr.bf16.mxu0 0
      %4525 = vmatmul.mubr.bf16.gmra.mrb[0].mxu0 %v4007
      %v4526 = vpop.f32.mrb[0].mxu0
      %v4527 = vadd.f32 %v4042, %v4526
      %v4528 = vpop.f32.mrb[0].mxu0
      %v4529 = vpop.f32.mrb[0].mxu0
      %v4530 = vadd.f32 %v4042, %v4529
      %v4531 = vpop.f32.mrb[0].mxu0
      %4532 = vmatprep.mubr.bf16.mxu0 0
      %4533 = vmatmul.mubr.bf16.gmra.mrb[0].mxu0 %v4008
      %v4534 = vpop.f32.mrb[0].mxu0
      %v4535 = vadd.f32 %v4042, %v4534
      %v4536 = vpop.f32.mrb[0].mxu0
      %v4537 = vpop.f32.mrb[0].mxu0
      %v4538 = vadd.f32 %v4042, %v4537
      %v4539 = vpop.f32.mrb[0].mxu0
      %4540 = vmatprep.mubr.bf16.mxu0 0
      %4541 = vmatmul.mubr.bf16.gmra.mrb[0].mxu0 %v4009
      %v4542 = vpop.f32.mrb[0].mxu0
      %v4543 = vadd.f32 %v4042, %v4542
      %v4544 = vpop.f32.mrb[0].mxu0
      %v4545 = vpop.f32.mrb[0].mxu0
      %v4546 = vadd.f32 %v4042, %v4545
      %v4547 = vpop.f32.mrb[0].mxu0
      %4548 = vmatprep.mubr.bf16.mxu0 0
      %4549 = vmatmul.mubr.bf16.gmra.mrb[0].mxu0 %v4010
      %v4550 = vpop.f32.mrb[0].mxu0
      %v4551 = vadd.f32 %v4042, %v4550
      %v4552 = vpop.f32.mrb[0].mxu0
      %v4553 = vpop.f32.mrb[0].mxu0
      %v4554 = vadd.f32 %v4042, %v4553
      %v4555 = vpop.f32.mrb[0].mxu0
      %4556 = vmatprep.mubr.bf16.mxu0 0
      %4557 = vmatmul.mubr.bf16.gmra.mrb[0].mxu0 %v4011
      %v4558 = vpop.f32.mrb[0].mxu0
      %v4559 = vadd.f32 %v4042, %v4558
      %v4560 = vpop.f32.mrb[0].mxu0
      %v4561 = vpop.f32.mrb[0].mxu0
      %v4562 = vadd.f32 %v4042, %v4561
      %v4563 = vpop.f32.mrb[0].mxu0
      %4564 = vmatprep.mubr.bf16.mxu0 0
      %4565 = vmatmul.mubr.bf16.gmra.mrb[0].mxu0 %v4012
      %v4566 = vpop.f32.mrb[0].mxu0
      %v4567 = vadd.f32 %v4042, %v4566
      %v4568 = vpop.f32.mrb[0].mxu0
      %v4569 = vpop.f32.mrb[0].mxu0
      %v4570 = vadd.f32 %v4042, %v4569
      %v4571 = vpop.f32.mrb[0].mxu0
      %4572 = vmatprep.mubr.bf16.mxu0 0
      %4573 = vmatmul.mubr.bf16.gmra.mrb[0].mxu0 %v4013
      %v4574 = vpop.f32.mrb[0].mxu0
      %v4575 = vadd.f32 %v4042, %v4574
      %v4576 = vpop.f32.mrb[0].mxu0
      %v4577 = vpop.f32.mrb[0].mxu0
      %v4578 = vadd.f32 %v4042, %v4577
      %v4579 = vpop.f32.mrb[0].mxu0
      %4580 = vmatprep.mubr.bf16.mxu0 0
      %4581 = vmatmul.mubr.bf16.gmra.mrb[0].mxu0 %v4014
      %v4582 = vpop.f32.mrb[0].mxu0
      %v4583 = vadd.f32 %v4042, %v4582
      %v4584 = vpop.f32.mrb[0].mxu0
      %v4585 = vpop.f32.mrb[0].mxu0
      %v4586 = vadd.f32 %v4042, %v4585
      %v4587 = vpop.f32.mrb[0].mxu0
      %4588 = vmatprep.mubr.bf16.mxu0 0
      %4589 = vmatmul.mubr.bf16.gmra.mrb[0].mxu0 %v4015
      %v4590 = vpop.f32.mrb[0].mxu0
      %v4591 = vadd.f32 %v4042, %v4590
      %v4592 = vpop.f32.mrb[0].mxu0
      %v4593 = vpop.f32.mrb[0].mxu0
      %v4594 = vadd.f32 %v4042, %v4593
      %v4595 = vpop.f32.mrb[0].mxu0
      %4596 = vmatprep.mubr.bf16.mxu0 0
      %4597 = vmatmul.mubr.bf16.gmra.mrb[0].mxu0 %v4016
      %v4598 = vpop.f32.mrb[0].mxu0
      %v4599 = vadd.f32 %v4042, %v4598
      %v4600 = vpop.f32.mrb[0].mxu0
      %v4601 = vpop.f32.mrb[0].mxu0
      %v4602 = vadd.f32 %v4042, %v4601
      %v4603 = vpop.f32.mrb[0].mxu0
      %4604 = vmatprep.mubr.bf16.mxu0 0
      %4605 = vmatmul.mubr.bf16.gmra.mrb[0].mxu0 %v4017
      %v4606 = vpop.f32.mrb[0].mxu0
      %v4607 = vadd.f32 %v4042, %v4606
      %v4608 = vpop.f32.mrb[0].mxu0
      %v4609 = vpop.f32.mrb[0].mxu0
      %v4610 = vadd.f32 %v4042, %v4609
      %v4611 = vpop.f32.mrb[0].mxu0
      %4612 = vmatprep.mubr.bf16.mxu0 0
      %4613 = vmatmul.mubr.bf16.gmra.mrb[0].mxu0 %v4018
      %v4614 = vpop.f32.mrb[0].mxu0
      %v4615 = vadd.f32 %v4042, %v4614
      %v4616 = vpop.f32.mrb[0].mxu0
      %v4617 = vpop.f32.mrb[0].mxu0
      %v4618 = vadd.f32 %v4042, %v4617
      %v4619 = vpop.f32.mrb[0].mxu0
      %4620 = vmatprep.mubr.bf16.mxu0 0
      %4621 = vmatmul.mubr.bf16.gmra.mrb[0].mxu0 %v4019
      %v4622 = vpop.f32.mrb[0].mxu0
      %v4623 = vadd.f32 %v4042, %v4622
      %v4624 = vpop.f32.mrb[0].mxu0
      %v4625 = vpop.f32.mrb[0].mxu0
      %v4626 = vadd.f32 %v4042, %v4625
      %v4627 = vpop.f32.mrb[0].mxu0
      %4628 = vmatprep.mubr.bf16.mxu0 0
      %4629 = vmatmul.mubr.bf16.gmra.mrb[0].mxu0 %v4020
      %v4630 = vpop.f32.mrb[0].mxu0
      %v4631 = vadd.f32 %v4042, %v4630
      %v4632 = vpop.f32.mrb[0].mxu0
      %v4633 = vpop.f32.mrb[0].mxu0
      %v4634 = vadd.f32 %v4042, %v4633
      %v4635 = vpop.f32.mrb[0].mxu0
      %4636 = vdwg.mxu0
      %v4637 = vmax.f32 %v4127, 0.0
      %v4638 = vmax.f32 %v4130, 0.0
      %v4639 = vmax.f32 %v4135, 0.0
      %v4640 = vmax.f32 %v4138, 0.0
      %v4641 = vmax.f32 %v4143, 0.0
      %v4642 = vmax.f32 %v4146, 0.0
      %v4643 = vmax.f32 %v4151, 0.0
      %v4644 = vmax.f32 %v4154, 0.0
      %v4645 = vmax.f32 %v4159, 0.0
      %v4646 = vmax.f32 %v4162, 0.0
      %v4647 = vmax.f32 %v4167, 0.0
      %v4648 = vmax.f32 %v4170, 0.0
      %v4649 = vmax.f32 %v4175, 0.0
      %v4650 = vmax.f32 %v4178, 0.0
      %v4651 = vmax.f32 %v4183, 0.0
      %v4652 = vmax.f32 %v4186, 0.0
      %v4653 = vmax.f32 %v4191, 0.0
      %v4654 = vmax.f32 %v4194, 0.0
      %v4655 = vmax.f32 %v4199, 0.0
      %v4656 = vmax.f32 %v4202, 0.0
      %v4657 = vmax.f32 %v4207, 0.0
      %v4658 = vmax.f32 %v4210, 0.0
      %v4659 = vmax.f32 %v4215, 0.0
      %v4660 = vmax.f32 %v4218, 0.0
      %v4661 = vmax.f32 %v4223, 0.0
      %v4662 = vmax.f32 %v4226, 0.0
      %v4663 = vmax.f32 %v4231, 0.0
      %v4664 = vmax.f32 %v4234, 0.0
      %v4665 = vmax.f32 %v4239, 0.0
      %v4666 = vmax.f32 %v4242, 0.0
      %v4667 = vmax.f32 %v4247, 0.0
      %v4668 = vmax.f32 %v4250, 0.0
      %v4669 = vmax.f32 %v4255, 0.0
      %v4670 = vmax.f32 %v4258, 0.0
      %v4671 = vmax.f32 %v4263, 0.0
      %v4672 = vmax.f32 %v4266, 0.0
      %v4673 = vmax.f32 %v4271, 0.0
      %v4674 = vmax.f32 %v4274, 0.0
      %v4675 = vmax.f32 %v4279, 0.0
      %v4676 = vmax.f32 %v4282, 0.0
      %v4677 = vmax.f32 %v4287, 0.0
      %v4678 = vmax.f32 %v4290, 0.0
      %v4679 = vmax.f32 %v4295, 0.0
      %v4680 = vmax.f32 %v4298, 0.0
      %v4681 = vmax.f32 %v4303, 0.0
      %v4682 = vmax.f32 %v4306, 0.0
      %v4683 = vmax.f32 %v4311, 0.0
      %v4684 = vmax.f32 %v4314, 0.0
      %v4685 = vmax.f32 %v4319, 0.0
      %v4686 = vmax.f32 %v4322, 0.0
      %v4687 = vmax.f32 %v4327, 0.0
      %v4688 = vmax.f32 %v4330, 0.0
      %v4689 = vmax.f32 %v4335, 0.0
      %v4690 = vmax.f32 %v4338, 0.0
      %v4691 = vmax.f32 %v4343, 0.0
      %v4692 = vmax.f32 %v4346, 0.0
      %v4693 = vmax.f32 %v4351, 0.0
      %v4694 = vmax.f32 %v4354, 0.0
      %v4695 = vmax.f32 %v4359, 0.0
      %v4696 = vmax.f32 %v4362, 0.0
      %v4697 = vmax.f32 %v4367, 0.0
      %v4698 = vmax.f32 %v4370, 0.0
      %v4699 = vmax.f32 %v4375, 0.0
      %v4700 = vmax.f32 %v4378, 0.0
      %v4701 = vmax.f32 %v4383, 0.0
      %v4702 = vmax.f32 %v4386, 0.0
      %v4703 = vmax.f32 %v4391, 0.0
      %v4704 = vmax.f32 %v4394, 0.0
      %v4705 = vmax.f32 %v4399, 0.0
      %v4706 = vmax.f32 %v4402, 0.0
      %v4707 = vmax.f32 %v4407, 0.0
      %v4708 = vmax.f32 %v4410, 0.0
      %v4709 = vmax.f32 %v4415, 0.0
      %v4710 = vmax.f32 %v4418, 0.0
      %v4711 = vmax.f32 %v4423, 0.0
      %v4712 = vmax.f32 %v4426, 0.0
      %v4713 = vmax.f32 %v4431, 0.0
      %v4714 = vmax.f32 %v4434, 0.0
      %v4715 = vmax.f32 %v4439, 0.0
      %v4716 = vmax.f32 %v4442, 0.0
      %v4717 = vmax.f32 %v4447, 0.0
      %v4718 = vmax.f32 %v4450, 0.0
      %v4719 = vmax.f32 %v4455, 0.0
      %v4720 = vmax.f32 %v4458, 0.0
      %v4721 = vmax.f32 %v4463, 0.0
      %v4722 = vmax.f32 %v4466, 0.0
      %v4723 = vmax.f32 %v4471, 0.0
      %v4724 = vmax.f32 %v4474, 0.0
      %v4725 = vmax.f32 %v4479, 0.0
      %v4726 = vmax.f32 %v4482, 0.0
      %v4727 = vmax.f32 %v4487, 0.0
      %v4728 = vmax.f32 %v4490, 0.0
      %v4729 = vmax.f32 %v4495, 0.0
      %v4730 = vmax.f32 %v4498, 0.0
      %v4731 = vmax.f32 %v4503, 0.0
      %v4732 = vmax.f32 %v4506, 0.0
      %v4733 = vmax.f32 %v4511, 0.0
      %v4734 = vmax.f32 %v4514, 0.0
      %v4735 = vmax.f32 %v4519, 0.0
      %v4736 = vmax.f32 %v4522, 0.0
      %v4737 = vmax.f32 %v4527, 0.0
      %v4738 = vmax.f32 %v4530, 0.0
      %v4739 = vmax.f32 %v4535, 0.0
      %v4740 = vmax.f32 %v4538, 0.0
      %v4741 = vmax.f32 %v4543, 0.0
      %v4742 = vmax.f32 %v4546, 0.0
      %v4743 = vmax.f32 %v4551, 0.0
      %v4744 = vmax.f32 %v4554, 0.0
      %v4745 = vmax.f32 %v4559, 0.0
      %v4746 = vmax.f32 %v4562, 0.0
      %v4747 = vmax.f32 %v4567, 0.0
      %v4748 = vmax.f32 %v4570, 0.0
      %v4749 = vmax.f32 %v4575, 0.0
      %v4750 = vmax.f32 %v4578, 0.0
      %v4751 = vmax.f32 %v4583, 0.0
      %v4752 = vmax.f32 %v4586, 0.0
      %v4753 = vmax.f32 %v4591, 0.0
      %v4754 = vmax.f32 %v4594, 0.0
      %v4755 = vmax.f32 %v4599, 0.0
      %v4756 = vmax.f32 %v4602, 0.0
      %v4757 = vmax.f32 %v4607, 0.0
      %v4758 = vmax.f32 %v4610, 0.0
      %v4759 = vmax.f32 %v4615, 0.0
      %v4760 = vmax.f32 %v4618, 0.0
      %v4761 = vmax.f32 %v4623, 0.0
      %v4762 = vmax.f32 %v4626, 0.0
      %v4763 = vmax.f32 %v4631, 0.0
      %v4764 = vmax.f32 %v4634, 0.0
      %v4765 = vmax.f32 %v4637, %v4641
      %v4766 = vmax.f32 %v4638, %v4642
      %v4767 = vmax.f32 %v4639, %v4643
      %v4768 = vmax.f32 %v4640, %v4644
      %v4769 = vmax.f32 %v4765, %v4645
      %v4770 = vmax.f32 %v4766, %v4646
      %v4771 = vmax.f32 %v4767, %v4647
      %v4772 = vmax.f32 %v4768, %v4648
      %v4773 = vmax.f32 %v4769, %v4649
      %v4774 = vmax.f32 %v4770, %v4650
      %v4775 = vmax.f32 %v4771, %v4651
      %v4776 = vmax.f32 %v4772, %v4652
      %v4777 = vmax.f32 %v4773, %v4774
      %v4778 = vmax.f32 %v4775, %v4776
      %v4779 = vmax.f32 %v4777, %v4778
      %v4780 = vrot.slane %v4779, 4
      %v4781 = vmax.f32 %v4779, %v4780
      %v4782 = vrot.slane %v4781, 2
      %v4783 = vmax.f32 %v4781, %v4782
      %v4784 = vrot.slane %v4783, 1
      %v4785 = vmax.f32 %v4783, %v4784
      %4786 = vst [vmem:[%s278] sm:$0x1] %v4785
      %v4787 = vmax.f32 %v4653, %v4657
      %v4788 = vmax.f32 %v4654, %v4658
      %v4789 = vmax.f32 %v4655, %v4659
      %v4790 = vmax.f32 %v4656, %v4660
      %v4791 = vmax.f32 %v4787, %v4661
      %v4792 = vmax.f32 %v4788, %v4662
      %v4793 = vmax.f32 %v4789, %v4663
      %v4794 = vmax.f32 %v4790, %v4664
      %v4795 = vmax.f32 %v4791, %v4665
      %v4796 = vmax.f32 %v4792, %v4666
      %v4797 = vmax.f32 %v4793, %v4667
      %v4798 = vmax.f32 %v4794, %v4668
      %v4799 = vmax.f32 %v4795, %v4796
      %v4800 = vmax.f32 %v4797, %v4798
      %v4801 = vmax.f32 %v4799, %v4800
      %v4802 = vrot.slane %v4801, 4
      %v4803 = vmax.f32 %v4801, %v4802
      %v4804 = vrot.slane %v4803, 2
      %v4805 = vmax.f32 %v4803, %v4804
      %v4806 = vrot.slane %v4805, 1
      %v4807 = vmax.f32 %v4805, %v4806
      %4808 = vst [vmem:[%s278 + $0x1] sm:$0x1] %v4807
      %v4809 = vmax.f32 %v4669, %v4673
      %v4810 = vmax.f32 %v4670, %v4674
      %v4811 = vmax.f32 %v4671, %v4675
      %v4812 = vmax.f32 %v4672, %v4676
      %v4813 = vmax.f32 %v4809, %v4677
      %v4814 = vmax.f32 %v4810, %v4678
      %v4815 = vmax.f32 %v4811, %v4679
      %v4816 = vmax.f32 %v4812, %v4680
      %v4817 = vmax.f32 %v4813, %v4681
      %v4818 = vmax.f32 %v4814, %v4682
      %v4819 = vmax.f32 %v4815, %v4683
      %v4820 = vmax.f32 %v4816, %v4684
      %v4821 = vmax.f32 %v4817, %v4818
      %v4822 = vmax.f32 %v4819, %v4820
      %v4823 = vmax.f32 %v4821, %v4822
      %v4824 = vrot.slane %v4823, 4
      %v4825 = vmax.f32 %v4823, %v4824
      %v4826 = vrot.slane %v4825, 2
      %v4827 = vmax.f32 %v4825, %v4826
      %v4828 = vrot.slane %v4827, 1
      %v4829 = vmax.f32 %v4827, %v4828
      %4830 = vst [vmem:[%s278 + $0x2] sm:$0x1] %v4829
      %v4831 = vmax.f32 %v4685, %v4689
      %v4832 = vmax.f32 %v4686, %v4690
      %v4833 = vmax.f32 %v4687, %v4691
      %v4834 = vmax.f32 %v4688, %v4692
      %v4835 = vmax.f32 %v4831, %v4693
      %v4836 = vmax.f32 %v4832, %v4694
      %v4837 = vmax.f32 %v4833, %v4695
      %v4838 = vmax.f32 %v4834, %v4696
      %v4839 = vmax.f32 %v4835, %v4697
      %v4840 = vmax.f32 %v4836, %v4698
      %v4841 = vmax.f32 %v4837, %v4699
      %v4842 = vmax.f32 %v4838, %v4700
      %v4843 = vmax.f32 %v4839, %v4840
      %v4844 = vmax.f32 %v4841, %v4842
      %v4845 = vmax.f32 %v4843, %v4844
      %v4846 = vrot.slane %v4845, 4
      %v4847 = vmax.f32 %v4845, %v4846
      %v4848 = vrot.slane %v4847, 2
      %v4849 = vmax.f32 %v4847, %v4848
      %v4850 = vrot.slane %v4849, 1
      %v4851 = vmax.f32 %v4849, %v4850
      %4852 = vst [vmem:[%s278 + $0x3] sm:$0x1] %v4851
      %v4853 = vmax.f32 %v4701, %v4705
      %v4854 = vmax.f32 %v4702, %v4706
      %v4855 = vmax.f32 %v4703, %v4707
      %v4856 = vmax.f32 %v4704, %v4708
      %v4857 = vmax.f32 %v4853, %v4709
      %v4858 = vmax.f32 %v4854, %v4710
      %v4859 = vmax.f32 %v4855, %v4711
      %v4860 = vmax.f32 %v4856, %v4712
      %v4861 = vmax.f32 %v4857, %v4713
      %v4862 = vmax.f32 %v4858, %v4714
      %v4863 = vmax.f32 %v4859, %v4715
      %v4864 = vmax.f32 %v4860, %v4716
      %v4865 = vmax.f32 %v4861, %v4862
      %v4866 = vmax.f32 %v4863, %v4864
      %v4867 = vmax.f32 %v4865, %v4866
      %v4868 = vrot.slane %v4867, 4
      %v4869 = vmax.f32 %v4867, %v4868
      %v4870 = vrot.slane %v4869, 2
      %v4871 = vmax.f32 %v4869, %v4870
      %v4872 = vrot.slane %v4871, 1
      %v4873 = vmax.f32 %v4871, %v4872
      %4874 = vst [vmem:[%s278 + $0x4] sm:$0x1] %v4873
      %v4875 = vmax.f32 %v4717, %v4721
      %v4876 = vmax.f32 %v4718, %v4722
      %v4877 = vmax.f32 %v4719, %v4723
      %v4878 = vmax.f32 %v4720, %v4724
      %v4879 = vmax.f32 %v4875, %v4725
      %v4880 = vmax.f32 %v4876, %v4726
      %v4881 = vmax.f32 %v4877, %v4727
      %v4882 = vmax.f32 %v4878, %v4728
      %v4883 = vmax.f32 %v4879, %v4729
      %v4884 = vmax.f32 %v4880, %v4730
      %v4885 = vmax.f32 %v4881, %v4731
      %v4886 = vmax.f32 %v4882, %v4732
      %v4887 = vmax.f32 %v4883, %v4884
      %v4888 = vmax.f32 %v4885, %v4886
      %v4889 = vmax.f32 %v4887, %v4888
      %v4890 = vrot.slane %v4889, 4
      %v4891 = vmax.f32 %v4889, %v4890
      %v4892 = vrot.slane %v4891, 2
      %v4893 = vmax.f32 %v4891, %v4892
      %v4894 = vrot.slane %v4893, 1
      %v4895 = vmax.f32 %v4893, %v4894
      %4896 = vst [vmem:[%s278 + $0x5] sm:$0x1] %v4895
      %v4897 = vmax.f32 %v4733, %v4737
      %v4898 = vmax.f32 %v4734, %v4738
      %v4899 = vmax.f32 %v4735, %v4739
      %v4900 = vmax.f32 %v4736, %v4740
      %v4901 = vmax.f32 %v4897, %v4741
      %v4902 = vmax.f32 %v4898, %v4742
      %v4903 = vmax.f32 %v4899, %v4743
      %v4904 = vmax.f32 %v4900, %v4744
      %v4905 = vmax.f32 %v4901, %v4745
      %v4906 = vmax.f32 %v4902, %v4746
      %v4907 = vmax.f32 %v4903, %v4747
      %v4908 = vmax.f32 %v4904, %v4748
      %v4909 = vmax.f32 %v4905, %v4906
      %v4910 = vmax.f32 %v4907, %v4908
      %v4911 = vmax.f32 %v4909, %v4910
      %v4912 = vrot.slane %v4911, 4
      %v4913 = vmax.f32 %v4911, %v4912
      %v4914 = vrot.slane %v4913, 2
      %v4915 = vmax.f32 %v4913, %v4914
      %v4916 = vrot.slane %v4915, 1
      %v4917 = vmax.f32 %v4915, %v4916
      %4918 = vst [vmem:[%s278 + $0x6] sm:$0x1] %v4917
      %v4919 = vmax.f32 %v4749, %v4753
      %v4920 = vmax.f32 %v4750, %v4754
      %v4921 = vmax.f32 %v4751, %v4755
      %v4922 = vmax.f32 %v4752, %v4756
      %v4923 = vmax.f32 %v4919, %v4757
      %v4924 = vmax.f32 %v4920, %v4758
      %v4925 = vmax.f32 %v4921, %v4759
      %v4926 = vmax.f32 %v4922, %v4760
      %v4927 = vmax.f32 %v4923, %v4761
      %v4928 = vmax.f32 %v4924, %v4762
      %v4929 = vmax.f32 %v4925, %v4763
      %v4930 = vmax.f32 %v4926, %v4764
      %v4931 = vmax.f32 %v4927, %v4928
      %v4932 = vmax.f32 %v4929, %v4930
      %v4933 = vmax.f32 %v4931, %v4932
      %v4934 = vrot.slane %v4933, 4
      %v4935 = vmax.f32 %v4933, %v4934
      %v4936 = vrot.slane %v4935, 2
      %v4937 = vmax.f32 %v4935, %v4936
      %v4938 = vrot.slane %v4937, 1
      %v4939 = vmax.f32 %v4937, %v4938
      %4940 = vst [vmem:[%s278 + $0x7] sm:$0x1] %v4939
      %p4941 = scmp.lt.s32.totalorder %s18, 1
      %s4942 = scalar_select %p4941, %s18, 1
      %s4943 = smul.addr %s4942, 8
      %s4944 = scalar_lea.vmem %s7, %s4943
      // Predicated region
      $region49: #{gnn_mot_forward.2} parent=47 // pred_check
        %p4945 = pneg %p188
      $region50: #{gnn_mot_forward.2} parent=47 // pred_check_branch
        %4947 = sbr.rel (%p4945) target = $region52
      $region51: #{gnn_mot_forward.2} parent=47 // pred_region
        _
      $region52: #{gnn_mot_forward.2} parent=47 // pred_fallthru
        _
    $region48: #{gnn_mot_forward.2} parent=5 // pred_fallthru
      _
    %p4948 = scmp.le.s32.totalorder 2, %s13
    // Predicated region
    $region53: #{gnn_mot_forward.2} parent=5 // pred_check
      %p4949 = pneg %p4948
    $region54: #{gnn_mot_forward.2} parent=5 // pred_check_branch
      %4951 = sbr.rel (%p4949) target = $region56
    $region55: #{gnn_mot_forward.2} parent=5 // pred_region
      %s4952 = ssub.s32 %s13, 2
      // Predicated region
      $region57: #{gnn_mot_forward.2} parent=55 // pred_check
        %p4953 = pneg %p194
      $region58: #{gnn_mot_forward.2} parent=55 // pred_check_branch
        %4955 = sbr.rel (%p4953) target = $region60
      $region59: #{gnn_mot_forward.2} parent=55 // pred_region
        %p4956 = scmp.lt.s32.totalorder %s19, 1
        %s4957 = scalar_select %p4956, %s19, 1
        %s4958 = smul.addr %s4957, 8
        %s4959 = scalar_lea.vmem %s7, %s4958
      $region60: #{gnn_mot_forward.2} parent=55 // pred_fallthru
        _
    $region56: #{gnn_mot_forward.2} parent=5 // pred_fallthru
      _
  $region6: #{gnn_mot_forward.2} parent=0 // loop_footer
    %s17 = sadd.s32 1, %s13
  $region7: #{gnn_mot_forward.2} parent=0 // loop_footer_branch
    %12 = sbr.rel target = $region3
  $region8: #{gnn_mot_forward.2} parent=0 // loop_exit
    _

// kernel: gnn_mot_forward.3
$region0: #{gnn_mot_forward.3}
  #allocation0 [shape = 'u32[]', space=smem, size = 0x4, offset = 0x4, fixed_abs, tag = 'smem constant byte address 0x4 - core index']
  #allocation1 [shape = 'u32[144,128]{1,0:T(1,128)}', space=vmem, size = 0x12000, scoped, tag = 'internal scratch']
  #allocation2 [shape = 'f32[1,1]{1,0:T(1,128)S(1)}', space=vmem, size = 0x200, scoped, tag = 'scoped memory for gnn_mot_forward.3']
  %s0 = inlined_call_operand.vmem [shape: f32[8,9], index: 0, kind: input, shape index: {}]
  %s1 = inlined_call_operand.vmem [shape: f32[64,9], index: 1, kind: input, shape index: {}]
  %s2 = inlined_call_operand.vmem [shape: f32[16,128], index: 2, kind: input, shape index: {}]
  %s3 = inlined_call_operand.vmem [shape: f32[8,8], index: 3, kind: input, shape index: {}]
  %s4 = inlined_call_operand.vmem [shape: f32[64,1], index: 4, kind: input, shape index: {}]
  %s5 = inlined_call_operand.vmem [shape: bf16[9,64], index: 5, kind: input, shape index: {}]
  %s6 = inlined_call_operand.vmem [shape: f32[1,64], index: 6, kind: input, shape index: {}]
  %s7 = inlined_call_operand.vmem [shape: bf16[64,128], index: 7, kind: input, shape index: {}]
  %s8 = inlined_call_operand.vmem [shape: f32[1,128], index: 8, kind: input, shape index: {}]
  %s9 = inlined_call_operand.vmem [shape: bf16[9,512], index: 9, kind: input, shape index: {}]
  %s10 = inlined_call_operand.vmem [shape: bf16[128,512], index: 10, kind: input, shape index: {}]
  %s11 = inlined_call_operand.vmem [shape: f32[1,512], index: 11, kind: input, shape index: {}]
  %s12 = inlined_call_operand.vmem [shape: bf16[128,512], index: 12, kind: input, shape index: {}]
  %s13 = inlined_call_operand.vmem [shape: bf16[128,512], index: 13, kind: input, shape index: {}]
  %s14 = inlined_call_operand.vmem [shape: f32[1,512], index: 14, kind: input, shape index: {}]
  %s15 = inlined_call_operand.vmem [shape: bf16[256,256], index: 15, kind: input, shape index: {}]
  %s16 = inlined_call_operand.vmem [shape: f32[1,256], index: 16, kind: input, shape index: {}]
  %s17 = inlined_call_operand.vmem [shape: bf16[256,64], index: 17, kind: input, shape index: {}]
  %s18 = inlined_call_operand.vmem [shape: f32[1,64], index: 18, kind: input, shape index: {}]
  %s19 = inlined_call_operand.vmem [shape: f32[1,64], index: 19, kind: input, shape index: {}]
  %s20 = inlined_call_operand.<no memory space> [shape: f32[1,1], index: 20, kind: input, shape index: {}]
  %s21 = inlined_call_operand.vmem [shape: f32[64,1], index: 21, kind: output, shape index: {}]
  %s22 = sld [smem:[#allocation0]]
  $region94: #{gnn_mot_forward.3} parent=0
    _
  %s24 = ssub.s32 1, %s22
  %s25 = scalar_select 0, %s24, %s22
  %v26 = vstv %s20
  %27 = vst [vmem:[#allocation2] sm:$0x1] %v26
  // Predicated region
  $region2: #{gnn_mot_forward.3} parent=0 // pred_check
    _
  $region3: #{gnn_mot_forward.3} parent=0 // pred_check_branch
    %29 = sbr.rel (0) target = $region5
  $region4: #{gnn_mot_forward.3} parent=0 // pred_region
    _
  $region5: #{gnn_mot_forward.3} parent=0 // pred_fallthru
    _
  // Predicated region
  $region6: #{gnn_mot_forward.3} parent=0 // pred_check
    _
  $region7: #{gnn_mot_forward.3} parent=0 // pred_check_branch
    %31 = sbr.rel (0) target = $region9
  $region8: #{gnn_mot_forward.3} parent=0 // pred_region
    _
  $region9: #{gnn_mot_forward.3} parent=0 // pred_fallthru
    _
  // Predicated region
  $region10: #{gnn_mot_forward.3} parent=0 // pred_check
    _
  $region11: #{gnn_mot_forward.3} parent=0 // pred_check_branch
    %33 = sbr.rel (0) target = $region13
  $region12: #{gnn_mot_forward.3} parent=0 // pred_region
    _
  $region13: #{gnn_mot_forward.3} parent=0 // pred_fallthru
    _
  // Predicated region
  $region14: #{gnn_mot_forward.3} parent=0 // pred_check
    _
  $region15: #{gnn_mot_forward.3} parent=0 // pred_check_branch
    %35 = sbr.rel (0) target = $region17
  $region16: #{gnn_mot_forward.3} parent=0 // pred_region
    _
  $region17: #{gnn_mot_forward.3} parent=0 // pred_fallthru
    _
  // Predicated region
  $region18: #{gnn_mot_forward.3} parent=0 // pred_check
    _
  $region19: #{gnn_mot_forward.3} parent=0 // pred_check_branch
    %37 = sbr.rel (0) target = $region21
  $region20: #{gnn_mot_forward.3} parent=0 // pred_region
    _
  $region21: #{gnn_mot_forward.3} parent=0 // pred_fallthru
    _
  // Predicated region
  $region22: #{gnn_mot_forward.3} parent=0 // pred_check
    _
  $region23: #{gnn_mot_forward.3} parent=0 // pred_check_branch
    %39 = sbr.rel (0) target = $region25
  $region24: #{gnn_mot_forward.3} parent=0 // pred_region
    _
  $region25: #{gnn_mot_forward.3} parent=0 // pred_fallthru
    _
  // Predicated region
  $region26: #{gnn_mot_forward.3} parent=0 // pred_check
    _
  $region27: #{gnn_mot_forward.3} parent=0 // pred_check_branch
    %41 = sbr.rel (0) target = $region29
  $region28: #{gnn_mot_forward.3} parent=0 // pred_region
    _
  $region29: #{gnn_mot_forward.3} parent=0 // pred_fallthru
    _
  // Predicated region
  $region30: #{gnn_mot_forward.3} parent=0 // pred_check
    _
  $region31: #{gnn_mot_forward.3} parent=0 // pred_check_branch
    %43 = sbr.rel (0) target = $region33
  $region32: #{gnn_mot_forward.3} parent=0 // pred_region
    _
  $region33: #{gnn_mot_forward.3} parent=0 // pred_fallthru
    _
  // Predicated region
  $region34: #{gnn_mot_forward.3} parent=0 // pred_check
    _
  $region35: #{gnn_mot_forward.3} parent=0 // pred_check_branch
    %45 = sbr.rel (0) target = $region37
  $region36: #{gnn_mot_forward.3} parent=0 // pred_region
    _
  $region37: #{gnn_mot_forward.3} parent=0 // pred_fallthru
    _
  // Predicated region
  $region38: #{gnn_mot_forward.3} parent=0 // pred_check
    _
  $region39: #{gnn_mot_forward.3} parent=0 // pred_check_branch
    %47 = sbr.rel (0) target = $region41
  $region40: #{gnn_mot_forward.3} parent=0 // pred_region
    _
  $region41: #{gnn_mot_forward.3} parent=0 // pred_fallthru
    _
  // Predicated region
  $region42: #{gnn_mot_forward.3} parent=0 // pred_check
    _
  $region43: #{gnn_mot_forward.3} parent=0 // pred_check_branch
    %49 = sbr.rel (0) target = $region45
  $region44: #{gnn_mot_forward.3} parent=0 // pred_region
    _
  $region45: #{gnn_mot_forward.3} parent=0 // pred_fallthru
    _
  // Predicated region
  $region46: #{gnn_mot_forward.3} parent=0 // pred_check
    _
  $region47: #{gnn_mot_forward.3} parent=0 // pred_check_branch
    %51 = sbr.rel (0) target = $region49
  $region48: #{gnn_mot_forward.3} parent=0 // pred_region
    _
  $region49: #{gnn_mot_forward.3} parent=0 // pred_fallthru
    _
  // Predicated region
  $region50: #{gnn_mot_forward.3} parent=0 // pred_check
    _
  $region51: #{gnn_mot_forward.3} parent=0 // pred_check_branch
    %53 = sbr.rel (0) target = $region53
  $region52: #{gnn_mot_forward.3} parent=0 // pred_region
    _
  $region53: #{gnn_mot_forward.3} parent=0 // pred_fallthru
    _
  // Predicated region
  $region54: #{gnn_mot_forward.3} parent=0 // pred_check
    _
  $region55: #{gnn_mot_forward.3} parent=0 // pred_check_branch
    %55 = sbr.rel (0) target = $region57
  $region56: #{gnn_mot_forward.3} parent=0 // pred_region
    _
  $region57: #{gnn_mot_forward.3} parent=0 // pred_fallthru
    _
  // Predicated region
  $region58: #{gnn_mot_forward.3} parent=0 // pred_check
    _
  $region59: #{gnn_mot_forward.3} parent=0 // pred_check_branch
    %57 = sbr.rel (0) target = $region61
  $region60: #{gnn_mot_forward.3} parent=0 // pred_region
    _
  $region61: #{gnn_mot_forward.3} parent=0 // pred_fallthru
    _
  // Predicated region
  $region62: #{gnn_mot_forward.3} parent=0 // pred_check
    _
  $region63: #{gnn_mot_forward.3} parent=0 // pred_check_branch
    %59 = sbr.rel (0) target = $region65
  $region64: #{gnn_mot_forward.3} parent=0 // pred_region
    _
  $region65: #{gnn_mot_forward.3} parent=0 // pred_fallthru
    _
  // Predicated region
  $region66: #{gnn_mot_forward.3} parent=0 // pred_check
    _
  $region67: #{gnn_mot_forward.3} parent=0 // pred_check_branch
    %61 = sbr.rel (0) target = $region69
  $region68: #{gnn_mot_forward.3} parent=0 // pred_region
    _
  $region69: #{gnn_mot_forward.3} parent=0 // pred_fallthru
    _
  // Predicated region
  $region70: #{gnn_mot_forward.3} parent=0 // pred_check
    _
  $region71: #{gnn_mot_forward.3} parent=0 // pred_check_branch
    %63 = sbr.rel (0) target = $region73
  $region72: #{gnn_mot_forward.3} parent=0 // pred_region
    _
  $region73: #{gnn_mot_forward.3} parent=0 // pred_fallthru
    _
  // Predicated region
  $region74: #{gnn_mot_forward.3} parent=0 // pred_check
    _
  $region75: #{gnn_mot_forward.3} parent=0 // pred_check_branch
    %65 = sbr.rel (0) target = $region77
  $region76: #{gnn_mot_forward.3} parent=0 // pred_region
    _
  $region77: #{gnn_mot_forward.3} parent=0 // pred_fallthru
    _
  // Predicated region
  $region78: #{gnn_mot_forward.3} parent=0 // pred_check
    _
  $region79: #{gnn_mot_forward.3} parent=0 // pred_check_branch
    %67 = sbr.rel (0) target = $region81
  $region80: #{gnn_mot_forward.3} parent=0 // pred_region
    _
  $region81: #{gnn_mot_forward.3} parent=0 // pred_fallthru
    _
  // Predicated region
  $region82: #{gnn_mot_forward.3} parent=0 // pred_check
    _
  $region83: #{gnn_mot_forward.3} parent=0 // pred_check_branch
    %69 = sbr.rel (0) target = $region85
  $region84: #{gnn_mot_forward.3} parent=0 // pred_region
    _
  $region85: #{gnn_mot_forward.3} parent=0 // pred_fallthru
    _
  %v71 = vld [vmem:[%s0] sm:$0xff]
  %v72 = vpack.c.bf16 %v71, %v71
  %v73 = vld [vmem:[%s5] sm:$0xf]
  %v74 = vld [vmem:[%s5 + $0x4] sm:$0x1]
  %v75 = vld [vmem:[%s6] sm:$0x1]
  %v77 = vlaneseq
  %v78 = vshrl.u32 %v77, 7
  %v79 = vsub.s32 0, %v78
  %v80 = vrot.slane %v75, %v79
  %v84 = vunpack.c.l.b16 %v73
  %v85 = vunpack.c.l.b16 %v74
  %v86 = vpack.c.b16 %v85, %v84
  %vm87 = vcmask 72704
  %v89 = vsel %vm87, %v72, 0
  %vm91 = vcmask 1043456
  %vm92 = vcmask 1044480
  %v93 = vsel %vm91, 4294967295, 65535
  %v94 = vsel %vm92, %v93, 0
  %v96 = vand.u32 %v86, %v94
  %98 = vmatprep.subr.bf16.mxu0 0
  %99 = vmatpush1.bf16.msra.mxu0 %v96
  %100 = vmatprep.subr.bf16.mxu0 0
  %101 = vmatpush1.bf16.msra.mxu0 0
  %102 = vmatprep.subr.bf16.mxu0 0
  %103 = vmatpush1.bf16.msra.mxu0 0
  %104 = vmatprep.subr.bf16.mxu0 0
  %105 = vmatpush1.bf16.msra.mxu0 0
  %106 = vmatprep.subr.bf16.mxu0 0
  %107 = vmatpush1.bf16.msra.mxu0 0
  %108 = vmatprep.subr.bf16.mxu0 0
  %109 = vmatpush1.bf16.msra.mxu0 0
  %110 = vmatprep.subr.bf16.mxu0 0
  %111 = vmatpush1.bf16.msra.mxu0 0
  %112 = vmatprep.subr.bf16.mxu0 0
  %113 = vmatpush1.bf16.msra.mxu0 0
  %114 = vmatprep.subr.bf16.mxu0 0
  %115 = vmatpush1.bf16.msra.mxu0 0
  %116 = vmatprep.subr.bf16.mxu0 0
  %117 = vmatpush1.bf16.msra.mxu0 0
  %118 = vmatprep.subr.bf16.mxu0 0
  %119 = vmatpush1.bf16.msra.mxu0 0
  %120 = vmatprep.subr.bf16.mxu0 0
  %121 = vmatpush1.bf16.msra.mxu0 0
  %122 = vmatprep.subr.bf16.mxu0 0
  %123 = vmatpush1.bf16.msra.mxu0 0
  %124 = vmatprep.subr.bf16.mxu0 0
  %125 = vmatpush1.bf16.msra.mxu0 0
  %126 = vmatprep.subr.bf16.mxu0 0
  %127 = vmatpush1.bf16.msra.mxu0 0
  %128 = vmatprep.subr.bf16.mxu0 0
  %129 = vmatpush1.bf16.msra.mxu0 0
  %130 = vmatprep.mubr.bf16.mxu0 0
  %131 = vmatmul.mubr.bf16.gmra.mrb[0].mxu0 %v89
  %v132 = vpop.f32.mrb[0].mxu0
  %v133 = vadd.f32 %v80, %v132
  %v134 = vpop.f32.mrb[0].mxu0
  %v135 = vpop.f32.mrb[0].mxu0
  %v136 = vpop.f32.mrb[0].mxu0
  %137 = vdwg.mxu0
  %v138 = vmax.f32 %v133, 0.0
  %v139 = vpack.c.bf16 %v138, %v138
  %v140 = vld [vmem:[%s7] sm:$0xf]
  %v141 = vld [vmem:[%s7 + $0x4] sm:$0xf]
  %v142 = vld [vmem:[%s7 + $0x8] sm:$0xf]
  %v143 = vld [vmem:[%s7 + $0xc] sm:$0xf]
  %v144 = vld [vmem:[%s7 + $0x10] sm:$0xf]
  %v145 = vld [vmem:[%s7 + $0x14] sm:$0xf]
  %v146 = vld [vmem:[%s7 + $0x18] sm:$0xf]
  %v147 = vld [vmem:[%s7 + $0x1c] sm:$0xf]
  %v148 = vld [vmem:[%s8] sm:$0x1]
  %v150 = vlaneseq
  %v151 = vshrl.u32 %v150, 7
  %v152 = vsub.s32 0, %v151
  %v153 = vrot.slane %v148, %v152
  %v163 = vunpack.c.l.b16 %v140
  %v164 = vunpack.c.l.b16 %v141
  %v165 = vunpack.c.l.b16 %v142
  %v166 = vunpack.c.l.b16 %v143
  %v167 = vunpack.c.l.b16 %v144
  %v168 = vunpack.c.l.b16 %v145
  %v169 = vunpack.c.l.b16 %v146
  %v170 = vunpack.c.l.b16 %v147
  %v171 = vpack.c.b16 %v164, %v163
  %v172 = vpack.c.b16 %v166, %v165
  %v173 = vpack.c.b16 %v168, %v167
  %v174 = vpack.c.b16 %v170, %v169
  %vm179 = vcmask 523264
  %v181 = vsel %vm179, %v139, 0
  %183 = vmatprep.subr.bf16.mxu0 0
  %184 = vmatpush1.bf16.msra.mxu0 %v171
  %185 = vmatprep.subr.bf16.mxu0 0
  %186 = vmatpush1.bf16.msra.mxu0 %v172
  %187 = vmatprep.subr.bf16.mxu0 0
  %188 = vmatpush1.bf16.msra.mxu0 %v173
  %189 = vmatprep.subr.bf16.mxu0 0
  %190 = vmatpush1.bf16.msra.mxu0 %v174
  %191 = vmatprep.subr.bf16.mxu0 0
  %192 = vmatpush1.bf16.msra.mxu0 0
  %193 = vmatprep.subr.bf16.mxu0 0
  %194 = vmatpush1.bf16.msra.mxu0 0
  %195 = vmatprep.subr.bf16.mxu0 0
  %196 = vmatpush1.bf16.msra.mxu0 0
  %197 = vmatprep.subr.bf16.mxu0 0
  %198 = vmatpush1.bf16.msra.mxu0 0
  %199 = vmatprep.subr.bf16.mxu0 0
  %200 = vmatpush1.bf16.msra.mxu0 0
  %201 = vmatprep.subr.bf16.mxu0 0
  %202 = vmatpush1.bf16.msra.mxu0 0
  %203 = vmatprep.subr.bf16.mxu0 0
  %204 = vmatpush1.bf16.msra.mxu0 0
  %205 = vmatprep.subr.bf16.mxu0 0
  %206 = vmatpush1.bf16.msra.mxu0 0
  %207 = vmatprep.subr.bf16.mxu0 0
  %208 = vmatpush1.bf16.msra.mxu0 0
  %209 = vmatprep.subr.bf16.mxu0 0
  %210 = vmatpush1.bf16.msra.mxu0 0
  %211 = vmatprep.subr.bf16.mxu0 0
  %212 = vmatpush1.bf16.msra.mxu0 0
  %213 = vmatprep.subr.bf16.mxu0 0
  %214 = vmatpush1.bf16.msra.mxu0 0
  %215 = vmatprep.mubr.bf16.mxu0 0
  %216 = vmatmul.mubr.bf16.gmra.mrb[0].mxu0 %v181
  %v217 = vpop.f32.mrb[0].mxu0
  %v218 = vadd.f32 %v153, %v217
  %v219 = vpop.f32.mrb[0].mxu0
  %v220 = vpop.f32.mrb[0].mxu0
  %v221 = vpop.f32.mrb[0].mxu0
  %222 = vdwg.mxu0
  %v223 = vld [vmem:[%s1] sm:$0xff]
  %v224 = vld [vmem:[%s1 + $0x8] sm:$0xff]
  %v225 = vld [vmem:[%s1 + $0x10] sm:$0xff]
  %v226 = vld [vmem:[%s1 + $0x18] sm:$0xff]
  %v227 = vld [vmem:[%s1 + $0x20] sm:$0xff]
  %v228 = vld [vmem:[%s1 + $0x28] sm:$0xff]
  %v229 = vld [vmem:[%s1 + $0x30] sm:$0xff]
  %v230 = vld [vmem:[%s1 + $0x38] sm:$0xff]
  %v231 = vpack.c.bf16 %v224, %v223
  %v232 = vpack.c.bf16 %v226, %v225
  %v233 = vpack.c.bf16 %v228, %v227
  %v234 = vpack.c.bf16 %v230, %v229
  %v235 = vld [vmem:[%s9] sm:$0xff]
  %v236 = vld [vmem:[%s9 + $0x8] sm:$0xff]
  %v237 = vld [vmem:[%s9 + $0x10] sm:$0x11]
  %v238 = vld [vmem:[%s9 + $0x18] sm:$0x11]
  %v239 = vld [vmem:[%s11] sm:$0xf]
  %v241 = vlaneseq
  %v242 = vshrl.u32 %v241, 7
  %v243 = vsub.s32 0, %v242
  %v244 = vrot.slane %v239, %v243
  %v245 = vlaneseq
  %v246 = vshrl.u32 %v245, 7
  %v247 = vsub.s32 1, %v246
  %v248 = vrot.slane %v239, %v247
  %v249 = vlaneseq
  %v250 = vshrl.u32 %v249, 7
  %v251 = vsub.s32 2, %v250
  %v252 = vrot.slane %v239, %v251
  %v253 = vlaneseq
  %v254 = vshrl.u32 %v253, 7
  %v255 = vsub.s32 3, %v254
  %v256 = vrot.slane %v239, %v255
  %v265 = vunpack.c.l.b16 %v235
  %v266 = vunpack.c.h.b16 %v235
  %v267 = vunpack.c.l.b16 %v236
  %v268 = vunpack.c.h.b16 %v236
  %v269 = vunpack.c.l.b16 %v237
  %v270 = vunpack.c.h.b16 %v237
  %v271 = vunpack.c.l.b16 %v238
  %v272 = vunpack.c.h.b16 %v238
  %v273 = vpack.c.b16 %v269, %v265
  %v274 = vpack.c.b16 %v270, %v266
  %v275 = vpack.c.b16 %v271, %v267
  %v276 = vpack.c.b16 %v272, %v268
  %v278 = vsel %vm87, %v231, 0
  %v281 = vsel %vm87, %v232, 0
  %v284 = vsel %vm87, %v233, 0
  %v287 = vsel %vm87, %v234, 0
  %v290 = vand.u32 %v273, %v94
  %v293 = vand.u32 %v274, %v94
  %v296 = vand.u32 %v275, %v94
  %v299 = vand.u32 %v276, %v94
  %301 = vmatprep.subr.bf16.mxu0 %v293
  %302 = vmatpush1.bf16.msra.mxu0 %v290
  %303 = vmatprep.subr.bf16.mxu0 0
  %304 = vmatpush1.bf16.msra.mxu0 0
  %305 = vmatprep.subr.bf16.mxu0 0
  %306 = vmatpush1.bf16.msra.mxu0 0
  %307 = vmatprep.subr.bf16.mxu0 0
  %308 = vmatpush1.bf16.msra.mxu0 0
  %309 = vmatprep.subr.bf16.mxu0 0
  %310 = vmatpush1.bf16.msra.mxu0 0
  %311 = vmatprep.subr.bf16.mxu0 0
  %312 = vmatpush1.bf16.msra.mxu0 0
  %313 = vmatprep.subr.bf16.mxu0 0
  %314 = vmatpush1.bf16.msra.mxu0 0
  %315 = vmatprep.subr.bf16.mxu0 0
  %316 = vmatpush1.bf16.msra.mxu0 0
  %317 = vmatprep.subr.bf16.mxu0 0
  %318 = vmatpush1.bf16.msra.mxu0 0
  %319 = vmatprep.subr.bf16.mxu0 0
  %320 = vmatpush1.bf16.msra.mxu0 0
  %321 = vmatprep.subr.bf16.mxu0 0
  %322 = vmatpush1.bf16.msra.mxu0 0
  %323 = vmatprep.subr.bf16.mxu0 0
  %324 = vmatpush1.bf16.msra.mxu0 0
  %325 = vmatprep.subr.bf16.mxu0 0
  %326 = vmatpush1.bf16.msra.mxu0 0
  %327 = vmatprep.subr.bf16.mxu0 0
  %328 = vmatpush1.bf16.msra.mxu0 0
  %329 = vmatprep.subr.bf16.mxu0 0
  %330 = vmatpush1.bf16.msra.mxu0 0
  %331 = vmatprep.subr.bf16.mxu0 0
  %332 = vmatpush1.bf16.msra.mxu0 0
  %333 = vmatprep.mubr.bf16.mxu0 0
  %334 = vmatmul.mubr.bf16.gmra.mrb[0].mxu0 %v278
  %v335 = vpop.f32.mrb[0].mxu0
  %v336 = vadd.f32 %v244, %v335
  %v337 = vpop.f32.mrb[0].mxu0
  %v338 = vadd.f32 %v248, %v337
  %v339 = vpop.f32.mrb[0].mxu0
  %v340 = vadd.f32 %v244, %v339
  %v341 = vpop.f32.mrb[0].mxu0
  %v342 = vadd.f32 %v248, %v341
  %343 = vmatprep.mubr.bf16.mxu0 0
  %344 = vmatmul.mubr.bf16.gmra.mrb[0].mxu0 %v281
  %v345 = vpop.f32.mrb[0].mxu0
  %v346 = vadd.f32 %v244, %v345
  %v347 = vpop.f32.mrb[0].mxu0
  %v348 = vadd.f32 %v248, %v347
  %v349 = vpop.f32.mrb[0].mxu0
  %v350 = vadd.f32 %v244, %v349
  %v351 = vpop.f32.mrb[0].mxu0
  %v352 = vadd.f32 %v248, %v351
  %353 = vmatprep.mubr.bf16.mxu0 0
  %354 = vmatmul.mubr.bf16.gmra.mrb[0].mxu0 %v284
  %v355 = vpop.f32.mrb[0].mxu0
  %v356 = vadd.f32 %v244, %v355
  %v357 = vpop.f32.mrb[0].mxu0
  %v358 = vadd.f32 %v248, %v357
  %v359 = vpop.f32.mrb[0].mxu0
  %v360 = vadd.f32 %v244, %v359
  %v361 = vpop.f32.mrb[0].mxu0
  %v362 = vadd.f32 %v248, %v361
  %363 = vmatprep.mubr.bf16.mxu0 0
  %364 = vmatmul.mubr.bf16.gmra.mrb[0].mxu0 %v287
  %v365 = vpop.f32.mrb[0].mxu0
  %v366 = vadd.f32 %v244, %v365
  %v367 = vpop.f32.mrb[0].mxu0
  %v368 = vadd.f32 %v248, %v367
  %v369 = vpop.f32.mrb[0].mxu0
  %v370 = vadd.f32 %v244, %v369
  %v371 = vpop.f32.mrb[0].mxu0
  %v372 = vadd.f32 %v248, %v371
  %373 = vdwg.mxu0
  %374 = vmatprep.subr.bf16.mxu0 %v299
  %375 = vmatpush1.bf16.msra.mxu0 %v296
  %376 = vmatprep.subr.bf16.mxu0 0
  %377 = vmatpush1.bf16.msra.mxu0 0
  %378 = vmatprep.subr.bf16.mxu0 0
  %379 = vmatpush1.bf16.msra.mxu0 0
  %380 = vmatprep.subr.bf16.mxu0 0
  %381 = vmatpush1.bf16.msra.mxu0 0
  %382 = vmatprep.subr.bf16.mxu0 0
  %383 = vmatpush1.bf16.msra.mxu0 0
  %384 = vmatprep.subr.bf16.mxu0 0
  %385 = vmatpush1.bf16.msra.mxu0 0
  %386 = vmatprep.subr.bf16.mxu0 0
  %387 = vmatpush1.bf16.msra.mxu0 0
  %388 = vmatprep.subr.bf16.mxu0 0
  %389 = vmatpush1.bf16.msra.mxu0 0
  %390 = vmatprep.subr.bf16.mxu0 0
  %391 = vmatpush1.bf16.msra.mxu0 0
  %392 = vmatprep.subr.bf16.mxu0 0
  %393 = vmatpush1.bf16.msra.mxu0 0
  %394 = vmatprep.subr.bf16.mxu0 0
  %395 = vmatpush1.bf16.msra.mxu0 0
  %396 = vmatprep.subr.bf16.mxu0 0
  %397 = vmatpush1.bf16.msra.mxu0 0
  %398 = vmatprep.subr.bf16.mxu0 0
  %399 = vmatpush1.bf16.msra.mxu0 0
  %400 = vmatprep.subr.bf16.mxu0 0
  %401 = vmatpush1.bf16.msra.mxu0 0
  %402 = vmatprep.subr.bf16.mxu0 0
  %403 = vmatpush1.bf16.msra.mxu0 0
  %404 = vmatprep.subr.bf16.mxu0 0
  %405 = vmatpush1.bf16.msra.mxu0 0
  %406 = vmatprep.mubr.bf16.mxu0 0
  %407 = vmatmul.mubr.bf16.gmra.mrb[0].mxu0 %v278
  %v408 = vpop.f32.mrb[0].mxu0
  %v409 = vadd.f32 %v252, %v408
  %v410 = vpop.f32.mrb[0].mxu0
  %v411 = vadd.f32 %v256, %v410
  %v412 = vpop.f32.mrb[0].mxu0
  %v413 = vadd.f32 %v252, %v412
  %v414 = vpop.f32.mrb[0].mxu0
  %v415 = vadd.f32 %v256, %v414
  %416 = vmatprep.mubr.bf16.mxu0 0
  %417 = vmatmul.mubr.bf16.gmra.mrb[0].mxu0 %v281
  %v418 = vpop.f32.mrb[0].mxu0
  %v419 = vadd.f32 %v252, %v418
  %v420 = vpop.f32.mrb[0].mxu0
  %v421 = vadd.f32 %v256, %v420
  %v422 = vpop.f32.mrb[0].mxu0
  %v423 = vadd.f32 %v252, %v422
  %v424 = vpop.f32.mrb[0].mxu0
  %v425 = vadd.f32 %v256, %v424
  %426 = vmatprep.mubr.bf16.mxu0 0
  %427 = vmatmul.mubr.bf16.gmra.mrb[0].mxu0 %v284
  %v428 = vpop.f32.mrb[0].mxu0
  %v429 = vadd.f32 %v252, %v428
  %v430 = vpop.f32.mrb[0].mxu0
  %v431 = vadd.f32 %v256, %v430
  %v432 = vpop.f32.mrb[0].mxu0
  %v433 = vadd.f32 %v252, %v432
  %v434 = vpop.f32.mrb[0].mxu0
  %v435 = vadd.f32 %v256, %v434
  %436 = vmatprep.mubr.bf16.mxu0 0
  %437 = vmatmul.mubr.bf16.gmra.mrb[0].mxu0 %v287
  %v438 = vpop.f32.mrb[0].mxu0
  %v439 = vadd.f32 %v252, %v438
  %v440 = vpop.f32.mrb[0].mxu0
  %v441 = vadd.f32 %v256, %v440
  %v442 = vpop.f32.mrb[0].mxu0
  %v443 = vadd.f32 %v252, %v442
  %v444 = vpop.f32.mrb[0].mxu0
  %v445 = vadd.f32 %v256, %v444
  %446 = vdwg.mxu0
  %v447 = vld [vmem:[%s10] sm:$0xff]
  %v448 = vld [vmem:[%s10 + $0x8] sm:$0xff]
  %v449 = vld [vmem:[%s10 + $0x10] sm:$0xff]
  %v450 = vld [vmem:[%s10 + $0x18] sm:$0xff]
  %v451 = vld [vmem:[%s10 + $0x20] sm:$0xff]
  %v452 = vld [vmem:[%s10 + $0x28] sm:$0xff]
  %v453 = vld [vmem:[%s10 + $0x30] sm:$0xff]
  %v454 = vld [vmem:[%s10 + $0x38] sm:$0xff]
  %v455 = vld [vmem:[%s10 + $0x40] sm:$0xff]
  %v456 = vld [vmem:[%s10 + $0x48] sm:$0xff]
  %v457 = vld [vmem:[%s10 + $0x50] sm:$0xff]
  %v458 = vld [vmem:[%s10 + $0x58] sm:$0xff]
  %v459 = vld [vmem:[%s10 + $0x60] sm:$0xff]
  %v460 = vld [vmem:[%s10 + $0x68] sm:$0xff]
  %v461 = vld [vmem:[%s10 + $0x70] sm:$0xff]
  %v462 = vld [vmem:[%s10 + $0x78] sm:$0xff]
  %v463 = vld [vmem:[%s10 + $0x80] sm:$0xff]
  %v464 = vld [vmem:[%s10 + $0x88] sm:$0xff]
  %v465 = vld [vmem:[%s10 + $0x90] sm:$0xff]
  %v466 = vld [vmem:[%s10 + $0x98] sm:$0xff]
  %v467 = vld [vmem:[%s10 + $0xa0] sm:$0xff]
  %v468 = vld [vmem:[%s10 + $0xa8] sm:$0xff]
  %v469 = vld [vmem:[%s10 + $0xb0] sm:$0xff]
  %v470 = vld [vmem:[%s10 + $0xb8] sm:$0xff]
  %v471 = vld [vmem:[%s10 + $0xc0] sm:$0xff]
  %v472 = vld [vmem:[%s10 + $0xc8] sm:$0xff]
  %v473 = vld [vmem:[%s10 + $0xd0] sm:$0xff]
  %v474 = vld [vmem:[%s10 + $0xd8] sm:$0xff]
  %v475 = vld [vmem:[%s10 + $0xe0] sm:$0xff]
  %v476 = vld [vmem:[%s10 + $0xe8] sm:$0xff]
  %v477 = vld [vmem:[%s10 + $0xf0] sm:$0xff]
  %v478 = vld [vmem:[%s10 + $0xf8] sm:$0xff]
  %v479 = vld [vmem:[%s12] sm:$0xff]
  %v480 = vld [vmem:[%s12 + $0x8] sm:$0xff]
  %v481 = vld [vmem:[%s12 + $0x10] sm:$0xff]
  %v482 = vld [vmem:[%s12 + $0x18] sm:$0xff]
  %v483 = vld [vmem:[%s12 + $0x20] sm:$0xff]
  %v484 = vld [vmem:[%s12 + $0x28] sm:$0xff]
  %v485 = vld [vmem:[%s12 + $0x30] sm:$0xff]
  %v486 = vld [vmem:[%s12 + $0x38] sm:$0xff]
  %v487 = vld [vmem:[%s12 + $0x40] sm:$0xff]
  %v488 = vld [vmem:[%s12 + $0x48] sm:$0xff]
  %v489 = vld [vmem:[%s12 + $0x50] sm:$0xff]
  %v490 = vld [vmem:[%s12 + $0x58] sm:$0xff]
  %v491 = vld [vmem:[%s12 + $0x60] sm:$0xff]
  %v492 = vld [vmem:[%s12 + $0x68] sm:$0xff]
  %v493 = vld [vmem:[%s12 + $0x70] sm:$0xff]
  %v494 = vld [vmem:[%s12 + $0x78] sm:$0xff]
  %v495 = vld [vmem:[%s12 + $0x80] sm:$0xff]
  %v496 = vld [vmem:[%s12 + $0x88] sm:$0xff]
  %v497 = vld [vmem:[%s12 + $0x90] sm:$0xff]
  %v498 = vld [vmem:[%s12 + $0x98] sm:$0xff]
  %v499 = vld [vmem:[%s12 + $0xa0] sm:$0xff]
  %v500 = vld [vmem:[%s12 + $0xa8] sm:$0xff]
  %v501 = vld [vmem:[%s12 + $0xb0] sm:$0xff]
  %v502 = vld [vmem:[%s12 + $0xb8] sm:$0xff]
  %v503 = vld [vmem:[%s12 + $0xc0] sm:$0xff]
  %v504 = vld [vmem:[%s12 + $0xc8] sm:$0xff]
  %v505 = vld [vmem:[%s12 + $0xd0] sm:$0xff]
  %v506 = vld [vmem:[%s12 + $0xd8] sm:$0xff]
  %v507 = vld [vmem:[%s12 + $0xe0] sm:$0xff]
  %v508 = vld [vmem:[%s12 + $0xe8] sm:$0xff]
  %v509 = vld [vmem:[%s12 + $0xf0] sm:$0xff]
  %v510 = vld [vmem:[%s12 + $0xf8] sm:$0xff]
  %v511 = vld [vmem:[%s13] sm:$0xff]
  %v512 = vld [vmem:[%s13 + $0x8] sm:$0xff]
  %v513 = vld [vmem:[%s13 + $0x10] sm:$0xff]
  %v514 = vld [vmem:[%s13 + $0x18] sm:$0xff]
  %v515 = vld [vmem:[%s13 + $0x20] sm:$0xff]
  %v516 = vld [vmem:[%s13 + $0x28] sm:$0xff]
  %v517 = vld [vmem:[%s13 + $0x30] sm:$0xff]
  %v518 = vld [vmem:[%s13 + $0x38] sm:$0xff]
  %v519 = vld [vmem:[%s13 + $0x40] sm:$0xff]
  %v520 = vld [vmem:[%s13 + $0x48] sm:$0xff]
  %v521 = vld [vmem:[%s13 + $0x50] sm:$0xff]
  %v522 = vld [vmem:[%s13 + $0x58] sm:$0xff]
  %v523 = vld [vmem:[%s13 + $0x60] sm:$0xff]
  %v524 = vld [vmem:[%s13 + $0x68] sm:$0xff]
  %v525 = vld [vmem:[%s13 + $0x70] sm:$0xff]
  %v526 = vld [vmem:[%s13 + $0x78] sm:$0xff]
  %v527 = vld [vmem:[%s13 + $0x80] sm:$0xff]
  %v528 = vld [vmem:[%s13 + $0x88] sm:$0xff]
  %v529 = vld [vmem:[%s13 + $0x90] sm:$0xff]
  %v530 = vld [vmem:[%s13 + $0x98] sm:$0xff]
  %v531 = vld [vmem:[%s13 + $0xa0] sm:$0xff]
  %v532 = vld [vmem:[%s13 + $0xa8] sm:$0xff]
  %v533 = vld [vmem:[%s13 + $0xb0] sm:$0xff]
  %v534 = vld [vmem:[%s13 + $0xb8] sm:$0xff]
  %v535 = vld [vmem:[%s13 + $0xc0] sm:$0xff]
  %v536 = vld [vmem:[%s13 + $0xc8] sm:$0xff]
  %v537 = vld [vmem:[%s13 + $0xd0] sm:$0xff]
  %v538 = vld [vmem:[%s13 + $0xd8] sm:$0xff]
  %v539 = vld [vmem:[%s13 + $0xe0] sm:$0xff]
  %v540 = vld [vmem:[%s13 + $0xe8] sm:$0xff]
  %v541 = vld [vmem:[%s13 + $0xf0] sm:$0xff]
  %v542 = vld [vmem:[%s13 + $0xf8] sm:$0xff]
  %v543 = vld [vmem:[%s14] sm:$0xf]
  %v576 = vunpack.c.l.b16 %v447
  %v577 = vunpack.c.h.b16 %v447
  %v578 = vunpack.c.l.b16 %v448
  %v579 = vunpack.c.h.b16 %v448
  %v580 = vunpack.c.l.b16 %v449
  %v581 = vunpack.c.h.b16 %v449
  %v582 = vunpack.c.l.b16 %v450
  %v583 = vunpack.c.h.b16 %v450
  %v584 = vunpack.c.l.b16 %v451
  %v585 = vunpack.c.h.b16 %v451
  %v586 = vunpack.c.l.b16 %v452
  %v587 = vunpack.c.h.b16 %v452
  %v588 = vunpack.c.l.b16 %v453
  %v589 = vunpack.c.h.b16 %v453
  %v590 = vunpack.c.l.b16 %v454
  %v591 = vunpack.c.h.b16 %v454
  %v592 = vunpack.c.l.b16 %v455
  %v593 = vunpack.c.h.b16 %v455
  %v594 = vunpack.c.l.b16 %v456
  %v595 = vunpack.c.h.b16 %v456
  %v596 = vunpack.c.l.b16 %v457
  %v597 = vunpack.c.h.b16 %v457
  %v598 = vunpack.c.l.b16 %v458
  %v599 = vunpack.c.h.b16 %v458
  %v600 = vunpack.c.l.b16 %v459
  %v601 = vunpack.c.h.b16 %v459
  %v602 = vunpack.c.l.b16 %v460
  %v603 = vunpack.c.h.b16 %v460
  %v604 = vunpack.c.l.b16 %v461
  %v605 = vunpack.c.h.b16 %v461
  %v606 = vunpack.c.l.b16 %v462
  %v607 = vunpack.c.h.b16 %v462
  %v608 = vunpack.c.l.b16 %v463
  %v609 = vunpack.c.h.b16 %v463
  %v610 = vunpack.c.l.b16 %v464
  %v611 = vunpack.c.h.b16 %v464
  %v612 = vunpack.c.l.b16 %v465
  %v613 = vunpack.c.h.b16 %v465
  %v614 = vunpack.c.l.b16 %v466
  %v615 = vunpack.c.h.b16 %v466
  %v616 = vunpack.c.l.b16 %v467
  %v617 = vunpack.c.h.b16 %v467
  %v618 = vunpack.c.l.b16 %v468
  %v619 = vunpack.c.h.b16 %v468
  %v620 = vunpack.c.l.b16 %v469
  %v621 = vunpack.c.h.b16 %v469
  %v622 = vunpack.c.l.b16 %v470
  %v623 = vunpack.c.h.b16 %v470
  %v624 = vunpack.c.l.b16 %v471
  %v625 = vunpack.c.h.b16 %v471
  %v626 = vunpack.c.l.b16 %v472
  %v627 = vunpack.c.h.b16 %v472
  %v628 = vunpack.c.l.b16 %v473
  %v629 = vunpack.c.h.b16 %v473
  %v630 = vunpack.c.l.b16 %v474
  %v631 = vunpack.c.h.b16 %v474
  %v632 = vunpack.c.l.b16 %v475
  %v633 = vunpack.c.h.b16 %v475
  %v634 = vunpack.c.l.b16 %v476
  %v635 = vunpack.c.h.b16 %v476
  %v636 = vunpack.c.l.b16 %v477
  %v637 = vunpack.c.h.b16 %v477
  %v638 = vunpack.c.l.b16 %v478
  %v639 = vunpack.c.h.b16 %v478
  %v640 = vpack.c.b16 %v580, %v576
  %v641 = vpack.c.b16 %v581, %v577
  %v642 = vpack.c.b16 %v582, %v578
  %v643 = vpack.c.b16 %v583, %v579
  %v644 = vpack.c.b16 %v588, %v584
  %v645 = vpack.c.b16 %v589, %v585
  %v646 = vpack.c.b16 %v590, %v586
  %v647 = vpack.c.b16 %v591, %v587
  %v648 = vpack.c.b16 %v596, %v592
  %v649 = vpack.c.b16 %v597, %v593
  %v650 = vpack.c.b16 %v598, %v594
  %v651 = vpack.c.b16 %v599, %v595
  %v652 = vpack.c.b16 %v604, %v600
  %v653 = vpack.c.b16 %v605, %v601
  %v654 = vpack.c.b16 %v606, %v602
  %v655 = vpack.c.b16 %v607, %v603
  %v656 = vpack.c.b16 %v612, %v608
  %v657 = vpack.c.b16 %v613, %v609
  %v658 = vpack.c.b16 %v614, %v610
  %v659 = vpack.c.b16 %v615, %v611
  %v660 = vpack.c.b16 %v620, %v616
  %v661 = vpack.c.b16 %v621, %v617
  %v662 = vpack.c.b16 %v622, %v618
  %v663 = vpack.c.b16 %v623, %v619
  %v664 = vpack.c.b16 %v628, %v624
  %v665 = vpack.c.b16 %v629, %v625
  %v666 = vpack.c.b16 %v630, %v626
  %v667 = vpack.c.b16 %v631, %v627
  %v668 = vpack.c.b16 %v636, %v632
  %v669 = vpack.c.b16 %v637, %v633
  %v670 = vpack.c.b16 %v638, %v634
  %v671 = vpack.c.b16 %v639, %v635
  %704 = vmatprep.subr.bf16.mxu0 %v641
  %705 = vmatpush1.bf16.msra.mxu0 %v640
  %706 = vmatprep.subr.bf16.mxu0 %v645
  %707 = vmatpush1.bf16.msra.mxu0 %v644
  %708 = vmatprep.subr.bf16.mxu0 %v649
  %709 = vmatpush1.bf16.msra.mxu0 %v648
  %710 = vmatprep.subr.bf16.mxu0 %v653
  %711 = vmatpush1.bf16.msra.mxu0 %v652
  %712 = vmatprep.subr.bf16.mxu0 %v657
  %713 = vmatpush1.bf16.msra.mxu0 %v656
  %714 = vmatprep.subr.bf16.mxu0 %v661
  %715 = vmatpush1.bf16.msra.mxu0 %v660
  %716 = vmatprep.subr.bf16.mxu0 %v665
  %717 = vmatpush1.bf16.msra.mxu0 %v664
  %718 = vmatprep.subr.bf16.mxu0 %v669
  %719 = vmatpush1.bf16.msra.mxu0 %v668
  %720 = vmatprep.subr.bf16.mxu0 0
  %721 = vmatpush1.bf16.msra.mxu0 0
  %722 = vmatprep.subr.bf16.mxu0 0
  %723 = vmatpush1.bf16.msra.mxu0 0
  %724 = vmatprep.subr.bf16.mxu0 0
  %725 = vmatpush1.bf16.msra.mxu0 0
  %726 = vmatprep.subr.bf16.mxu0 0
  %727 = vmatpush1.bf16.msra.mxu0 0
  %728 = vmatprep.subr.bf16.mxu0 0
  %729 = vmatpush1.bf16.msra.mxu0 0
  %730 = vmatprep.subr.bf16.mxu0 0
  %731 = vmatpush1.bf16.msra.mxu0 0
  %732 = vmatprep.subr.bf16.mxu0 0
  %733 = vmatpush1.bf16.msra.mxu0 0
  %734 = vmatprep.subr.bf16.mxu0 0
  %735 = vmatpush1.bf16.msra.mxu0 0
  %736 = vmatprep.mubr.bf16.mxu0 0
  %737 = vmatmul.mubr.bf16.gmra.mrb[0].mxu0 0
  %v738 = vpop.f32.mrb[0].mxu0
  %v739 = vadd.f32 0.0, %v738
  %v740 = vpop.f32.mrb[0].mxu0
  %v741 = vadd.f32 0.0, %v740
  %v742 = vpop.f32.mrb[0].mxu0
  %v743 = vpop.f32.mrb[0].mxu0
  %744 = vdwg.mxu0
  %745 = vmatprep.subr.bf16.mxu0 %v643
  %746 = vmatpush1.bf16.msra.mxu0 %v642
  %747 = vmatprep.subr.bf16.mxu0 %v647
  %748 = vmatpush1.bf16.msra.mxu0 %v646
  %749 = vmatprep.subr.bf16.mxu0 %v651
  %750 = vmatpush1.bf16.msra.mxu0 %v650
  %751 = vmatprep.subr.bf16.mxu0 %v655
  %752 = vmatpush1.bf16.msra.mxu0 %v654
  %753 = vmatprep.subr.bf16.mxu0 %v659
  %754 = vmatpush1.bf16.msra.mxu0 %v658
  %755 = vmatprep.subr.bf16.mxu0 %v663
  %756 = vmatpush1.bf16.msra.mxu0 %v662
  %757 = vmatprep.subr.bf16.mxu0 %v667
  %758 = vmatpush1.bf16.msra.mxu0 %v666
  %759 = vmatprep.subr.bf16.mxu0 %v671
  %760 = vmatpush1.bf16.msra.mxu0 %v670
  %761 = vmatprep.subr.bf16.mxu0 0
  %762 = vmatpush1.bf16.msra.mxu0 0
  %763 = vmatprep.subr.bf16.mxu0 0
  %764 = vmatpush1.bf16.msra.mxu0 0
  %765 = vmatprep.subr.bf16.mxu0 0
  %766 = vmatpush1.bf16.msra.mxu0 0
  %767 = vmatprep.subr.bf16.mxu0 0
  %768 = vmatpush1.bf16.msra.mxu0 0
  %769 = vmatprep.subr.bf16.mxu0 0
  %770 = vmatpush1.bf16.msra.mxu0 0
  %771 = vmatprep.subr.bf16.mxu0 0
  %772 = vmatpush1.bf16.msra.mxu0 0
  %773 = vmatprep.subr.bf16.mxu0 0
  %774 = vmatpush1.bf16.msra.mxu0 0
  %775 = vmatprep.subr.bf16.mxu0 0
  %776 = vmatpush1.bf16.msra.mxu0 0
  %777 = vmatprep.mubr.bf16.mxu0 0
  %778 = vmatmul.mubr.bf16.gmra.mrb[0].mxu0 0
  %v779 = vpop.f32.mrb[0].mxu0
  %v780 = vadd.f32 0.0, %v779
  %v781 = vpop.f32.mrb[0].mxu0
  %v782 = vadd.f32 0.0, %v781
  %v783 = vpop.f32.mrb[0].mxu0
  %v784 = vpop.f32.mrb[0].mxu0
  %785 = vdwg.mxu0
  %v786 = vadd.f32 %v336, %v739
  %v787 = vadd.f32 %v338, %v741
  %v788 = vadd.f32 %v409, %v780
  %v789 = vadd.f32 %v411, %v782
  %v790 = vxor.u32 %v786, 2147483648
  %v791 = vmul.f32 %v790, 1.442695
  %v792 = vpow.pop %v791
  %v793 = vadd.f32 %v792, 1.0
  %v794 = vrcp.pop %v793
  %v795 = vmul.f32 1.0, %v794
  %v796 = vxor.u32 %v787, 2147483648
  %v797 = vmul.f32 %v796, 1.442695
  %v798 = vpow.pop %v797
  %v799 = vadd.f32 %v798, 1.0
  %v800 = vrcp.pop %v799
  %v801 = vmul.f32 1.0, %v800
  %v802 = vtanh.pop %v788
  %v803 = vxor.u32 %v789, 2147483648
  %v804 = vmul.f32 %v803, 1.442695
  %v805 = vpow.pop %v804
  %v806 = vadd.f32 %v805, 1.0
  %v807 = vrcp.pop %v806
  %v808 = vmul.f32 1.0, %v807
  %v809 = vmul.f32 %v801, 0.0
  %v810 = vmul.f32 %v795, %v802
  %v811 = vadd.f32 %v809, %v810
  %v812 = vtanh.pop %v811
  %v813 = vmul.f32 %v808, %v812
  %v814 = vpack.c.bf16 %v813, %v813
  %v847 = vunpack.c.l.b16 %v511
  %v848 = vunpack.c.h.b16 %v511
  %v849 = vunpack.c.l.b16 %v512
  %v850 = vunpack.c.h.b16 %v512
  %v851 = vunpack.c.l.b16 %v513
  %v852 = vunpack.c.h.b16 %v513
  %v853 = vunpack.c.l.b16 %v514
  %v854 = vunpack.c.h.b16 %v514
  %v855 = vunpack.c.l.b16 %v515
  %v856 = vunpack.c.h.b16 %v515
  %v857 = vunpack.c.l.b16 %v516
  %v858 = vunpack.c.h.b16 %v516
  %v859 = vunpack.c.l.b16 %v517
  %v860 = vunpack.c.h.b16 %v517
  %v861 = vunpack.c.l.b16 %v518
  %v862 = vunpack.c.h.b16 %v518
  %v863 = vunpack.c.l.b16 %v519
  %v864 = vunpack.c.h.b16 %v519
  %v865 = vunpack.c.l.b16 %v520
  %v866 = vunpack.c.h.b16 %v520
  %v867 = vunpack.c.l.b16 %v521
  %v868 = vunpack.c.h.b16 %v521
  %v869 = vunpack.c.l.b16 %v522
  %v870 = vunpack.c.h.b16 %v522
  %v871 = vunpack.c.l.b16 %v523
  %v872 = vunpack.c.h.b16 %v523
  %v873 = vunpack.c.l.b16 %v524
  %v874 = vunpack.c.h.b16 %v524
  %v875 = vunpack.c.l.b16 %v525
  %v876 = vunpack.c.h.b16 %v525
  %v877 = vunpack.c.l.b16 %v526
  %v878 = vunpack.c.h.b16 %v526
  %v879 = vunpack.c.l.b16 %v527
  %v880 = vunpack.c.h.b16 %v527
  %v881 = vunpack.c.l.b16 %v528
  %v882 = vunpack.c.h.b16 %v528
  %v883 = vunpack.c.l.b16 %v529
  %v884 = vunpack.c.h.b16 %v529
  %v885 = vunpack.c.l.b16 %v530
  %v886 = vunpack.c.h.b16 %v530
  %v887 = vunpack.c.l.b16 %v531
  %v888 = vunpack.c.h.b16 %v531
  %v889 = vunpack.c.l.b16 %v532
  %v890 = vunpack.c.h.b16 %v532
  %v891 = vunpack.c.l.b16 %v533
  %v892 = vunpack.c.h.b16 %v533
  %v893 = vunpack.c.l.b16 %v534
  %v894 = vunpack.c.h.b16 %v534
  %v895 = vunpack.c.l.b16 %v535
  %v896 = vunpack.c.h.b16 %v535
  %v897 = vunpack.c.l.b16 %v536
  %v898 = vunpack.c.h.b16 %v536
  %v899 = vunpack.c.l.b16 %v537
  %v900 = vunpack.c.h.b16 %v537
  %v901 = vunpack.c.l.b16 %v538
  %v902 = vunpack.c.h.b16 %v538
  %v903 = vunpack.c.l.b16 %v539
  %v904 = vunpack.c.h.b16 %v539
  %v905 = vunpack.c.l.b16 %v540
  %v906 = vunpack.c.h.b16 %v540
  %v907 = vunpack.c.l.b16 %v541
  %v908 = vunpack.c.h.b16 %v541
  %v909 = vunpack.c.l.b16 %v542
  %v910 = vunpack.c.h.b16 %v542
  %v911 = vpack.c.b16 %v851, %v847
  %v912 = vpack.c.b16 %v852, %v848
  %v913 = vpack.c.b16 %v853, %v849
  %v914 = vpack.c.b16 %v854, %v850
  %v915 = vpack.c.b16 %v859, %v855
  %v916 = vpack.c.b16 %v860, %v856
  %v917 = vpack.c.b16 %v861, %v857
  %v918 = vpack.c.b16 %v862, %v858
  %v919 = vpack.c.b16 %v867, %v863
  %v920 = vpack.c.b16 %v868, %v864
  %v921 = vpack.c.b16 %v869, %v865
  %v922 = vpack.c.b16 %v870, %v866
  %v923 = vpack.c.b16 %v875, %v871
  %v924 = vpack.c.b16 %v876, %v872
  %v925 = vpack.c.b16 %v877, %v873
  %v926 = vpack.c.b16 %v878, %v874
  %v927 = vpack.c.b16 %v883, %v879
  %v928 = vpack.c.b16 %v884, %v880
  %v929 = vpack.c.b16 %v885, %v881
  %v930 = vpack.c.b16 %v886, %v882
  %v931 = vpack.c.b16 %v891, %v887
  %v932 = vpack.c.b16 %v892, %v888
  %v933 = vpack.c.b16 %v893, %v889
  %v934 = vpack.c.b16 %v894, %v890
  %v935 = vpack.c.b16 %v899, %v895
  %v936 = vpack.c.b16 %v900, %v896
  %v937 = vpack.c.b16 %v901, %v897
  %v938 = vpack.c.b16 %v902, %v898
  %v939 = vpack.c.b16 %v907, %v903
  %v940 = vpack.c.b16 %v908, %v904
  %v941 = vpack.c.b16 %v909, %v905
  %v942 = vpack.c.b16 %v910, %v906
  %975 = vmatprep.subr.bf16.mxu0 %v912
  %976 = vmatpush1.bf16.msra.mxu0 %v911
  %977 = vmatprep.subr.bf16.mxu0 %v916
  %978 = vmatpush1.bf16.msra.mxu0 %v915
  %979 = vmatprep.subr.bf16.mxu0 %v920
  %980 = vmatpush1.bf16.msra.mxu0 %v919
  %981 = vmatprep.subr.bf16.mxu0 %v924
  %982 = vmatpush1.bf16.msra.mxu0 %v923
  %983 = vmatprep.subr.bf16.mxu0 %v928
  %984 = vmatpush1.bf16.msra.mxu0 %v927
  %985 = vmatprep.subr.bf16.mxu0 %v932
  %986 = vmatpush1.bf16.msra.mxu0 %v931
  %987 = vmatprep.subr.bf16.mxu0 %v936
  %988 = vmatpush1.bf16.msra.mxu0 %v935
  %989 = vmatprep.subr.bf16.mxu0 %v940
  %990 = vmatpush1.bf16.msra.mxu0 %v939
  %991 = vmatprep.subr.bf16.mxu0 0
  %992 = vmatpush1.bf16.msra.mxu0 0
  %993 = vmatprep.subr.bf16.mxu0 0
  %994 = vmatpush1.bf16.msra.mxu0 0
  %995 = vmatprep.subr.bf16.mxu0 0
  %996 = vmatpush1.bf16.msra.mxu0 0
  %997 = vmatprep.subr.bf16.mxu0 0
  %998 = vmatpush1.bf16.msra.mxu0 0
  %999 = vmatprep.subr.bf16.mxu0 0
  %1000 = vmatpush1.bf16.msra.mxu0 0
  %1001 = vmatprep.subr.bf16.mxu0 0
  %1002 = vmatpush1.bf16.msra.mxu0 0
  %1003 = vmatprep.subr.bf16.mxu0 0
  %1004 = vmatpush1.bf16.msra.mxu0 0
  %1005 = vmatprep.subr.bf16.mxu0 0
  %1006 = vmatpush1.bf16.msra.mxu0 0
  %1007 = vmatprep.mubr.bf16.mxu0 0
  %1008 = vmatmul.mubr.bf16.gmra.mrb[0].mxu0 0
  %v1009 = vpop.f32.mrb[0].mxu0
  %v1010 = vadd.f32 0.0, %v1009
  %v1011 = vpop.f32.mrb[0].mxu0
  %v1012 = vadd.f32 0.0, %v1011
  %v1013 = vpop.f32.mrb[0].mxu0
  %v1014 = vpop.f32.mrb[0].mxu0
  %1015 = vdwg.mxu0
  %1016 = vmatprep.subr.bf16.mxu0 %v914
  %1017 = vmatpush1.bf16.msra.mxu0 %v913
  %1018 = vmatprep.subr.bf16.mxu0 %v918
  %1019 = vmatpush1.bf16.msra.mxu0 %v917
  %1020 = vmatprep.subr.bf16.mxu0 %v922
  %1021 = vmatpush1.bf16.msra.mxu0 %v921
  %1022 = vmatprep.subr.bf16.mxu0 %v926
  %1023 = vmatpush1.bf16.msra.mxu0 %v925
  %1024 = vmatprep.subr.bf16.mxu0 %v930
  %1025 = vmatpush1.bf16.msra.mxu0 %v929
  %1026 = vmatprep.subr.bf16.mxu0 %v934
  %1027 = vmatpush1.bf16.msra.mxu0 %v933
  %1028 = vmatprep.subr.bf16.mxu0 %v938
  %1029 = vmatpush1.bf16.msra.mxu0 %v937
  %1030 = vmatprep.subr.bf16.mxu0 %v942
  %1031 = vmatpush1.bf16.msra.mxu0 %v941
  %1032 = vmatprep.subr.bf16.mxu0 0
  %1033 = vmatpush1.bf16.msra.mxu0 0
  %1034 = vmatprep.subr.bf16.mxu0 0
  %1035 = vmatpush1.bf16.msra.mxu0 0
  %1036 = vmatprep.subr.bf16.mxu0 0
  %1037 = vmatpush1.bf16.msra.mxu0 0
  %1038 = vmatprep.subr.bf16.mxu0 0
  %1039 = vmatpush1.bf16.msra.mxu0 0
  %1040 = vmatprep.subr.bf16.mxu0 0
  %1041 = vmatpush1.bf16.msra.mxu0 0
  %1042 = vmatprep.subr.bf16.mxu0 0
  %1043 = vmatpush1.bf16.msra.mxu0 0
  %1044 = vmatprep.subr.bf16.mxu0 0
  %1045 = vmatpush1.bf16.msra.mxu0 0
  %1046 = vmatprep.subr.bf16.mxu0 0
  %1047 = vmatpush1.bf16.msra.mxu0 0
  %1048 = vmatprep.mubr.bf16.mxu0 0
  %1049 = vmatmul.mubr.bf16.gmra.mrb[0].mxu0 0
  %v1050 = vpop.f32.mrb[0].mxu0
  %v1051 = vadd.f32 0.0, %v1050
  %v1052 = vpop.f32.mrb[0].mxu0
  %v1053 = vadd.f32 0.0, %v1052
  %v1054 = vpop.f32.mrb[0].mxu0
  %v1055 = vpop.f32.mrb[0].mxu0
  %1056 = vdwg.mxu0
  %v1089 = vunpack.c.l.b16 %v479
  %v1090 = vunpack.c.h.b16 %v479
  %v1091 = vunpack.c.l.b16 %v480
  %v1092 = vunpack.c.h.b16 %v480
  %v1093 = vunpack.c.l.b16 %v481
  %v1094 = vunpack.c.h.b16 %v481
  %v1095 = vunpack.c.l.b16 %v482
  %v1096 = vunpack.c.h.b16 %v482
  %v1097 = vunpack.c.l.b16 %v483
  %v1098 = vunpack.c.h.b16 %v483
  %v1099 = vunpack.c.l.b16 %v484
  %v1100 = vunpack.c.h.b16 %v484
  %v1101 = vunpack.c.l.b16 %v485
  %v1102 = vunpack.c.h.b16 %v485
  %v1103 = vunpack.c.l.b16 %v486
  %v1104 = vunpack.c.h.b16 %v486
  %v1105 = vunpack.c.l.b16 %v487
  %v1106 = vunpack.c.h.b16 %v487
  %v1107 = vunpack.c.l.b16 %v488
  %v1108 = vunpack.c.h.b16 %v488
  %v1109 = vunpack.c.l.b16 %v489
  %v1110 = vunpack.c.h.b16 %v489
  %v1111 = vunpack.c.l.b16 %v490
  %v1112 = vunpack.c.h.b16 %v490
  %v1113 = vunpack.c.l.b16 %v491
  %v1114 = vunpack.c.h.b16 %v491
  %v1115 = vunpack.c.l.b16 %v492
  %v1116 = vunpack.c.h.b16 %v492
  %v1117 = vunpack.c.l.b16 %v493
  %v1118 = vunpack.c.h.b16 %v493
  %v1119 = vunpack.c.l.b16 %v494
  %v1120 = vunpack.c.h.b16 %v494
  %v1121 = vunpack.c.l.b16 %v495
  %v1122 = vunpack.c.h.b16 %v495
  %v1123 = vunpack.c.l.b16 %v496
  %v1124 = vunpack.c.h.b16 %v496
  %v1125 = vunpack.c.l.b16 %v497
  %v1126 = vunpack.c.h.b16 %v497
  %v1127 = vunpack.c.l.b16 %v498
  %v1128 = vunpack.c.h.b16 %v498
  %v1129 = vunpack.c.l.b16 %v499
  %v1130 = vunpack.c.h.b16 %v499
  %v1131 = vunpack.c.l.b16 %v500
  %v1132 = vunpack.c.h.b16 %v500
  %v1133 = vunpack.c.l.b16 %v501
  %v1134 = vunpack.c.h.b16 %v501
  %v1135 = vunpack.c.l.b16 %v502
  %v1136 = vunpack.c.h.b16 %v502
  %v1137 = vunpack.c.l.b16 %v503
  %v1138 = vunpack.c.h.b16 %v503
  %v1139 = vunpack.c.l.b16 %v504
  %v1140 = vunpack.c.h.b16 %v504
  %v1141 = vunpack.c.l.b16 %v505
  %v1142 = vunpack.c.h.b16 %v505
  %v1143 = vunpack.c.l.b16 %v506
  %v1144 = vunpack.c.h.b16 %v506
  %v1145 = vunpack.c.l.b16 %v507
  %v1146 = vunpack.c.h.b16 %v507
  %v1147 = vunpack.c.l.b16 %v508
  %v1148 = vunpack.c.h.b16 %v508
  %v1149 = vunpack.c.l.b16 %v509
  %v1150 = vunpack.c.h.b16 %v509
  %v1151 = vunpack.c.l.b16 %v510
  %v1152 = vunpack.c.h.b16 %v510
  %v1153 = vpack.c.b16 %v1093, %v1089
  %v1154 = vpack.c.b16 %v1094, %v1090
  %v1155 = vpack.c.b16 %v1095, %v1091
  %v1156 = vpack.c.b16 %v1096, %v1092
  %v1157 = vpack.c.b16 %v1101, %v1097
  %v1158 = vpack.c.b16 %v1102, %v1098
  %v1159 = vpack.c.b16 %v1103, %v1099
  %v1160 = vpack.c.b16 %v1104, %v1100
  %v1161 = vpack.c.b16 %v1109, %v1105
  %v1162 = vpack.c.b16 %v1110, %v1106
  %v1163 = vpack.c.b16 %v1111, %v1107
  %v1164 = vpack.c.b16 %v1112, %v1108
  %v1165 = vpack.c.b16 %v1117, %v1113
  %v1166 = vpack.c.b16 %v1118, %v1114
  %v1167 = vpack.c.b16 %v1119, %v1115
  %v1168 = vpack.c.b16 %v1120, %v1116
  %v1169 = vpack.c.b16 %v1125, %v1121
  %v1170 = vpack.c.b16 %v1126, %v1122
  %v1171 = vpack.c.b16 %v1127, %v1123
  %v1172 = vpack.c.b16 %v1128, %v1124
  %v1173 = vpack.c.b16 %v1133, %v1129
  %v1174 = vpack.c.b16 %v1134, %v1130
  %v1175 = vpack.c.b16 %v1135, %v1131
  %v1176 = vpack.c.b16 %v1136, %v1132
  %v1177 = vpack.c.b16 %v1141, %v1137
  %v1178 = vpack.c.b16 %v1142, %v1138
  %v1179 = vpack.c.b16 %v1143, %v1139
  %v1180 = vpack.c.b16 %v1144, %v1140
  %v1181 = vpack.c.b16 %v1149, %v1145
  %v1182 = vpack.c.b16 %v1150, %v1146
  %v1183 = vpack.c.b16 %v1151, %v1147
  %v1184 = vpack.c.b16 %v1152, %v1148
  %1217 = vmatprep.subr.bf16.mxu0 %v1154
  %1218 = vmatpush1.bf16.msra.mxu0 %v1153
  %1219 = vmatprep.subr.bf16.mxu0 %v1158
  %1220 = vmatpush1.bf16.msra.mxu0 %v1157
  %1221 = vmatprep.subr.bf16.mxu0 %v1162
  %1222 = vmatpush1.bf16.msra.mxu0 %v1161
  %1223 = vmatprep.subr.bf16.mxu0 %v1166
  %1224 = vmatpush1.bf16.msra.mxu0 %v1165
  %1225 = vmatprep.subr.bf16.mxu0 %v1170
  %1226 = vmatpush1.bf16.msra.mxu0 %v1169
  %1227 = vmatprep.subr.bf16.mxu0 %v1174
  %1228 = vmatpush1.bf16.msra.mxu0 %v1173
  %1229 = vmatprep.subr.bf16.mxu0 %v1178
  %1230 = vmatpush1.bf16.msra.mxu0 %v1177
  %1231 = vmatprep.subr.bf16.mxu0 %v1182
  %1232 = vmatpush1.bf16.msra.mxu0 %v1181
  %1233 = vmatprep.subr.bf16.mxu0 0
  %1234 = vmatpush1.bf16.msra.mxu0 0
  %1235 = vmatprep.subr.bf16.mxu0 0
  %1236 = vmatpush1.bf16.msra.mxu0 0
  %1237 = vmatprep.subr.bf16.mxu0 0
  %1238 = vmatpush1.bf16.msra.mxu0 0
  %1239 = vmatprep.subr.bf16.mxu0 0
  %1240 = vmatpush1.bf16.msra.mxu0 0
  %1241 = vmatprep.subr.bf16.mxu0 0
  %1242 = vmatpush1.bf16.msra.mxu0 0
  %1243 = vmatprep.subr.bf16.mxu0 0
  %1244 = vmatpush1.bf16.msra.mxu0 0
  %1245 = vmatprep.subr.bf16.mxu0 0
  %1246 = vmatpush1.bf16.msra.mxu0 0
  %1247 = vmatprep.subr.bf16.mxu0 0
  %1248 = vmatpush1.bf16.msra.mxu0 0
  %1249 = vmatprep.mubr.bf16.mxu0 0
  %1250 = vmatmul.mubr.bf16.gmra.mrb[0].mxu0 %v814
  %v1251 = vpop.f32.mrb[0].mxu0
  %v1252 = vadd.f32 %v1010, %v1251
  %v1253 = vpop.f32.mrb[0].mxu0
  %v1254 = vadd.f32 %v1012, %v1253
  %v1255 = vpop.f32.mrb[0].mxu0
  %v1256 = vpop.f32.mrb[0].mxu0
  %1257 = vdwg.mxu0
  %1258 = vmatprep.subr.bf16.mxu0 %v1156
  %1259 = vmatpush1.bf16.msra.mxu0 %v1155
  %1260 = vmatprep.subr.bf16.mxu0 %v1160
  %1261 = vmatpush1.bf16.msra.mxu0 %v1159
  %1262 = vmatprep.subr.bf16.mxu0 %v1164
  %1263 = vmatpush1.bf16.msra.mxu0 %v1163
  %1264 = vmatprep.subr.bf16.mxu0 %v1168
  %1265 = vmatpush1.bf16.msra.mxu0 %v1167
  %1266 = vmatprep.subr.bf16.mxu0 %v1172
  %1267 = vmatpush1.bf16.msra.mxu0 %v1171
  %1268 = vmatprep.subr.bf16.mxu0 %v1176
  %1269 = vmatpush1.bf16.msra.mxu0 %v1175
  %1270 = vmatprep.subr.bf16.mxu0 %v1180
  %1271 = vmatpush1.bf16.msra.mxu0 %v1179
  %1272 = vmatprep.subr.bf16.mxu0 %v1184
  %1273 = vmatpush1.bf16.msra.mxu0 %v1183
  %1274 = vmatprep.subr.bf16.mxu0 0
  %1275 = vmatpush1.bf16.msra.mxu0 0
  %1276 = vmatprep.subr.bf16.mxu0 0
  %1277 = vmatpush1.bf16.msra.mxu0 0
  %1278 = vmatprep.subr.bf16.mxu0 0
  %1279 = vmatpush1.bf16.msra.mxu0 0
  %1280 = vmatprep.subr.bf16.mxu0 0
  %1281 = vmatpush1.bf16.msra.mxu0 0
  %1282 = vmatprep.subr.bf16.mxu0 0
  %1283 = vmatpush1.bf16.msra.mxu0 0
  %1284 = vmatprep.subr.bf16.mxu0 0
  %1285 = vmatpush1.bf16.msra.mxu0 0
  %1286 = vmatprep.subr.bf16.mxu0 0
  %1287 = vmatpush1.bf16.msra.mxu0 0
  %1288 = vmatprep.subr.bf16.mxu0 0
  %1289 = vmatpush1.bf16.msra.mxu0 0
  %1290 = vmatprep.mubr.bf16.mxu0 0
  %1291 = vmatmul.mubr.bf16.gmra.mrb[0].mxu0 %v814
  %v1292 = vpop.f32.mrb[0].mxu0
  %v1293 = vadd.f32 %v1051, %v1292
  %v1294 = vpop.f32.mrb[0].mxu0
  %v1295 = vadd.f32 %v1053, %v1294
  %v1296 = vpop.f32.mrb[0].mxu0
  %v1297 = vpop.f32.mrb[0].mxu0
  %1298 = vdwg.mxu0
  %v1300 = vlaneseq
  %v1301 = vshrl.u32 %v1300, 7
  %v1302 = vsub.s32 0, %v1301
  %v1303 = vrot.slane %v543, %v1302
  %v1304 = vlaneseq
  %v1305 = vshrl.u32 %v1304, 7
  %v1306 = vsub.s32 1, %v1305
  %v1307 = vrot.slane %v543, %v1306
  %v1308 = vlaneseq
  %v1309 = vshrl.u32 %v1308, 7
  %v1310 = vsub.s32 2, %v1309
  %v1311 = vrot.slane %v543, %v1310
  %v1312 = vlaneseq
  %v1313 = vshrl.u32 %v1312, 7
  %v1314 = vsub.s32 3, %v1313
  %v1315 = vrot.slane %v543, %v1314
  %v1320 = vadd.f32 %v1252, %v1303
  %v1321 = vadd.f32 %v1254, %v1307
  %v1322 = vadd.f32 %v1293, %v1311
  %v1323 = vadd.f32 %v1295, %v1315
  %v1324 = vxor.u32 %v1320, 2147483648
  %v1325 = vmul.f32 %v1324, 1.442695
  %v1326 = vpow.pop %v1325
  %v1327 = vadd.f32 %v1326, 1.0
  %v1328 = vrcp.pop %v1327
  %v1329 = vmul.f32 1.0, %v1328
  %v1330 = vxor.u32 %v1321, 2147483648
  %v1331 = vmul.f32 %v1330, 1.442695
  %v1332 = vpow.pop %v1331
  %v1333 = vadd.f32 %v1332, 1.0
  %v1334 = vrcp.pop %v1333
  %v1335 = vmul.f32 1.0, %v1334
  %v1336 = vtanh.pop %v1322
  %v1337 = vxor.u32 %v1323, 2147483648
  %v1338 = vmul.f32 %v1337, 1.442695
  %v1339 = vpow.pop %v1338
  %v1340 = vadd.f32 %v1339, 1.0
  %v1341 = vrcp.pop %v1340
  %v1342 = vmul.f32 1.0, %v1341
  %v1343 = vmul.f32 %v1335, 0.0
  %v1344 = vmul.f32 %v1329, %v1336
  %v1345 = vadd.f32 %v1343, %v1344
  %v1346 = vtanh.pop %v1345
  %v1347 = vmul.f32 %v1342, %v1346
  %1348 = vmatprep.subr.bf16.mxu0 %v641
  %1349 = vmatpush1.bf16.msra.mxu0 %v640
  %1350 = vmatprep.subr.bf16.mxu0 %v645
  %1351 = vmatpush1.bf16.msra.mxu0 %v644
  %1352 = vmatprep.subr.bf16.mxu0 %v649
  %1353 = vmatpush1.bf16.msra.mxu0 %v648
  %1354 = vmatprep.subr.bf16.mxu0 %v653
  %1355 = vmatpush1.bf16.msra.mxu0 %v652
  %1356 = vmatprep.subr.bf16.mxu0 %v657
  %1357 = vmatpush1.bf16.msra.mxu0 %v656
  %1358 = vmatprep.subr.bf16.mxu0 %v661
  %1359 = vmatpush1.bf16.msra.mxu0 %v660
  %1360 = vmatprep.subr.bf16.mxu0 %v665
  %1361 = vmatpush1.bf16.msra.mxu0 %v664
  %1362 = vmatprep.subr.bf16.mxu0 %v669
  %1363 = vmatpush1.bf16.msra.mxu0 %v668
  %1364 = vmatprep.subr.bf16.mxu0 0
  %1365 = vmatpush1.bf16.msra.mxu0 0
  %1366 = vmatprep.subr.bf16.mxu0 0
  %1367 = vmatpush1.bf16.msra.mxu0 0
  %1368 = vmatprep.subr.bf16.mxu0 0
  %1369 = vmatpush1.bf16.msra.mxu0 0
  %1370 = vmatprep.subr.bf16.mxu0 0
  %1371 = vmatpush1.bf16.msra.mxu0 0
  %1372 = vmatprep.subr.bf16.mxu0 0
  %1373 = vmatpush1.bf16.msra.mxu0 0
  %1374 = vmatprep.subr.bf16.mxu0 0
  %1375 = vmatpush1.bf16.msra.mxu0 0
  %1376 = vmatprep.subr.bf16.mxu0 0
  %1377 = vmatpush1.bf16.msra.mxu0 0
  %1378 = vmatprep.subr.bf16.mxu0 0
  %1379 = vmatpush1.bf16.msra.mxu0 0
  %1380 = vmatprep.mubr.bf16.mxu0 0
  %1381 = vmatmul.mubr.bf16.gmra.mrb[0].mxu0 %v814
  %v1382 = vpop.f32.mrb[0].mxu0
  %v1383 = vadd.f32 0.0, %v1382
  %v1384 = vpop.f32.mrb[0].mxu0
  %v1385 = vadd.f32 0.0, %v1384
  %v1386 = vpop.f32.mrb[0].mxu0
  %v1387 = vpop.f32.mrb[0].mxu0
  %1388 = vdwg.mxu0
  %1389 = vmatprep.subr.bf16.mxu0 %v643
  %1390 = vmatpush1.bf16.msra.mxu0 %v642
  %1391 = vmatprep.subr.bf16.mxu0 %v647
  %1392 = vmatpush1.bf16.msra.mxu0 %v646
  %1393 = vmatprep.subr.bf16.mxu0 %v651
  %1394 = vmatpush1.bf16.msra.mxu0 %v650
  %1395 = vmatprep.subr.bf16.mxu0 %v655
  %1396 = vmatpush1.bf16.msra.mxu0 %v654
  %1397 = vmatprep.subr.bf16.mxu0 %v659
  %1398 = vmatpush1.bf16.msra.mxu0 %v658
  %1399 = vmatprep.subr.bf16.mxu0 %v663
  %1400 = vmatpush1.bf16.msra.mxu0 %v662
  %1401 = vmatprep.subr.bf16.mxu0 %v667
  %1402 = vmatpush1.bf16.msra.mxu0 %v666
  %1403 = vmatprep.subr.bf16.mxu0 %v671
  %1404 = vmatpush1.bf16.msra.mxu0 %v670
  %1405 = vmatprep.subr.bf16.mxu0 0
  %1406 = vmatpush1.bf16.msra.mxu0 0
  %1407 = vmatprep.subr.bf16.mxu0 0
  %1408 = vmatpush1.bf16.msra.mxu0 0
  %1409 = vmatprep.subr.bf16.mxu0 0
  %1410 = vmatpush1.bf16.msra.mxu0 0
  %1411 = vmatprep.subr.bf16.mxu0 0
  %1412 = vmatpush1.bf16.msra.mxu0 0
  %1413 = vmatprep.subr.bf16.mxu0 0
  %1414 = vmatpush1.bf16.msra.mxu0 0
  %1415 = vmatprep.subr.bf16.mxu0 0
  %1416 = vmatpush1.bf16.msra.mxu0 0
  %1417 = vmatprep.subr.bf16.mxu0 0
  %1418 = vmatpush1.bf16.msra.mxu0 0
  %1419 = vmatprep.subr.bf16.mxu0 0
  %1420 = vmatpush1.bf16.msra.mxu0 0
  %1421 = vmatprep.mubr.bf16.mxu0 0
  %1422 = vmatmul.mubr.bf16.gmra.mrb[0].mxu0 %v814
  %v1423 = vpop.f32.mrb[0].mxu0
  %v1424 = vadd.f32 0.0, %v1423
  %v1425 = vpop.f32.mrb[0].mxu0
  %v1426 = vadd.f32 0.0, %v1425
  %v1427 = vpop.f32.mrb[0].mxu0
  %v1428 = vpop.f32.mrb[0].mxu0
  %1429 = vdwg.mxu0
  %v1430 = vadd.f32 %v340, %v1383
  %v1431 = vadd.f32 %v342, %v1385
  %v1432 = vadd.f32 %v413, %v1424
  %v1433 = vadd.f32 %v415, %v1426
  %v1434 = vxor.u32 %v1430, 2147483648
  %v1435 = vmul.f32 %v1434, 1.442695
  %v1436 = vpow.pop %v1435
  %v1437 = vadd.f32 %v1436, 1.0
  %v1438 = vrcp.pop %v1437
  %v1439 = vmul.f32 1.0, %v1438
  %v1440 = vxor.u32 %v1431, 2147483648
  %v1441 = vmul.f32 %v1440, 1.442695
  %v1442 = vpow.pop %v1441
  %v1443 = vadd.f32 %v1442, 1.0
  %v1444 = vrcp.pop %v1443
  %v1445 = vmul.f32 1.0, %v1444
  %v1446 = vtanh.pop %v1432
  %v1447 = vxor.u32 %v1433, 2147483648
  %v1448 = vmul.f32 %v1447, 1.442695
  %v1449 = vpow.pop %v1448
  %v1450 = vadd.f32 %v1449, 1.0
  %v1451 = vrcp.pop %v1450
  %v1452 = vmul.f32 1.0, %v1451
  %v1453 = vmul.f32 %v1445, %v811
  %v1454 = vmul.f32 %v1439, %v1446
  %v1455 = vadd.f32 %v1453, %v1454
  %v1456 = vtanh.pop %v1455
  %v1457 = vmul.f32 %v1452, %v1456
  %v1458 = vpack.c.bf16 %v1457, %v1457
  %v1459 = vpack.c.bf16 %v1347, %v1347
  %1460 = vmatprep.subr.bf16.mxu0 %v912
  %1461 = vmatpush1.bf16.msra.mxu0 %v911
  %1462 = vmatprep.subr.bf16.mxu0 %v916
  %1463 = vmatpush1.bf16.msra.mxu0 %v915
  %1464 = vmatprep.subr.bf16.mxu0 %v920
  %1465 = vmatpush1.bf16.msra.mxu0 %v919
  %1466 = vmatprep.subr.bf16.mxu0 %v924
  %1467 = vmatpush1.bf16.msra.mxu0 %v923
  %1468 = vmatprep.subr.bf16.mxu0 %v928
  %1469 = vmatpush1.bf16.msra.mxu0 %v927
  %1470 = vmatprep.subr.bf16.mxu0 %v932
  %1471 = vmatpush1.bf16.msra.mxu0 %v931
  %1472 = vmatprep.subr.bf16.mxu0 %v936
  %1473 = vmatpush1.bf16.msra.mxu0 %v935
  %1474 = vmatprep.subr.bf16.mxu0 %v940
  %1475 = vmatpush1.bf16.msra.mxu0 %v939
  %1476 = vmatprep.subr.bf16.mxu0 0
  %1477 = vmatpush1.bf16.msra.mxu0 0
  %1478 = vmatprep.subr.bf16.mxu0 0
  %1479 = vmatpush1.bf16.msra.mxu0 0
  %1480 = vmatprep.subr.bf16.mxu0 0
  %1481 = vmatpush1.bf16.msra.mxu0 0
  %1482 = vmatprep.subr.bf16.mxu0 0
  %1483 = vmatpush1.bf16.msra.mxu0 0
  %1484 = vmatprep.subr.bf16.mxu0 0
  %1485 = vmatpush1.bf16.msra.mxu0 0
  %1486 = vmatprep.subr.bf16.mxu0 0
  %1487 = vmatpush1.bf16.msra.mxu0 0
  %1488 = vmatprep.subr.bf16.mxu0 0
  %1489 = vmatpush1.bf16.msra.mxu0 0
  %1490 = vmatprep.subr.bf16.mxu0 0
  %1491 = vmatpush1.bf16.msra.mxu0 0
  %1492 = vmatprep.mubr.bf16.mxu0 0
  %1493 = vmatmul.mubr.bf16.gmra.mrb[0].mxu0 %v1459
  %v1494 = vpop.f32.mrb[0].mxu0
  %v1495 = vadd.f32 0.0, %v1494
  %v1496 = vpop.f32.mrb[0].mxu0
  %v1497 = vadd.f32 0.0, %v1496
  %v1498 = vpop.f32.mrb[0].mxu0
  %v1499 = vpop.f32.mrb[0].mxu0
  %1500 = vdwg.mxu0
  %1501 = vmatprep.subr.bf16.mxu0 %v914
  %1502 = vmatpush1.bf16.msra.mxu0 %v913
  %1503 = vmatprep.subr.bf16.mxu0 %v918
  %1504 = vmatpush1.bf16.msra.mxu0 %v917
  %1505 = vmatprep.subr.bf16.mxu0 %v922
  %1506 = vmatpush1.bf16.msra.mxu0 %v921
  %1507 = vmatprep.subr.bf16.mxu0 %v926
  %1508 = vmatpush1.bf16.msra.mxu0 %v925
  %1509 = vmatprep.subr.bf16.mxu0 %v930
  %1510 = vmatpush1.bf16.msra.mxu0 %v929
  %1511 = vmatprep.subr.bf16.mxu0 %v934
  %1512 = vmatpush1.bf16.msra.mxu0 %v933
  %1513 = vmatprep.subr.bf16.mxu0 %v938
  %1514 = vmatpush1.bf16.msra.mxu0 %v937
  %1515 = vmatprep.subr.bf16.mxu0 %v942
  %1516 = vmatpush1.bf16.msra.mxu0 %v941
  %1517 = vmatprep.subr.bf16.mxu0 0
  %1518 = vmatpush1.bf16.msra.mxu0 0
  %1519 = vmatprep.subr.bf16.mxu0 0
  %1520 = vmatpush1.bf16.msra.mxu0 0
  %1521 = vmatprep.subr.bf16.mxu0 0
  %1522 = vmatpush1.bf16.msra.mxu0 0
  %1523 = vmatprep.subr.bf16.mxu0 0
  %1524 = vmatpush1.bf16.msra.mxu0 0
  %1525 = vmatprep.subr.bf16.mxu0 0
  %1526 = vmatpush1.bf16.msra.mxu0 0
  %1527 = vmatprep.subr.bf16.mxu0 0
  %1528 = vmatpush1.bf16.msra.mxu0 0
  %1529 = vmatprep.subr.bf16.mxu0 0
  %1530 = vmatpush1.bf16.msra.mxu0 0
  %1531 = vmatprep.subr.bf16.mxu0 0
  %1532 = vmatpush1.bf16.msra.mxu0 0
  %1533 = vmatprep.mubr.bf16.mxu0 0
  %1534 = vmatmul.mubr.bf16.gmra.mrb[0].mxu0 %v1459
  %v1535 = vpop.f32.mrb[0].mxu0
  %v1536 = vadd.f32 0.0, %v1535
  %v1537 = vpop.f32.mrb[0].mxu0
  %v1538 = vadd.f32 0.0, %v1537
  %v1539 = vpop.f32.mrb[0].mxu0
  %v1540 = vpop.f32.mrb[0].mxu0
  %1541 = vdwg.mxu0
  %1542 = vmatprep.subr.bf16.mxu0 %v1154
  %1543 = vmatpush1.bf16.msra.mxu0 %v1153
  %1544 = vmatprep.subr.bf16.mxu0 %v1158
  %1545 = vmatpush1.bf16.msra.mxu0 %v1157
  %1546 = vmatprep.subr.bf16.mxu0 %v1162
  %1547 = vmatpush1.bf16.msra.mxu0 %v1161
  %1548 = vmatprep.subr.bf16.mxu0 %v1166
  %1549 = vmatpush1.bf16.msra.mxu0 %v1165
  %1550 = vmatprep.subr.bf16.mxu0 %v1170
  %1551 = vmatpush1.bf16.msra.mxu0 %v1169
  %1552 = vmatprep.subr.bf16.mxu0 %v1174
  %1553 = vmatpush1.bf16.msra.mxu0 %v1173
  %1554 = vmatprep.subr.bf16.mxu0 %v1178
  %1555 = vmatpush1.bf16.msra.mxu0 %v1177
  %1556 = vmatprep.subr.bf16.mxu0 %v1182
  %1557 = vmatpush1.bf16.msra.mxu0 %v1181
  %1558 = vmatprep.subr.bf16.mxu0 0
  %1559 = vmatpush1.bf16.msra.mxu0 0
  %1560 = vmatprep.subr.bf16.mxu0 0
  %1561 = vmatpush1.bf16.msra.mxu0 0
  %1562 = vmatprep.subr.bf16.mxu0 0
  %1563 = vmatpush1.bf16.msra.mxu0 0
  %1564 = vmatprep.subr.bf16.mxu0 0
  %1565 = vmatpush1.bf16.msra.mxu0 0
  %1566 = vmatprep.subr.bf16.mxu0 0
  %1567 = vmatpush1.bf16.msra.mxu0 0
  %1568 = vmatprep.subr.bf16.mxu0 0
  %1569 = vmatpush1.bf16.msra.mxu0 0
  %1570 = vmatprep.subr.bf16.mxu0 0
  %1571 = vmatpush1.bf16.msra.mxu0 0
  %1572 = vmatprep.subr.bf16.mxu0 0
  %1573 = vmatpush1.bf16.msra.mxu0 0
  %1574 = vmatprep.mubr.bf16.mxu0 0
  %1575 = vmatmul.mubr.bf16.gmra.mrb[0].mxu0 %v1458
  %v1576 = vpop.f32.mrb[0].mxu0
  %v1577 = vadd.f32 %v1495, %v1576
  %v1578 = vpop.f32.mrb[0].mxu0
  %v1579 = vadd.f32 %v1497, %v1578
  %v1580 = vpop.f32.mrb[0].mxu0
  %v1581 = vpop.f32.mrb[0].mxu0
  %1582 = vdwg.mxu0
  %1583 = vmatprep.subr.bf16.mxu0 %v1156
  %1584 = vmatpush1.bf16.msra.mxu0 %v1155
  %1585 = vmatprep.subr.bf16.mxu0 %v1160
  %1586 = vmatpush1.bf16.msra.mxu0 %v1159
  %1587 = vmatprep.subr.bf16.mxu0 %v1164
  %1588 = vmatpush1.bf16.msra.mxu0 %v1163
  %1589 = vmatprep.subr.bf16.mxu0 %v1168
  %1590 = vmatpush1.bf16.msra.mxu0 %v1167
  %1591 = vmatprep.subr.bf16.mxu0 %v1172
  %1592 = vmatpush1.bf16.msra.mxu0 %v1171
  %1593 = vmatprep.subr.bf16.mxu0 %v1176
  %1594 = vmatpush1.bf16.msra.mxu0 %v1175
  %1595 = vmatprep.subr.bf16.mxu0 %v1180
  %1596 = vmatpush1.bf16.msra.mxu0 %v1179
  %1597 = vmatprep.subr.bf16.mxu0 %v1184
  %1598 = vmatpush1.bf16.msra.mxu0 %v1183
  %1599 = vmatprep.subr.bf16.mxu0 0
  %1600 = vmatpush1.bf16.msra.mxu0 0
  %1601 = vmatprep.subr.bf16.mxu0 0
  %1602 = vmatpush1.bf16.msra.mxu0 0
  %1603 = vmatprep.subr.bf16.mxu0 0
  %1604 = vmatpush1.bf16.msra.mxu0 0
  %1605 = vmatprep.subr.bf16.mxu0 0
  %1606 = vmatpush1.bf16.msra.mxu0 0
  %1607 = vmatprep.subr.bf16.mxu0 0
  %1608 = vmatpush1.bf16.msra.mxu0 0
  %1609 = vmatprep.subr.bf16.mxu0 0
  %1610 = vmatpush1.bf16.msra.mxu0 0
  %1611 = vmatprep.subr.bf16.mxu0 0
  %1612 = vmatpush1.bf16.msra.mxu0 0
  %1613 = vmatprep.subr.bf16.mxu0 0
  %1614 = vmatpush1.bf16.msra.mxu0 0
  %1615 = vmatprep.mubr.bf16.mxu0 0
  %1616 = vmatmul.mubr.bf16.gmra.mrb[0].mxu0 %v1458
  %v1617 = vpop.f32.mrb[0].mxu0
  %v1618 = vadd.f32 %v1536, %v1617
  %v1619 = vpop.f32.mrb[0].mxu0
  %v1620 = vadd.f32 %v1538, %v1619
  %v1621 = vpop.f32.mrb[0].mxu0
  %v1622 = vpop.f32.mrb[0].mxu0
  %1623 = vdwg.mxu0
  %v1624 = vadd.f32 %v1577, %v1303
  %v1625 = vadd.f32 %v1579, %v1307
  %v1626 = vadd.f32 %v1618, %v1311
  %v1627 = vadd.f32 %v1620, %v1315
  %v1628 = vxor.u32 %v1624, 2147483648
  %v1629 = vmul.f32 %v1628, 1.442695
  %v1630 = vpow.pop %v1629
  %v1631 = vadd.f32 %v1630, 1.0
  %v1632 = vrcp.pop %v1631
  %v1633 = vmul.f32 1.0, %v1632
  %v1634 = vxor.u32 %v1625, 2147483648
  %v1635 = vmul.f32 %v1634, 1.442695
  %v1636 = vpow.pop %v1635
  %v1637 = vadd.f32 %v1636, 1.0
  %v1638 = vrcp.pop %v1637
  %v1639 = vmul.f32 1.0, %v1638
  %v1640 = vtanh.pop %v1626
  %v1641 = vxor.u32 %v1627, 2147483648
  %v1642 = vmul.f32 %v1641, 1.442695
  %v1643 = vpow.pop %v1642
  %v1644 = vadd.f32 %v1643, 1.0
  %v1645 = vrcp.pop %v1644
  %v1646 = vmul.f32 1.0, %v1645
  %v1647 = vmul.f32 %v1639, %v1345
  %v1648 = vmul.f32 %v1633, %v1640
  %v1649 = vadd.f32 %v1647, %v1648
  %v1650 = vtanh.pop %v1649
  %v1651 = vmul.f32 %v1646, %v1650
  %1652 = vmatprep.subr.bf16.mxu0 %v641
  %1653 = vmatpush1.bf16.msra.mxu0 %v640
  %1654 = vmatprep.subr.bf16.mxu0 %v645
  %1655 = vmatpush1.bf16.msra.mxu0 %v644
  %1656 = vmatprep.subr.bf16.mxu0 %v649
  %1657 = vmatpush1.bf16.msra.mxu0 %v648
  %1658 = vmatprep.subr.bf16.mxu0 %v653
  %1659 = vmatpush1.bf16.msra.mxu0 %v652
  %1660 = vmatprep.subr.bf16.mxu0 %v657
  %1661 = vmatpush1.bf16.msra.mxu0 %v656
  %1662 = vmatprep.subr.bf16.mxu0 %v661
  %1663 = vmatpush1.bf16.msra.mxu0 %v660
  %1664 = vmatprep.subr.bf16.mxu0 %v665
  %1665 = vmatpush1.bf16.msra.mxu0 %v664
  %1666 = vmatprep.subr.bf16.mxu0 %v669
  %1667 = vmatpush1.bf16.msra.mxu0 %v668
  %1668 = vmatprep.subr.bf16.mxu0 0
  %1669 = vmatpush1.bf16.msra.mxu0 0
  %1670 = vmatprep.subr.bf16.mxu0 0
  %1671 = vmatpush1.bf16.msra.mxu0 0
  %1672 = vmatprep.subr.bf16.mxu0 0
  %1673 = vmatpush1.bf16.msra.mxu0 0
  %1674 = vmatprep.subr.bf16.mxu0 0
  %1675 = vmatpush1.bf16.msra.mxu0 0
  %1676 = vmatprep.subr.bf16.mxu0 0
  %1677 = vmatpush1.bf16.msra.mxu0 0
  %1678 = vmatprep.subr.bf16.mxu0 0
  %1679 = vmatpush1.bf16.msra.mxu0 0
  %1680 = vmatprep.subr.bf16.mxu0 0
  %1681 = vmatpush1.bf16.msra.mxu0 0
  %1682 = vmatprep.subr.bf16.mxu0 0
  %1683 = vmatpush1.bf16.msra.mxu0 0
  %1684 = vmatprep.mubr.bf16.mxu0 0
  %1685 = vmatmul.mubr.bf16.gmra.mrb[0].mxu0 %v1458
  %v1686 = vpop.f32.mrb[0].mxu0
  %v1687 = vadd.f32 0.0, %v1686
  %v1688 = vpop.f32.mrb[0].mxu0
  %v1689 = vadd.f32 0.0, %v1688
  %v1690 = vpop.f32.mrb[0].mxu0
  %v1691 = vpop.f32.mrb[0].mxu0
  %1692 = vdwg.mxu0
  %1693 = vmatprep.subr.bf16.mxu0 %v643
  %1694 = vmatpush1.bf16.msra.mxu0 %v642
  %1695 = vmatprep.subr.bf16.mxu0 %v647
  %1696 = vmatpush1.bf16.msra.mxu0 %v646
  %1697 = vmatprep.subr.bf16.mxu0 %v651
  %1698 = vmatpush1.bf16.msra.mxu0 %v650
  %1699 = vmatprep.subr.bf16.mxu0 %v655
  %1700 = vmatpush1.bf16.msra.mxu0 %v654
  %1701 = vmatprep.subr.bf16.mxu0 %v659
  %1702 = vmatpush1.bf16.msra.mxu0 %v658
  %1703 = vmatprep.subr.bf16.mxu0 %v663
  %1704 = vmatpush1.bf16.msra.mxu0 %v662
  %1705 = vmatprep.subr.bf16.mxu0 %v667
  %1706 = vmatpush1.bf16.msra.mxu0 %v666
  %1707 = vmatprep.subr.bf16.mxu0 %v671
  %1708 = vmatpush1.bf16.msra.mxu0 %v670
  %1709 = vmatprep.subr.bf16.mxu0 0
  %1710 = vmatpush1.bf16.msra.mxu0 0
  %1711 = vmatprep.subr.bf16.mxu0 0
  %1712 = vmatpush1.bf16.msra.mxu0 0
  %1713 = vmatprep.subr.bf16.mxu0 0
  %1714 = vmatpush1.bf16.msra.mxu0 0
  %1715 = vmatprep.subr.bf16.mxu0 0
  %1716 = vmatpush1.bf16.msra.mxu0 0
  %1717 = vmatprep.subr.bf16.mxu0 0
  %1718 = vmatpush1.bf16.msra.mxu0 0
  %1719 = vmatprep.subr.bf16.mxu0 0
  %1720 = vmatpush1.bf16.msra.mxu0 0
  %1721 = vmatprep.subr.bf16.mxu0 0
  %1722 = vmatpush1.bf16.msra.mxu0 0
  %1723 = vmatprep.subr.bf16.mxu0 0
  %1724 = vmatpush1.bf16.msra.mxu0 0
  %1725 = vmatprep.mubr.bf16.mxu0 0
  %1726 = vmatmul.mubr.bf16.gmra.mrb[0].mxu0 %v1458
  %v1727 = vpop.f32.mrb[0].mxu0
  %v1728 = vadd.f32 0.0, %v1727
  %v1729 = vpop.f32.mrb[0].mxu0
  %v1730 = vadd.f32 0.0, %v1729
  %v1731 = vpop.f32.mrb[0].mxu0
  %v1732 = vpop.f32.mrb[0].mxu0
  %1733 = vdwg.mxu0
  %v1734 = vadd.f32 %v346, %v1687
  %v1735 = vadd.f32 %v348, %v1689
  %v1736 = vadd.f32 %v419, %v1728
  %v1737 = vadd.f32 %v421, %v1730
  %v1738 = vxor.u32 %v1734, 2147483648
  %v1739 = vmul.f32 %v1738, 1.442695
  %v1740 = vpow.pop %v1739
  %v1741 = vadd.f32 %v1740, 1.0
  %v1742 = vrcp.pop %v1741
  %v1743 = vmul.f32 1.0, %v1742
  %v1744 = vxor.u32 %v1735, 2147483648
  %v1745 = vmul.f32 %v1744, 1.442695
  %v1746 = vpow.pop %v1745
  %v1747 = vadd.f32 %v1746, 1.0
  %v1748 = vrcp.pop %v1747
  %v1749 = vmul.f32 1.0, %v1748
  %v1750 = vtanh.pop %v1736
  %v1751 = vxor.u32 %v1737, 2147483648
  %v1752 = vmul.f32 %v1751, 1.442695
  %v1753 = vpow.pop %v1752
  %v1754 = vadd.f32 %v1753, 1.0
  %v1755 = vrcp.pop %v1754
  %v1756 = vmul.f32 1.0, %v1755
  %v1757 = vmul.f32 %v1749, %v1455
  %v1758 = vmul.f32 %v1743, %v1750
  %v1759 = vadd.f32 %v1757, %v1758
  %v1760 = vtanh.pop %v1759
  %v1761 = vmul.f32 %v1756, %v1760
  %v1762 = vpack.c.bf16 %v1761, %v1761
  %v1763 = vpack.c.bf16 %v1651, %v1651
  %1764 = vmatprep.subr.bf16.mxu0 %v912
  %1765 = vmatpush1.bf16.msra.mxu0 %v911
  %1766 = vmatprep.subr.bf16.mxu0 %v916
  %1767 = vmatpush1.bf16.msra.mxu0 %v915
  %1768 = vmatprep.subr.bf16.mxu0 %v920
  %1769 = vmatpush1.bf16.msra.mxu0 %v919
  %1770 = vmatprep.subr.bf16.mxu0 %v924
  %1771 = vmatpush1.bf16.msra.mxu0 %v923
  %1772 = vmatprep.subr.bf16.mxu0 %v928
  %1773 = vmatpush1.bf16.msra.mxu0 %v927
  %1774 = vmatprep.subr.bf16.mxu0 %v932
  %1775 = vmatpush1.bf16.msra.mxu0 %v931
  %1776 = vmatprep.subr.bf16.mxu0 %v936
  %1777 = vmatpush1.bf16.msra.mxu0 %v935
  %1778 = vmatprep.subr.bf16.mxu0 %v940
  %1779 = vmatpush1.bf16.msra.mxu0 %v939
  %1780 = vmatprep.subr.bf16.mxu0 0
  %1781 = vmatpush1.bf16.msra.mxu0 0
  %1782 = vmatprep.subr.bf16.mxu0 0
  %1783 = vmatpush1.bf16.msra.mxu0 0
  %1784 = vmatprep.subr.bf16.mxu0 0
  %1785 = vmatpush1.bf16.msra.mxu0 0
  %1786 = vmatprep.subr.bf16.mxu0 0
  %1787 = vmatpush1.bf16.msra.mxu0 0
  %1788 = vmatprep.subr.bf16.mxu0 0
  %1789 = vmatpush1.bf16.msra.mxu0 0
  %1790 = vmatprep.subr.bf16.mxu0 0
  %1791 = vmatpush1.bf16.msra.mxu0 0
  %1792 = vmatprep.subr.bf16.mxu0 0
  %1793 = vmatpush1.bf16.msra.mxu0 0
  %1794 = vmatprep.subr.bf16.mxu0 0
  %1795 = vmatpush1.bf16.msra.mxu0 0
  %1796 = vmatprep.mubr.bf16.mxu0 0
  %1797 = vmatmul.mubr.bf16.gmra.mrb[0].mxu0 %v1763
  %v1798 = vpop.f32.mrb[0].mxu0
  %v1799 = vadd.f32 0.0, %v1798
  %v1800 = vpop.f32.mrb[0].mxu0
  %v1801 = vadd.f32 0.0, %v1800
  %v1802 = vpop.f32.mrb[0].mxu0
  %v1803 = vpop.f32.mrb[0].mxu0
  %1804 = vdwg.mxu0
  %1805 = vmatprep.subr.bf16.mxu0 %v914
  %1806 = vmatpush1.bf16.msra.mxu0 %v913
  %1807 = vmatprep.subr.bf16.mxu0 %v918
  %1808 = vmatpush1.bf16.msra.mxu0 %v917
  %1809 = vmatprep.subr.bf16.mxu0 %v922
  %1810 = vmatpush1.bf16.msra.mxu0 %v921
  %1811 = vmatprep.subr.bf16.mxu0 %v926
  %1812 = vmatpush1.bf16.msra.mxu0 %v925
  %1813 = vmatprep.subr.bf16.mxu0 %v930
  %1814 = vmatpush1.bf16.msra.mxu0 %v929
  %1815 = vmatprep.subr.bf16.mxu0 %v934
  %1816 = vmatpush1.bf16.msra.mxu0 %v933
  %1817 = vmatprep.subr.bf16.mxu0 %v938
  %1818 = vmatpush1.bf16.msra.mxu0 %v937
  %1819 = vmatprep.subr.bf16.mxu0 %v942
  %1820 = vmatpush1.bf16.msra.mxu0 %v941
  %1821 = vmatprep.subr.bf16.mxu0 0
  %1822 = vmatpush1.bf16.msra.mxu0 0
  %1823 = vmatprep.subr.bf16.mxu0 0
  %1824 = vmatpush1.bf16.msra.mxu0 0
  %1825 = vmatprep.subr.bf16.mxu0 0
  %1826 = vmatpush1.bf16.msra.mxu0 0
  %1827 = vmatprep.subr.bf16.mxu0 0
  %1828 = vmatpush1.bf16.msra.mxu0 0
  %1829 = vmatprep.subr.bf16.mxu0 0
  %1830 = vmatpush1.bf16.msra.mxu0 0
  %1831 = vmatprep.subr.bf16.mxu0 0
  %1832 = vmatpush1.bf16.msra.mxu0 0
  %1833 = vmatprep.subr.bf16.mxu0 0
  %1834 = vmatpush1.bf16.msra.mxu0 0
  %1835 = vmatprep.subr.bf16.mxu0 0
  %1836 = vmatpush1.bf16.msra.mxu0 0
  %1837 = vmatprep.mubr.bf16.mxu0 0
  %1838 = vmatmul.mubr.bf16.gmra.mrb[0].mxu0 %v1763
  %v1839 = vpop.f32.mrb[0].mxu0
  %v1840 = vadd.f32 0.0, %v1839
  %v1841 = vpop.f32.mrb[0].mxu0
  %v1842 = vadd.f32 0.0, %v1841
  %v1843 = vpop.f32.mrb[0].mxu0
  %v1844 = vpop.f32.mrb[0].mxu0
  %1845 = vdwg.mxu0
  %1846 = vmatprep.subr.bf16.mxu0 %v1154
  %1847 = vmatpush1.bf16.msra.mxu0 %v1153
  %1848 = vmatprep.subr.bf16.mxu0 %v1158
  %1849 = vmatpush1.bf16.msra.mxu0 %v1157
  %1850 = vmatprep.subr.bf16.mxu0 %v1162
  %1851 = vmatpush1.bf16.msra.mxu0 %v1161
  %1852 = vmatprep.subr.bf16.mxu0 %v1166
  %1853 = vmatpush1.bf16.msra.mxu0 %v1165
  %1854 = vmatprep.subr.bf16.mxu0 %v1170
  %1855 = vmatpush1.bf16.msra.mxu0 %v1169
  %1856 = vmatprep.subr.bf16.mxu0 %v1174
  %1857 = vmatpush1.bf16.msra.mxu0 %v1173
  %1858 = vmatprep.subr.bf16.mxu0 %v1178
  %1859 = vmatpush1.bf16.msra.mxu0 %v1177
  %1860 = vmatprep.subr.bf16.mxu0 %v1182
  %1861 = vmatpush1.bf16.msra.mxu0 %v1181
  %1862 = vmatprep.subr.bf16.mxu0 0
  %1863 = vmatpush1.bf16.msra.mxu0 0
  %1864 = vmatprep.subr.bf16.mxu0 0
  %1865 = vmatpush1.bf16.msra.mxu0 0
  %1866 = vmatprep.subr.bf16.mxu0 0
  %1867 = vmatpush1.bf16.msra.mxu0 0
  %1868 = vmatprep.subr.bf16.mxu0 0
  %1869 = vmatpush1.bf16.msra.mxu0 0
  %1870 = vmatprep.subr.bf16.mxu0 0
  %1871 = vmatpush1.bf16.msra.mxu0 0
  %1872 = vmatprep.subr.bf16.mxu0 0
  %1873 = vmatpush1.bf16.msra.mxu0 0
  %1874 = vmatprep.subr.bf16.mxu0 0
  %1875 = vmatpush1.bf16.msra.mxu0 0
  %1876 = vmatprep.subr.bf16.mxu0 0
  %1877 = vmatpush1.bf16.msra.mxu0 0
  %1878 = vmatprep.mubr.bf16.mxu0 0
  %1879 = vmatmul.mubr.bf16.gmra.mrb[0].mxu0 %v1762
  %v1880 = vpop.f32.mrb[0].mxu0
  %v1881 = vadd.f32 %v1799, %v1880
  %v1882 = vpop.f32.mrb[0].mxu0
  %v1883 = vadd.f32 %v1801, %v1882
  %v1884 = vpop.f32.mrb[0].mxu0
  %v1885 = vpop.f32.mrb[0].mxu0
  %1886 = vdwg.mxu0
  %1887 = vmatprep.subr.bf16.mxu0 %v1156
  %1888 = vmatpush1.bf16.msra.mxu0 %v1155
  %1889 = vmatprep.subr.bf16.mxu0 %v1160
  %1890 = vmatpush1.bf16.msra.mxu0 %v1159
  %1891 = vmatprep.subr.bf16.mxu0 %v1164
  %1892 = vmatpush1.bf16.msra.mxu0 %v1163
  %1893 = vmatprep.subr.bf16.mxu0 %v1168
  %1894 = vmatpush1.bf16.msra.mxu0 %v1167
  %1895 = vmatprep.subr.bf16.mxu0 %v1172
  %1896 = vmatpush1.bf16.msra.mxu0 %v1171
  %1897 = vmatprep.subr.bf16.mxu0 %v1176
  %1898 = vmatpush1.bf16.msra.mxu0 %v1175
  %1899 = vmatprep.subr.bf16.mxu0 %v1180
  %1900 = vmatpush1.bf16.msra.mxu0 %v1179
  %1901 = vmatprep.subr.bf16.mxu0 %v1184
  %1902 = vmatpush1.bf16.msra.mxu0 %v1183
  %1903 = vmatprep.subr.bf16.mxu0 0
  %1904 = vmatpush1.bf16.msra.mxu0 0
  %1905 = vmatprep.subr.bf16.mxu0 0
  %1906 = vmatpush1.bf16.msra.mxu0 0
  %1907 = vmatprep.subr.bf16.mxu0 0
  %1908 = vmatpush1.bf16.msra.mxu0 0
  %1909 = vmatprep.subr.bf16.mxu0 0
  %1910 = vmatpush1.bf16.msra.mxu0 0
  %1911 = vmatprep.subr.bf16.mxu0 0
  %1912 = vmatpush1.bf16.msra.mxu0 0
  %1913 = vmatprep.subr.bf16.mxu0 0
  %1914 = vmatpush1.bf16.msra.mxu0 0
  %1915 = vmatprep.subr.bf16.mxu0 0
  %1916 = vmatpush1.bf16.msra.mxu0 0
  %1917 = vmatprep.subr.bf16.mxu0 0
  %1918 = vmatpush1.bf16.msra.mxu0 0
  %1919 = vmatprep.mubr.bf16.mxu0 0
  %1920 = vmatmul.mubr.bf16.gmra.mrb[0].mxu0 %v1762
  %v1921 = vpop.f32.mrb[0].mxu0
  %v1922 = vadd.f32 %v1840, %v1921
  %v1923 = vpop.f32.mrb[0].mxu0
  %v1924 = vadd.f32 %v1842, %v1923
  %v1925 = vpop.f32.mrb[0].mxu0
  %v1926 = vpop.f32.mrb[0].mxu0
  %1927 = vdwg.mxu0
  %v1928 = vadd.f32 %v1881, %v1303
  %v1929 = vadd.f32 %v1883, %v1307
  %v1930 = vadd.f32 %v1922, %v1311
  %v1931 = vadd.f32 %v1924, %v1315
  %v1932 = vxor.u32 %v1928, 2147483648
  %v1933 = vmul.f32 %v1932, 1.442695
  %v1934 = vpow.pop %v1933
  %v1935 = vadd.f32 %v1934, 1.0
  %v1936 = vrcp.pop %v1935
  %v1937 = vmul.f32 1.0, %v1936
  %v1938 = vxor.u32 %v1929, 2147483648
  %v1939 = vmul.f32 %v1938, 1.442695
  %v1940 = vpow.pop %v1939
  %v1941 = vadd.f32 %v1940, 1.0
  %v1942 = vrcp.pop %v1941
  %v1943 = vmul.f32 1.0, %v1942
  %v1944 = vtanh.pop %v1930
  %v1945 = vxor.u32 %v1931, 2147483648
  %v1946 = vmul.f32 %v1945, 1.442695
  %v1947 = vpow.pop %v1946
  %v1948 = vadd.f32 %v1947, 1.0
  %v1949 = vrcp.pop %v1948
  %v1950 = vmul.f32 1.0, %v1949
  %v1951 = vmul.f32 %v1943, %v1649
  %v1952 = vmul.f32 %v1937, %v1944
  %v1953 = vadd.f32 %v1951, %v1952
  %v1954 = vtanh.pop %v1953
  %v1955 = vmul.f32 %v1950, %v1954
  %1956 = vmatprep.subr.bf16.mxu0 %v641
  %1957 = vmatpush1.bf16.msra.mxu0 %v640
  %1958 = vmatprep.subr.bf16.mxu0 %v645
  %1959 = vmatpush1.bf16.msra.mxu0 %v644
  %1960 = vmatprep.subr.bf16.mxu0 %v649
  %1961 = vmatpush1.bf16.msra.mxu0 %v648
  %1962 = vmatprep.subr.bf16.mxu0 %v653
  %1963 = vmatpush1.bf16.msra.mxu0 %v652
  %1964 = vmatprep.subr.bf16.mxu0 %v657
  %1965 = vmatpush1.bf16.msra.mxu0 %v656
  %1966 = vmatprep.subr.bf16.mxu0 %v661
  %1967 = vmatpush1.bf16.msra.mxu0 %v660
  %1968 = vmatprep.subr.bf16.mxu0 %v665
  %1969 = vmatpush1.bf16.msra.mxu0 %v664
  %1970 = vmatprep.subr.bf16.mxu0 %v669
  %1971 = vmatpush1.bf16.msra.mxu0 %v668
  %1972 = vmatprep.subr.bf16.mxu0 0
  %1973 = vmatpush1.bf16.msra.mxu0 0
  %1974 = vmatprep.subr.bf16.mxu0 0
  %1975 = vmatpush1.bf16.msra.mxu0 0
  %1976 = vmatprep.subr.bf16.mxu0 0
  %1977 = vmatpush1.bf16.msra.mxu0 0
  %1978 = vmatprep.subr.bf16.mxu0 0
  %1979 = vmatpush1.bf16.msra.mxu0 0
  %1980 = vmatprep.subr.bf16.mxu0 0
  %1981 = vmatpush1.bf16.msra.mxu0 0
  %1982 = vmatprep.subr.bf16.mxu0 0
  %1983 = vmatpush1.bf16.msra.mxu0 0
  %1984 = vmatprep.subr.bf16.mxu0 0
  %1985 = vmatpush1.bf16.msra.mxu0 0
  %1986 = vmatprep.subr.bf16.mxu0 0
  %1987 = vmatpush1.bf16.msra.mxu0 0
  %1988 = vmatprep.mubr.bf16.mxu0 0
  %1989 = vmatmul.mubr.bf16.gmra.mrb[0].mxu0 %v1762
  %v1990 = vpop.f32.mrb[0].mxu0
  %v1991 = vadd.f32 0.0, %v1990
  %v1992 = vpop.f32.mrb[0].mxu0
  %v1993 = vadd.f32 0.0, %v1992
  %v1994 = vpop.f32.mrb[0].mxu0
  %v1995 = vpop.f32.mrb[0].mxu0
  %1996 = vdwg.mxu0
  %1997 = vmatprep.subr.bf16.mxu0 %v643
  %1998 = vmatpush1.bf16.msra.mxu0 %v642
  %1999 = vmatprep.subr.bf16.mxu0 %v647
  %2000 = vmatpush1.bf16.msra.mxu0 %v646
  %2001 = vmatprep.subr.bf16.mxu0 %v651
  %2002 = vmatpush1.bf16.msra.mxu0 %v650
  %2003 = vmatprep.subr.bf16.mxu0 %v655
  %2004 = vmatpush1.bf16.msra.mxu0 %v654
  %2005 = vmatprep.subr.bf16.mxu0 %v659
  %2006 = vmatpush1.bf16.msra.mxu0 %v658
  %2007 = vmatprep.subr.bf16.mxu0 %v663
  %2008 = vmatpush1.bf16.msra.mxu0 %v662
  %2009 = vmatprep.subr.bf16.mxu0 %v667
  %2010 = vmatpush1.bf16.msra.mxu0 %v666
  %2011 = vmatprep.subr.bf16.mxu0 %v671
  %2012 = vmatpush1.bf16.msra.mxu0 %v670
  %2013 = vmatprep.subr.bf16.mxu0 0
  %2014 = vmatpush1.bf16.msra.mxu0 0
  %2015 = vmatprep.subr.bf16.mxu0 0
  %2016 = vmatpush1.bf16.msra.mxu0 0
  %2017 = vmatprep.subr.bf16.mxu0 0
  %2018 = vmatpush1.bf16.msra.mxu0 0
  %2019 = vmatprep.subr.bf16.mxu0 0
  %2020 = vmatpush1.bf16.msra.mxu0 0
  %2021 = vmatprep.subr.bf16.mxu0 0
  %2022 = vmatpush1.bf16.msra.mxu0 0
  %2023 = vmatprep.subr.bf16.mxu0 0
  %2024 = vmatpush1.bf16.msra.mxu0 0
  %2025 = vmatprep.subr.bf16.mxu0 0
  %2026 = vmatpush1.bf16.msra.mxu0 0
  %2027 = vmatprep.subr.bf16.mxu0 0
  %2028 = vmatpush1.bf16.msra.mxu0 0
  %2029 = vmatprep.mubr.bf16.mxu0 0
  %2030 = vmatmul.mubr.bf16.gmra.mrb[0].mxu0 %v1762
  %v2031 = vpop.f32.mrb[0].mxu0
  %v2032 = vadd.f32 0.0, %v2031
  %v2033 = vpop.f32.mrb[0].mxu0
  %v2034 = vadd.f32 0.0, %v2033
  %v2035 = vpop.f32.mrb[0].mxu0
  %v2036 = vpop.f32.mrb[0].mxu0
  %2037 = vdwg.mxu0
  %v2038 = vadd.f32 %v350, %v1991
  %v2039 = vadd.f32 %v352, %v1993
  %v2040 = vadd.f32 %v423, %v2032
  %v2041 = vadd.f32 %v425, %v2034
  %v2042 = vxor.u32 %v2038, 2147483648
  %v2043 = vmul.f32 %v2042, 1.442695
  %v2044 = vpow.pop %v2043
  %v2045 = vadd.f32 %v2044, 1.0
  %v2046 = vrcp.pop %v2045
  %v2047 = vmul.f32 1.0, %v2046
  %v2048 = vxor.u32 %v2039, 2147483648
  %v2049 = vmul.f32 %v2048, 1.442695
  %v2050 = vpow.pop %v2049
  %v2051 = vadd.f32 %v2050, 1.0
  %v2052 = vrcp.pop %v2051
  %v2053 = vmul.f32 1.0, %v2052
  %v2054 = vtanh.pop %v2040
  %v2055 = vxor.u32 %v2041, 2147483648
  %v2056 = vmul.f32 %v2055, 1.442695
  %v2057 = vpow.pop %v2056
  %v2058 = vadd.f32 %v2057, 1.0
  %v2059 = vrcp.pop %v2058
  %v2060 = vmul.f32 1.0, %v2059
  %v2061 = vmul.f32 %v2053, %v1759
  %v2062 = vmul.f32 %v2047, %v2054
  %v2063 = vadd.f32 %v2061, %v2062
  %v2064 = vtanh.pop %v2063
  %v2065 = vmul.f32 %v2060, %v2064
  %v2066 = vpack.c.bf16 %v2065, %v2065
  %v2067 = vpack.c.bf16 %v1955, %v1955
  %2068 = vmatprep.subr.bf16.mxu0 %v912
  %2069 = vmatpush1.bf16.msra.mxu0 %v911
  %2070 = vmatprep.subr.bf16.mxu0 %v916
  %2071 = vmatpush1.bf16.msra.mxu0 %v915
  %2072 = vmatprep.subr.bf16.mxu0 %v920
  %2073 = vmatpush1.bf16.msra.mxu0 %v919
  %2074 = vmatprep.subr.bf16.mxu0 %v924
  %2075 = vmatpush1.bf16.msra.mxu0 %v923
  %2076 = vmatprep.subr.bf16.mxu0 %v928
  %2077 = vmatpush1.bf16.msra.mxu0 %v927
  %2078 = vmatprep.subr.bf16.mxu0 %v932
  %2079 = vmatpush1.bf16.msra.mxu0 %v931
  %2080 = vmatprep.subr.bf16.mxu0 %v936
  %2081 = vmatpush1.bf16.msra.mxu0 %v935
  %2082 = vmatprep.subr.bf16.mxu0 %v940
  %2083 = vmatpush1.bf16.msra.mxu0 %v939
  %2084 = vmatprep.subr.bf16.mxu0 0
  %2085 = vmatpush1.bf16.msra.mxu0 0
  %2086 = vmatprep.subr.bf16.mxu0 0
  %2087 = vmatpush1.bf16.msra.mxu0 0
  %2088 = vmatprep.subr.bf16.mxu0 0
  %2089 = vmatpush1.bf16.msra.mxu0 0
  %2090 = vmatprep.subr.bf16.mxu0 0
  %2091 = vmatpush1.bf16.msra.mxu0 0
  %2092 = vmatprep.subr.bf16.mxu0 0
  %2093 = vmatpush1.bf16.msra.mxu0 0
  %2094 = vmatprep.subr.bf16.mxu0 0
  %2095 = vmatpush1.bf16.msra.mxu0 0
  %2096 = vmatprep.subr.bf16.mxu0 0
  %2097 = vmatpush1.bf16.msra.mxu0 0
  %2098 = vmatprep.subr.bf16.mxu0 0
  %2099 = vmatpush1.bf16.msra.mxu0 0
  %2100 = vmatprep.mubr.bf16.mxu0 0
  %2101 = vmatmul.mubr.bf16.gmra.mrb[0].mxu0 %v2067
  %v2102 = vpop.f32.mrb[0].mxu0
  %v2103 = vadd.f32 0.0, %v2102
  %v2104 = vpop.f32.mrb[0].mxu0
  %v2105 = vadd.f32 0.0, %v2104
  %v2106 = vpop.f32.mrb[0].mxu0
  %v2107 = vpop.f32.mrb[0].mxu0
  %2108 = vdwg.mxu0
  %2109 = vmatprep.subr.bf16.mxu0 %v914
  %2110 = vmatpush1.bf16.msra.mxu0 %v913
  %2111 = vmatprep.subr.bf16.mxu0 %v918
  %2112 = vmatpush1.bf16.msra.mxu0 %v917
  %2113 = vmatprep.subr.bf16.mxu0 %v922
  %2114 = vmatpush1.bf16.msra.mxu0 %v921
  %2115 = vmatprep.subr.bf16.mxu0 %v926
  %2116 = vmatpush1.bf16.msra.mxu0 %v925
  %2117 = vmatprep.subr.bf16.mxu0 %v930
  %2118 = vmatpush1.bf16.msra.mxu0 %v929
  %2119 = vmatprep.subr.bf16.mxu0 %v934
  %2120 = vmatpush1.bf16.msra.mxu0 %v933
  %2121 = vmatprep.subr.bf16.mxu0 %v938
  %2122 = vmatpush1.bf16.msra.mxu0 %v937
  %2123 = vmatprep.subr.bf16.mxu0 %v942
  %2124 = vmatpush1.bf16.msra.mxu0 %v941
  %2125 = vmatprep.subr.bf16.mxu0 0
  %2126 = vmatpush1.bf16.msra.mxu0 0
  %2127 = vmatprep.subr.bf16.mxu0 0
  %2128 = vmatpush1.bf16.msra.mxu0 0
  %2129 = vmatprep.subr.bf16.mxu0 0
  %2130 = vmatpush1.bf16.msra.mxu0 0
  %2131 = vmatprep.subr.bf16.mxu0 0
  %2132 = vmatpush1.bf16.msra.mxu0 0
  %2133 = vmatprep.subr.bf16.mxu0 0
  %2134 = vmatpush1.bf16.msra.mxu0 0
  %2135 = vmatprep.subr.bf16.mxu0 0
  %2136 = vmatpush1.bf16.msra.mxu0 0
  %2137 = vmatprep.subr.bf16.mxu0 0
  %2138 = vmatpush1.bf16.msra.mxu0 0
  %2139 = vmatprep.subr.bf16.mxu0 0
  %2140 = vmatpush1.bf16.msra.mxu0 0
  %2141 = vmatprep.mubr.bf16.mxu0 0
  %2142 = vmatmul.mubr.bf16.gmra.mrb[0].mxu0 %v2067
  %v2143 = vpop.f32.mrb[0].mxu0
  %v2144 = vadd.f32 0.0, %v2143
  %v2145 = vpop.f32.mrb[0].mxu0
  %v2146 = vadd.f32 0.0, %v2145
  %v2147 = vpop.f32.mrb[0].mxu0
  %v2148 = vpop.f32.mrb[0].mxu0
  %2149 = vdwg.mxu0
  %2150 = vmatprep.subr.bf16.mxu0 %v1154
  %2151 = vmatpush1.bf16.msra.mxu0 %v1153
  %2152 = vmatprep.subr.bf16.mxu0 %v1158
  %2153 = vmatpush1.bf16.msra.mxu0 %v1157
  %2154 = vmatprep.subr.bf16.mxu0 %v1162
  %2155 = vmatpush1.bf16.msra.mxu0 %v1161
  %2156 = vmatprep.subr.bf16.mxu0 %v1166
  %2157 = vmatpush1.bf16.msra.mxu0 %v1165
  %2158 = vmatprep.subr.bf16.mxu0 %v1170
  %2159 = vmatpush1.bf16.msra.mxu0 %v1169
  %2160 = vmatprep.subr.bf16.mxu0 %v1174
  %2161 = vmatpush1.bf16.msra.mxu0 %v1173
  %2162 = vmatprep.subr.bf16.mxu0 %v1178
  %2163 = vmatpush1.bf16.msra.mxu0 %v1177
  %2164 = vmatprep.subr.bf16.mxu0 %v1182
  %2165 = vmatpush1.bf16.msra.mxu0 %v1181
  %2166 = vmatprep.subr.bf16.mxu0 0
  %2167 = vmatpush1.bf16.msra.mxu0 0
  %2168 = vmatprep.subr.bf16.mxu0 0
  %2169 = vmatpush1.bf16.msra.mxu0 0
  %2170 = vmatprep.subr.bf16.mxu0 0
  %2171 = vmatpush1.bf16.msra.mxu0 0
  %2172 = vmatprep.subr.bf16.mxu0 0
  %2173 = vmatpush1.bf16.msra.mxu0 0
  %2174 = vmatprep.subr.bf16.mxu0 0
  %2175 = vmatpush1.bf16.msra.mxu0 0
  %2176 = vmatprep.subr.bf16.mxu0 0
  %2177 = vmatpush1.bf16.msra.mxu0 0
  %2178 = vmatprep.subr.bf16.mxu0 0
  %2179 = vmatpush1.bf16.msra.mxu0 0
  %2180 = vmatprep.subr.bf16.mxu0 0
  %2181 = vmatpush1.bf16.msra.mxu0 0
  %2182 = vmatprep.mubr.bf16.mxu0 0
  %2183 = vmatmul.mubr.bf16.gmra.mrb[0].mxu0 %v2066
  %v2184 = vpop.f32.mrb[0].mxu0
  %v2185 = vadd.f32 %v2103, %v2184
  %v2186 = vpop.f32.mrb[0].mxu0
  %v2187 = vadd.f32 %v2105, %v2186
  %v2188 = vpop.f32.mrb[0].mxu0
  %v2189 = vpop.f32.mrb[0].mxu0
  %2190 = vdwg.mxu0
  %2191 = vmatprep.subr.bf16.mxu0 %v1156
  %2192 = vmatpush1.bf16.msra.mxu0 %v1155
  %2193 = vmatprep.subr.bf16.mxu0 %v1160
  %2194 = vmatpush1.bf16.msra.mxu0 %v1159
  %2195 = vmatprep.subr.bf16.mxu0 %v1164
  %2196 = vmatpush1.bf16.msra.mxu0 %v1163
  %2197 = vmatprep.subr.bf16.mxu0 %v1168
  %2198 = vmatpush1.bf16.msra.mxu0 %v1167
  %2199 = vmatprep.subr.bf16.mxu0 %v1172
  %2200 = vmatpush1.bf16.msra.mxu0 %v1171
  %2201 = vmatprep.subr.bf16.mxu0 %v1176
  %2202 = vmatpush1.bf16.msra.mxu0 %v1175
  %2203 = vmatprep.subr.bf16.mxu0 %v1180
  %2204 = vmatpush1.bf16.msra.mxu0 %v1179
  %2205 = vmatprep.subr.bf16.mxu0 %v1184
  %2206 = vmatpush1.bf16.msra.mxu0 %v1183
  %2207 = vmatprep.subr.bf16.mxu0 0
  %2208 = vmatpush1.bf16.msra.mxu0 0
  %2209 = vmatprep.subr.bf16.mxu0 0
  %2210 = vmatpush1.bf16.msra.mxu0 0
  %2211 = vmatprep.subr.bf16.mxu0 0
  %2212 = vmatpush1.bf16.msra.mxu0 0
  %2213 = vmatprep.subr.bf16.mxu0 0
  %2214 = vmatpush1.bf16.msra.mxu0 0
  %2215 = vmatprep.subr.bf16.mxu0 0
  %2216 = vmatpush1.bf16.msra.mxu0 0
  %2217 = vmatprep.subr.bf16.mxu0 0
  %2218 = vmatpush1.bf16.msra.mxu0 0
  %2219 = vmatprep.subr.bf16.mxu0 0
  %2220 = vmatpush1.bf16.msra.mxu0 0
  %2221 = vmatprep.subr.bf16.mxu0 0
  %2222 = vmatpush1.bf16.msra.mxu0 0
  %2223 = vmatprep.mubr.bf16.mxu0 0
  %2224 = vmatmul.mubr.bf16.gmra.mrb[0].mxu0 %v2066
  %v2225 = vpop.f32.mrb[0].mxu0
  %v2226 = vadd.f32 %v2144, %v2225
  %v2227 = vpop.f32.mrb[0].mxu0
  %v2228 = vadd.f32 %v2146, %v2227
  %v2229 = vpop.f32.mrb[0].mxu0
  %v2230 = vpop.f32.mrb[0].mxu0
  %2231 = vdwg.mxu0
  %v2232 = vadd.f32 %v2185, %v1303
  %v2233 = vadd.f32 %v2187, %v1307
  %v2234 = vadd.f32 %v2226, %v1311
  %v2235 = vadd.f32 %v2228, %v1315
  %v2236 = vxor.u32 %v2232, 2147483648
  %v2237 = vmul.f32 %v2236, 1.442695
  %v2238 = vpow.pop %v2237
  %v2239 = vadd.f32 %v2238, 1.0
  %v2240 = vrcp.pop %v2239
  %v2241 = vmul.f32 1.0, %v2240
  %v2242 = vxor.u32 %v2233, 2147483648
  %v2243 = vmul.f32 %v2242, 1.442695
  %v2244 = vpow.pop %v2243
  %v2245 = vadd.f32 %v2244, 1.0
  %v2246 = vrcp.pop %v2245
  %v2247 = vmul.f32 1.0, %v2246
  %v2248 = vtanh.pop %v2234
  %v2249 = vxor.u32 %v2235, 2147483648
  %v2250 = vmul.f32 %v2249, 1.442695
  %v2251 = vpow.pop %v2250
  %v2252 = vadd.f32 %v2251, 1.0
  %v2253 = vrcp.pop %v2252
  %v2254 = vmul.f32 1.0, %v2253
  %v2255 = vmul.f32 %v2247, %v1953
  %v2256 = vmul.f32 %v2241, %v2248
  %v2257 = vadd.f32 %v2255, %v2256
  %v2258 = vtanh.pop %v2257
  %v2259 = vmul.f32 %v2254, %v2258
  %2260 = vmatprep.subr.bf16.mxu0 %v641
  %2261 = vmatpush1.bf16.msra.mxu0 %v640
  %2262 = vmatprep.subr.bf16.mxu0 %v645
  %2263 = vmatpush1.bf16.msra.mxu0 %v644
  %2264 = vmatprep.subr.bf16.mxu0 %v649
  %2265 = vmatpush1.bf16.msra.mxu0 %v648
  %2266 = vmatprep.subr.bf16.mxu0 %v653
  %2267 = vmatpush1.bf16.msra.mxu0 %v652
  %2268 = vmatprep.subr.bf16.mxu0 %v657
  %2269 = vmatpush1.bf16.msra.mxu0 %v656
  %2270 = vmatprep.subr.bf16.mxu0 %v661
  %2271 = vmatpush1.bf16.msra.mxu0 %v660
  %2272 = vmatprep.subr.bf16.mxu0 %v665
  %2273 = vmatpush1.bf16.msra.mxu0 %v664
  %2274 = vmatprep.subr.bf16.mxu0 %v669
  %2275 = vmatpush1.bf16.msra.mxu0 %v668
  %2276 = vmatprep.subr.bf16.mxu0 0
  %2277 = vmatpush1.bf16.msra.mxu0 0
  %2278 = vmatprep.subr.bf16.mxu0 0
  %2279 = vmatpush1.bf16.msra.mxu0 0
  %2280 = vmatprep.subr.bf16.mxu0 0
  %2281 = vmatpush1.bf16.msra.mxu0 0
  %2282 = vmatprep.subr.bf16.mxu0 0
  %2283 = vmatpush1.bf16.msra.mxu0 0
  %2284 = vmatprep.subr.bf16.mxu0 0
  %2285 = vmatpush1.bf16.msra.mxu0 0
  %2286 = vmatprep.subr.bf16.mxu0 0
  %2287 = vmatpush1.bf16.msra.mxu0 0
  %2288 = vmatprep.subr.bf16.mxu0 0
  %2289 = vmatpush1.bf16.msra.mxu0 0
  %2290 = vmatprep.subr.bf16.mxu0 0
  %2291 = vmatpush1.bf16.msra.mxu0 0
  %2292 = vmatprep.mubr.bf16.mxu0 0
  %2293 = vmatmul.mubr.bf16.gmra.mrb[0].mxu0 %v2066
  %v2294 = vpop.f32.mrb[0].mxu0
  %v2295 = vadd.f32 0.0, %v2294
  %v2296 = vpop.f32.mrb[0].mxu0
  %v2297 = vadd.f32 0.0, %v2296
  %v2298 = vpop.f32.mrb[0].mxu0
  %v2299 = vpop.f32.mrb[0].mxu0
  %2300 = vdwg.mxu0
  %2301 = vmatprep.subr.bf16.mxu0 %v643
  %2302 = vmatpush1.bf16.msra.mxu0 %v642
  %2303 = vmatprep.subr.bf16.mxu0 %v647
  %2304 = vmatpush1.bf16.msra.mxu0 %v646
  %2305 = vmatprep.subr.bf16.mxu0 %v651
  %2306 = vmatpush1.bf16.msra.mxu0 %v650
  %2307 = vmatprep.subr.bf16.mxu0 %v655
  %2308 = vmatpush1.bf16.msra.mxu0 %v654
  %2309 = vmatprep.subr.bf16.mxu0 %v659
  %2310 = vmatpush1.bf16.msra.mxu0 %v658
  %2311 = vmatprep.subr.bf16.mxu0 %v663
  %2312 = vmatpush1.bf16.msra.mxu0 %v662
  %2313 = vmatprep.subr.bf16.mxu0 %v667
  %2314 = vmatpush1.bf16.msra.mxu0 %v666
  %2315 = vmatprep.subr.bf16.mxu0 %v671
  %2316 = vmatpush1.bf16.msra.mxu0 %v670
  %2317 = vmatprep.subr.bf16.mxu0 0
  %2318 = vmatpush1.bf16.msra.mxu0 0
  %2319 = vmatprep.subr.bf16.mxu0 0
  %2320 = vmatpush1.bf16.msra.mxu0 0
  %2321 = vmatprep.subr.bf16.mxu0 0
  %2322 = vmatpush1.bf16.msra.mxu0 0
  %2323 = vmatprep.subr.bf16.mxu0 0
  %2324 = vmatpush1.bf16.msra.mxu0 0
  %2325 = vmatprep.subr.bf16.mxu0 0
  %2326 = vmatpush1.bf16.msra.mxu0 0
  %2327 = vmatprep.subr.bf16.mxu0 0
  %2328 = vmatpush1.bf16.msra.mxu0 0
  %2329 = vmatprep.subr.bf16.mxu0 0
  %2330 = vmatpush1.bf16.msra.mxu0 0
  %2331 = vmatprep.subr.bf16.mxu0 0
  %2332 = vmatpush1.bf16.msra.mxu0 0
  %2333 = vmatprep.mubr.bf16.mxu0 0
  %2334 = vmatmul.mubr.bf16.gmra.mrb[0].mxu0 %v2066
  %v2335 = vpop.f32.mrb[0].mxu0
  %v2336 = vadd.f32 0.0, %v2335
  %v2337 = vpop.f32.mrb[0].mxu0
  %v2338 = vadd.f32 0.0, %v2337
  %v2339 = vpop.f32.mrb[0].mxu0
  %v2340 = vpop.f32.mrb[0].mxu0
  %2341 = vdwg.mxu0
  %v2342 = vadd.f32 %v356, %v2295
  %v2343 = vadd.f32 %v358, %v2297
  %v2344 = vadd.f32 %v429, %v2336
  %v2345 = vadd.f32 %v431, %v2338
  %v2346 = vxor.u32 %v2342, 2147483648
  %v2347 = vmul.f32 %v2346, 1.442695
  %v2348 = vpow.pop %v2347
  %v2349 = vadd.f32 %v2348, 1.0
  %v2350 = vrcp.pop %v2349
  %v2351 = vmul.f32 1.0, %v2350
  %v2352 = vxor.u32 %v2343, 2147483648
  %v2353 = vmul.f32 %v2352, 1.442695
  %v2354 = vpow.pop %v2353
  %v2355 = vadd.f32 %v2354, 1.0
  %v2356 = vrcp.pop %v2355
  %v2357 = vmul.f32 1.0, %v2356
  %v2358 = vtanh.pop %v2344
  %v2359 = vxor.u32 %v2345, 2147483648
  %v2360 = vmul.f32 %v2359, 1.442695
  %v2361 = vpow.pop %v2360
  %v2362 = vadd.f32 %v2361, 1.0
  %v2363 = vrcp.pop %v2362
  %v2364 = vmul.f32 1.0, %v2363
  %v2365 = vmul.f32 %v2357, %v2063
  %v2366 = vmul.f32 %v2351, %v2358
  %v2367 = vadd.f32 %v2365, %v2366
  %v2368 = vtanh.pop %v2367
  %v2369 = vmul.f32 %v2364, %v2368
  %v2370 = vpack.c.bf16 %v2369, %v2369
  %v2371 = vpack.c.bf16 %v2259, %v2259
  %2372 = vmatprep.subr.bf16.mxu0 %v912
  %2373 = vmatpush1.bf16.msra.mxu0 %v911
  %2374 = vmatprep.subr.bf16.mxu0 %v916
  %2375 = vmatpush1.bf16.msra.mxu0 %v915
  %2376 = vmatprep.subr.bf16.mxu0 %v920
  %2377 = vmatpush1.bf16.msra.mxu0 %v919
  %2378 = vmatprep.subr.bf16.mxu0 %v924
  %2379 = vmatpush1.bf16.msra.mxu0 %v923
  %2380 = vmatprep.subr.bf16.mxu0 %v928
  %2381 = vmatpush1.bf16.msra.mxu0 %v927
  %2382 = vmatprep.subr.bf16.mxu0 %v932
  %2383 = vmatpush1.bf16.msra.mxu0 %v931
  %2384 = vmatprep.subr.bf16.mxu0 %v936
  %2385 = vmatpush1.bf16.msra.mxu0 %v935
  %2386 = vmatprep.subr.bf16.mxu0 %v940
  %2387 = vmatpush1.bf16.msra.mxu0 %v939
  %2388 = vmatprep.subr.bf16.mxu0 0
  %2389 = vmatpush1.bf16.msra.mxu0 0
  %2390 = vmatprep.subr.bf16.mxu0 0
  %2391 = vmatpush1.bf16.msra.mxu0 0
  %2392 = vmatprep.subr.bf16.mxu0 0
  %2393 = vmatpush1.bf16.msra.mxu0 0
  %2394 = vmatprep.subr.bf16.mxu0 0
  %2395 = vmatpush1.bf16.msra.mxu0 0
  %2396 = vmatprep.subr.bf16.mxu0 0
  %2397 = vmatpush1.bf16.msra.mxu0 0
  %2398 = vmatprep.subr.bf16.mxu0 0
  %2399 = vmatpush1.bf16.msra.mxu0 0
  %2400 = vmatprep.subr.bf16.mxu0 0
  %2401 = vmatpush1.bf16.msra.mxu0 0
  %2402 = vmatprep.subr.bf16.mxu0 0
  %2403 = vmatpush1.bf16.msra.mxu0 0
  %2404 = vmatprep.mubr.bf16.mxu0 0
  %2405 = vmatmul.mubr.bf16.gmra.mrb[0].mxu0 %v2371
  %v2406 = vpop.f32.mrb[0].mxu0
  %v2407 = vadd.f32 0.0, %v2406
  %v2408 = vpop.f32.mrb[0].mxu0
  %v2409 = vadd.f32 0.0, %v2408
  %v2410 = vpop.f32.mrb[0].mxu0
  %v2411 = vpop.f32.mrb[0].mxu0
  %2412 = vdwg.mxu0
  %2413 = vmatprep.subr.bf16.mxu0 %v914
  %2414 = vmatpush1.bf16.msra.mxu0 %v913
  %2415 = vmatprep.subr.bf16.mxu0 %v918
  %2416 = vmatpush1.bf16.msra.mxu0 %v917
  %2417 = vmatprep.subr.bf16.mxu0 %v922
  %2418 = vmatpush1.bf16.msra.mxu0 %v921
  %2419 = vmatprep.subr.bf16.mxu0 %v926
  %2420 = vmatpush1.bf16.msra.mxu0 %v925
  %2421 = vmatprep.subr.bf16.mxu0 %v930
  %2422 = vmatpush1.bf16.msra.mxu0 %v929
  %2423 = vmatprep.subr.bf16.mxu0 %v934
  %2424 = vmatpush1.bf16.msra.mxu0 %v933
  %2425 = vmatprep.subr.bf16.mxu0 %v938
  %2426 = vmatpush1.bf16.msra.mxu0 %v937
  %2427 = vmatprep.subr.bf16.mxu0 %v942
  %2428 = vmatpush1.bf16.msra.mxu0 %v941
  %2429 = vmatprep.subr.bf16.mxu0 0
  %2430 = vmatpush1.bf16.msra.mxu0 0
  %2431 = vmatprep.subr.bf16.mxu0 0
  %2432 = vmatpush1.bf16.msra.mxu0 0
  %2433 = vmatprep.subr.bf16.mxu0 0
  %2434 = vmatpush1.bf16.msra.mxu0 0
  %2435 = vmatprep.subr.bf16.mxu0 0
  %2436 = vmatpush1.bf16.msra.mxu0 0
  %2437 = vmatprep.subr.bf16.mxu0 0
  %2438 = vmatpush1.bf16.msra.mxu0 0
  %2439 = vmatprep.subr.bf16.mxu0 0
  %2440 = vmatpush1.bf16.msra.mxu0 0
  %2441 = vmatprep.subr.bf16.mxu0 0
  %2442 = vmatpush1.bf16.msra.mxu0 0
  %2443 = vmatprep.subr.bf16.mxu0 0
  %2444 = vmatpush1.bf16.msra.mxu0 0
  %2445 = vmatprep.mubr.bf16.mxu0 0
  %2446 = vmatmul.mubr.bf16.gmra.mrb[0].mxu0 %v2371
  %v2447 = vpop.f32.mrb[0].mxu0
  %v2448 = vadd.f32 0.0, %v2447
  %v2449 = vpop.f32.mrb[0].mxu0
  %v2450 = vadd.f32 0.0, %v2449
  %v2451 = vpop.f32.mrb[0].mxu0
  %v2452 = vpop.f32.mrb[0].mxu0
  %2453 = vdwg.mxu0
  %2454 = vmatprep.subr.bf16.mxu0 %v1154
  %2455 = vmatpush1.bf16.msra.mxu0 %v1153
  %2456 = vmatprep.subr.bf16.mxu0 %v1158
  %2457 = vmatpush1.bf16.msra.mxu0 %v1157
  %2458 = vmatprep.subr.bf16.mxu0 %v1162
  %2459 = vmatpush1.bf16.msra.mxu0 %v1161
  %2460 = vmatprep.subr.bf16.mxu0 %v1166
  %2461 = vmatpush1.bf16.msra.mxu0 %v1165
  %2462 = vmatprep.subr.bf16.mxu0 %v1170
  %2463 = vmatpush1.bf16.msra.mxu0 %v1169
  %2464 = vmatprep.subr.bf16.mxu0 %v1174
  %2465 = vmatpush1.bf16.msra.mxu0 %v1173
  %2466 = vmatprep.subr.bf16.mxu0 %v1178
  %2467 = vmatpush1.bf16.msra.mxu0 %v1177
  %2468 = vmatprep.subr.bf16.mxu0 %v1182
  %2469 = vmatpush1.bf16.msra.mxu0 %v1181
  %2470 = vmatprep.subr.bf16.mxu0 0
  %2471 = vmatpush1.bf16.msra.mxu0 0
  %2472 = vmatprep.subr.bf16.mxu0 0
  %2473 = vmatpush1.bf16.msra.mxu0 0
  %2474 = vmatprep.subr.bf16.mxu0 0
  %2475 = vmatpush1.bf16.msra.mxu0 0
  %2476 = vmatprep.subr.bf16.mxu0 0
  %2477 = vmatpush1.bf16.msra.mxu0 0
  %2478 = vmatprep.subr.bf16.mxu0 0
  %2479 = vmatpush1.bf16.msra.mxu0 0
  %2480 = vmatprep.subr.bf16.mxu0 0
  %2481 = vmatpush1.bf16.msra.mxu0 0
  %2482 = vmatprep.subr.bf16.mxu0 0
  %2483 = vmatpush1.bf16.msra.mxu0 0
  %2484 = vmatprep.subr.bf16.mxu0 0
  %2485 = vmatpush1.bf16.msra.mxu0 0
  %2486 = vmatprep.mubr.bf16.mxu0 0
  %2487 = vmatmul.mubr.bf16.gmra.mrb[0].mxu0 %v2370
  %v2488 = vpop.f32.mrb[0].mxu0
  %v2489 = vadd.f32 %v2407, %v2488
  %v2490 = vpop.f32.mrb[0].mxu0
  %v2491 = vadd.f32 %v2409, %v2490
  %v2492 = vpop.f32.mrb[0].mxu0
  %v2493 = vpop.f32.mrb[0].mxu0
  %2494 = vdwg.mxu0
  %2495 = vmatprep.subr.bf16.mxu0 %v1156
  %2496 = vmatpush1.bf16.msra.mxu0 %v1155
  %2497 = vmatprep.subr.bf16.mxu0 %v1160
  %2498 = vmatpush1.bf16.msra.mxu0 %v1159
  %2499 = vmatprep.subr.bf16.mxu0 %v1164
  %2500 = vmatpush1.bf16.msra.mxu0 %v1163
  %2501 = vmatprep.subr.bf16.mxu0 %v1168
  %2502 = vmatpush1.bf16.msra.mxu0 %v1167
  %2503 = vmatprep.subr.bf16.mxu0 %v1172
  %2504 = vmatpush1.bf16.msra.mxu0 %v1171
  %2505 = vmatprep.subr.bf16.mxu0 %v1176
  %2506 = vmatpush1.bf16.msra.mxu0 %v1175
  %2507 = vmatprep.subr.bf16.mxu0 %v1180
  %2508 = vmatpush1.bf16.msra.mxu0 %v1179
  %2509 = vmatprep.subr.bf16.mxu0 %v1184
  %2510 = vmatpush1.bf16.msra.mxu0 %v1183
  %2511 = vmatprep.subr.bf16.mxu0 0
  %2512 = vmatpush1.bf16.msra.mxu0 0
  %2513 = vmatprep.subr.bf16.mxu0 0
  %2514 = vmatpush1.bf16.msra.mxu0 0
  %2515 = vmatprep.subr.bf16.mxu0 0
  %2516 = vmatpush1.bf16.msra.mxu0 0
  %2517 = vmatprep.subr.bf16.mxu0 0
  %2518 = vmatpush1.bf16.msra.mxu0 0
  %2519 = vmatprep.subr.bf16.mxu0 0
  %2520 = vmatpush1.bf16.msra.mxu0 0
  %2521 = vmatprep.subr.bf16.mxu0 0
  %2522 = vmatpush1.bf16.msra.mxu0 0
  %2523 = vmatprep.subr.bf16.mxu0 0
  %2524 = vmatpush1.bf16.msra.mxu0 0
  %2525 = vmatprep.subr.bf16.mxu0 0
  %2526 = vmatpush1.bf16.msra.mxu0 0
  %2527 = vmatprep.mubr.bf16.mxu0 0
  %2528 = vmatmul.mubr.bf16.gmra.mrb[0].mxu0 %v2370
  %v2529 = vpop.f32.mrb[0].mxu0
  %v2530 = vadd.f32 %v2448, %v2529
  %v2531 = vpop.f32.mrb[0].mxu0
  %v2532 = vadd.f32 %v2450, %v2531
  %v2533 = vpop.f32.mrb[0].mxu0
  %v2534 = vpop.f32.mrb[0].mxu0
  %2535 = vdwg.mxu0
  %v2536 = vadd.f32 %v2489, %v1303
  %v2537 = vadd.f32 %v2491, %v1307
  %v2538 = vadd.f32 %v2530, %v1311
  %v2539 = vadd.f32 %v2532, %v1315
  %v2540 = vxor.u32 %v2536, 2147483648
  %v2541 = vmul.f32 %v2540, 1.442695
  %v2542 = vpow.pop %v2541
  %v2543 = vadd.f32 %v2542, 1.0
  %v2544 = vrcp.pop %v2543
  %v2545 = vmul.f32 1.0, %v2544
  %v2546 = vxor.u32 %v2537, 2147483648
  %v2547 = vmul.f32 %v2546, 1.442695
  %v2548 = vpow.pop %v2547
  %v2549 = vadd.f32 %v2548, 1.0
  %v2550 = vrcp.pop %v2549
  %v2551 = vmul.f32 1.0, %v2550
  %v2552 = vtanh.pop %v2538
  %v2553 = vxor.u32 %v2539, 2147483648
  %v2554 = vmul.f32 %v2553, 1.442695
  %v2555 = vpow.pop %v2554
  %v2556 = vadd.f32 %v2555, 1.0
  %v2557 = vrcp.pop %v2556
  %v2558 = vmul.f32 1.0, %v2557
  %v2559 = vmul.f32 %v2551, %v2257
  %v2560 = vmul.f32 %v2545, %v2552
  %v2561 = vadd.f32 %v2559, %v2560
  %v2562 = vtanh.pop %v2561
  %v2563 = vmul.f32 %v2558, %v2562
  %2564 = vmatprep.subr.bf16.mxu0 %v641
  %2565 = vmatpush1.bf16.msra.mxu0 %v640
  %2566 = vmatprep.subr.bf16.mxu0 %v645
  %2567 = vmatpush1.bf16.msra.mxu0 %v644
  %2568 = vmatprep.subr.bf16.mxu0 %v649
  %2569 = vmatpush1.bf16.msra.mxu0 %v648
  %2570 = vmatprep.subr.bf16.mxu0 %v653
  %2571 = vmatpush1.bf16.msra.mxu0 %v652
  %2572 = vmatprep.subr.bf16.mxu0 %v657
  %2573 = vmatpush1.bf16.msra.mxu0 %v656
  %2574 = vmatprep.subr.bf16.mxu0 %v661
  %2575 = vmatpush1.bf16.msra.mxu0 %v660
  %2576 = vmatprep.subr.bf16.mxu0 %v665
  %2577 = vmatpush1.bf16.msra.mxu0 %v664
  %2578 = vmatprep.subr.bf16.mxu0 %v669
  %2579 = vmatpush1.bf16.msra.mxu0 %v668
  %2580 = vmatprep.subr.bf16.mxu0 0
  %2581 = vmatpush1.bf16.msra.mxu0 0
  %2582 = vmatprep.subr.bf16.mxu0 0
  %2583 = vmatpush1.bf16.msra.mxu0 0
  %2584 = vmatprep.subr.bf16.mxu0 0
  %2585 = vmatpush1.bf16.msra.mxu0 0
  %2586 = vmatprep.subr.bf16.mxu0 0
  %2587 = vmatpush1.bf16.msra.mxu0 0
  %2588 = vmatprep.subr.bf16.mxu0 0
  %2589 = vmatpush1.bf16.msra.mxu0 0
  %2590 = vmatprep.subr.bf16.mxu0 0
  %2591 = vmatpush1.bf16.msra.mxu0 0
  %2592 = vmatprep.subr.bf16.mxu0 0
  %2593 = vmatpush1.bf16.msra.mxu0 0
  %2594 = vmatprep.subr.bf16.mxu0 0
  %2595 = vmatpush1.bf16.msra.mxu0 0
  %2596 = vmatprep.mubr.bf16.mxu0 0
  %2597 = vmatmul.mubr.bf16.gmra.mrb[0].mxu0 %v2370
  %v2598 = vpop.f32.mrb[0].mxu0
  %v2599 = vadd.f32 0.0, %v2598
  %v2600 = vpop.f32.mrb[0].mxu0
  %v2601 = vadd.f32 0.0, %v2600
  %v2602 = vpop.f32.mrb[0].mxu0
  %v2603 = vpop.f32.mrb[0].mxu0
  %2604 = vdwg.mxu0
  %2605 = vmatprep.subr.bf16.mxu0 %v643
  %2606 = vmatpush1.bf16.msra.mxu0 %v642
  %2607 = vmatprep.subr.bf16.mxu0 %v647
  %2608 = vmatpush1.bf16.msra.mxu0 %v646
  %2609 = vmatprep.subr.bf16.mxu0 %v651
  %2610 = vmatpush1.bf16.msra.mxu0 %v650
  %2611 = vmatprep.subr.bf16.mxu0 %v655
  %2612 = vmatpush1.bf16.msra.mxu0 %v654
  %2613 = vmatprep.subr.bf16.mxu0 %v659
  %2614 = vmatpush1.bf16.msra.mxu0 %v658
  %2615 = vmatprep.subr.bf16.mxu0 %v663
  %2616 = vmatpush1.bf16.msra.mxu0 %v662
  %2617 = vmatprep.subr.bf16.mxu0 %v667
  %2618 = vmatpush1.bf16.msra.mxu0 %v666
  %2619 = vmatprep.subr.bf16.mxu0 %v671
  %2620 = vmatpush1.bf16.msra.mxu0 %v670
  %2621 = vmatprep.subr.bf16.mxu0 0
  %2622 = vmatpush1.bf16.msra.mxu0 0
  %2623 = vmatprep.subr.bf16.mxu0 0
  %2624 = vmatpush1.bf16.msra.mxu0 0
  %2625 = vmatprep.subr.bf16.mxu0 0
  %2626 = vmatpush1.bf16.msra.mxu0 0
  %2627 = vmatprep.subr.bf16.mxu0 0
  %2628 = vmatpush1.bf16.msra.mxu0 0
  %2629 = vmatprep.subr.bf16.mxu0 0
  %2630 = vmatpush1.bf16.msra.mxu0 0
  %2631 = vmatprep.subr.bf16.mxu0 0
  %2632 = vmatpush1.bf16.msra.mxu0 0
  %2633 = vmatprep.subr.bf16.mxu0 0
  %2634 = vmatpush1.bf16.msra.mxu0 0
  %2635 = vmatprep.subr.bf16.mxu0 0
  %2636 = vmatpush1.bf16.msra.mxu0 0
  %2637 = vmatprep.mubr.bf16.mxu0 0
  %2638 = vmatmul.mubr.bf16.gmra.mrb[0].mxu0 %v2370
  %v2639 = vpop.f32.mrb[0].mxu0
  %v2640 = vadd.f32 0.0, %v2639
  %v2641 = vpop.f32.mrb[0].mxu0
  %v2642 = vadd.f32 0.0, %v2641
  %v2643 = vpop.f32.mrb[0].mxu0
  %v2644 = vpop.f32.mrb[0].mxu0
  %2645 = vdwg.mxu0
  %v2646 = vadd.f32 %v360, %v2599
  %v2647 = vadd.f32 %v362, %v2601
  %v2648 = vadd.f32 %v433, %v2640
  %v2649 = vadd.f32 %v435, %v2642
  %v2650 = vxor.u32 %v2646, 2147483648
  %v2651 = vmul.f32 %v2650, 1.442695
  %v2652 = vpow.pop %v2651
  %v2653 = vadd.f32 %v2652, 1.0
  %v2654 = vrcp.pop %v2653
  %v2655 = vmul.f32 1.0, %v2654
  %v2656 = vxor.u32 %v2647, 2147483648
  %v2657 = vmul.f32 %v2656, 1.442695
  %v2658 = vpow.pop %v2657
  %v2659 = vadd.f32 %v2658, 1.0
  %v2660 = vrcp.pop %v2659
  %v2661 = vmul.f32 1.0, %v2660
  %v2662 = vtanh.pop %v2648
  %v2663 = vxor.u32 %v2649, 2147483648
  %v2664 = vmul.f32 %v2663, 1.442695
  %v2665 = vpow.pop %v2664
  %v2666 = vadd.f32 %v2665, 1.0
  %v2667 = vrcp.pop %v2666
  %v2668 = vmul.f32 1.0, %v2667
  %v2669 = vmul.f32 %v2661, %v2367
  %v2670 = vmul.f32 %v2655, %v2662
  %v2671 = vadd.f32 %v2669, %v2670
  %v2672 = vtanh.pop %v2671
  %v2673 = vmul.f32 %v2668, %v2672
  %v2674 = vpack.c.bf16 %v2673, %v2673
  %v2675 = vpack.c.bf16 %v2563, %v2563
  %2676 = vmatprep.subr.bf16.mxu0 %v912
  %2677 = vmatpush1.bf16.msra.mxu0 %v911
  %2678 = vmatprep.subr.bf16.mxu0 %v916
  %2679 = vmatpush1.bf16.msra.mxu0 %v915
  %2680 = vmatprep.subr.bf16.mxu0 %v920
  %2681 = vmatpush1.bf16.msra.mxu0 %v919
  %2682 = vmatprep.subr.bf16.mxu0 %v924
  %2683 = vmatpush1.bf16.msra.mxu0 %v923
  %2684 = vmatprep.subr.bf16.mxu0 %v928
  %2685 = vmatpush1.bf16.msra.mxu0 %v927
  %2686 = vmatprep.subr.bf16.mxu0 %v932
  %2687 = vmatpush1.bf16.msra.mxu0 %v931
  %2688 = vmatprep.subr.bf16.mxu0 %v936
  %2689 = vmatpush1.bf16.msra.mxu0 %v935
  %2690 = vmatprep.subr.bf16.mxu0 %v940
  %2691 = vmatpush1.bf16.msra.mxu0 %v939
  %2692 = vmatprep.subr.bf16.mxu0 0
  %2693 = vmatpush1.bf16.msra.mxu0 0
  %2694 = vmatprep.subr.bf16.mxu0 0
  %2695 = vmatpush1.bf16.msra.mxu0 0
  %2696 = vmatprep.subr.bf16.mxu0 0
  %2697 = vmatpush1.bf16.msra.mxu0 0
  %2698 = vmatprep.subr.bf16.mxu0 0
  %2699 = vmatpush1.bf16.msra.mxu0 0
  %2700 = vmatprep.subr.bf16.mxu0 0
  %2701 = vmatpush1.bf16.msra.mxu0 0
  %2702 = vmatprep.subr.bf16.mxu0 0
  %2703 = vmatpush1.bf16.msra.mxu0 0
  %2704 = vmatprep.subr.bf16.mxu0 0
  %2705 = vmatpush1.bf16.msra.mxu0 0
  %2706 = vmatprep.subr.bf16.mxu0 0
  %2707 = vmatpush1.bf16.msra.mxu0 0
  %2708 = vmatprep.mubr.bf16.mxu0 0
  %2709 = vmatmul.mubr.bf16.gmra.mrb[0].mxu0 %v2675
  %v2710 = vpop.f32.mrb[0].mxu0
  %v2711 = vadd.f32 0.0, %v2710
  %v2712 = vpop.f32.mrb[0].mxu0
  %v2713 = vadd.f32 0.0, %v2712
  %v2714 = vpop.f32.mrb[0].mxu0
  %v2715 = vpop.f32.mrb[0].mxu0
  %2716 = vdwg.mxu0
  %2717 = vmatprep.subr.bf16.mxu0 %v914
  %2718 = vmatpush1.bf16.msra.mxu0 %v913
  %2719 = vmatprep.subr.bf16.mxu0 %v918
  %2720 = vmatpush1.bf16.msra.mxu0 %v917
  %2721 = vmatprep.subr.bf16.mxu0 %v922
  %2722 = vmatpush1.bf16.msra.mxu0 %v921
  %2723 = vmatprep.subr.bf16.mxu0 %v926
  %2724 = vmatpush1.bf16.msra.mxu0 %v925
  %2725 = vmatprep.subr.bf16.mxu0 %v930
  %2726 = vmatpush1.bf16.msra.mxu0 %v929
  %2727 = vmatprep.subr.bf16.mxu0 %v934
  %2728 = vmatpush1.bf16.msra.mxu0 %v933
  %2729 = vmatprep.subr.bf16.mxu0 %v938
  %2730 = vmatpush1.bf16.msra.mxu0 %v937
  %2731 = vmatprep.subr.bf16.mxu0 %v942
  %2732 = vmatpush1.bf16.msra.mxu0 %v941
  %2733 = vmatprep.subr.bf16.mxu0 0
  %2734 = vmatpush1.bf16.msra.mxu0 0
  %2735 = vmatprep.subr.bf16.mxu0 0
  %2736 = vmatpush1.bf16.msra.mxu0 0
  %2737 = vmatprep.subr.bf16.mxu0 0
  %2738 = vmatpush1.bf16.msra.mxu0 0
  %2739 = vmatprep.subr.bf16.mxu0 0
  %2740 = vmatpush1.bf16.msra.mxu0 0
  %2741 = vmatprep.subr.bf16.mxu0 0
  %2742 = vmatpush1.bf16.msra.mxu0 0
  %2743 = vmatprep.subr.bf16.mxu0 0
  %2744 = vmatpush1.bf16.msra.mxu0 0
  %2745 = vmatprep.subr.bf16.mxu0 0
  %2746 = vmatpush1.bf16.msra.mxu0 0
  %2747 = vmatprep.subr.bf16.mxu0 0
  %2748 = vmatpush1.bf16.msra.mxu0 0
  %2749 = vmatprep.mubr.bf16.mxu0 0
  %2750 = vmatmul.mubr.bf16.gmra.mrb[0].mxu0 %v2675
  %v2751 = vpop.f32.mrb[0].mxu0
  %v2752 = vadd.f32 0.0, %v2751
  %v2753 = vpop.f32.mrb[0].mxu0
  %v2754 = vadd.f32 0.0, %v2753
  %v2755 = vpop.f32.mrb[0].mxu0
  %v2756 = vpop.f32.mrb[0].mxu0
  %2757 = vdwg.mxu0
  %2758 = vmatprep.subr.bf16.mxu0 %v1154
  %2759 = vmatpush1.bf16.msra.mxu0 %v1153
  %2760 = vmatprep.subr.bf16.mxu0 %v1158
  %2761 = vmatpush1.bf16.msra.mxu0 %v1157
  %2762 = vmatprep.subr.bf16.mxu0 %v1162
  %2763 = vmatpush1.bf16.msra.mxu0 %v1161
  %2764 = vmatprep.subr.bf16.mxu0 %v1166
  %2765 = vmatpush1.bf16.msra.mxu0 %v1165
  %2766 = vmatprep.subr.bf16.mxu0 %v1170
  %2767 = vmatpush1.bf16.msra.mxu0 %v1169
  %2768 = vmatprep.subr.bf16.mxu0 %v1174
  %2769 = vmatpush1.bf16.msra.mxu0 %v1173
  %2770 = vmatprep.subr.bf16.mxu0 %v1178
  %2771 = vmatpush1.bf16.msra.mxu0 %v1177
  %2772 = vmatprep.subr.bf16.mxu0 %v1182
  %2773 = vmatpush1.bf16.msra.mxu0 %v1181
  %2774 = vmatprep.subr.bf16.mxu0 0
  %2775 = vmatpush1.bf16.msra.mxu0 0
  %2776 = vmatprep.subr.bf16.mxu0 0
  %2777 = vmatpush1.bf16.msra.mxu0 0
  %2778 = vmatprep.subr.bf16.mxu0 0
  %2779 = vmatpush1.bf16.msra.mxu0 0
  %2780 = vmatprep.subr.bf16.mxu0 0
  %2781 = vmatpush1.bf16.msra.mxu0 0
  %2782 = vmatprep.subr.bf16.mxu0 0
  %2783 = vmatpush1.bf16.msra.mxu0 0
  %2784 = vmatprep.subr.bf16.mxu0 0
  %2785 = vmatpush1.bf16.msra.mxu0 0
  %2786 = vmatprep.subr.bf16.mxu0 0
  %2787 = vmatpush1.bf16.msra.mxu0 0
  %2788 = vmatprep.subr.bf16.mxu0 0
  %2789 = vmatpush1.bf16.msra.mxu0 0
  %2790 = vmatprep.mubr.bf16.mxu0 0
  %2791 = vmatmul.mubr.bf16.gmra.mrb[0].mxu0 %v2674
  %v2792 = vpop.f32.mrb[0].mxu0
  %v2793 = vadd.f32 %v2711, %v2792
  %v2794 = vpop.f32.mrb[0].mxu0
  %v2795 = vadd.f32 %v2713, %v2794
  %v2796 = vpop.f32.mrb[0].mxu0
  %v2797 = vpop.f32.mrb[0].mxu0
  %2798 = vdwg.mxu0
  %2799 = vmatprep.subr.bf16.mxu0 %v1156
  %2800 = vmatpush1.bf16.msra.mxu0 %v1155
  %2801 = vmatprep.subr.bf16.mxu0 %v1160
  %2802 = vmatpush1.bf16.msra.mxu0 %v1159
  %2803 = vmatprep.subr.bf16.mxu0 %v1164
  %2804 = vmatpush1.bf16.msra.mxu0 %v1163
  %2805 = vmatprep.subr.bf16.mxu0 %v1168
  %2806 = vmatpush1.bf16.msra.mxu0 %v1167
  %2807 = vmatprep.subr.bf16.mxu0 %v1172
  %2808 = vmatpush1.bf16.msra.mxu0 %v1171
  %2809 = vmatprep.subr.bf16.mxu0 %v1176
  %2810 = vmatpush1.bf16.msra.mxu0 %v1175
  %2811 = vmatprep.subr.bf16.mxu0 %v1180
  %2812 = vmatpush1.bf16.msra.mxu0 %v1179
  %2813 = vmatprep.subr.bf16.mxu0 %v1184
  %2814 = vmatpush1.bf16.msra.mxu0 %v1183
  %2815 = vmatprep.subr.bf16.mxu0 0
  %2816 = vmatpush1.bf16.msra.mxu0 0
  %2817 = vmatprep.subr.bf16.mxu0 0
  %2818 = vmatpush1.bf16.msra.mxu0 0
  %2819 = vmatprep.subr.bf16.mxu0 0
  %2820 = vmatpush1.bf16.msra.mxu0 0
  %2821 = vmatprep.subr.bf16.mxu0 0
  %2822 = vmatpush1.bf16.msra.mxu0 0
  %2823 = vmatprep.subr.bf16.mxu0 0
  %2824 = vmatpush1.bf16.msra.mxu0 0
  %2825 = vmatprep.subr.bf16.mxu0 0
  %2826 = vmatpush1.bf16.msra.mxu0 0
  %2827 = vmatprep.subr.bf16.mxu0 0
  %2828 = vmatpush1.bf16.msra.mxu0 0
  %2829 = vmatprep.subr.bf16.mxu0 0
  %2830 = vmatpush1.bf16.msra.mxu0 0
  %2831 = vmatprep.mubr.bf16.mxu0 0
  %2832 = vmatmul.mubr.bf16.gmra.mrb[0].mxu0 %v2674
  %v2833 = vpop.f32.mrb[0].mxu0
  %v2834 = vadd.f32 %v2752, %v2833
  %v2835 = vpop.f32.mrb[0].mxu0
  %v2836 = vadd.f32 %v2754, %v2835
  %v2837 = vpop.f32.mrb[0].mxu0
  %v2838 = vpop.f32.mrb[0].mxu0
  %2839 = vdwg.mxu0
  %v2840 = vadd.f32 %v2793, %v1303
  %v2841 = vadd.f32 %v2795, %v1307
  %v2842 = vadd.f32 %v2834, %v1311
  %v2843 = vadd.f32 %v2836, %v1315
  %v2844 = vxor.u32 %v2840, 2147483648
  %v2845 = vmul.f32 %v2844, 1.442695
  %v2846 = vpow.pop %v2845
  %v2847 = vadd.f32 %v2846, 1.0
  %v2848 = vrcp.pop %v2847
  %v2849 = vmul.f32 1.0, %v2848
  %v2850 = vxor.u32 %v2841, 2147483648
  %v2851 = vmul.f32 %v2850, 1.442695
  %v2852 = vpow.pop %v2851
  %v2853 = vadd.f32 %v2852, 1.0
  %v2854 = vrcp.pop %v2853
  %v2855 = vmul.f32 1.0, %v2854
  %v2856 = vtanh.pop %v2842
  %v2857 = vxor.u32 %v2843, 2147483648
  %v2858 = vmul.f32 %v2857, 1.442695
  %v2859 = vpow.pop %v2858
  %v2860 = vadd.f32 %v2859, 1.0
  %v2861 = vrcp.pop %v2860
  %v2862 = vmul.f32 1.0, %v2861
  %v2863 = vmul.f32 %v2855, %v2561
  %v2864 = vmul.f32 %v2849, %v2856
  %v2865 = vadd.f32 %v2863, %v2864
  %v2866 = vtanh.pop %v2865
  %v2867 = vmul.f32 %v2862, %v2866
  %2868 = vmatprep.subr.bf16.mxu0 %v641
  %2869 = vmatpush1.bf16.msra.mxu0 %v640
  %2870 = vmatprep.subr.bf16.mxu0 %v645
  %2871 = vmatpush1.bf16.msra.mxu0 %v644
  %2872 = vmatprep.subr.bf16.mxu0 %v649
  %2873 = vmatpush1.bf16.msra.mxu0 %v648
  %2874 = vmatprep.subr.bf16.mxu0 %v653
  %2875 = vmatpush1.bf16.msra.mxu0 %v652
  %2876 = vmatprep.subr.bf16.mxu0 %v657
  %2877 = vmatpush1.bf16.msra.mxu0 %v656
  %2878 = vmatprep.subr.bf16.mxu0 %v661
  %2879 = vmatpush1.bf16.msra.mxu0 %v660
  %2880 = vmatprep.subr.bf16.mxu0 %v665
  %2881 = vmatpush1.bf16.msra.mxu0 %v664
  %2882 = vmatprep.subr.bf16.mxu0 %v669
  %2883 = vmatpush1.bf16.msra.mxu0 %v668
  %2884 = vmatprep.subr.bf16.mxu0 0
  %2885 = vmatpush1.bf16.msra.mxu0 0
  %2886 = vmatprep.subr.bf16.mxu0 0
  %2887 = vmatpush1.bf16.msra.mxu0 0
  %2888 = vmatprep.subr.bf16.mxu0 0
  %2889 = vmatpush1.bf16.msra.mxu0 0
  %2890 = vmatprep.subr.bf16.mxu0 0
  %2891 = vmatpush1.bf16.msra.mxu0 0
  %2892 = vmatprep.subr.bf16.mxu0 0
  %2893 = vmatpush1.bf16.msra.mxu0 0
  %2894 = vmatprep.subr.bf16.mxu0 0
  %2895 = vmatpush1.bf16.msra.mxu0 0
  %2896 = vmatprep.subr.bf16.mxu0 0
  %2897 = vmatpush1.bf16.msra.mxu0 0
  %2898 = vmatprep.subr.bf16.mxu0 0
  %2899 = vmatpush1.bf16.msra.mxu0 0
  %2900 = vmatprep.mubr.bf16.mxu0 0
  %2901 = vmatmul.mubr.bf16.gmra.mrb[0].mxu0 %v2674
  %v2902 = vpop.f32.mrb[0].mxu0
  %v2903 = vadd.f32 0.0, %v2902
  %v2904 = vpop.f32.mrb[0].mxu0
  %v2905 = vadd.f32 0.0, %v2904
  %v2906 = vpop.f32.mrb[0].mxu0
  %v2907 = vpop.f32.mrb[0].mxu0
  %2908 = vdwg.mxu0
  %2909 = vmatprep.subr.bf16.mxu0 %v643
  %2910 = vmatpush1.bf16.msra.mxu0 %v642
  %2911 = vmatprep.subr.bf16.mxu0 %v647
  %2912 = vmatpush1.bf16.msra.mxu0 %v646
  %2913 = vmatprep.subr.bf16.mxu0 %v651
  %2914 = vmatpush1.bf16.msra.mxu0 %v650
  %2915 = vmatprep.subr.bf16.mxu0 %v655
  %2916 = vmatpush1.bf16.msra.mxu0 %v654
  %2917 = vmatprep.subr.bf16.mxu0 %v659
  %2918 = vmatpush1.bf16.msra.mxu0 %v658
  %2919 = vmatprep.subr.bf16.mxu0 %v663
  %2920 = vmatpush1.bf16.msra.mxu0 %v662
  %2921 = vmatprep.subr.bf16.mxu0 %v667
  %2922 = vmatpush1.bf16.msra.mxu0 %v666
  %2923 = vmatprep.subr.bf16.mxu0 %v671
  %2924 = vmatpush1.bf16.msra.mxu0 %v670
  %2925 = vmatprep.subr.bf16.mxu0 0
  %2926 = vmatpush1.bf16.msra.mxu0 0
  %2927 = vmatprep.subr.bf16.mxu0 0
  %2928 = vmatpush1.bf16.msra.mxu0 0
  %2929 = vmatprep.subr.bf16.mxu0 0
  %2930 = vmatpush1.bf16.msra.mxu0 0
  %2931 = vmatprep.subr.bf16.mxu0 0
  %2932 = vmatpush1.bf16.msra.mxu0 0
  %2933 = vmatprep.subr.bf16.mxu0 0
  %2934 = vmatpush1.bf16.msra.mxu0 0
  %2935 = vmatprep.subr.bf16.mxu0 0
  %2936 = vmatpush1.bf16.msra.mxu0 0
  %2937 = vmatprep.subr.bf16.mxu0 0
  %2938 = vmatpush1.bf16.msra.mxu0 0
  %2939 = vmatprep.subr.bf16.mxu0 0
  %2940 = vmatpush1.bf16.msra.mxu0 0
  %2941 = vmatprep.mubr.bf16.mxu0 0
  %2942 = vmatmul.mubr.bf16.gmra.mrb[0].mxu0 %v2674
  %v2943 = vpop.f32.mrb[0].mxu0
  %v2944 = vadd.f32 0.0, %v2943
  %v2945 = vpop.f32.mrb[0].mxu0
  %v2946 = vadd.f32 0.0, %v2945
  %v2947 = vpop.f32.mrb[0].mxu0
  %v2948 = vpop.f32.mrb[0].mxu0
  %2949 = vdwg.mxu0
  %v2950 = vadd.f32 %v366, %v2903
  %v2951 = vadd.f32 %v368, %v2905
  %v2952 = vadd.f32 %v439, %v2944
  %v2953 = vadd.f32 %v441, %v2946
  %v2954 = vxor.u32 %v2950, 2147483648
  %v2955 = vmul.f32 %v2954, 1.442695
  %v2956 = vpow.pop %v2955
  %v2957 = vadd.f32 %v2956, 1.0
  %v2958 = vrcp.pop %v2957
  %v2959 = vmul.f32 1.0, %v2958
  %v2960 = vxor.u32 %v2951, 2147483648
  %v2961 = vmul.f32 %v2960, 1.442695
  %v2962 = vpow.pop %v2961
  %v2963 = vadd.f32 %v2962, 1.0
  %v2964 = vrcp.pop %v2963
  %v2965 = vmul.f32 1.0, %v2964
  %v2966 = vtanh.pop %v2952
  %v2967 = vxor.u32 %v2953, 2147483648
  %v2968 = vmul.f32 %v2967, 1.442695
  %v2969 = vpow.pop %v2968
  %v2970 = vadd.f32 %v2969, 1.0
  %v2971 = vrcp.pop %v2970
  %v2972 = vmul.f32 1.0, %v2971
  %v2973 = vmul.f32 %v2965, %v2671
  %v2974 = vmul.f32 %v2959, %v2966
  %v2975 = vadd.f32 %v2973, %v2974
  %v2976 = vtanh.pop %v2975
  %v2977 = vmul.f32 %v2972, %v2976
  %v2978 = vpack.c.bf16 %v2977, %v2977
  %v2979 = vpack.c.bf16 %v2867, %v2867
  %2980 = vmatprep.subr.bf16.mxu0 %v912
  %2981 = vmatpush1.bf16.msra.mxu0 %v911
  %2982 = vmatprep.subr.bf16.mxu0 %v916
  %2983 = vmatpush1.bf16.msra.mxu0 %v915
  %2984 = vmatprep.subr.bf16.mxu0 %v920
  %2985 = vmatpush1.bf16.msra.mxu0 %v919
  %2986 = vmatprep.subr.bf16.mxu0 %v924
  %2987 = vmatpush1.bf16.msra.mxu0 %v923
  %2988 = vmatprep.subr.bf16.mxu0 %v928
  %2989 = vmatpush1.bf16.msra.mxu0 %v927
  %2990 = vmatprep.subr.bf16.mxu0 %v932
  %2991 = vmatpush1.bf16.msra.mxu0 %v931
  %2992 = vmatprep.subr.bf16.mxu0 %v936
  %2993 = vmatpush1.bf16.msra.mxu0 %v935
  %2994 = vmatprep.subr.bf16.mxu0 %v940
  %2995 = vmatpush1.bf16.msra.mxu0 %v939
  %2996 = vmatprep.subr.bf16.mxu0 0
  %2997 = vmatpush1.bf16.msra.mxu0 0
  %2998 = vmatprep.subr.bf16.mxu0 0
  %2999 = vmatpush1.bf16.msra.mxu0 0
  %3000 = vmatprep.subr.bf16.mxu0 0
  %3001 = vmatpush1.bf16.msra.mxu0 0
  %3002 = vmatprep.subr.bf16.mxu0 0
  %3003 = vmatpush1.bf16.msra.mxu0 0
  %3004 = vmatprep.subr.bf16.mxu0 0
  %3005 = vmatpush1.bf16.msra.mxu0 0
  %3006 = vmatprep.subr.bf16.mxu0 0
  %3007 = vmatpush1.bf16.msra.mxu0 0
  %3008 = vmatprep.subr.bf16.mxu0 0
  %3009 = vmatpush1.bf16.msra.mxu0 0
  %3010 = vmatprep.subr.bf16.mxu0 0
  %3011 = vmatpush1.bf16.msra.mxu0 0
  %3012 = vmatprep.mubr.bf16.mxu0 0
  %3013 = vmatmul.mubr.bf16.gmra.mrb[0].mxu0 %v2979
  %v3014 = vpop.f32.mrb[0].mxu0
  %v3015 = vadd.f32 0.0, %v3014
  %v3016 = vpop.f32.mrb[0].mxu0
  %v3017 = vadd.f32 0.0, %v3016
  %v3018 = vpop.f32.mrb[0].mxu0
  %v3019 = vpop.f32.mrb[0].mxu0
  %3020 = vdwg.mxu0
  %3021 = vmatprep.subr.bf16.mxu0 %v914
  %3022 = vmatpush1.bf16.msra.mxu0 %v913
  %3023 = vmatprep.subr.bf16.mxu0 %v918
  %3024 = vmatpush1.bf16.msra.mxu0 %v917
  %3025 = vmatprep.subr.bf16.mxu0 %v922
  %3026 = vmatpush1.bf16.msra.mxu0 %v921
  %3027 = vmatprep.subr.bf16.mxu0 %v926
  %3028 = vmatpush1.bf16.msra.mxu0 %v925
  %3029 = vmatprep.subr.bf16.mxu0 %v930
  %3030 = vmatpush1.bf16.msra.mxu0 %v929
  %3031 = vmatprep.subr.bf16.mxu0 %v934
  %3032 = vmatpush1.bf16.msra.mxu0 %v933
  %3033 = vmatprep.subr.bf16.mxu0 %v938
  %3034 = vmatpush1.bf16.msra.mxu0 %v937
  %3035 = vmatprep.subr.bf16.mxu0 %v942
  %3036 = vmatpush1.bf16.msra.mxu0 %v941
  %3037 = vmatprep.subr.bf16.mxu0 0
  %3038 = vmatpush1.bf16.msra.mxu0 0
  %3039 = vmatprep.subr.bf16.mxu0 0
  %3040 = vmatpush1.bf16.msra.mxu0 0
  %3041 = vmatprep.subr.bf16.mxu0 0
  %3042 = vmatpush1.bf16.msra.mxu0 0
  %3043 = vmatprep.subr.bf16.mxu0 0
  %3044 = vmatpush1.bf16.msra.mxu0 0
  %3045 = vmatprep.subr.bf16.mxu0 0
  %3046 = vmatpush1.bf16.msra.mxu0 0
  %3047 = vmatprep.subr.bf16.mxu0 0
  %3048 = vmatpush1.bf16.msra.mxu0 0
  %3049 = vmatprep.subr.bf16.mxu0 0
  %3050 = vmatpush1.bf16.msra.mxu0 0
  %3051 = vmatprep.subr.bf16.mxu0 0
  %3052 = vmatpush1.bf16.msra.mxu0 0
  %3053 = vmatprep.mubr.bf16.mxu0 0
  %3054 = vmatmul.mubr.bf16.gmra.mrb[0].mxu0 %v2979
  %v3055 = vpop.f32.mrb[0].mxu0
  %v3056 = vadd.f32 0.0, %v3055
  %v3057 = vpop.f32.mrb[0].mxu0
  %v3058 = vadd.f32 0.0, %v3057
  %v3059 = vpop.f32.mrb[0].mxu0
  %v3060 = vpop.f32.mrb[0].mxu0
  %3061 = vdwg.mxu0
  %3062 = vmatprep.subr.bf16.mxu0 %v1154
  %3063 = vmatpush1.bf16.msra.mxu0 %v1153
  %3064 = vmatprep.subr.bf16.mxu0 %v1158
  %3065 = vmatpush1.bf16.msra.mxu0 %v1157
  %3066 = vmatprep.subr.bf16.mxu0 %v1162
  %3067 = vmatpush1.bf16.msra.mxu0 %v1161
  %3068 = vmatprep.subr.bf16.mxu0 %v1166
  %3069 = vmatpush1.bf16.msra.mxu0 %v1165
  %3070 = vmatprep.subr.bf16.mxu0 %v1170
  %3071 = vmatpush1.bf16.msra.mxu0 %v1169
  %3072 = vmatprep.subr.bf16.mxu0 %v1174
  %3073 = vmatpush1.bf16.msra.mxu0 %v1173
  %3074 = vmatprep.subr.bf16.mxu0 %v1178
  %3075 = vmatpush1.bf16.msra.mxu0 %v1177
  %3076 = vmatprep.subr.bf16.mxu0 %v1182
  %3077 = vmatpush1.bf16.msra.mxu0 %v1181
  %3078 = vmatprep.subr.bf16.mxu0 0
  %3079 = vmatpush1.bf16.msra.mxu0 0
  %3080 = vmatprep.subr.bf16.mxu0 0
  %3081 = vmatpush1.bf16.msra.mxu0 0
  %3082 = vmatprep.subr.bf16.mxu0 0
  %3083 = vmatpush1.bf16.msra.mxu0 0
  %3084 = vmatprep.subr.bf16.mxu0 0
  %3085 = vmatpush1.bf16.msra.mxu0 0
  %3086 = vmatprep.subr.bf16.mxu0 0
  %3087 = vmatpush1.bf16.msra.mxu0 0
  %3088 = vmatprep.subr.bf16.mxu0 0
  %3089 = vmatpush1.bf16.msra.mxu0 0
  %3090 = vmatprep.subr.bf16.mxu0 0
  %3091 = vmatpush1.bf16.msra.mxu0 0
  %3092 = vmatprep.subr.bf16.mxu0 0
  %3093 = vmatpush1.bf16.msra.mxu0 0
  %3094 = vmatprep.mubr.bf16.mxu0 0
  %3095 = vmatmul.mubr.bf16.gmra.mrb[0].mxu0 %v2978
  %v3096 = vpop.f32.mrb[0].mxu0
  %v3097 = vadd.f32 %v3015, %v3096
  %v3098 = vpop.f32.mrb[0].mxu0
  %v3099 = vadd.f32 %v3017, %v3098
  %v3100 = vpop.f32.mrb[0].mxu0
  %v3101 = vpop.f32.mrb[0].mxu0
  %3102 = vdwg.mxu0
  %3103 = vmatprep.subr.bf16.mxu0 %v1156
  %3104 = vmatpush1.bf16.msra.mxu0 %v1155
  %3105 = vmatprep.subr.bf16.mxu0 %v1160
  %3106 = vmatpush1.bf16.msra.mxu0 %v1159
  %3107 = vmatprep.subr.bf16.mxu0 %v1164
  %3108 = vmatpush1.bf16.msra.mxu0 %v1163
  %3109 = vmatprep.subr.bf16.mxu0 %v1168
  %3110 = vmatpush1.bf16.msra.mxu0 %v1167
  %3111 = vmatprep.subr.bf16.mxu0 %v1172
  %3112 = vmatpush1.bf16.msra.mxu0 %v1171
  %3113 = vmatprep.subr.bf16.mxu0 %v1176
  %3114 = vmatpush1.bf16.msra.mxu0 %v1175
  %3115 = vmatprep.subr.bf16.mxu0 %v1180
  %3116 = vmatpush1.bf16.msra.mxu0 %v1179
  %3117 = vmatprep.subr.bf16.mxu0 %v1184
  %3118 = vmatpush1.bf16.msra.mxu0 %v1183
  %3119 = vmatprep.subr.bf16.mxu0 0
  %3120 = vmatpush1.bf16.msra.mxu0 0
  %3121 = vmatprep.subr.bf16.mxu0 0
  %3122 = vmatpush1.bf16.msra.mxu0 0
  %3123 = vmatprep.subr.bf16.mxu0 0
  %3124 = vmatpush1.bf16.msra.mxu0 0
  %3125 = vmatprep.subr.bf16.mxu0 0
  %3126 = vmatpush1.bf16.msra.mxu0 0
  %3127 = vmatprep.subr.bf16.mxu0 0
  %3128 = vmatpush1.bf16.msra.mxu0 0
  %3129 = vmatprep.subr.bf16.mxu0 0
  %3130 = vmatpush1.bf16.msra.mxu0 0
  %3131 = vmatprep.subr.bf16.mxu0 0
  %3132 = vmatpush1.bf16.msra.mxu0 0
  %3133 = vmatprep.subr.bf16.mxu0 0
  %3134 = vmatpush1.bf16.msra.mxu0 0
  %3135 = vmatprep.mubr.bf16.mxu0 0
  %3136 = vmatmul.mubr.bf16.gmra.mrb[0].mxu0 %v2978
  %v3137 = vpop.f32.mrb[0].mxu0
  %v3138 = vadd.f32 %v3056, %v3137
  %v3139 = vpop.f32.mrb[0].mxu0
  %v3140 = vadd.f32 %v3058, %v3139
  %v3141 = vpop.f32.mrb[0].mxu0
  %v3142 = vpop.f32.mrb[0].mxu0
  %3143 = vdwg.mxu0
  %v3144 = vadd.f32 %v3097, %v1303
  %v3145 = vadd.f32 %v3099, %v1307
  %v3146 = vadd.f32 %v3138, %v1311
  %v3147 = vadd.f32 %v3140, %v1315
  %v3148 = vxor.u32 %v3144, 2147483648
  %v3149 = vmul.f32 %v3148, 1.442695
  %v3150 = vpow.pop %v3149
  %v3151 = vadd.f32 %v3150, 1.0
  %v3152 = vrcp.pop %v3151
  %v3153 = vmul.f32 1.0, %v3152
  %v3154 = vxor.u32 %v3145, 2147483648
  %v3155 = vmul.f32 %v3154, 1.442695
  %v3156 = vpow.pop %v3155
  %v3157 = vadd.f32 %v3156, 1.0
  %v3158 = vrcp.pop %v3157
  %v3159 = vmul.f32 1.0, %v3158
  %v3160 = vtanh.pop %v3146
  %v3161 = vxor.u32 %v3147, 2147483648
  %v3162 = vmul.f32 %v3161, 1.442695
  %v3163 = vpow.pop %v3162
  %v3164 = vadd.f32 %v3163, 1.0
  %v3165 = vrcp.pop %v3164
  %v3166 = vmul.f32 1.0, %v3165
  %v3167 = vmul.f32 %v3159, %v2865
  %v3168 = vmul.f32 %v3153, %v3160
  %v3169 = vadd.f32 %v3167, %v3168
  %v3170 = vtanh.pop %v3169
  %v3171 = vmul.f32 %v3166, %v3170
  %3172 = vmatprep.subr.bf16.mxu0 %v641
  %3173 = vmatpush1.bf16.msra.mxu0 %v640
  %3174 = vmatprep.subr.bf16.mxu0 %v645
  %3175 = vmatpush1.bf16.msra.mxu0 %v644
  %3176 = vmatprep.subr.bf16.mxu0 %v649
  %3177 = vmatpush1.bf16.msra.mxu0 %v648
  %3178 = vmatprep.subr.bf16.mxu0 %v653
  %3179 = vmatpush1.bf16.msra.mxu0 %v652
  %3180 = vmatprep.subr.bf16.mxu0 %v657
  %3181 = vmatpush1.bf16.msra.mxu0 %v656
  %3182 = vmatprep.subr.bf16.mxu0 %v661
  %3183 = vmatpush1.bf16.msra.mxu0 %v660
  %3184 = vmatprep.subr.bf16.mxu0 %v665
  %3185 = vmatpush1.bf16.msra.mxu0 %v664
  %3186 = vmatprep.subr.bf16.mxu0 %v669
  %3187 = vmatpush1.bf16.msra.mxu0 %v668
  %3188 = vmatprep.subr.bf16.mxu0 0
  %3189 = vmatpush1.bf16.msra.mxu0 0
  %3190 = vmatprep.subr.bf16.mxu0 0
  %3191 = vmatpush1.bf16.msra.mxu0 0
  %3192 = vmatprep.subr.bf16.mxu0 0
  %3193 = vmatpush1.bf16.msra.mxu0 0
  %3194 = vmatprep.subr.bf16.mxu0 0
  %3195 = vmatpush1.bf16.msra.mxu0 0
  %3196 = vmatprep.subr.bf16.mxu0 0
  %3197 = vmatpush1.bf16.msra.mxu0 0
  %3198 = vmatprep.subr.bf16.mxu0 0
  %3199 = vmatpush1.bf16.msra.mxu0 0
  %3200 = vmatprep.subr.bf16.mxu0 0
  %3201 = vmatpush1.bf16.msra.mxu0 0
  %3202 = vmatprep.subr.bf16.mxu0 0
  %3203 = vmatpush1.bf16.msra.mxu0 0
  %3204 = vmatprep.mubr.bf16.mxu0 0
  %3205 = vmatmul.mubr.bf16.gmra.mrb[0].mxu0 %v2978
  %v3206 = vpop.f32.mrb[0].mxu0
  %v3207 = vadd.f32 0.0, %v3206
  %v3208 = vpop.f32.mrb[0].mxu0
  %v3209 = vadd.f32 0.0, %v3208
  %v3210 = vpop.f32.mrb[0].mxu0
  %v3211 = vpop.f32.mrb[0].mxu0
  %3212 = vdwg.mxu0
  %3213 = vmatprep.subr.bf16.mxu0 %v643
  %3214 = vmatpush1.bf16.msra.mxu0 %v642
  %3215 = vmatprep.subr.bf16.mxu0 %v647
  %3216 = vmatpush1.bf16.msra.mxu0 %v646
  %3217 = vmatprep.subr.bf16.mxu0 %v651
  %3218 = vmatpush1.bf16.msra.mxu0 %v650
  %3219 = vmatprep.subr.bf16.mxu0 %v655
  %3220 = vmatpush1.bf16.msra.mxu0 %v654
  %3221 = vmatprep.subr.bf16.mxu0 %v659
  %3222 = vmatpush1.bf16.msra.mxu0 %v658
  %3223 = vmatprep.subr.bf16.mxu0 %v663
  %3224 = vmatpush1.bf16.msra.mxu0 %v662
  %3225 = vmatprep.subr.bf16.mxu0 %v667
  %3226 = vmatpush1.bf16.msra.mxu0 %v666
  %3227 = vmatprep.subr.bf16.mxu0 %v671
  %3228 = vmatpush1.bf16.msra.mxu0 %v670
  %3229 = vmatprep.subr.bf16.mxu0 0
  %3230 = vmatpush1.bf16.msra.mxu0 0
  %3231 = vmatprep.subr.bf16.mxu0 0
  %3232 = vmatpush1.bf16.msra.mxu0 0
  %3233 = vmatprep.subr.bf16.mxu0 0
  %3234 = vmatpush1.bf16.msra.mxu0 0
  %3235 = vmatprep.subr.bf16.mxu0 0
  %3236 = vmatpush1.bf16.msra.mxu0 0
  %3237 = vmatprep.subr.bf16.mxu0 0
  %3238 = vmatpush1.bf16.msra.mxu0 0
  %3239 = vmatprep.subr.bf16.mxu0 0
  %3240 = vmatpush1.bf16.msra.mxu0 0
  %3241 = vmatprep.subr.bf16.mxu0 0
  %3242 = vmatpush1.bf16.msra.mxu0 0
  %3243 = vmatprep.subr.bf16.mxu0 0
  %3244 = vmatpush1.bf16.msra.mxu0 0
  %3245 = vmatprep.mubr.bf16.mxu0 0
  %3246 = vmatmul.mubr.bf16.gmra.mrb[0].mxu0 %v2978
  %v3247 = vpop.f32.mrb[0].mxu0
  %v3248 = vadd.f32 0.0, %v3247
  %v3249 = vpop.f32.mrb[0].mxu0
  %v3250 = vadd.f32 0.0, %v3249
  %v3251 = vpop.f32.mrb[0].mxu0
  %v3252 = vpop.f32.mrb[0].mxu0
  %3253 = vdwg.mxu0
  %v3254 = vadd.f32 %v370, %v3207
  %v3255 = vadd.f32 %v372, %v3209
  %v3256 = vadd.f32 %v443, %v3248
  %v3257 = vadd.f32 %v445, %v3250
  %v3258 = vxor.u32 %v3254, 2147483648
  %v3259 = vmul.f32 %v3258, 1.442695
  %v3260 = vpow.pop %v3259
  %v3261 = vadd.f32 %v3260, 1.0
  %v3262 = vrcp.pop %v3261
  %v3263 = vmul.f32 1.0, %v3262
  %v3264 = vxor.u32 %v3255, 2147483648
  %v3265 = vmul.f32 %v3264, 1.442695
  %v3266 = vpow.pop %v3265
  %v3267 = vadd.f32 %v3266, 1.0
  %v3268 = vrcp.pop %v3267
  %v3269 = vmul.f32 1.0, %v3268
  %v3270 = vtanh.pop %v3256
  %v3271 = vxor.u32 %v3257, 2147483648
  %v3272 = vmul.f32 %v3271, 1.442695
  %v3273 = vpow.pop %v3272
  %v3274 = vadd.f32 %v3273, 1.0
  %v3275 = vrcp.pop %v3274
  %v3276 = vmul.f32 1.0, %v3275
  %v3277 = vmul.f32 %v3269, %v2975
  %v3278 = vmul.f32 %v3263, %v3270
  %v3279 = vadd.f32 %v3277, %v3278
  %v3280 = vtanh.pop %v3279
  %v3281 = vmul.f32 %v3276, %v3280
  %v3282 = vpack.c.bf16 %v3281, %v3281
  %v3283 = vpack.c.bf16 %v3171, %v3171
  %3284 = vmatprep.subr.bf16.mxu0 %v912
  %3285 = vmatpush1.bf16.msra.mxu0 %v911
  %3286 = vmatprep.subr.bf16.mxu0 %v916
  %3287 = vmatpush1.bf16.msra.mxu0 %v915
  %3288 = vmatprep.subr.bf16.mxu0 %v920
  %3289 = vmatpush1.bf16.msra.mxu0 %v919
  %3290 = vmatprep.subr.bf16.mxu0 %v924
  %3291 = vmatpush1.bf16.msra.mxu0 %v923
  %3292 = vmatprep.subr.bf16.mxu0 %v928
  %3293 = vmatpush1.bf16.msra.mxu0 %v927
  %3294 = vmatprep.subr.bf16.mxu0 %v932
  %3295 = vmatpush1.bf16.msra.mxu0 %v931
  %3296 = vmatprep.subr.bf16.mxu0 %v936
  %3297 = vmatpush1.bf16.msra.mxu0 %v935
  %3298 = vmatprep.subr.bf16.mxu0 %v940
  %3299 = vmatpush1.bf16.msra.mxu0 %v939
  %3300 = vmatprep.subr.bf16.mxu0 0
  %3301 = vmatpush1.bf16.msra.mxu0 0
  %3302 = vmatprep.subr.bf16.mxu0 0
  %3303 = vmatpush1.bf16.msra.mxu0 0
  %3304 = vmatprep.subr.bf16.mxu0 0
  %3305 = vmatpush1.bf16.msra.mxu0 0
  %3306 = vmatprep.subr.bf16.mxu0 0
  %3307 = vmatpush1.bf16.msra.mxu0 0
  %3308 = vmatprep.subr.bf16.mxu0 0
  %3309 = vmatpush1.bf16.msra.mxu0 0
  %3310 = vmatprep.subr.bf16.mxu0 0
  %3311 = vmatpush1.bf16.msra.mxu0 0
  %3312 = vmatprep.subr.bf16.mxu0 0
  %3313 = vmatpush1.bf16.msra.mxu0 0
  %3314 = vmatprep.subr.bf16.mxu0 0
  %3315 = vmatpush1.bf16.msra.mxu0 0
  %3316 = vmatprep.mubr.bf16.mxu0 0
  %3317 = vmatmul.mubr.bf16.gmra.mrb[0].mxu0 %v3283
  %v3318 = vpop.f32.mrb[0].mxu0
  %v3319 = vadd.f32 0.0, %v3318
  %v3320 = vpop.f32.mrb[0].mxu0
  %v3321 = vadd.f32 0.0, %v3320
  %v3322 = vpop.f32.mrb[0].mxu0
  %v3323 = vpop.f32.mrb[0].mxu0
  %3324 = vdwg.mxu0
  %3325 = vmatprep.subr.bf16.mxu0 %v914
  %3326 = vmatpush1.bf16.msra.mxu0 %v913
  %3327 = vmatprep.subr.bf16.mxu0 %v918
  %3328 = vmatpush1.bf16.msra.mxu0 %v917
  %3329 = vmatprep.subr.bf16.mxu0 %v922
  %3330 = vmatpush1.bf16.msra.mxu0 %v921
  %3331 = vmatprep.subr.bf16.mxu0 %v926
  %3332 = vmatpush1.bf16.msra.mxu0 %v925
  %3333 = vmatprep.subr.bf16.mxu0 %v930
  %3334 = vmatpush1.bf16.msra.mxu0 %v929
  %3335 = vmatprep.subr.bf16.mxu0 %v934
  %3336 = vmatpush1.bf16.msra.mxu0 %v933
  %3337 = vmatprep.subr.bf16.mxu0 %v938
  %3338 = vmatpush1.bf16.msra.mxu0 %v937
  %3339 = vmatprep.subr.bf16.mxu0 %v942
  %3340 = vmatpush1.bf16.msra.mxu0 %v941
  %3341 = vmatprep.subr.bf16.mxu0 0
  %3342 = vmatpush1.bf16.msra.mxu0 0
  %3343 = vmatprep.subr.bf16.mxu0 0
  %3344 = vmatpush1.bf16.msra.mxu0 0
  %3345 = vmatprep.subr.bf16.mxu0 0
  %3346 = vmatpush1.bf16.msra.mxu0 0
  %3347 = vmatprep.subr.bf16.mxu0 0
  %3348 = vmatpush1.bf16.msra.mxu0 0
  %3349 = vmatprep.subr.bf16.mxu0 0
  %3350 = vmatpush1.bf16.msra.mxu0 0
  %3351 = vmatprep.subr.bf16.mxu0 0
  %3352 = vmatpush1.bf16.msra.mxu0 0
  %3353 = vmatprep.subr.bf16.mxu0 0
  %3354 = vmatpush1.bf16.msra.mxu0 0
  %3355 = vmatprep.subr.bf16.mxu0 0
  %3356 = vmatpush1.bf16.msra.mxu0 0
  %3357 = vmatprep.mubr.bf16.mxu0 0
  %3358 = vmatmul.mubr.bf16.gmra.mrb[0].mxu0 %v3283
  %v3359 = vpop.f32.mrb[0].mxu0
  %v3360 = vadd.f32 0.0, %v3359
  %v3361 = vpop.f32.mrb[0].mxu0
  %v3362 = vadd.f32 0.0, %v3361
  %v3363 = vpop.f32.mrb[0].mxu0
  %v3364 = vpop.f32.mrb[0].mxu0
  %3365 = vdwg.mxu0
  %3366 = vmatprep.subr.bf16.mxu0 %v1154
  %3367 = vmatpush1.bf16.msra.mxu0 %v1153
  %3368 = vmatprep.subr.bf16.mxu0 %v1158
  %3369 = vmatpush1.bf16.msra.mxu0 %v1157
  %3370 = vmatprep.subr.bf16.mxu0 %v1162
  %3371 = vmatpush1.bf16.msra.mxu0 %v1161
  %3372 = vmatprep.subr.bf16.mxu0 %v1166
  %3373 = vmatpush1.bf16.msra.mxu0 %v1165
  %3374 = vmatprep.subr.bf16.mxu0 %v1170
  %3375 = vmatpush1.bf16.msra.mxu0 %v1169
  %3376 = vmatprep.subr.bf16.mxu0 %v1174
  %3377 = vmatpush1.bf16.msra.mxu0 %v1173
  %3378 = vmatprep.subr.bf16.mxu0 %v1178
  %3379 = vmatpush1.bf16.msra.mxu0 %v1177
  %3380 = vmatprep.subr.bf16.mxu0 %v1182
  %3381 = vmatpush1.bf16.msra.mxu0 %v1181
  %3382 = vmatprep.subr.bf16.mxu0 0
  %3383 = vmatpush1.bf16.msra.mxu0 0
  %3384 = vmatprep.subr.bf16.mxu0 0
  %3385 = vmatpush1.bf16.msra.mxu0 0
  %3386 = vmatprep.subr.bf16.mxu0 0
  %3387 = vmatpush1.bf16.msra.mxu0 0
  %3388 = vmatprep.subr.bf16.mxu0 0
  %3389 = vmatpush1.bf16.msra.mxu0 0
  %3390 = vmatprep.subr.bf16.mxu0 0
  %3391 = vmatpush1.bf16.msra.mxu0 0
  %3392 = vmatprep.subr.bf16.mxu0 0
  %3393 = vmatpush1.bf16.msra.mxu0 0
  %3394 = vmatprep.subr.bf16.mxu0 0
  %3395 = vmatpush1.bf16.msra.mxu0 0
  %3396 = vmatprep.subr.bf16.mxu0 0
  %3397 = vmatpush1.bf16.msra.mxu0 0
  %3398 = vmatprep.mubr.bf16.mxu0 0
  %3399 = vmatmul.mubr.bf16.gmra.mrb[0].mxu0 %v3282
  %v3400 = vpop.f32.mrb[0].mxu0
  %v3401 = vadd.f32 %v3319, %v3400
  %v3402 = vpop.f32.mrb[0].mxu0
  %v3403 = vadd.f32 %v3321, %v3402
  %v3404 = vpop.f32.mrb[0].mxu0
  %v3405 = vpop.f32.mrb[0].mxu0
  %3406 = vdwg.mxu0
  %3407 = vmatprep.subr.bf16.mxu0 %v1156
  %3408 = vmatpush1.bf16.msra.mxu0 %v1155
  %3409 = vmatprep.subr.bf16.mxu0 %v1160
  %3410 = vmatpush1.bf16.msra.mxu0 %v1159
  %3411 = vmatprep.subr.bf16.mxu0 %v1164
  %3412 = vmatpush1.bf16.msra.mxu0 %v1163
  %3413 = vmatprep.subr.bf16.mxu0 %v1168
  %3414 = vmatpush1.bf16.msra.mxu0 %v1167
  %3415 = vmatprep.subr.bf16.mxu0 %v1172
  %3416 = vmatpush1.bf16.msra.mxu0 %v1171
  %3417 = vmatprep.subr.bf16.mxu0 %v1176
  %3418 = vmatpush1.bf16.msra.mxu0 %v1175
  %3419 = vmatprep.subr.bf16.mxu0 %v1180
  %3420 = vmatpush1.bf16.msra.mxu0 %v1179
  %3421 = vmatprep.subr.bf16.mxu0 %v1184
  %3422 = vmatpush1.bf16.msra.mxu0 %v1183
  %3423 = vmatprep.subr.bf16.mxu0 0
  %3424 = vmatpush1.bf16.msra.mxu0 0
  %3425 = vmatprep.subr.bf16.mxu0 0
  %3426 = vmatpush1.bf16.msra.mxu0 0
  %3427 = vmatprep.subr.bf16.mxu0 0
  %3428 = vmatpush1.bf16.msra.mxu0 0
  %3429 = vmatprep.subr.bf16.mxu0 0
  %3430 = vmatpush1.bf16.msra.mxu0 0
  %3431 = vmatprep.subr.bf16.mxu0 0
  %3432 = vmatpush1.bf16.msra.mxu0 0
  %3433 = vmatprep.subr.bf16.mxu0 0
  %3434 = vmatpush1.bf16.msra.mxu0 0
  %3435 = vmatprep.subr.bf16.mxu0 0
  %3436 = vmatpush1.bf16.msra.mxu0 0
  %3437 = vmatprep.subr.bf16.mxu0 0
  %3438 = vmatpush1.bf16.msra.mxu0 0
  %3439 = vmatprep.mubr.bf16.mxu0 0
  %3440 = vmatmul.mubr.bf16.gmra.mrb[0].mxu0 %v3282
  %v3441 = vpop.f32.mrb[0].mxu0
  %v3442 = vadd.f32 %v3360, %v3441
  %v3443 = vpop.f32.mrb[0].mxu0
  %v3444 = vadd.f32 %v3362, %v3443
  %v3445 = vpop.f32.mrb[0].mxu0
  %v3446 = vpop.f32.mrb[0].mxu0
  %3447 = vdwg.mxu0
  %v3448 = vadd.f32 %v3401, %v1303
  %v3449 = vadd.f32 %v3403, %v1307
  %v3450 = vadd.f32 %v3442, %v1311
  %v3451 = vadd.f32 %v3444, %v1315
  %v3452 = vxor.u32 %v3448, 2147483648
  %v3453 = vmul.f32 %v3452, 1.442695
  %v3454 = vpow.pop %v3453
  %v3455 = vadd.f32 %v3454, 1.0
  %v3456 = vrcp.pop %v3455
  %v3457 = vmul.f32 1.0, %v3456
  %v3458 = vxor.u32 %v3449, 2147483648
  %v3459 = vmul.f32 %v3458, 1.442695
  %v3460 = vpow.pop %v3459
  %v3461 = vadd.f32 %v3460, 1.0
  %v3462 = vrcp.pop %v3461
  %v3463 = vmul.f32 1.0, %v3462
  %v3464 = vtanh.pop %v3450
  %v3465 = vxor.u32 %v3451, 2147483648
  %v3466 = vmul.f32 %v3465, 1.442695
  %v3467 = vpow.pop %v3466
  %v3468 = vadd.f32 %v3467, 1.0
  %v3469 = vrcp.pop %v3468
  %v3470 = vmul.f32 1.0, %v3469
  %v3471 = vmul.f32 %v3463, %v3169
  %v3472 = vmul.f32 %v3457, %v3464
  %v3473 = vadd.f32 %v3471, %v3472
  %v3474 = vtanh.pop %v3473
  %v3475 = vmul.f32 %v3470, %v3474
  %v3476 = vld [vmem:[%s2] sm:$0xff]
  %v3477 = vld [vmem:[%s2 + $0x8] sm:$0xff]
  %v3478 = vld [vmem:[%s3] sm:$0xff]
  %vm3479 = vcmask 64512
  %v3480 = vsel %vm3479, %v3478, 0.0
  %3481 = vadd.xlane.f32.xlu0 %v3480
  %v3482 = vpop.xlane.xlu0 %3481
  %v3483 = vadd.f32 %v3482, 1.0
  %v3484 = vpack.c.bf16 %v3478, %v3478
  %v3485 = vpack.c.bf16 %v3477, %v3477
  %v3486 = vpack.c.bf16 %v3475, %v3475
  %v3488 = vsel %vm3479, %v3484, 0
  %v3491 = vsel %vm91, %v3485, 0
  %v3494 = vsel %vm91, %v3486, 0
  %3496 = vmatprep.subr.bf16.mxu0 %v3494
  %3497 = vmatpush1.bf16.msra.mxu0 %v3491
  %3498 = vmatprep.subr.bf16.mxu0 0
  %3499 = vmatpush1.bf16.msra.mxu0 0
  %3500 = vmatprep.subr.bf16.mxu0 0
  %3501 = vmatpush1.bf16.msra.mxu0 0
  %3502 = vmatprep.subr.bf16.mxu0 0
  %3503 = vmatpush1.bf16.msra.mxu0 0
  %3504 = vmatprep.subr.bf16.mxu0 0
  %3505 = vmatpush1.bf16.msra.mxu0 0
  %3506 = vmatprep.subr.bf16.mxu0 0
  %3507 = vmatpush1.bf16.msra.mxu0 0
  %3508 = vmatprep.subr.bf16.mxu0 0
  %3509 = vmatpush1.bf16.msra.mxu0 0
  %3510 = vmatprep.subr.bf16.mxu0 0
  %3511 = vmatpush1.bf16.msra.mxu0 0
  %3512 = vmatprep.subr.bf16.mxu0 0
  %3513 = vmatpush1.bf16.msra.mxu0 0
  %3514 = vmatprep.subr.bf16.mxu0 0
  %3515 = vmatpush1.bf16.msra.mxu0 0
  %3516 = vmatprep.subr.bf16.mxu0 0
  %3517 = vmatpush1.bf16.msra.mxu0 0
  %3518 = vmatprep.subr.bf16.mxu0 0
  %3519 = vmatpush1.bf16.msra.mxu0 0
  %3520 = vmatprep.subr.bf16.mxu0 0
  %3521 = vmatpush1.bf16.msra.mxu0 0
  %3522 = vmatprep.subr.bf16.mxu0 0
  %3523 = vmatpush1.bf16.msra.mxu0 0
  %3524 = vmatprep.subr.bf16.mxu0 0
  %3525 = vmatpush1.bf16.msra.mxu0 0
  %3526 = vmatprep.subr.bf16.mxu0 0
  %3527 = vmatpush1.bf16.msra.mxu0 0
  %3528 = vmatprep.mubr.bf16.mxu0 0
  %3529 = vmatmul.mubr.bf16.gmra.mrb[0].mxu0 %v3488
  %v3530 = vpop.f32.mrb[0].mxu0
  %v3531 = vadd.f32 0.0, %v3530
  %v3532 = vpop.f32.mrb[0].mxu0
  %v3533 = vadd.f32 0.0, %v3532
  %v3534 = vpop.f32.mrb[0].mxu0
  %v3535 = vpop.f32.mrb[0].mxu0
  %3536 = vdwg.mxu0
  %v3537 = vadd.f32 %v3476, %v3531
  %v3538 = vadd.f32 %v218, %v3533
  %v3539 = vrcp.pop %v3483
  %v3540 = vmul.f32 %v3537, %v3539
  %v3541 = vmul.f32 %v3538, %v3539
  %v3542 = vpack.c.bf16 %v3477, %v3540
  %v3543 = vpack.c.bf16 %v3475, %v3541
  %v3544 = vld [vmem:[%s15] sm:$0xff]
  %v3545 = vld [vmem:[%s15 + $0x8] sm:$0xff]
  %v3546 = vld [vmem:[%s15 + $0x10] sm:$0xff]
  %v3547 = vld [vmem:[%s15 + $0x18] sm:$0xff]
  %v3548 = vld [vmem:[%s15 + $0x20] sm:$0xff]
  %v3549 = vld [vmem:[%s15 + $0x28] sm:$0xff]
  %v3550 = vld [vmem:[%s15 + $0x30] sm:$0xff]
  %v3551 = vld [vmem:[%s15 + $0x38] sm:$0xff]
  %v3552 = vld [vmem:[%s15 + $0x40] sm:$0xff]
  %v3553 = vld [vmem:[%s15 + $0x48] sm:$0xff]
  %v3554 = vld [vmem:[%s15 + $0x50] sm:$0xff]
  %v3555 = vld [vmem:[%s15 + $0x58] sm:$0xff]
  %v3556 = vld [vmem:[%s15 + $0x60] sm:$0xff]
  %v3557 = vld [vmem:[%s15 + $0x68] sm:$0xff]
  %v3558 = vld [vmem:[%s15 + $0x70] sm:$0xff]
  %v3559 = vld [vmem:[%s15 + $0x78] sm:$0xff]
  %v3560 = vld [vmem:[%s15 + $0x80] sm:$0xff]
  %v3561 = vld [vmem:[%s15 + $0x88] sm:$0xff]
  %v3562 = vld [vmem:[%s15 + $0x90] sm:$0xff]
  %v3563 = vld [vmem:[%s15 + $0x98] sm:$0xff]
  %v3564 = vld [vmem:[%s15 + $0xa0] sm:$0xff]
  %v3565 = vld [vmem:[%s15 + $0xa8] sm:$0xff]
  %v3566 = vld [vmem:[%s15 + $0xb0] sm:$0xff]
  %v3567 = vld [vmem:[%s15 + $0xb8] sm:$0xff]
  %v3568 = vld [vmem:[%s15 + $0xc0] sm:$0xff]
  %v3569 = vld [vmem:[%s15 + $0xc8] sm:$0xff]
  %v3570 = vld [vmem:[%s15 + $0xd0] sm:$0xff]
  %v3571 = vld [vmem:[%s15 + $0xd8] sm:$0xff]
  %v3572 = vld [vmem:[%s15 + $0xe0] sm:$0xff]
  %v3573 = vld [vmem:[%s15 + $0xe8] sm:$0xff]
  %v3574 = vld [vmem:[%s15 + $0xf0] sm:$0xff]
  %v3575 = vld [vmem:[%s15 + $0xf8] sm:$0xff]
  %v3576 = vld [vmem:[%s16] sm:$0x3]
  %v3578 = vlaneseq
  %v3579 = vshrl.u32 %v3578, 7
  %v3580 = vsub.s32 0, %v3579
  %v3581 = vrot.slane %v3576, %v3580
  %v3582 = vlaneseq
  %v3583 = vshrl.u32 %v3582, 7
  %v3584 = vsub.s32 1, %v3583
  %v3585 = vrot.slane %v3576, %v3584
  %v3620 = vunpack.c.l.b16 %v3544
  %v3621 = vunpack.c.h.b16 %v3544
  %v3622 = vunpack.c.l.b16 %v3545
  %v3623 = vunpack.c.h.b16 %v3545
  %v3624 = vunpack.c.l.b16 %v3546
  %v3625 = vunpack.c.h.b16 %v3546
  %v3626 = vunpack.c.l.b16 %v3547
  %v3627 = vunpack.c.h.b16 %v3547
  %v3628 = vunpack.c.l.b16 %v3548
  %v3629 = vunpack.c.h.b16 %v3548
  %v3630 = vunpack.c.l.b16 %v3549
  %v3631 = vunpack.c.h.b16 %v3549
  %v3632 = vunpack.c.l.b16 %v3550
  %v3633 = vunpack.c.h.b16 %v3550
  %v3634 = vunpack.c.l.b16 %v3551
  %v3635 = vunpack.c.h.b16 %v3551
  %v3636 = vunpack.c.l.b16 %v3552
  %v3637 = vunpack.c.h.b16 %v3552
  %v3638 = vunpack.c.l.b16 %v3553
  %v3639 = vunpack.c.h.b16 %v3553
  %v3640 = vunpack.c.l.b16 %v3554
  %v3641 = vunpack.c.h.b16 %v3554
  %v3642 = vunpack.c.l.b16 %v3555
  %v3643 = vunpack.c.h.b16 %v3555
  %v3644 = vunpack.c.l.b16 %v3556
  %v3645 = vunpack.c.h.b16 %v3556
  %v3646 = vunpack.c.l.b16 %v3557
  %v3647 = vunpack.c.h.b16 %v3557
  %v3648 = vunpack.c.l.b16 %v3558
  %v3649 = vunpack.c.h.b16 %v3558
  %v3650 = vunpack.c.l.b16 %v3559
  %v3651 = vunpack.c.h.b16 %v3559
  %v3652 = vunpack.c.l.b16 %v3560
  %v3653 = vunpack.c.h.b16 %v3560
  %v3654 = vunpack.c.l.b16 %v3561
  %v3655 = vunpack.c.h.b16 %v3561
  %v3656 = vunpack.c.l.b16 %v3562
  %v3657 = vunpack.c.h.b16 %v3562
  %v3658 = vunpack.c.l.b16 %v3563
  %v3659 = vunpack.c.h.b16 %v3563
  %v3660 = vunpack.c.l.b16 %v3564
  %v3661 = vunpack.c.h.b16 %v3564
  %v3662 = vunpack.c.l.b16 %v3565
  %v3663 = vunpack.c.h.b16 %v3565
  %v3664 = vunpack.c.l.b16 %v3566
  %v3665 = vunpack.c.h.b16 %v3566
  %v3666 = vunpack.c.l.b16 %v3567
  %v3667 = vunpack.c.h.b16 %v3567
  %v3668 = vunpack.c.l.b16 %v3568
  %v3669 = vunpack.c.h.b16 %v3568
  %v3670 = vunpack.c.l.b16 %v3569
  %v3671 = vunpack.c.h.b16 %v3569
  %v3672 = vunpack.c.l.b16 %v3570
  %v3673 = vunpack.c.h.b16 %v3570
  %v3674 = vunpack.c.l.b16 %v3571
  %v3675 = vunpack.c.h.b16 %v3571
  %v3676 = vunpack.c.l.b16 %v3572
  %v3677 = vunpack.c.h.b16 %v3572
  %v3678 = vunpack.c.l.b16 %v3573
  %v3679 = vunpack.c.h.b16 %v3573
  %v3680 = vunpack.c.l.b16 %v3574
  %v3681 = vunpack.c.h.b16 %v3574
  %v3682 = vunpack.c.l.b16 %v3575
  %v3683 = vunpack.c.h.b16 %v3575
  %v3684 = vpack.c.b16 %v3622, %v3620
  %v3685 = vpack.c.b16 %v3623, %v3621
  %v3686 = vpack.c.b16 %v3626, %v3624
  %v3687 = vpack.c.b16 %v3627, %v3625
  %v3688 = vpack.c.b16 %v3630, %v3628
  %v3689 = vpack.c.b16 %v3631, %v3629
  %v3690 = vpack.c.b16 %v3634, %v3632
  %v3691 = vpack.c.b16 %v3635, %v3633
  %v3692 = vpack.c.b16 %v3638, %v3636
  %v3693 = vpack.c.b16 %v3639, %v3637
  %v3694 = vpack.c.b16 %v3642, %v3640
  %v3695 = vpack.c.b16 %v3643, %v3641
  %v3696 = vpack.c.b16 %v3646, %v3644
  %v3697 = vpack.c.b16 %v3647, %v3645
  %v3698 = vpack.c.b16 %v3650, %v3648
  %v3699 = vpack.c.b16 %v3651, %v3649
  %v3700 = vpack.c.b16 %v3654, %v3652
  %v3701 = vpack.c.b16 %v3655, %v3653
  %v3702 = vpack.c.b16 %v3658, %v3656
  %v3703 = vpack.c.b16 %v3659, %v3657
  %v3704 = vpack.c.b16 %v3662, %v3660
  %v3705 = vpack.c.b16 %v3663, %v3661
  %v3706 = vpack.c.b16 %v3666, %v3664
  %v3707 = vpack.c.b16 %v3667, %v3665
  %v3708 = vpack.c.b16 %v3670, %v3668
  %v3709 = vpack.c.b16 %v3671, %v3669
  %v3710 = vpack.c.b16 %v3674, %v3672
  %v3711 = vpack.c.b16 %v3675, %v3673
  %v3712 = vpack.c.b16 %v3678, %v3676
  %v3713 = vpack.c.b16 %v3679, %v3677
  %v3714 = vpack.c.b16 %v3682, %v3680
  %v3715 = vpack.c.b16 %v3683, %v3681
  %3748 = vmatprep.subr.bf16.mxu0 %v3685
  %3749 = vmatpush1.bf16.msra.mxu0 %v3684
  %3750 = vmatprep.subr.bf16.mxu0 %v3687
  %3751 = vmatpush1.bf16.msra.mxu0 %v3686
  %3752 = vmatprep.subr.bf16.mxu0 %v3689
  %3753 = vmatpush1.bf16.msra.mxu0 %v3688
  %3754 = vmatprep.subr.bf16.mxu0 %v3691
  %3755 = vmatpush1.bf16.msra.mxu0 %v3690
  %3756 = vmatprep.subr.bf16.mxu0 %v3693
  %3757 = vmatpush1.bf16.msra.mxu0 %v3692
  %3758 = vmatprep.subr.bf16.mxu0 %v3695
  %3759 = vmatpush1.bf16.msra.mxu0 %v3694
  %3760 = vmatprep.subr.bf16.mxu0 %v3697
  %3761 = vmatpush1.bf16.msra.mxu0 %v3696
  %3762 = vmatprep.subr.bf16.mxu0 %v3699
  %3763 = vmatpush1.bf16.msra.mxu0 %v3698
  %3764 = vmatprep.subr.bf16.mxu0 %v3701
  %3765 = vmatpush1.bf16.msra.mxu0 %v3700
  %3766 = vmatprep.subr.bf16.mxu0 %v3703
  %3767 = vmatpush1.bf16.msra.mxu0 %v3702
  %3768 = vmatprep.subr.bf16.mxu0 %v3705
  %3769 = vmatpush1.bf16.msra.mxu0 %v3704
  %3770 = vmatprep.subr.bf16.mxu0 %v3707
  %3771 = vmatpush1.bf16.msra.mxu0 %v3706
  %3772 = vmatprep.subr.bf16.mxu0 %v3709
  %3773 = vmatpush1.bf16.msra.mxu0 %v3708
  %3774 = vmatprep.subr.bf16.mxu0 %v3711
  %3775 = vmatpush1.bf16.msra.mxu0 %v3710
  %3776 = vmatprep.subr.bf16.mxu0 %v3713
  %3777 = vmatpush1.bf16.msra.mxu0 %v3712
  %3778 = vmatprep.subr.bf16.mxu0 %v3715
  %3779 = vmatpush1.bf16.msra.mxu0 %v3714
  %3780 = vmatprep.mubr.bf16.mxu0 %v3543
  %3781 = vmatmul.mubr.bf16.gmra.mrb[0].mxu0 %v3542
  %v3782 = vpop.f32.mrb[0].mxu0
  %v3783 = vadd.f32 %v3581, %v3782
  %v3784 = vpop.f32.mrb[0].mxu0
  %v3785 = vadd.f32 %v3585, %v3784
  %v3786 = vpop.f32.mrb[0].mxu0
  %v3787 = vadd.f32 %v3581, %v3786
  %v3788 = vpop.f32.mrb[0].mxu0
  %v3789 = vadd.f32 %v3585, %v3788
  %3790 = vdwg.mxu0
  %v3791 = vmax.f32 %v3783, 0.0
  %v3792 = vmax.f32 %v3785, 0.0
  %v3793 = vmax.f32 %v3787, 0.0
  %v3794 = vmax.f32 %v3789, 0.0
  %v3795 = vlaneseq
  %v3796 = vshrl.u32 %v3795, 7
  %v3797 = vsub.s32 0, %v3796
  %v3798 = vrot.slane %v3791, %v3797
  %v3799 = vlaneseq
  %v3800 = vshrl.u32 %v3799, 7
  %v3801 = vsub.s32 0, %v3800
  %v3802 = vrot.slane %v3792, %v3801
  %v3803 = vsub.f32 %v3798, %v3793
  %v3804 = vsub.f32 %v3802, %v3794
  %v3805 = vand.u32 2147483647, %v3803
  %v3806 = vand.u32 2147483647, %v3804
  %v3807 = vlaneseq
  %v3808 = vshrl.u32 %v3807, 7
  %v3809 = vsub.s32 1, %v3808
  %v3810 = vrot.slane %v3791, %v3809
  %v3811 = vlaneseq
  %v3812 = vshrl.u32 %v3811, 7
  %v3813 = vsub.s32 1, %v3812
  %v3814 = vrot.slane %v3792, %v3813
  %v3815 = vsub.f32 %v3810, %v3793
  %v3816 = vsub.f32 %v3814, %v3794
  %v3817 = vand.u32 2147483647, %v3815
  %v3818 = vand.u32 2147483647, %v3816
  %v3819 = vlaneseq
  %v3820 = vshrl.u32 %v3819, 7
  %v3821 = vsub.s32 2, %v3820
  %v3822 = vrot.slane %v3791, %v3821
  %v3823 = vlaneseq
  %v3824 = vshrl.u32 %v3823, 7
  %v3825 = vsub.s32 2, %v3824
  %v3826 = vrot.slane %v3792, %v3825
  %v3827 = vsub.f32 %v3822, %v3793
  %v3828 = vsub.f32 %v3826, %v3794
  %v3829 = vand.u32 2147483647, %v3827
  %v3830 = vand.u32 2147483647, %v3828
  %v3831 = vlaneseq
  %v3832 = vshrl.u32 %v3831, 7
  %v3833 = vsub.s32 3, %v3832
  %v3834 = vrot.slane %v3791, %v3833
  %v3835 = vlaneseq
  %v3836 = vshrl.u32 %v3835, 7
  %v3837 = vsub.s32 3, %v3836
  %v3838 = vrot.slane %v3792, %v3837
  %v3839 = vsub.f32 %v3834, %v3793
  %v3840 = vsub.f32 %v3838, %v3794
  %v3841 = vand.u32 2147483647, %v3839
  %v3842 = vand.u32 2147483647, %v3840
  %v3843 = vlaneseq
  %v3844 = vshrl.u32 %v3843, 7
  %v3845 = vsub.s32 4, %v3844
  %v3846 = vrot.slane %v3791, %v3845
  %v3847 = vlaneseq
  %v3848 = vshrl.u32 %v3847, 7
  %v3849 = vsub.s32 4, %v3848
  %v3850 = vrot.slane %v3792, %v3849
  %v3851 = vsub.f32 %v3846, %v3793
  %v3852 = vsub.f32 %v3850, %v3794
  %v3853 = vand.u32 2147483647, %v3851
  %v3854 = vand.u32 2147483647, %v3852
  %v3855 = vlaneseq
  %v3856 = vshrl.u32 %v3855, 7
  %v3857 = vsub.s32 5, %v3856
  %v3858 = vrot.slane %v3791, %v3857
  %v3859 = vlaneseq
  %v3860 = vshrl.u32 %v3859, 7
  %v3861 = vsub.s32 5, %v3860
  %v3862 = vrot.slane %v3792, %v3861
  %v3863 = vsub.f32 %v3858, %v3793
  %v3864 = vsub.f32 %v3862, %v3794
  %v3865 = vand.u32 2147483647, %v3863
  %v3866 = vand.u32 2147483647, %v3864
  %v3867 = vlaneseq
  %v3868 = vshrl.u32 %v3867, 7
  %v3869 = vsub.s32 6, %v3868
  %v3870 = vrot.slane %v3791, %v3869
  %v3871 = vlaneseq
  %v3872 = vshrl.u32 %v3871, 7
  %v3873 = vsub.s32 6, %v3872
  %v3874 = vrot.slane %v3792, %v3873
  %v3875 = vsub.f32 %v3870, %v3793
  %v3876 = vsub.f32 %v3874, %v3794
  %v3877 = vand.u32 2147483647, %v3875
  %v3878 = vand.u32 2147483647, %v3876
  %v3879 = vlaneseq
  %v3880 = vshrl.u32 %v3879, 7
  %v3881 = vsub.s32 7, %v3880
  %v3882 = vrot.slane %v3791, %v3881
  %v3883 = vlaneseq
  %v3884 = vshrl.u32 %v3883, 7
  %v3885 = vsub.s32 7, %v3884
  %v3886 = vrot.slane %v3792, %v3885
  %v3887 = vsub.f32 %v3882, %v3793
  %v3888 = vsub.f32 %v3886, %v3794
  %v3889 = vand.u32 2147483647, %v3887
  %v3890 = vand.u32 2147483647, %v3888
  %v3891 = vpack.c.bf16 %v3817, %v3805
  %v3892 = vpack.c.bf16 %v3818, %v3806
  %v3893 = vpack.c.bf16 %v3841, %v3829
  %v3894 = vpack.c.bf16 %v3842, %v3830
  %v3895 = vpack.c.bf16 %v3865, %v3853
  %v3896 = vpack.c.bf16 %v3866, %v3854
  %v3897 = vpack.c.bf16 %v3889, %v3877
  %v3898 = vpack.c.bf16 %v3890, %v3878
  %v3899 = vld [vmem:[%s17] sm:$0xf]
  %v3900 = vld [vmem:[%s17 + $0x4] sm:$0xf]
  %v3901 = vld [vmem:[%s17 + $0x8] sm:$0xf]
  %v3902 = vld [vmem:[%s17 + $0xc] sm:$0xf]
  %v3903 = vld [vmem:[%s17 + $0x10] sm:$0xf]
  %v3904 = vld [vmem:[%s17 + $0x14] sm:$0xf]
  %v3905 = vld [vmem:[%s17 + $0x18] sm:$0xf]
  %v3906 = vld [vmem:[%s17 + $0x1c] sm:$0xf]
  %v3907 = vld [vmem:[%s17 + $0x20] sm:$0xf]
  %v3908 = vld [vmem:[%s17 + $0x24] sm:$0xf]
  %v3909 = vld [vmem:[%s17 + $0x28] sm:$0xf]
  %v3910 = vld [vmem:[%s17 + $0x2c] sm:$0xf]
  %v3911 = vld [vmem:[%s17 + $0x30] sm:$0xf]
  %v3912 = vld [vmem:[%s17 + $0x34] sm:$0xf]
  %v3913 = vld [vmem:[%s17 + $0x38] sm:$0xf]
  %v3914 = vld [vmem:[%s17 + $0x3c] sm:$0xf]
  %v3915 = vld [vmem:[%s17 + $0x40] sm:$0xf]
  %v3916 = vld [vmem:[%s17 + $0x44] sm:$0xf]
  %v3917 = vld [vmem:[%s17 + $0x48] sm:$0xf]
  %v3918 = vld [vmem:[%s17 + $0x4c] sm:$0xf]
  %v3919 = vld [vmem:[%s17 + $0x50] sm:$0xf]
  %v3920 = vld [vmem:[%s17 + $0x54] sm:$0xf]
  %v3921 = vld [vmem:[%s17 + $0x58] sm:$0xf]
  %v3922 = vld [vmem:[%s17 + $0x5c] sm:$0xf]
  %v3923 = vld [vmem:[%s17 + $0x60] sm:$0xf]
  %v3924 = vld [vmem:[%s17 + $0x64] sm:$0xf]
  %v3925 = vld [vmem:[%s17 + $0x68] sm:$0xf]
  %v3926 = vld [vmem:[%s17 + $0x6c] sm:$0xf]
  %v3927 = vld [vmem:[%s17 + $0x70] sm:$0xf]
  %v3928 = vld [vmem:[%s17 + $0x74] sm:$0xf]
  %v3929 = vld [vmem:[%s17 + $0x78] sm:$0xf]
  %v3930 = vld [vmem:[%s17 + $0x7c] sm:$0xf]
  %v3931 = vld [vmem:[%s18] sm:$0x1]
  %v3933 = vlaneseq
  %v3934 = vshrl.u32 %v3933, 7
  %v3935 = vsub.s32 0, %v3934
  %v3936 = vrot.slane %v3931, %v3935
  %v3970 = vunpack.c.l.b16 %v3899
  %v3971 = vunpack.c.l.b16 %v3900
  %v3972 = vunpack.c.l.b16 %v3901
  %v3973 = vunpack.c.l.b16 %v3902
  %v3974 = vunpack.c.l.b16 %v3903
  %v3975 = vunpack.c.l.b16 %v3904
  %v3976 = vunpack.c.l.b16 %v3905
  %v3977 = vunpack.c.l.b16 %v3906
  %v3978 = vunpack.c.l.b16 %v3907
  %v3979 = vunpack.c.l.b16 %v3908
  %v3980 = vunpack.c.l.b16 %v3909
  %v3981 = vunpack.c.l.b16 %v3910
  %v3982 = vunpack.c.l.b16 %v3911
  %v3983 = vunpack.c.l.b16 %v3912
  %v3984 = vunpack.c.l.b16 %v3913
  %v3985 = vunpack.c.l.b16 %v3914
  %v3986 = vunpack.c.l.b16 %v3915
  %v3987 = vunpack.c.l.b16 %v3916
  %v3988 = vunpack.c.l.b16 %v3917
  %v3989 = vunpack.c.l.b16 %v3918
  %v3990 = vunpack.c.l.b16 %v3919
  %v3991 = vunpack.c.l.b16 %v3920
  %v3992 = vunpack.c.l.b16 %v3921
  %v3993 = vunpack.c.l.b16 %v3922
  %v3994 = vunpack.c.l.b16 %v3923
  %v3995 = vunpack.c.l.b16 %v3924
  %v3996 = vunpack.c.l.b16 %v3925
  %v3997 = vunpack.c.l.b16 %v3926
  %v3998 = vunpack.c.l.b16 %v3927
  %v3999 = vunpack.c.l.b16 %v3928
  %v4000 = vunpack.c.l.b16 %v3929
  %v4001 = vunpack.c.l.b16 %v3930
  %v4002 = vpack.c.b16 %v3971, %v3970
  %v4003 = vpack.c.b16 %v3973, %v3972
  %v4004 = vpack.c.b16 %v3975, %v3974
  %v4005 = vpack.c.b16 %v3977, %v3976
  %v4006 = vpack.c.b16 %v3979, %v3978
  %v4007 = vpack.c.b16 %v3981, %v3980
  %v4008 = vpack.c.b16 %v3983, %v3982
  %v4009 = vpack.c.b16 %v3985, %v3984
  %v4010 = vpack.c.b16 %v3987, %v3986
  %v4011 = vpack.c.b16 %v3989, %v3988
  %v4012 = vpack.c.b16 %v3991, %v3990
  %v4013 = vpack.c.b16 %v3993, %v3992
  %v4014 = vpack.c.b16 %v3995, %v3994
  %v4015 = vpack.c.b16 %v3997, %v3996
  %v4016 = vpack.c.b16 %v3999, %v3998
  %v4017 = vpack.c.b16 %v4001, %v4000
  %4034 = vmatprep.subr.bf16.mxu0 0
  %4035 = vmatpush1.bf16.msra.mxu0 %v4002
  %4036 = vmatprep.subr.bf16.mxu0 0
  %4037 = vmatpush1.bf16.msra.mxu0 %v4003
  %4038 = vmatprep.subr.bf16.mxu0 0
  %4039 = vmatpush1.bf16.msra.mxu0 %v4004
  %4040 = vmatprep.subr.bf16.mxu0 0
  %4041 = vmatpush1.bf16.msra.mxu0 %v4005
  %4042 = vmatprep.subr.bf16.mxu0 0
  %4043 = vmatpush1.bf16.msra.mxu0 %v4006
  %4044 = vmatprep.subr.bf16.mxu0 0
  %4045 = vmatpush1.bf16.msra.mxu0 %v4007
  %4046 = vmatprep.subr.bf16.mxu0 0
  %4047 = vmatpush1.bf16.msra.mxu0 %v4008
  %4048 = vmatprep.subr.bf16.mxu0 0
  %4049 = vmatpush1.bf16.msra.mxu0 %v4009
  %4050 = vmatprep.subr.bf16.mxu0 0
  %4051 = vmatpush1.bf16.msra.mxu0 %v4010
  %4052 = vmatprep.subr.bf16.mxu0 0
  %4053 = vmatpush1.bf16.msra.mxu0 %v4011
  %4054 = vmatprep.subr.bf16.mxu0 0
  %4055 = vmatpush1.bf16.msra.mxu0 %v4012
  %4056 = vmatprep.subr.bf16.mxu0 0
  %4057 = vmatpush1.bf16.msra.mxu0 %v4013
  %4058 = vmatprep.subr.bf16.mxu0 0
  %4059 = vmatpush1.bf16.msra.mxu0 %v4014
  %4060 = vmatprep.subr.bf16.mxu0 0
  %4061 = vmatpush1.bf16.msra.mxu0 %v4015
  %4062 = vmatprep.subr.bf16.mxu0 0
  %4063 = vmatpush1.bf16.msra.mxu0 %v4016
  %4064 = vmatprep.subr.bf16.mxu0 0
  %4065 = vmatpush1.bf16.msra.mxu0 %v4017
  %4066 = vmatprep.mubr.bf16.mxu0 %v3892
  %4067 = vmatmul.mubr.bf16.gmra.mrb[0].mxu0 %v3891
  %v4068 = vpop.f32.mrb[0].mxu0
  %v4069 = vadd.f32 %v3936, %v4068
  %v4070 = vpop.f32.mrb[0].mxu0
  %v4071 = vpop.f32.mrb[0].mxu0
  %v4072 = vadd.f32 %v3936, %v4071
  %v4073 = vpop.f32.mrb[0].mxu0
  %4074 = vmatprep.mubr.bf16.mxu0 %v3894
  %4075 = vmatmul.mubr.bf16.gmra.mrb[0].mxu0 %v3893
  %v4076 = vpop.f32.mrb[0].mxu0
  %v4077 = vadd.f32 %v3936, %v4076
  %v4078 = vpop.f32.mrb[0].mxu0
  %v4079 = vpop.f32.mrb[0].mxu0
  %v4080 = vadd.f32 %v3936, %v4079
  %v4081 = vpop.f32.mrb[0].mxu0
  %4082 = vmatprep.mubr.bf16.mxu0 %v3896
  %4083 = vmatmul.mubr.bf16.gmra.mrb[0].mxu0 %v3895
  %v4084 = vpop.f32.mrb[0].mxu0
  %v4085 = vadd.f32 %v3936, %v4084
  %v4086 = vpop.f32.mrb[0].mxu0
  %v4087 = vpop.f32.mrb[0].mxu0
  %v4088 = vadd.f32 %v3936, %v4087
  %v4089 = vpop.f32.mrb[0].mxu0
  %4090 = vmatprep.mubr.bf16.mxu0 %v3898
  %4091 = vmatmul.mubr.bf16.gmra.mrb[0].mxu0 %v3897
  %v4092 = vpop.f32.mrb[0].mxu0
  %v4093 = vadd.f32 %v3936, %v4092
  %v4094 = vpop.f32.mrb[0].mxu0
  %v4095 = vpop.f32.mrb[0].mxu0
  %v4096 = vadd.f32 %v3936, %v4095
  %v4097 = vpop.f32.mrb[0].mxu0
  %4098 = vdwg.mxu0
  %v4099 = vmax.f32 %v4069, 0.0
  %v4100 = vmax.f32 %v4072, 0.0
  %v4101 = vmax.f32 %v4077, 0.0
  %v4102 = vmax.f32 %v4080, 0.0
  %v4103 = vmax.f32 %v4085, 0.0
  %v4104 = vmax.f32 %v4088, 0.0
  %v4105 = vmax.f32 %v4093, 0.0
  %v4106 = vmax.f32 %v4096, 0.0
  %v4107 = vld [vmem:[%s19] sm:$0x1]
  %v4109 = vlaneseq
  %v4110 = vshrl.u32 %v4109, 7
  %v4111 = vsub.s32 0, %v4110
  %v4112 = vrot.slane %v4107, %v4111
  %v4114 = vmul.f32 %v4099, %v4112
  %v4115 = vmul.f32 %v4100, %v4112
  %v4116 = vmul.f32 %v4101, %v4112
  %v4117 = vmul.f32 %v4102, %v4112
  %v4118 = vmul.f32 %v4103, %v4112
  %v4119 = vmul.f32 %v4104, %v4112
  %v4120 = vmul.f32 %v4105, %v4112
  %v4121 = vmul.f32 %v4106, %v4112
  %v4122 = vsel %vm179, %v4114, 0.0
  %4123 = vadd.xlane.f32.xlu0 %v4122
  %v4124 = vpop.xlane.xlu0 %4123
  %v4125 = vsel %vm179, %v4115, 0.0
  %4126 = vadd.xlane.f32.xlu0 %v4125
  %v4127 = vpop.xlane.xlu0 %4126
  %v4128 = vsel %vm179, %v4116, 0.0
  %4129 = vadd.xlane.f32.xlu0 %v4128
  %v4130 = vpop.xlane.xlu0 %4129
  %v4131 = vsel %vm179, %v4117, 0.0
  %4132 = vadd.xlane.f32.xlu0 %v4131
  %v4133 = vpop.xlane.xlu0 %4132
  %v4134 = vsel %vm179, %v4118, 0.0
  %4135 = vadd.xlane.f32.xlu0 %v4134
  %v4136 = vpop.xlane.xlu0 %4135
  %v4137 = vsel %vm179, %v4119, 0.0
  %4138 = vadd.xlane.f32.xlu0 %v4137
  %v4139 = vpop.xlane.xlu0 %4138
  %v4140 = vsel %vm179, %v4120, 0.0
  %4141 = vadd.xlane.f32.xlu0 %v4140
  %v4142 = vpop.xlane.xlu0 %4141
  %v4143 = vsel %vm179, %v4121, 0.0
  %4144 = vadd.xlane.f32.xlu0 %v4143
  %v4145 = vpop.xlane.xlu0 %4144
  %v4146 = vld [vmem:[#allocation2] sm:$0x1]
  %s4147 = vtos %v4146
  %v4148 = vstv %s4147
  %v4149 = vadd.f32 %v4124, %v4148
  %v4150 = vadd.f32 %v4127, %v4148
  %v4151 = vadd.f32 %v4130, %v4148
  %v4152 = vadd.f32 %v4133, %v4148
  %v4153 = vadd.f32 %v4136, %v4148
  %v4154 = vadd.f32 %v4139, %v4148
  %v4155 = vadd.f32 %v4142, %v4148
  %v4156 = vadd.f32 %v4145, %v4148
  %v4157 = vxor.u32 %v4149, 2147483648
  %v4158 = vxor.u32 %v4150, 2147483648
  %v4159 = vxor.u32 %v4151, 2147483648
  %v4160 = vxor.u32 %v4152, 2147483648
  %v4161 = vxor.u32 %v4153, 2147483648
  %v4162 = vxor.u32 %v4154, 2147483648
  %v4163 = vxor.u32 %v4155, 2147483648
  %v4164 = vxor.u32 %v4156, 2147483648
  %v4165 = vmul.f32 %v4157, 1.442695
  %v4166 = vpow.pop %v4165
  %v4167 = vmul.f32 %v4158, 1.442695
  %v4168 = vpow.pop %v4167
  %v4169 = vmul.f32 %v4159, 1.442695
  %v4170 = vpow.pop %v4169
  %v4171 = vmul.f32 %v4160, 1.442695
  %v4172 = vpow.pop %v4171
  %v4173 = vmul.f32 %v4161, 1.442695
  %v4174 = vpow.pop %v4173
  %v4175 = vmul.f32 %v4162, 1.442695
  %v4176 = vpow.pop %v4175
  %v4177 = vmul.f32 %v4163, 1.442695
  %v4178 = vpow.pop %v4177
  %v4179 = vmul.f32 %v4164, 1.442695
  %v4180 = vpow.pop %v4179
  %v4181 = vadd.f32 %v4166, 1.0
  %v4182 = vadd.f32 %v4168, 1.0
  %v4183 = vadd.f32 %v4170, 1.0
  %v4184 = vadd.f32 %v4172, 1.0
  %v4185 = vadd.f32 %v4174, 1.0
  %v4186 = vadd.f32 %v4176, 1.0
  %v4187 = vadd.f32 %v4178, 1.0
  %v4188 = vadd.f32 %v4180, 1.0
  %v4189 = vrcp.pop %v4181
  %v4190 = vmul.f32 1.0, %v4189
  %v4191 = vrcp.pop %v4182
  %v4192 = vmul.f32 1.0, %v4191
  %v4193 = vrcp.pop %v4183
  %v4194 = vmul.f32 1.0, %v4193
  %v4195 = vrcp.pop %v4184
  %v4196 = vmul.f32 1.0, %v4195
  %v4197 = vrcp.pop %v4185
  %v4198 = vmul.f32 1.0, %v4197
  %v4199 = vrcp.pop %v4186
  %v4200 = vmul.f32 1.0, %v4199
  %v4201 = vrcp.pop %v4187
  %v4202 = vmul.f32 1.0, %v4201
  %v4203 = vrcp.pop %v4188
  %v4204 = vmul.f32 1.0, %v4203
  %v4205 = vld [vmem:[%s4] sm:$0xff]
  %v4206 = vld [vmem:[%s4 + $0x8] sm:$0xff]
  %v4207 = vld [vmem:[%s4 + $0x10] sm:$0xff]
  %v4208 = vld [vmem:[%s4 + $0x18] sm:$0xff]
  %v4209 = vld [vmem:[%s4 + $0x20] sm:$0xff]
  %v4210 = vld [vmem:[%s4 + $0x28] sm:$0xff]
  %v4211 = vld [vmem:[%s4 + $0x30] sm:$0xff]
  %v4212 = vld [vmem:[%s4 + $0x38] sm:$0xff]
  %vm4213 = vcmp.eq.f32.partialorder %v4205, 0.0
  %vm4214 = vcmp.eq.f32.partialorder %v4206, 0.0
  %vm4215 = vcmp.eq.f32.partialorder %v4207, 0.0
  %vm4216 = vcmp.eq.f32.partialorder %v4208, 0.0
  %vm4217 = vcmp.eq.f32.partialorder %v4209, 0.0
  %vm4218 = vcmp.eq.f32.partialorder %v4210, 0.0
  %vm4219 = vcmp.eq.f32.partialorder %v4211, 0.0
  %vm4220 = vcmp.eq.f32.partialorder %v4212, 0.0
  %v4221 = vmul.f32 %v4205, %v4190
  %v4222 = vmul.f32 %v4206, %v4192
  %v4223 = vmul.f32 %v4207, %v4194
  %v4224 = vmul.f32 %v4208, %v4196
  %v4225 = vmul.f32 %v4209, %v4198
  %v4226 = vmul.f32 %v4210, %v4200
  %v4227 = vmul.f32 %v4211, %v4202
  %v4228 = vmul.f32 %v4212, %v4204
  %v4229 = vsel %vm4213, 99.0, %v4221
  %v4230 = vsel %vm4214, 99.0, %v4222
  %v4231 = vsel %vm4215, 99.0, %v4223
  %v4232 = vsel %vm4216, 99.0, %v4224
  %v4233 = vsel %vm4217, 99.0, %v4225
  %v4234 = vsel %vm4218, 99.0, %v4226
  %v4235 = vsel %vm4219, 99.0, %v4227
  %v4236 = vsel %vm4220, 99.0, %v4228
  %vm4237 = vcmask 7168
  %4238 = vst.msk [vmem:[%s21] sm:$0xff] %vm4237, %v4229
  %4239 = vst.msk [vmem:[%s21 + $0x8] sm:$0xff] %vm4237, %v4230
  %4240 = vst.msk [vmem:[%s21 + $0x10] sm:$0xff] %vm4237, %v4231
  %4241 = vst.msk [vmem:[%s21 + $0x18] sm:$0xff] %vm4237, %v4232
  %4242 = vst.msk [vmem:[%s21 + $0x20] sm:$0xff] %vm4237, %v4233
  %4243 = vst.msk [vmem:[%s21 + $0x28] sm:$0xff] %vm4237, %v4234
  %4244 = vst.msk [vmem:[%s21 + $0x30] sm:$0xff] %vm4237, %v4235
  %4245 = vst.msk [vmem:[%s21 + $0x38] sm:$0xff] %vm4237, %v4236
  // Predicated region
  $region86: #{gnn_mot_forward.3} parent=0 // pred_check
    _
  $region87: #{gnn_mot_forward.3} parent=0 // pred_check_branch
    %4247 = sbr.rel (0) target = $region89
  $region88: #{gnn_mot_forward.3} parent=0 // pred_region
    _
  $region89: #{gnn_mot_forward.3} parent=0 // pred_fallthru
    _
  // Predicated region
  $region90: #{gnn_mot_forward.3} parent=0 // pred_check
    _
  $region91: #{gnn_mot_forward.3} parent=0 // pred_check_branch
    %4249 = sbr.rel (0) target = $region93
  $region92: #{gnn_mot_forward.3} parent=0 // pred_region
    _
  $region93: #{gnn_mot_forward.3} parent=0 // pred_fallthru
    _

</llo_original>
